<compile_context>
chip_gen: v6e
topology: v6e:2x2x1
jax: 0.10.0
libtpu: 0.0.40
codegen_flags: <defaults>
</compile_context>

<pallas_src>
import math
import functools

import jax
import jax.numpy as jnp
from jax.experimental import pallas as pl
from jax.experimental.pallas import tpu as pltpu

C_FEAT = 2048   # backbone / pooled feature dim
C_MID = 1024    # ASE conv output + classifier-input dim

# Packed per-stream scale/bias layout along the lane axis (all offsets are
# multiples of 128 -> lane-aligned static slices inside the kernel).
_O_FC1S = 0
_O_FC1B = _O_FC1S + C_MID
_O_FC2S = _O_FC1B + C_MID
_O_FC2B = _O_FC2S + C_FEAT
_O_CVS = _O_FC2B + C_FEAT
_O_CVB = _O_CVS + C_MID
_SB_LEN = _O_CVB + C_MID            # 8192

# Actual need: 2x ~6.3 MiB int8 weight double-buffers + feats/bias tiles
# + in-kernel cast temps (~12 MiB) ~= 26 MiB.  48 MiB is explicit headroom
# that still fits v7x's 64 MiB per-TC VMEM.
_VMEM_LIMIT_BYTES = 48 * 1024 * 1024


# ----------------------------------------------------------------------------
# Fused per-stream Pallas kernel: GeM -> fc1 -> fc2 -> gate -> conv/BN -> feat
# ----------------------------------------------------------------------------
def _stream_kernel(gem_p_ref, feats_ref, fc1w_ref, fc2w_ref, convw_ref, sb_ref,
                   y_ref, *, eps):
    s = pl.program_id(0)

    # --- GeneralizedMeanPoolingP over the spatial axis (f32) -----------------
    p = gem_p_ref[s]
    inv_p = 1.0 / p                                      # hoisted
    x = feats_ref[0].astype(jnp.float32)                 # (B, SP, C_FEAT)
    xp = jnp.power(jnp.maximum(x, eps), p)               # exp(p*log(x)) -> EUP
    pooled = jnp.power(jnp.mean(xp, axis=1), inv_p)      # (B, C_FEAT)

    # --- packed per-stream dequant scales and biases (f32) -------------------
    sb = sb_ref[0]                                       # (1, 8192)
    fc1_s = sb[:, _O_FC1S:_O_FC1S + C_MID]
    fc1_b = sb[:, _O_FC1B:_O_FC1B + C_MID]
    fc2_s = sb[:, _O_FC2S:_O_FC2S + C_FEAT]
    fc2_b = sb[:, _O_FC2B:_O_FC2B + C_FEAT]
    cv_s = sb[:, _O_CVS:_O_CVS + C_MID]
    cv_b = sb[:, _O_CVB:_O_CVB + C_MID]

    # --- ASE FC block: fc1 -> ReLU -> fc2; gate fused into the epilogue ------
    # int8 weights -> bf16 MXU operand; per-column dequant scale applied to the
    # f32 accumulator output (== dequantizing the weight, but O(B*N) work).
    w1 = fc1w_ref[0].astype(jnp.float32).astype(jnp.bfloat16)
    h1 = jnp.dot(pooled.astype(jnp.bfloat16), w1,
                 preferred_element_type=jnp.float32)
    h1 = jnp.maximum(h1 * fc1_s + fc1_b, 0.0)            # (B, C_MID)

    w2 = fc2w_ref[0].astype(jnp.float32).astype(jnp.bfloat16)
    fe = jnp.dot(h1.astype(jnp.bfloat16), w2,
                 preferred_element_type=jnp.float32)
    fe = fe * fc2_s + fc2_b                              # (B, C_FEAT)
    gated = pooled * (1.0 + jax.nn.sigmoid(fe))          # x + x*sigmoid(fe)

    # --- conv1x1 (BatchNorm folded, eval stats) + ReLU ------------------------
    wc = convw_ref[0].astype(jnp.float32).astype(jnp.bfloat16)
    y = jnp.dot(gated.astype(jnp.bfloat16), wc,
                preferred_element_type=jnp.float32)
    y = jnp.maximum(y * cv_s + cv_b, 0.0)                # (B, C_MID)
    y_ref[0] = y.astype(y_ref.dtype)


def fused_streams(feats, gem_p, fc1_q, fc2_q, conv_q, sb, *, eps=1e-6):
    """feats: (S, B, SP, C_FEAT) bf16; int8 weights + packed f32 scales/biases
    stacked over the S = 3*stride streams."""
    S, B, SP, C = feats.shape
    Cm = C_MID

    # Advisory cost estimate: the kernel is HBM-weight-DMA bound; telling XLA
    # about the ~weight bytes lets it overlap the stem with the kernel prologue.
    weight_bytes = int(fc1_q.size + fc2_q.size + conv_q.size)      # int8 = 1 B
    bytes_accessed = int(feats.size * feats.dtype.itemsize) + weight_bytes \
        + int(sb.size * 4) + int(gem_p.size * 4) + S * B * Cm * 4
    flops = 2 * S * B * (C * Cm + Cm * C + C * Cm)
    transcendentals = S * B * (2 * SP * C + 3 * C + Cm)

    return pl.pallas_call(
        functools.partial(_stream_kernel, eps=eps),
        out_shape=jax.ShapeDtypeStruct((S, B, Cm), jnp.float32),
        grid=(S,),
        in_specs=[
            pl.BlockSpec(memory_space=pltpu.MemorySpace.SMEM),      # gem_p (S,)
            pl.BlockSpec((1, B, SP, C), lambda s: (s, 0, 0, 0)),    # feats bf16
            pl.BlockSpec((1, C, Cm), lambda s: (s, 0, 0)),          # fc1 w int8
            pl.BlockSpec((1, Cm, C), lambda s: (s, 0, 0)),          # fc2 w int8
            pl.BlockSpec((1, C, Cm), lambda s: (s, 0, 0)),          # conv w int8
            pl.BlockSpec((1, 1, _SB_LEN), lambda s: (s, 0, 0)),     # scales+biases
        ],
        out_specs=pl.BlockSpec((1, B, Cm), lambda s: (s, 0, 0)),    # lane-dense
        compiler_params=pltpu.CompilerParams(
            dimension_semantics=("parallel",),   # independent streams -> 2 TCs on v7x
            vmem_limit_bytes=_VMEM_LIMIT_BYTES),
        cost_estimate=pl.CostEstimate(flops=flops,
                                      transcendentals=transcendentals,
                                      bytes_accessed=bytes_accessed),
    )(gem_p, feats, fc1_q, fc2_q, conv_q, sb)


# ----------------------------------------------------------------------------
# Plain-JAX glue
# ----------------------------------------------------------------------------
def grid_sample_bilinear(img, grid):
    """torch.nn.functional.grid_sample, mode='bilinear', padding_mode='zeros',
    align_corners=False.  img: (B,C,H,W); grid: (B,Ho,Wo,2) with (x,y) in [-1,1]."""
    B, C, H, W = img.shape
    gx, gy = grid[..., 0], grid[..., 1]
    ix = ((gx + 1.0) * W - 1.0) / 2.0
    iy = ((gy + 1.0) * H - 1.0) / 2.0
    ix0 = jnp.floor(ix)
    iy0 = jnp.floor(iy)

    def corner(iy_, ix_):
        valid = ((ix_ >= 0) & (ix_ <= W - 1) & (iy_ >= 0) & (iy_ <= H - 1))
        xc = jnp.clip(ix_, 0, W - 1).astype(jnp.int32)
        yc = jnp.clip(iy_, 0, H - 1).astype(jnp.int32)
        g = jax.vmap(lambda im, yy, xx: im[:, yy, xx])(img, yc, xc)  # (B,C,Ho,Wo)
        return g * valid[:, None, :, :].astype(img.dtype)

    w00 = (ix0 + 1 - ix) * (iy0 + 1 - iy)
    w01 = (ix - ix0) * (iy0 + 1 - iy)
    w10 = (ix0 + 1 - ix) * (iy - iy0)
    w11 = (ix - ix0) * (iy - iy0)
    return (corner(iy0, ix0) * w00[:, None] +
            corner(iy0, ix0 + 1) * w01[:, None] +
            corner(iy0 + 1, ix0) * w10[:, None] +
            corner(iy0 + 1, ix0 + 1) * w11[:, None])


def _quantize_cols(w):
    """Per-output-column symmetric int8 quantization of a (K, N) f32 weight."""
    amax = jnp.max(jnp.abs(w), axis=0)
    scale = jnp.maximum(amax, 1e-12) / 127.0
    q = jnp.clip(jnp.rint(w / scale[None, :]), -127.0, 127.0).astype(jnp.int8)
    return q, scale.astype(jnp.float32)


def init_params(key, num_class, stride, M, lambda_init, in_ch):
    del num_class  # classifier head is training-only; eval forward discards logits
    keys = iter(jax.random.split(key, 128))

    def lin(k, fan_in, fan_out):
        bound = 1.0 / math.sqrt(fan_in)
        kw, kb = jax.random.split(k)
        w = jax.random.uniform(kw, (fan_in, fan_out), jnp.float32, -bound, bound)
        b = jax.random.uniform(kb, (fan_out,), jnp.float32, -bound, bound)
        return w, b

    n_streams = 3 * stride
    fc1_q, fc2_q, cv_q, sb_rows, gemp = [], [], [], [], []
    for _ in range(n_streams):
        w1, b1 = lin(next(keys), C_FEAT, C_MID)            # Linear(2048, 1024)
        q1, s1 = _quantize_cols(w1)
        w2, b2 = lin(next(keys), C_MID, C_FEAT)            # Linear(1024, 2048)
        q2, s2 = _quantize_cols(w2)
        wc, bc = lin(next(keys), C_FEAT, C_MID)            # Conv2d(2048, 1024, 1)
        # BatchNorm2d(1024), fresh init, eval mode: gamma=1, beta=0, mean=0, var=1
        gamma = jnp.ones((C_MID,)); beta = jnp.zeros((C_MID,))
        rmean = jnp.zeros((C_MID,)); rvar = jnp.ones((C_MID,))
        bn_scale = gamma / jnp.sqrt(rvar + 1e-5)
        qc, sc = _quantize_cols(wc * bn_scale[None, :])    # BN folded into conv
        bcf = (bc - rmean) * bn_scale + beta

        fc1_q.append(q1); fc2_q.append(q2); cv_q.append(qc)
        sb_rows.append(jnp.concatenate([s1, b1, s2, b2, sc, bcf]))   # (8192,)
        gemp.append(3.0)                                   # GeneralizedMeanPoolingP init

    params = {
        "lambdak": jnp.full((M,), lambda_init, jnp.float32),
        # TODO(synk): build_backbone(cfg['backbone']) (ResNet-50) not in the snippet;
        # stand-in = 1x1-conv stem in_ch->2048 + ReLU (same 2048-d contract).
        "backbone": [lin(next(keys), in_ch, C_FEAT) for _ in range(3)],
        "fc1_q": jnp.stack(fc1_q),                         # (S, 2048, 1024) int8
        "fc2_q": jnp.stack(fc2_q),                         # (S, 1024, 2048) int8
        "conv_q": jnp.stack(cv_q),                         # (S, 2048, 1024) int8
        "sb": jnp.stack(sb_rows)[:, None, :].astype(jnp.float32),   # (S, 1, 8192)
        "gem_p": jnp.asarray(gemp, jnp.float32),
        # fc_list classifier omitted: eval path never uses the logits.
    }
    return params


def model_forward(params, x, label, cfg, num_class):
    del label, num_class  # eval path: loss/logit branch unused
    N, M, R_max, stride = cfg["N"], cfg["M"], cfg["R_max"], cfg["stride"]
    B, C_in = x.shape[0], x.shape[1]
    assert N % stride == 0
    h = N // stride
    x = x.astype(jnp.float32)

    # --- polar grids from lambdak --------------------------------------------
    lam = params["lambdak"]
    csum = jnp.concatenate([jnp.zeros((1,), lam.dtype), jnp.cumsum(lam)])[:N]
    z = csum / jnp.sum(lam)
    a0, b0 = -math.pi, math.pi
    a1, b1 = -math.pi / 4, -3 * math.pi / 4
    a2, b2 = 3 * math.pi / 4, math.pi / 4
    thetas = jnp.stack([(b0 - a0) * z + a0,
                        (b1 - a1) * z + a1,
                        (b2 - a2) * z + a2])                    # (3, N)
    jj = jnp.arange(M, dtype=jnp.float32)
    gx = R_max * jj[None, None, :] * jnp.sin(thetas)[:, :, None] / M
    gy = R_max * jj[None, None, :] * jnp.cos(thetas)[:, :, None] / M
    grids = jnp.stack([gx, gy], axis=-1).astype(jnp.float32)    # (3, N, M, 2)

    # --- grid_sample + (stand-in) backbone stem, arranged per stream ---------
    feats_list = []
    for i in range(3):
        grid_i = jnp.broadcast_to(grids[i][None], (B, N, M, 2))
        gf = grid_sample_bilinear(x, grid_i)                    # (B, C_in, N, M)
        wb, bb = params["backbone"][i]
        # C_in is tiny (3): do the stem contraction in the grid_sample epilogue
        # (VPU-sized work) instead of a zero-padded MXU matmul.
        gf_r = gf.reshape(B, C_in, stride, h, M)
        fi = jnp.einsum('bcjhm,cd->jbhmd', gf_r, wb) + bb       # (stride,B,h,M,2048)
        fi = jnp.maximum(fi, 0.0).astype(jnp.bfloat16)          # bf16 feats -> half DMA
        feats_list.append(fi.reshape(stride, B, h * M, C_FEAT))
    feats = jnp.concatenate(feats_list, axis=0)                 # (3*stride, B, h*M, 2048)

    # --- single fused Pallas kernel over all 3*stride streams ----------------
    y = fused_streams(feats, params["gem_p"],
                      params["fc1_q"], params["fc2_q"], params["conv_q"],
                      params["sb"])                             # (S, B, 1024) f32

    feat = jnp.transpose(y, (1, 0, 2)).reshape(B, -1)           # (B, 3*stride*1024)
    # TODO(synk): CrossEntropyLabelSmooth / CircleLoss are the training-only branch;
    # eval path of the reference forward returns loss = 0.
    loss = jnp.zeros((), jnp.float32)
    return feat, loss


if __name__ == "__main__":
    cfg = {"N": 8, "M": 8, "R_max": 1.0, "stride": 4,
           "lambda_init": 1.0, "Margin": 0.25, "backbone": "resnet50"}
    num_class = 8
    B, C_in, H, W = 2, 3, 16, 16

    key = jax.random.PRNGKey(0)
    kx, kp = jax.random.split(key)
    x = jax.random.normal(kx, (B, C_in, H, W), jnp.float32)
    label = jnp.arange(B, dtype=jnp.int32) % num_class
    params = init_params(kp, num_class=num_class, stride=cfg["stride"],
                         M=cfg["M"], lambda_init=cfg["lambda_init"], in_ch=C_in)

    fwd = jax.jit(lambda p, xx, ll: model_forward(p, xx, ll, cfg, num_class))
    feat, loss = fwd(params, x, label)
    jax.block_until_ready(feat)
    assert feat.shape == (B, 3 * cfg["stride"] * 1024)
    assert bool(jnp.all(jnp.isfinite(feat)))
    print("KERNEL_OK")
</pallas_src>

<mosaic_0001>
module attributes {stable_mosaic.version = 11 : i64} {
  func.func @_stream_kernel(%arg0: i32, %arg1: memref<12xf32, #tpu.memory_space<smem>>, %arg2: memref<1x2x16x2048xbf16, #tpu.memory_space<vmem>>, %arg3: memref<1x2048x1024xi8, #tpu.memory_space<vmem>>, %arg4: memref<1x1024x2048xi8, #tpu.memory_space<vmem>>, %arg5: memref<1x2048x1024xi8, #tpu.memory_space<vmem>>, %arg6: memref<1x1x8192xf32, #tpu.memory_space<vmem>>, %arg7: memref<1x2x1024xf32, #tpu.memory_space<vmem>>) attributes {dimension_semantics = [#tpu.dimension_semantics<parallel>], iteration_bounds = array<i64: 12>, scalar_prefetch = 0 : i64, scratch_operands = 0 : i64, tpu.core_type = #tpu.core_type<tc>, window_params = [{transform_indices = @transform_0, window_bounds = array<i64: 12>}, {transform_indices = @transform_1, window_bounds = array<i64: 1, 2, 16, 2048>}, {transform_indices = @transform_2, window_bounds = array<i64: 1, 2048, 1024>}, {transform_indices = @transform_3, window_bounds = array<i64: 1, 1024, 2048>}, {transform_indices = @transform_4, window_bounds = array<i64: 1, 2048, 1024>}, {transform_indices = @transform_5, window_bounds = array<i64: 1, 1, 8192>}, {transform_indices = @transform_6, window_bounds = array<i64: 1, 2, 1024>}]} {
    %0 = arith.index_cast %arg0 : i32 to index
    %1 = memref.load %arg1[%0] : memref<12xf32, #tpu.memory_space<smem>>
    %cst = arith.constant 1.000000e+00 : f32
    %2 = arith.divf %cst, %1 : f32
    %c0 = arith.constant 0 : index
    %c0_0 = arith.constant 0 : index
    %c0_1 = arith.constant 0 : index
    %c0_2 = arith.constant 0 : index
    %3 = vector.load %arg2[%c0, %c0_0, %c0_1, %c0_2] : memref<1x2x16x2048xbf16, #tpu.memory_space<vmem>>, vector<1x2x16x2048xbf16>
    %4 = vector.shape_cast %3 : vector<1x2x16x2048xbf16> to vector<2x16x2048xbf16>
    %5 = arith.extf %4 : vector<2x16x2048xbf16> to vector<2x16x2048xf32>
    %cst_3 = arith.constant 9.99999997E-7 : f32
    %6 = vector.broadcast %cst_3 : f32 to vector<2x16x2048xf32>
    %7 = arith.maximumf %5, %6 : vector<2x16x2048xf32>
    %8 = vector.broadcast %1 : f32 to vector<2x16x2048xf32>
    %9 = math.powf %7, %8 : vector<2x16x2048xf32>
    %cst_4 = arith.constant dense<0.000000e+00> : vector<2x2048xf32>
    %10 = vector.multi_reduction <add>, %9, %cst_4 [1] : vector<2x16x2048xf32> to vector<2x2048xf32>
    %cst_5 = arith.constant 1.600000e+01 : f32
    %11 = vector.broadcast %cst_5 : f32 to vector<2x2048xf32>
    %12 = arith.divf %10, %11 : vector<2x2048xf32>
    %13 = vector.broadcast %2 : f32 to vector<2x2048xf32>
    %14 = math.powf %12, %13 : vector<2x2048xf32>
    %c0_6 = arith.constant 0 : index
    %c0_7 = arith.constant 0 : index
    %c0_8 = arith.constant 0 : index
    %15 = vector.load %arg6[%c0_6, %c0_7, %c0_8] : memref<1x1x8192xf32, #tpu.memory_space<vmem>>, vector<1x1x8192xf32>
    %16 = vector.shape_cast %15 : vector<1x1x8192xf32> to vector<1x8192xf32>
    %17 = vector.extract_strided_slice %16 {offsets = [0, 0], sizes = [1, 1024], strides = [1, 1]} : vector<1x8192xf32> to vector<1x1024xf32>
    %18 = vector.extract_strided_slice %16 {offsets = [0, 1024], sizes = [1, 1024], strides = [1, 1]} : vector<1x8192xf32> to vector<1x1024xf32>
    %19 = vector.extract_strided_slice %16 {offsets = [0, 2048], sizes = [1, 2048], strides = [1, 1]} : vector<1x8192xf32> to vector<1x2048xf32>
    %20 = vector.extract_strided_slice %16 {offsets = [0, 4096], sizes = [1, 2048], strides = [1, 1]} : vector<1x8192xf32> to vector<1x2048xf32>
    %21 = vector.extract_strided_slice %16 {offsets = [0, 6144], sizes = [1, 1024], strides = [1, 1]} : vector<1x8192xf32> to vector<1x1024xf32>
    %22 = vector.extract_strided_slice %16 {offsets = [0, 7168], sizes = [1, 1024], strides = [1, 1]} : vector<1x8192xf32> to vector<1x1024xf32>
    %c0_9 = arith.constant 0 : index
    %c0_10 = arith.constant 0 : index
    %c0_11 = arith.constant 0 : index
    %23 = vector.load %arg3[%c0_9, %c0_10, %c0_11] : memref<1x2048x1024xi8, #tpu.memory_space<vmem>>, vector<1x2048x1024xi8>
    %24 = vector.shape_cast %23 : vector<1x2048x1024xi8> to vector<2048x1024xi8>
    %25 = arith.sitofp %24 : vector<2048x1024xi8> to vector<2048x1024xf32>
    %26 = arith.truncf %25 : vector<2048x1024xf32> to vector<2048x1024xbf16>
    %27 = arith.truncf %14 : vector<2x2048xf32> to vector<2x2048xbf16>
    %cst_12 = arith.constant dense<0.000000e+00> : vector<2x1024xf32>
    %28 = tpu.matmul %27, %26, %cst_12 {dimension_numbers = #tpu.dot_dimension_numbers<[1], [0], [0], [1], [0, 0, 1, 1], [], []>} : vector<2x2048xbf16>, vector<2048x1024xbf16>, vector<2x1024xf32> -> vector<2x1024xf32>
    %29 = vector.broadcast %17 : vector<1x1024xf32> to vector<2x1024xf32>
    %30 = arith.mulf %28, %29 : vector<2x1024xf32>
    %31 = vector.broadcast %18 : vector<1x1024xf32> to vector<2x1024xf32>
    %32 = arith.addf %30, %31 : vector<2x1024xf32>
    %cst_13 = arith.constant 0.000000e+00 : f32
    %33 = vector.broadcast %cst_13 : f32 to vector<2x1024xf32>
    %34 = arith.maximumf %32, %33 : vector<2x1024xf32>
    %c0_14 = arith.constant 0 : index
    %c0_15 = arith.constant 0 : index
    %c0_16 = arith.constant 0 : index
    %35 = vector.load %arg4[%c0_14, %c0_15, %c0_16] : memref<1x1024x2048xi8, #tpu.memory_space<vmem>>, vector<1x1024x2048xi8>
    %36 = vector.shape_cast %35 : vector<1x1024x2048xi8> to vector<1024x2048xi8>
    %37 = arith.sitofp %36 : vector<1024x2048xi8> to vector<1024x2048xf32>
    %38 = arith.truncf %37 : vector<1024x2048xf32> to vector<1024x2048xbf16>
    %39 = arith.truncf %34 : vector<2x1024xf32> to vector<2x1024xbf16>
    %cst_17 = arith.constant dense<0.000000e+00> : vector<2x2048xf32>
    %40 = tpu.matmul %39, %38, %cst_17 {dimension_numbers = #tpu.dot_dimension_numbers<[1], [0], [0], [1], [0, 0, 1, 1], [], []>} : vector<2x1024xbf16>, vector<1024x2048xbf16>, vector<2x2048xf32> -> vector<2x2048xf32>
    %41 = vector.broadcast %19 : vector<1x2048xf32> to vector<2x2048xf32>
    %42 = arith.mulf %40, %41 : vector<2x2048xf32>
    %43 = vector.broadcast %20 : vector<1x2048xf32> to vector<2x2048xf32>
    %44 = arith.addf %42, %43 : vector<2x2048xf32>
    %45 = arith.negf %44 : vector<2x2048xf32>
    %46 = math.exp %45 : vector<2x2048xf32>
    %cst_18 = arith.constant 1.000000e+00 : f32
    %47 = vector.broadcast %cst_18 : f32 to vector<2x2048xf32>
    %48 = arith.addf %47, %46 : vector<2x2048xf32>
    %49 = arith.divf %47, %48 : vector<2x2048xf32>
    %cst_19 = arith.constant 1.000000e+00 : f32
    %50 = vector.broadcast %cst_19 : f32 to vector<2x2048xf32>
    %51 = arith.addf %50, %49 : vector<2x2048xf32>
    %52 = arith.mulf %14, %51 : vector<2x2048xf32>
    %c0_20 = arith.constant 0 : index
    %c0_21 = arith.constant 0 : index
    %c0_22 = arith.constant 0 : index
    %53 = vector.load %arg5[%c0_20, %c0_21, %c0_22] : memref<1x2048x1024xi8, #tpu.memory_space<vmem>>, vector<1x2048x1024xi8>
    %54 = vector.shape_cast %53 : vector<1x2048x1024xi8> to vector<2048x1024xi8>
    %55 = arith.sitofp %54 : vector<2048x1024xi8> to vector<2048x1024xf32>
    %56 = arith.truncf %55 : vector<2048x1024xf32> to vector<2048x1024xbf16>
    %57 = arith.truncf %52 : vector<2x2048xf32> to vector<2x2048xbf16>
    %cst_23 = arith.constant dense<0.000000e+00> : vector<2x1024xf32>
    %58 = tpu.matmul %57, %56, %cst_23 {dimension_numbers = #tpu.dot_dimension_numbers<[1], [0], [0], [1], [0, 0, 1, 1], [], []>} : vector<2x2048xbf16>, vector<2048x1024xbf16>, vector<2x1024xf32> -> vector<2x1024xf32>
    %59 = vector.broadcast %21 : vector<1x1024xf32> to vector<2x1024xf32>
    %60 = arith.mulf %58, %59 : vector<2x1024xf32>
    %61 = vector.broadcast %22 : vector<1x1024xf32> to vector<2x1024xf32>
    %62 = arith.addf %60, %61 : vector<2x1024xf32>
    %cst_24 = arith.constant 0.000000e+00 : f32
    %63 = vector.broadcast %cst_24 : f32 to vector<2x1024xf32>
    %64 = arith.maximumf %62, %63 : vector<2x1024xf32>
    %c0_25 = arith.constant 0 : index
    %c0_26 = arith.constant 0 : index
    %c0_27 = arith.constant 0 : index
    %65 = vector.load %arg7[%c0_25, %c0_26, %c0_27] : memref<1x2x1024xf32, #tpu.memory_space<vmem>>, vector<1x2x1024xf32>
    %66 = vector.shape_cast %65 : vector<1x2x1024xf32> to vector<2x1024xf32>
    %67 = vector.shape_cast %64 : vector<2x1024xf32> to vector<1x2x1024xf32>
    tpu.vector_store %arg7[%c0_25, %c0_26, %c0_27], %67 {strides = array<i32>} : memref<1x2x1024xf32, #tpu.memory_space<vmem>>, vector<1x2x1024xf32>,
    return
  }
  func.func @transform_0(%arg0: i32) -> i32 {
    %c0_i32 = arith.constant 0 : i32
    %c0_i32_0 = arith.constant 0 : i32
    return %c0_i32 : i32
  }
  func.func @transform_1(%arg0: i32) -> (i32, i32, i32, i32) {
    %c0_i32 = arith.constant 0 : i32
    %c0_i32_0 = arith.constant 0 : i32
    %c0_i32_1 = arith.constant 0 : i32
    %c0_i32_2 = arith.constant 0 : i32
    return %arg0, %c0_i32, %c0_i32_0, %c0_i32_1 : i32, i32, i32, i32
  }
  func.func @transform_2(%arg0: i32) -> (i32, i32, i32) {
    %c0_i32 = arith.constant 0 : i32
    %c0_i32_0 = arith.constant 0 : i32
    %c0_i32_1 = arith.constant 0 : i32
    return %arg0, %c0_i32, %c0_i32_0 : i32, i32, i32
  }
  func.func @transform_3(%arg0: i32) -> (i32, i32, i32) {
    %c0_i32 = arith.constant 0 : i32
    %c0_i32_0 = arith.constant 0 : i32
    %c0_i32_1 = arith.constant 0 : i32
    return %arg0, %c0_i32, %c0_i32_0 : i32, i32, i32
  }
  func.func @transform_4(%arg0: i32) -> (i32, i32, i32) {
    %c0_i32 = arith.constant 0 : i32
    %c0_i32_0 = arith.constant 0 : i32
    %c0_i32_1 = arith.constant 0 : i32
    return %arg0, %c0_i32, %c0_i32_0 : i32, i32, i32
  }
  func.func @transform_5(%arg0: i32) -> (i32, i32, i32) {
    %c0_i32 = arith.constant 0 : i32
    %c0_i32_0 = arith.constant 0 : i32
    %c0_i32_1 = arith.constant 0 : i32
    return %arg0, %c0_i32, %c0_i32_0 : i32, i32, i32
  }
  func.func @transform_6(%arg0: i32) -> (i32, i32, i32) {
    %c0_i32 = arith.constant 0 : i32
    %c0_i32_0 = arith.constant 0 : i32
    %c0_i32_1 = arith.constant 0 : i32
    return %arg0, %c0_i32, %c0_i32_0 : i32, i32, i32
  }
}

</mosaic_0001>

<llo_original>
// kernel: _lambda_.1
$region0: #{_lambda_.1}
  #allocation0 [shape = 'u32[]', space=smem, size = 0x4, offset = 0x4, fixed_abs, tag = 'smem constant byte address 0x4 - core index']
  #allocation1 [shape = 'u32[144,128]{1,0:T(1,128)}', space=vmem, size = 0x12000, scoped, tag = 'internal scratch']
  %s0 = inlined_call_operand.vmem [shape: f32[12], index: 0, kind: input, shape index: {}]
  %s1 = inlined_call_operand.vmem [shape: bf16[12,2,16,2048], index: 1, kind: input, shape index: {}]
  %s2 = inlined_call_operand.hbm [shape: s8[12,2048,1024], index: 2, kind: input, shape index: {}]
  %s3 = inlined_call_operand.hbm [shape: s8[12,1024,2048], index: 3, kind: input, shape index: {}]
  %s4 = inlined_call_operand.hbm [shape: s8[12,2048,1024], index: 4, kind: input, shape index: {}]
  %s5 = inlined_call_operand.vmem [shape: f32[12,1,8192], index: 5, kind: input, shape index: {}]
  %s6 = inlined_call_operand.hbm [shape: f32[12,2,1024], index: 6, kind: output, shape index: {}]
  %s7 = sld [smem:[#allocation0]]
  $region73: #{_lambda_.1} parent=0
    _
  %s9 = ssub.s32 1, %s7
  %s10 = scalar_select 0, %s9, %s7
  $region1: #{_lambda_.1} parent=0
    #allocation2 [shape = 'u8[512]{0}', space=smem, size = 0x200, scoped, tag = 'input window, operand 0, single buffered']
    #allocation3 [shape = 's32[2]{0}', space=sflag, size = 0x8, scoped, tag = 'scoped memory for _lambda_.1']
    #allocation4 [shape = 's32[2]{0}', space=sflag, size = 0x8, scoped, tag = 'scoped memory for _lambda_.1']
    #allocation5 [shape = 's32[2]{0}', space=sflag, size = 0x8, scoped, tag = 'scoped memory for _lambda_.1']
    #allocation6 [shape = 'u8[4194304]{0}', space=vmem, size = 0x400000, scoped, tag = 'input window, operand 2']
    #allocation7 [shape = 'u8[4194304]{0}', space=vmem, size = 0x400000, scoped, tag = 'input window, operand 3']
    #allocation8 [shape = 's32[2]{0}', space=sflag, size = 0x8, scoped, tag = 'scoped memory for _lambda_.1']
    #allocation9 [shape = 'u8[4194304]{0}', space=vmem, size = 0x400000, scoped, tag = 'input window, operand 4']
    #allocation10 [shape = 'u8[16384]{0}', space=vmem, size = 0x4000, scoped, tag = 'output window, operand 0']
    %11 = vsyncpa [#allocation5], 0
    %12 = vsyncpa [#allocation3], 0
    %s13 = scalar_lea.sflag [#allocation3], 1
    %14 = vsyncpa %s13, 0
    %15 = vsyncpa [#allocation8], 0
    %s16 = scalar_lea.sflag [#allocation8], 1
    %17 = vsyncpa %s16, 0
    %18 = vsyncpa [#allocation4], 0
    %s19 = scalar_lea.sflag [#allocation4], 1
    %20 = vsyncpa %s19, 0
    loop: start=0, step=1, limit=14
    $region2: #{_lambda_.1} parent=1 // loop_pre_header
      _
    $region3: #{_lambda_.1} parent=1 // loop_header
      %s22 = sphi 0, %s26
      %p23 = scmp.ge.s32.totalorder %s22, 14
      %s30 = sphi 0, %s30
      %s32 = sphi 0, %s30
      %s33 = sphi 0, %s32
      %s47 = sphi 0, %s33
      %s53 = sphi 0, %s55
      %s56 = sphi 0, %s53
      %s57 = sphi 0, %s56
      %s73 = sphi 0, %s57
      %s79 = sphi 0, %s81
      %s82 = sphi 0, %s79
      %s83 = sphi 0, %s82
      %s99 = sphi 0, %s83
      %s105 = sphi 0, %s107
      %s108 = sphi 0, %s105
      %s109 = sphi 0, %s108
      %s125 = sphi 0, %s109
      %s131 = sphi 0, %s133
      %s134 = sphi 0, %s131
      %s135 = sphi 0, %s134
      %s151 = sphi 0, %s135
      %s157 = sphi 0, %s159
      %s160 = sphi 0, %s157
      %s161 = sphi 0, %s160
      %s177 = sphi 0, %s161
      %s183 = sphi 0, %s185
      %s186 = sphi 0, %s183
      %s187 = sphi 0, %s186
      %s203 = sphi 0, %s187
    $region4: #{_lambda_.1} parent=1 // loop_header_branch
      %25 = sbr.rel (%p23) target = $region8
    $region5: #{_lambda_.1} parent=1 // loop_body
      %s27 = ssub.s32 %s22, 1
      %s28 = ssub.s32 %s22, 2
      %s29 = sadd.s32 %s22, 1
      %s31 = sadd.s32 %s30, 1
      %p34 = scmp.eq.s32.totalorder %s22, 11
      %p35 = scmp.ne.s32.totalorder %s30, %s32
      %p36 = scmp.eq.s32.totalorder %s22, 0
      %p37 = por %p35, %p36
      %p38 = scmp.ne.s32.totalorder %s30, %s32
      %p39 = scmp.eq.s32.totalorder %s27, 11
      %p40 = por %p38, %p39
      %p41 = scmp.ne.s32.totalorder %s32, %s33
      %p42 = scmp.eq.s32.totalorder %s27, 0
      %p43 = por %p41, %p42
      %p44 = scmp.ne.s32.totalorder %s32, %s33
      %p45 = scmp.eq.s32.totalorder %s28, 11
      %p46 = por %p44, %p45
      %p48 = scmp.ne.s32.totalorder %s33, %s47
      %p49 = scmp.eq.s32.totalorder %s28, 0
      %p50 = por %p48, %p49
      %s51 = ssub.s32 %s22, %s29
      %p52 = scmp.eq.s32.totalorder %s51, 0
      %s54 = sadd.s32 %s53, 1
      %s55 = scalar_select %p52, %s53, %s54
      %p58 = pneg %p52
      %p59 = scmp.eq.s32.totalorder %s22, 11
      %p60 = por %p58, %p59
      %p61 = scmp.ne.s32.totalorder %s53, %s56
      %p62 = scmp.eq.s32.totalorder %s22, 0
      %p63 = por %p61, %p62
      %p64 = scmp.ne.s32.totalorder %s53, %s56
      %p65 = scmp.eq.s32.totalorder %s27, 11
      %p66 = por %p64, %p65
      %p67 = scmp.ne.s32.totalorder %s56, %s57
      %p68 = scmp.eq.s32.totalorder %s27, 0
      %p69 = por %p67, %p68
      %p70 = scmp.ne.s32.totalorder %s56, %s57
      %p71 = scmp.eq.s32.totalorder %s28, 11
      %p72 = por %p70, %p71
      %p74 = scmp.ne.s32.totalorder %s57, %s73
      %p75 = scmp.eq.s32.totalorder %s28, 0
      %p76 = por %p74, %p75
      %s77 = ssub.s32 %s22, %s29
      %p78 = scmp.eq.s32.totalorder %s77, 0
      %s80 = sadd.s32 %s79, 1
      %s81 = scalar_select %p78, %s79, %s80
      %p84 = pneg %p78
      %p85 = scmp.eq.s32.totalorder %s22, 11
      %p86 = por %p84, %p85
      %p87 = scmp.ne.s32.totalorder %s79, %s82
      %p88 = scmp.eq.s32.totalorder %s22, 0
      %p89 = por %p87, %p88
      %p90 = scmp.ne.s32.totalorder %s79, %s82
      %p91 = scmp.eq.s32.totalorder %s27, 11
      %p92 = por %p90, %p91
      %p93 = scmp.ne.s32.totalorder %s82, %s83
      %p94 = scmp.eq.s32.totalorder %s27, 0
      %p95 = por %p93, %p94
      %p96 = scmp.ne.s32.totalorder %s82, %s83
      %p97 = scmp.eq.s32.totalorder %s28, 11
      %p98 = por %p96, %p97
      %p100 = scmp.ne.s32.totalorder %s83, %s99
      %p101 = scmp.eq.s32.totalorder %s28, 0
      %p102 = por %p100, %p101
      %s103 = ssub.s32 %s22, %s29
      %p104 = scmp.eq.s32.totalorder %s103, 0
      %s106 = sadd.s32 %s105, 1
      %s107 = scalar_select %p104, %s105, %s106
      %p110 = pneg %p104
      %p111 = scmp.eq.s32.totalorder %s22, 11
      %p112 = por %p110, %p111
      %p113 = scmp.ne.s32.totalorder %s105, %s108
      %p114 = scmp.eq.s32.totalorder %s22, 0
      %p115 = por %p113, %p114
      %p116 = scmp.ne.s32.totalorder %s105, %s108
      %p117 = scmp.eq.s32.totalorder %s27, 11
      %p118 = por %p116, %p117
      %p119 = scmp.ne.s32.totalorder %s108, %s109
      %p120 = scmp.eq.s32.totalorder %s27, 0
      %p121 = por %p119, %p120
      %p122 = scmp.ne.s32.totalorder %s108, %s109
      %p123 = scmp.eq.s32.totalorder %s28, 11
      %p124 = por %p122, %p123
      %p126 = scmp.ne.s32.totalorder %s109, %s125
      %p127 = scmp.eq.s32.totalorder %s28, 0
      %p128 = por %p126, %p127
      %s129 = ssub.s32 %s22, %s29
      %p130 = scmp.eq.s32.totalorder %s129, 0
      %s132 = sadd.s32 %s131, 1
      %s133 = scalar_select %p130, %s131, %s132
      %p136 = pneg %p130
      %p137 = scmp.eq.s32.totalorder %s22, 11
      %p138 = por %p136, %p137
      %p139 = scmp.ne.s32.totalorder %s131, %s134
      %p140 = scmp.eq.s32.totalorder %s22, 0
      %p141 = por %p139, %p140
      %p142 = scmp.ne.s32.totalorder %s131, %s134
      %p143 = scmp.eq.s32.totalorder %s27, 11
      %p144 = por %p142, %p143
      %p145 = scmp.ne.s32.totalorder %s134, %s135
      %p146 = scmp.eq.s32.totalorder %s27, 0
      %p147 = por %p145, %p146
      %p148 = scmp.ne.s32.totalorder %s134, %s135
      %p149 = scmp.eq.s32.totalorder %s28, 11
      %p150 = por %p148, %p149
      %p152 = scmp.ne.s32.totalorder %s135, %s151
      %p153 = scmp.eq.s32.totalorder %s28, 0
      %p154 = por %p152, %p153
      %s155 = ssub.s32 %s22, %s29
      %p156 = scmp.eq.s32.totalorder %s155, 0
      %s158 = sadd.s32 %s157, 1
      %s159 = scalar_select %p156, %s157, %s158
      %p162 = pneg %p156
      %p163 = scmp.eq.s32.totalorder %s22, 11
      %p164 = por %p162, %p163
      %p165 = scmp.ne.s32.totalorder %s157, %s160
      %p166 = scmp.eq.s32.totalorder %s22, 0
      %p167 = por %p165, %p166
      %p168 = scmp.ne.s32.totalorder %s157, %s160
      %p169 = scmp.eq.s32.totalorder %s27, 11
      %p170 = por %p168, %p169
      %p171 = scmp.ne.s32.totalorder %s160, %s161
      %p172 = scmp.eq.s32.totalorder %s27, 0
      %p173 = por %p171, %p172
      %p174 = scmp.ne.s32.totalorder %s160, %s161
      %p175 = scmp.eq.s32.totalorder %s28, 11
      %p176 = por %p174, %p175
      %p178 = scmp.ne.s32.totalorder %s161, %s177
      %p179 = scmp.eq.s32.totalorder %s28, 0
      %p180 = por %p178, %p179
      %s181 = ssub.s32 %s22, %s29
      %p182 = scmp.eq.s32.totalorder %s181, 0
      %s184 = sadd.s32 %s183, 1
      %s185 = scalar_select %p182, %s183, %s184
      %p188 = pneg %p182
      %p189 = scmp.eq.s32.totalorder %s22, 11
      %p190 = por %p188, %p189
      %p191 = scmp.ne.s32.totalorder %s183, %s186
      %p192 = scmp.eq.s32.totalorder %s22, 0
      %p193 = por %p191, %p192
      %p194 = scmp.ne.s32.totalorder %s183, %s186
      %p195 = scmp.eq.s32.totalorder %s27, 11
      %p196 = por %p194, %p195
      %p197 = scmp.ne.s32.totalorder %s186, %s187
      %p198 = scmp.eq.s32.totalorder %s27, 0
      %p199 = por %p197, %p198
      %p200 = scmp.ne.s32.totalorder %s186, %s187
      %p201 = scmp.eq.s32.totalorder %s28, 11
      %p202 = por %p200, %p201
      %p204 = scmp.ne.s32.totalorder %s187, %s203
      %p205 = scmp.eq.s32.totalorder %s28, 0
      %p206 = por %p204, %p205
      %p207 = scmp.le.s32.totalorder 1, %s22
      %p208 = scmp.lt.s32.totalorder %s22, 13
      %p209 = pnand %p207, %p208
      %p210 = pneg %p209
      // Predicated region
      $region9: #{_lambda_.1} parent=5 // pred_check
        _
      $region10: #{_lambda_.1} parent=5 // pred_check_branch
        %212 = sbr.rel (%p209) target = $region12
      $region11: #{_lambda_.1} parent=5 // pred_region
        %s213 = ssub.s32 %s22, 1
        // Predicated region
        $region13: #{_lambda_.1} parent=11 // pred_check
          %p214 = pneg %p43
        $region14: #{_lambda_.1} parent=11 // pred_check_branch
          %216 = sbr.rel (%p214) target = $region16
        $region15: #{_lambda_.1} parent=11 // pred_region
          %s218 = ssub.s32 16, 16
          %219 = vsyncadd [#allocation5], %s218
          %s221 = sshll.u32 %s0, 4
          %s222 = int_to_ptr.vmem [resolvable:$true] %s221
          %224 = dma.vmem_to_smem %s222, 16, [#allocation2], [#allocation5]
        $region16: #{_lambda_.1} parent=11 // pred_fallthru
          _
      $region12: #{_lambda_.1} parent=5 // pred_fallthru
        _
      %p225 = scmp.lt.s32.totalorder %s22, 12
      // Predicated region
      $region17: #{_lambda_.1} parent=5 // pred_check
        %p226 = pneg %p225
      $region18: #{_lambda_.1} parent=5 // pred_check_branch
        %228 = sbr.rel (%p226) target = $region20
      $region19: #{_lambda_.1} parent=5 // pred_region
        // Predicated region
        $region21: #{_lambda_.1} parent=19 // pred_check
          %p229 = pneg %p63
        $region22: #{_lambda_.1} parent=19 // pred_check_branch
          %231 = sbr.rel (%p229) target = $region24
        $region23: #{_lambda_.1} parent=19 // pred_region
          %p232 = scmp.lt.s32.totalorder %s22, 11
          %s233 = scalar_select %p232, %s22, 11
          %s234 = smul.addr %s233, 64
          %s235 = smul.addr %s234, 4
          %s236 = scalar_lea.vmem %s1, %s235
        $region24: #{_lambda_.1} parent=19 // pred_fallthru
          _
        // Predicated region
        $region25: #{_lambda_.1} parent=19 // pred_check
          %p237 = pneg %p89
        $region26: #{_lambda_.1} parent=19 // pred_check_branch
          %239 = sbr.rel (%p237) target = $region28
        $region27: #{_lambda_.1} parent=19 // pred_region
          %s240 = sand.u32 %s79, 1
          %s241 = scalar_lea.sflag [#allocation3], %s240
          %s242 = sand.u32 %s79, 1
          %s243 = smul.addr %s242, 4096
          %s244 = scalar_lea.vmem [#allocation6], %s243
          %s246 = ssub.s32 65536, 65536
          %247 = vsyncadd %s241, %s246
          %s248 = smul.addr %s22, 512
          %s249 = smul.addr %s248, 128
          %s250 = scalar_lea.hbm %s2, %s249
          %s251 = sshll.u32 %s244, 4
          %s252 = int_to_ptr.vmem [resolvable:$true] %s251
          %257 = dma.hbm_to_vmem [thread:$0]  %s250, 65536, %s252, %s241, 1024, 1024, 64
        $region28: #{_lambda_.1} parent=19 // pred_fallthru
          _
        // Predicated region
        $region29: #{_lambda_.1} parent=19 // pred_check
          %p258 = pneg %p115
        $region30: #{_lambda_.1} parent=19 // pred_check_branch
          %260 = sbr.rel (%p258) target = $region32
        $region31: #{_lambda_.1} parent=19 // pred_region
          %s261 = sand.u32 %s22, 1
          %s262 = scalar_lea.sflag [#allocation8], %s261
          %s263 = sand.u32 %s105, 1
          %s264 = smul.addr %s263, 4096
          %s265 = scalar_lea.vmem [#allocation7], %s264
          %s267 = ssub.s32 65536, 65536
          %268 = vsyncadd %s262, %s267
          %s269 = smul.addr %s22, 512
          %s270 = smul.addr %s269, 128
          %s271 = scalar_lea.hbm %s3, %s270
          %s272 = sshll.u32 %s265, 4
          %s273 = int_to_ptr.vmem [resolvable:$true] %s272
          %278 = dma.hbm_to_vmem [thread:$0]  %s271, 65536, %s273, %s262, 2048, 2048, 128
        $region32: #{_lambda_.1} parent=19 // pred_fallthru
          _
        // Predicated region
        $region33: #{_lambda_.1} parent=19 // pred_check
          %p279 = pneg %p141
        $region34: #{_lambda_.1} parent=19 // pred_check_branch
          %281 = sbr.rel (%p279) target = $region36
        $region35: #{_lambda_.1} parent=19 // pred_region
          %s282 = sand.u32 %s22, 1
          %s283 = scalar_lea.sflag [#allocation8], %s282
          %s284 = sand.u32 %s131, 1
          %s285 = smul.addr %s284, 4096
          %s286 = scalar_lea.vmem [#allocation9], %s285
          %s288 = ssub.s32 65536, 65536
          %289 = vsyncadd %s283, %s288
          %s290 = smul.addr %s22, 512
          %s291 = smul.addr %s290, 128
          %s292 = scalar_lea.hbm %s4, %s291
          %s293 = sshll.u32 %s286, 4
          %s294 = int_to_ptr.vmem [resolvable:$true] %s293
          %299 = dma.hbm_to_vmem [thread:$0]  %s292, 65536, %s294, %s283, 1024, 1024, 64
        $region36: #{_lambda_.1} parent=19 // pred_fallthru
          _
        // Predicated region
        $region37: #{_lambda_.1} parent=19 // pred_check
          %p300 = pneg %p167
        $region38: #{_lambda_.1} parent=19 // pred_check_branch
          %302 = sbr.rel (%p300) target = $region40
        $region39: #{_lambda_.1} parent=19 // pred_region
          %p303 = scmp.lt.s32.totalorder %s22, 11
          %s304 = scalar_select %p303, %s22, 11
          %s305 = smul.addr %s304, 64
          %s306 = scalar_lea.vmem %s5, %s305
        $region40: #{_lambda_.1} parent=19 // pred_fallthru
          _
      $region20: #{_lambda_.1} parent=5 // pred_fallthru
        _
      %p307 = scmp.le.s32.totalorder 1, %s22
      %p308 = scmp.lt.s32.totalorder %s22, 13
      %p309 = pnand %p307, %p308
      %p310 = pneg %p309
      // Predicated region
      $region41: #{_lambda_.1} parent=5 // pred_check
        _
      $region42: #{_lambda_.1} parent=5 // pred_check_branch
        %312 = sbr.rel (%p309) target = $region44
      $region43: #{_lambda_.1} parent=5 // pred_region
        %s313 = ssub.s32 %s22, 1
        // Predicated region
        $region45: #{_lambda_.1} parent=43 // pred_check
          %p314 = pneg %p43
        $region46: #{_lambda_.1} parent=43 // pred_check_branch
          %316 = sbr.rel (%p314) target = $region48
        $region47: #{_lambda_.1} parent=43 // pred_region
          %317 = dma.done [#allocation5], 16
        $region48: #{_lambda_.1} parent=43 // pred_fallthru
          _
        %s318 = sand.u32 %s82, 1
        %s319 = scalar_lea.sflag [#allocation3], %s318
        %s320 = sand.u32 %s82, 1
        %s321 = smul.addr %s320, 4096
        %s322 = scalar_lea.vmem [#allocation6], %s321
        // Predicated region
        $region49: #{_lambda_.1} parent=43 // pred_check
          %p323 = pneg %p95
        $region50: #{_lambda_.1} parent=43 // pred_check_branch
          %325 = sbr.rel (%p323) target = $region52
        $region51: #{_lambda_.1} parent=43 // pred_region
          %326 = dma.done %s319, 65536
        $region52: #{_lambda_.1} parent=43 // pred_fallthru
          _
        %s327 = sand.u32 %s27, 1
        %s328 = scalar_lea.sflag [#allocation8], %s327
        %s329 = sand.u32 %s108, 1
        %s330 = smul.addr %s329, 4096
        %s331 = scalar_lea.vmem [#allocation7], %s330
        // Predicated region
        $region53: #{_lambda_.1} parent=43 // pred_check
          %p332 = pneg %p121
        $region54: #{_lambda_.1} parent=43 // pred_check_branch
          %334 = sbr.rel (%p332) target = $region56
        $region55: #{_lambda_.1} parent=43 // pred_region
          %335 = dma.done %s328, 65536
        $region56: #{_lambda_.1} parent=43 // pred_fallthru
          _
        %s336 = sand.u32 %s27, 1
        %s337 = scalar_lea.sflag [#allocation8], %s336
        %s338 = sand.u32 %s134, 1
        %s339 = smul.addr %s338, 4096
        %s340 = scalar_lea.vmem [#allocation9], %s339
        // Predicated region
        $region57: #{_lambda_.1} parent=43 // pred_check
          %p341 = pneg %p147
        $region58: #{_lambda_.1} parent=43 // pred_check_branch
          %343 = sbr.rel (%p341) target = $region60
        $region59: #{_lambda_.1} parent=43 // pred_region
          %344 = dma.done %s337, 65536
        $region60: #{_lambda_.1} parent=43 // pred_fallthru
          _
        %345 = sfence
        %p346 = pneg %p43
        %p347 = pneg %p40
        %p348 = scmp.lt.s32.totalorder %s27, 11
        %s349 = scalar_select %p348, %s27, 11
        %s350 = smul.addr %s349, 64
        %s351 = smul.addr %s350, 4
        %s352 = scalar_lea.vmem %s1, %s351
        %p353 = pneg %p69
        %p354 = pneg %p66
        %s355 = sand.u32 %s82, 1
        %s356 = scalar_lea.sflag [#allocation3], %s355
        %s357 = sand.u32 %s82, 1
        %s358 = smul.addr %s357, 4096
        %s359 = scalar_lea.vmem [#allocation6], %s358
        %p360 = pneg %p95
        %p361 = pneg %p92
        %s362 = sand.u32 %s27, 1
        %s363 = scalar_lea.sflag [#allocation8], %s362
        %s364 = sand.u32 %s108, 1
        %s365 = smul.addr %s364, 4096
        %s366 = scalar_lea.vmem [#allocation7], %s365
        %p367 = pneg %p121
        %p368 = pneg %p118
        %s369 = sand.u32 %s27, 1
        %s370 = scalar_lea.sflag [#allocation8], %s369
        %s371 = sand.u32 %s134, 1
        %s372 = smul.addr %s371, 4096
        %s373 = scalar_lea.vmem [#allocation9], %s372
        %p374 = pneg %p147
        %p375 = pneg %p144
        %p376 = scmp.lt.s32.totalorder %s27, 11
        %s377 = scalar_select %p376, %s27, 11
        %s378 = smul.addr %s377, 64
        %s379 = scalar_lea.vmem %s5, %s378
        %p380 = pneg %p173
        %p381 = pneg %p170
        %p382 = pneg %p199
        %p383 = pneg %p196
        %s384 = sand.u32 %s186, 1
        %s385 = scalar_lea.sflag [#allocation4], %s384
        %s386 = sand.u32 %s186, 1
        %s387 = smul.addr %s386, 16
        %s388 = scalar_lea.vmem [#allocation10], %s387
        %p389 = scmp.lt.s32.totalorder %s27, 11
        %s390 = scalar_select %p389, %s27, 11
        %s391 = smul.addr %s390, 64
        %s392 = smul.addr %s391, 4
        %s393 = scalar_lea.vmem %s1, %s392
        %p394 = scmp.lt.s32.totalorder %s27, 11
        %s395 = scalar_select %p394, %s27, 11
        %s396 = smul.addr %s395, 64
        %s397 = scalar_lea.vmem %s5, %s396
        %s398 = sld [smem:[#allocation2 + %s27]]
        %v399 = vstv %s398
        %v400 = vrcp.pop %v399
        %s401 = vtos %v400
        %v402 = vld [vmem:[%s393] sm:$0xff]
        %v403 = vld [vmem:[%s393 + $0x8] sm:$0xff]
        %v404 = vld [vmem:[%s393 + $0x10] sm:$0xff]
        %v405 = vld [vmem:[%s393 + $0x18] sm:$0xff]
        %v406 = vld [vmem:[%s393 + $0x20] sm:$0xff]
        %v407 = vld [vmem:[%s393 + $0x28] sm:$0xff]
        %v408 = vld [vmem:[%s393 + $0x30] sm:$0xff]
        %v409 = vld [vmem:[%s393 + $0x38] sm:$0xff]
        %v410 = vld [vmem:[%s393 + $0x40] sm:$0xff]
        %v411 = vld [vmem:[%s393 + $0x48] sm:$0xff]
        %v412 = vld [vmem:[%s393 + $0x50] sm:$0xff]
        %v413 = vld [vmem:[%s393 + $0x58] sm:$0xff]
        %v414 = vld [vmem:[%s393 + $0x60] sm:$0xff]
        %v415 = vld [vmem:[%s393 + $0x68] sm:$0xff]
        %v416 = vld [vmem:[%s393 + $0x70] sm:$0xff]
        %v417 = vld [vmem:[%s393 + $0x78] sm:$0xff]
        %v418 = vld [vmem:[%s393 + $0x80] sm:$0xff]
        %v419 = vld [vmem:[%s393 + $0x88] sm:$0xff]
        %v420 = vld [vmem:[%s393 + $0x90] sm:$0xff]
        %v421 = vld [vmem:[%s393 + $0x98] sm:$0xff]
        %v422 = vld [vmem:[%s393 + $0xa0] sm:$0xff]
        %v423 = vld [vmem:[%s393 + $0xa8] sm:$0xff]
        %v424 = vld [vmem:[%s393 + $0xb0] sm:$0xff]
        %v425 = vld [vmem:[%s393 + $0xb8] sm:$0xff]
        %v426 = vld [vmem:[%s393 + $0xc0] sm:$0xff]
        %v427 = vld [vmem:[%s393 + $0xc8] sm:$0xff]
        %v428 = vld [vmem:[%s393 + $0xd0] sm:$0xff]
        %v429 = vld [vmem:[%s393 + $0xd8] sm:$0xff]
        %v430 = vld [vmem:[%s393 + $0xe0] sm:$0xff]
        %v431 = vld [vmem:[%s393 + $0xe8] sm:$0xff]
        %v432 = vld [vmem:[%s393 + $0xf0] sm:$0xff]
        %v433 = vld [vmem:[%s393 + $0xf8] sm:$0xff]
        %v434 = vunpack.c.l.bf16 %v402
        %v435 = vunpack.c.h.bf16 %v402
        %v436 = vunpack.c.l.bf16 %v403
        %v437 = vunpack.c.h.bf16 %v403
        %v438 = vunpack.c.l.bf16 %v404
        %v439 = vunpack.c.h.bf16 %v404
        %v440 = vunpack.c.l.bf16 %v405
        %v441 = vunpack.c.h.bf16 %v405
        %v442 = vunpack.c.l.bf16 %v406
        %v443 = vunpack.c.h.bf16 %v406
        %v444 = vunpack.c.l.bf16 %v407
        %v445 = vunpack.c.h.bf16 %v407
        %v446 = vunpack.c.l.bf16 %v408
        %v447 = vunpack.c.h.bf16 %v408
        %v448 = vunpack.c.l.bf16 %v409
        %v449 = vunpack.c.h.bf16 %v409
        %v450 = vunpack.c.l.bf16 %v410
        %v451 = vunpack.c.h.bf16 %v410
        %v452 = vunpack.c.l.bf16 %v411
        %v453 = vunpack.c.h.bf16 %v411
        %v454 = vunpack.c.l.bf16 %v412
        %v455 = vunpack.c.h.bf16 %v412
        %v456 = vunpack.c.l.bf16 %v413
        %v457 = vunpack.c.h.bf16 %v413
        %v458 = vunpack.c.l.bf16 %v414
        %v459 = vunpack.c.h.bf16 %v414
        %v460 = vunpack.c.l.bf16 %v415
        %v461 = vunpack.c.h.bf16 %v415
        %v462 = vunpack.c.l.bf16 %v416
        %v463 = vunpack.c.h.bf16 %v416
        %v464 = vunpack.c.l.bf16 %v417
        %v465 = vunpack.c.h.bf16 %v417
        %v466 = vunpack.c.l.bf16 %v418
        %v467 = vunpack.c.h.bf16 %v418
        %v468 = vunpack.c.l.bf16 %v419
        %v469 = vunpack.c.h.bf16 %v419
        %v470 = vunpack.c.l.bf16 %v420
        %v471 = vunpack.c.h.bf16 %v420
        %v472 = vunpack.c.l.bf16 %v421
        %v473 = vunpack.c.h.bf16 %v421
        %v474 = vunpack.c.l.bf16 %v422
        %v475 = vunpack.c.h.bf16 %v422
        %v476 = vunpack.c.l.bf16 %v423
        %v477 = vunpack.c.h.bf16 %v423
        %v478 = vunpack.c.l.bf16 %v424
        %v479 = vunpack.c.h.bf16 %v424
        %v480 = vunpack.c.l.bf16 %v425
        %v481 = vunpack.c.h.bf16 %v425
        %v482 = vunpack.c.l.bf16 %v426
        %v483 = vunpack.c.h.bf16 %v426
        %v484 = vunpack.c.l.bf16 %v427
        %v485 = vunpack.c.h.bf16 %v427
        %v486 = vunpack.c.l.bf16 %v428
        %v487 = vunpack.c.h.bf16 %v428
        %v488 = vunpack.c.l.bf16 %v429
        %v489 = vunpack.c.h.bf16 %v429
        %v490 = vunpack.c.l.bf16 %v430
        %v491 = vunpack.c.h.bf16 %v430
        %v492 = vunpack.c.l.bf16 %v431
        %v493 = vunpack.c.h.bf16 %v431
        %v494 = vunpack.c.l.bf16 %v432
        %v495 = vunpack.c.h.bf16 %v432
        %v496 = vunpack.c.l.bf16 %v433
        %v497 = vunpack.c.h.bf16 %v433
        %v498 = vmax.f32 %v434, 1e-06
        %v499 = vmax.f32 %v435, 1e-06
        %v500 = vmax.f32 %v436, 1e-06
        %v501 = vmax.f32 %v437, 1e-06
        %v502 = vmax.f32 %v438, 1e-06
        %v503 = vmax.f32 %v439, 1e-06
        %v504 = vmax.f32 %v440, 1e-06
        %v505 = vmax.f32 %v441, 1e-06
        %v506 = vmax.f32 %v442, 1e-06
        %v507 = vmax.f32 %v443, 1e-06
        %v508 = vmax.f32 %v444, 1e-06
        %v509 = vmax.f32 %v445, 1e-06
        %v510 = vmax.f32 %v446, 1e-06
        %v511 = vmax.f32 %v447, 1e-06
        %v512 = vmax.f32 %v448, 1e-06
        %v513 = vmax.f32 %v449, 1e-06
        %v514 = vmax.f32 %v450, 1e-06
        %v515 = vmax.f32 %v451, 1e-06
        %v516 = vmax.f32 %v452, 1e-06
        %v517 = vmax.f32 %v453, 1e-06
        %v518 = vmax.f32 %v454, 1e-06
        %v519 = vmax.f32 %v455, 1e-06
        %v520 = vmax.f32 %v456, 1e-06
        %v521 = vmax.f32 %v457, 1e-06
        %v522 = vmax.f32 %v458, 1e-06
        %v523 = vmax.f32 %v459, 1e-06
        %v524 = vmax.f32 %v460, 1e-06
        %v525 = vmax.f32 %v461, 1e-06
        %v526 = vmax.f32 %v462, 1e-06
        %v527 = vmax.f32 %v463, 1e-06
        %v528 = vmax.f32 %v464, 1e-06
        %v529 = vmax.f32 %v465, 1e-06
        %v530 = vmax.f32 %v466, 1e-06
        %v531 = vmax.f32 %v467, 1e-06
        %v532 = vmax.f32 %v468, 1e-06
        %v533 = vmax.f32 %v469, 1e-06
        %v534 = vmax.f32 %v470, 1e-06
        %v535 = vmax.f32 %v471, 1e-06
        %v536 = vmax.f32 %v472, 1e-06
        %v537 = vmax.f32 %v473, 1e-06
        %v538 = vmax.f32 %v474, 1e-06
        %v539 = vmax.f32 %v475, 1e-06
        %v540 = vmax.f32 %v476, 1e-06
        %v541 = vmax.f32 %v477, 1e-06
        %v542 = vmax.f32 %v478, 1e-06
        %v543 = vmax.f32 %v479, 1e-06
        %v544 = vmax.f32 %v480, 1e-06
        %v545 = vmax.f32 %v481, 1e-06
        %v546 = vmax.f32 %v482, 1e-06
        %v547 = vmax.f32 %v483, 1e-06
        %v548 = vmax.f32 %v484, 1e-06
        %v549 = vmax.f32 %v485, 1e-06
        %v550 = vmax.f32 %v486, 1e-06
        %v551 = vmax.f32 %v487, 1e-06
        %v552 = vmax.f32 %v488, 1e-06
        %v553 = vmax.f32 %v489, 1e-06
        %v554 = vmax.f32 %v490, 1e-06
        %v555 = vmax.f32 %v491, 1e-06
        %v556 = vmax.f32 %v492, 1e-06
        %v557 = vmax.f32 %v493, 1e-06
        %v558 = vmax.f32 %v494, 1e-06
        %v559 = vmax.f32 %v495, 1e-06
        %v560 = vmax.f32 %v496, 1e-06
        %v561 = vmax.f32 %v497, 1e-06
        %v562 = vstv %s398
        %v563 = vpow.f32 %v498, %v562
        %v564 = vpow.f32 %v499, %v562
        %v565 = vpow.f32 %v500, %v562
        %v566 = vpow.f32 %v501, %v562
        %v567 = vpow.f32 %v502, %v562
        %v568 = vpow.f32 %v503, %v562
        %v569 = vpow.f32 %v504, %v562
        %v570 = vpow.f32 %v505, %v562
        %v571 = vpow.f32 %v506, %v562
        %v572 = vpow.f32 %v507, %v562
        %v573 = vpow.f32 %v508, %v562
        %v574 = vpow.f32 %v509, %v562
        %v575 = vpow.f32 %v510, %v562
        %v576 = vpow.f32 %v511, %v562
        %v577 = vpow.f32 %v512, %v562
        %v578 = vpow.f32 %v513, %v562
        %v579 = vpow.f32 %v514, %v562
        %v580 = vpow.f32 %v515, %v562
        %v581 = vpow.f32 %v516, %v562
        %v582 = vpow.f32 %v517, %v562
        %v583 = vpow.f32 %v518, %v562
        %v584 = vpow.f32 %v519, %v562
        %v585 = vpow.f32 %v520, %v562
        %v586 = vpow.f32 %v521, %v562
        %v587 = vpow.f32 %v522, %v562
        %v588 = vpow.f32 %v523, %v562
        %v589 = vpow.f32 %v524, %v562
        %v590 = vpow.f32 %v525, %v562
        %v591 = vpow.f32 %v526, %v562
        %v592 = vpow.f32 %v527, %v562
        %v593 = vpow.f32 %v528, %v562
        %v594 = vpow.f32 %v529, %v562
        %v595 = vpow.f32 %v530, %v562
        %v596 = vpow.f32 %v531, %v562
        %v597 = vpow.f32 %v532, %v562
        %v598 = vpow.f32 %v533, %v562
        %v599 = vpow.f32 %v534, %v562
        %v600 = vpow.f32 %v535, %v562
        %v601 = vpow.f32 %v536, %v562
        %v602 = vpow.f32 %v537, %v562
        %v603 = vpow.f32 %v538, %v562
        %v604 = vpow.f32 %v539, %v562
        %v605 = vpow.f32 %v540, %v562
        %v606 = vpow.f32 %v541, %v562
        %v607 = vpow.f32 %v542, %v562
        %v608 = vpow.f32 %v543, %v562
        %v609 = vpow.f32 %v544, %v562
        %v610 = vpow.f32 %v545, %v562
        %v611 = vpow.f32 %v546, %v562
        %v612 = vpow.f32 %v547, %v562
        %v613 = vpow.f32 %v548, %v562
        %v614 = vpow.f32 %v549, %v562
        %v615 = vpow.f32 %v550, %v562
        %v616 = vpow.f32 %v551, %v562
        %v617 = vpow.f32 %v552, %v562
        %v618 = vpow.f32 %v553, %v562
        %v619 = vpow.f32 %v554, %v562
        %v620 = vpow.f32 %v555, %v562
        %v621 = vpow.f32 %v556, %v562
        %v622 = vpow.f32 %v557, %v562
        %v623 = vpow.f32 %v558, %v562
        %v624 = vpow.f32 %v559, %v562
        %v625 = vpow.f32 %v560, %v562
        %v626 = vpow.f32 %v561, %v562
        %v627 = vadd.f32 %v563, %v579
        %v628 = vrot.slane %v627, 4
        %v629 = vadd.f32 %v627, %v628
        %v630 = vrot.slane %v629, 2
        %v631 = vadd.f32 %v629, %v630
        %v632 = vrot.slane %v631, 1
        %v633 = vadd.f32 %v631, %v632
        %v634 = vadd.f32 %v564, %v580
        %v635 = vrot.slane %v634, 4
        %v636 = vadd.f32 %v634, %v635
        %v637 = vrot.slane %v636, 2
        %v638 = vadd.f32 %v636, %v637
        %v639 = vrot.slane %v638, 1
        %v640 = vadd.f32 %v638, %v639
        %v641 = vadd.f32 %v565, %v581
        %v642 = vrot.slane %v641, 4
        %v643 = vadd.f32 %v641, %v642
        %v644 = vrot.slane %v643, 2
        %v645 = vadd.f32 %v643, %v644
        %v646 = vrot.slane %v645, 1
        %v647 = vadd.f32 %v645, %v646
        %v648 = vadd.f32 %v566, %v582
        %v649 = vrot.slane %v648, 4
        %v650 = vadd.f32 %v648, %v649
        %v651 = vrot.slane %v650, 2
        %v652 = vadd.f32 %v650, %v651
        %v653 = vrot.slane %v652, 1
        %v654 = vadd.f32 %v652, %v653
        %v655 = vadd.f32 %v567, %v583
        %v656 = vrot.slane %v655, 4
        %v657 = vadd.f32 %v655, %v656
        %v658 = vrot.slane %v657, 2
        %v659 = vadd.f32 %v657, %v658
        %v660 = vrot.slane %v659, 1
        %v661 = vadd.f32 %v659, %v660
        %v662 = vadd.f32 %v568, %v584
        %v663 = vrot.slane %v662, 4
        %v664 = vadd.f32 %v662, %v663
        %v665 = vrot.slane %v664, 2
        %v666 = vadd.f32 %v664, %v665
        %v667 = vrot.slane %v666, 1
        %v668 = vadd.f32 %v666, %v667
        %v669 = vadd.f32 %v569, %v585
        %v670 = vrot.slane %v669, 4
        %v671 = vadd.f32 %v669, %v670
        %v672 = vrot.slane %v671, 2
        %v673 = vadd.f32 %v671, %v672
        %v674 = vrot.slane %v673, 1
        %v675 = vadd.f32 %v673, %v674
        %v676 = vadd.f32 %v570, %v586
        %v677 = vrot.slane %v676, 4
        %v678 = vadd.f32 %v676, %v677
        %v679 = vrot.slane %v678, 2
        %v680 = vadd.f32 %v678, %v679
        %v681 = vrot.slane %v680, 1
        %v682 = vadd.f32 %v680, %v681
        %v683 = vadd.f32 %v571, %v587
        %v684 = vrot.slane %v683, 4
        %v685 = vadd.f32 %v683, %v684
        %v686 = vrot.slane %v685, 2
        %v687 = vadd.f32 %v685, %v686
        %v688 = vrot.slane %v687, 1
        %v689 = vadd.f32 %v687, %v688
        %v690 = vadd.f32 %v572, %v588
        %v691 = vrot.slane %v690, 4
        %v692 = vadd.f32 %v690, %v691
        %v693 = vrot.slane %v692, 2
        %v694 = vadd.f32 %v692, %v693
        %v695 = vrot.slane %v694, 1
        %v696 = vadd.f32 %v694, %v695
        %v697 = vadd.f32 %v573, %v589
        %v698 = vrot.slane %v697, 4
        %v699 = vadd.f32 %v697, %v698
        %v700 = vrot.slane %v699, 2
        %v701 = vadd.f32 %v699, %v700
        %v702 = vrot.slane %v701, 1
        %v703 = vadd.f32 %v701, %v702
        %v704 = vadd.f32 %v574, %v590
        %v705 = vrot.slane %v704, 4
        %v706 = vadd.f32 %v704, %v705
        %v707 = vrot.slane %v706, 2
        %v708 = vadd.f32 %v706, %v707
        %v709 = vrot.slane %v708, 1
        %v710 = vadd.f32 %v708, %v709
        %v711 = vadd.f32 %v575, %v591
        %v712 = vrot.slane %v711, 4
        %v713 = vadd.f32 %v711, %v712
        %v714 = vrot.slane %v713, 2
        %v715 = vadd.f32 %v713, %v714
        %v716 = vrot.slane %v715, 1
        %v717 = vadd.f32 %v715, %v716
        %v718 = vadd.f32 %v576, %v592
        %v719 = vrot.slane %v718, 4
        %v720 = vadd.f32 %v718, %v719
        %v721 = vrot.slane %v720, 2
        %v722 = vadd.f32 %v720, %v721
        %v723 = vrot.slane %v722, 1
        %v724 = vadd.f32 %v722, %v723
        %v725 = vadd.f32 %v577, %v593
        %v726 = vrot.slane %v725, 4
        %v727 = vadd.f32 %v725, %v726
        %v728 = vrot.slane %v727, 2
        %v729 = vadd.f32 %v727, %v728
        %v730 = vrot.slane %v729, 1
        %v731 = vadd.f32 %v729, %v730
        %v732 = vadd.f32 %v578, %v594
        %v733 = vrot.slane %v732, 4
        %v734 = vadd.f32 %v732, %v733
        %v735 = vrot.slane %v734, 2
        %v736 = vadd.f32 %v734, %v735
        %v737 = vrot.slane %v736, 1
        %v738 = vadd.f32 %v736, %v737
        %v739 = vadd.f32 %v595, %v611
        %v740 = vrot.slane %v739, 4
        %v741 = vadd.f32 %v739, %v740
        %v742 = vrot.slane %v741, 2
        %v743 = vadd.f32 %v741, %v742
        %v744 = vrot.slane %v743, 1
        %v745 = vadd.f32 %v743, %v744
        %v746 = vadd.f32 %v596, %v612
        %v747 = vrot.slane %v746, 4
        %v748 = vadd.f32 %v746, %v747
        %v749 = vrot.slane %v748, 2
        %v750 = vadd.f32 %v748, %v749
        %v751 = vrot.slane %v750, 1
        %v752 = vadd.f32 %v750, %v751
        %v753 = vadd.f32 %v597, %v613
        %v754 = vrot.slane %v753, 4
        %v755 = vadd.f32 %v753, %v754
        %v756 = vrot.slane %v755, 2
        %v757 = vadd.f32 %v755, %v756
        %v758 = vrot.slane %v757, 1
        %v759 = vadd.f32 %v757, %v758
        %v760 = vadd.f32 %v598, %v614
        %v761 = vrot.slane %v760, 4
        %v762 = vadd.f32 %v760, %v761
        %v763 = vrot.slane %v762, 2
        %v764 = vadd.f32 %v762, %v763
        %v765 = vrot.slane %v764, 1
        %v766 = vadd.f32 %v764, %v765
        %v767 = vadd.f32 %v599, %v615
        %v768 = vrot.slane %v767, 4
        %v769 = vadd.f32 %v767, %v768
        %v770 = vrot.slane %v769, 2
        %v771 = vadd.f32 %v769, %v770
        %v772 = vrot.slane %v771, 1
        %v773 = vadd.f32 %v771, %v772
        %v774 = vadd.f32 %v600, %v616
        %v775 = vrot.slane %v774, 4
        %v776 = vadd.f32 %v774, %v775
        %v777 = vrot.slane %v776, 2
        %v778 = vadd.f32 %v776, %v777
        %v779 = vrot.slane %v778, 1
        %v780 = vadd.f32 %v778, %v779
        %v781 = vadd.f32 %v601, %v617
        %v782 = vrot.slane %v781, 4
        %v783 = vadd.f32 %v781, %v782
        %v784 = vrot.slane %v783, 2
        %v785 = vadd.f32 %v783, %v784
        %v786 = vrot.slane %v785, 1
        %v787 = vadd.f32 %v785, %v786
        %v788 = vadd.f32 %v602, %v618
        %v789 = vrot.slane %v788, 4
        %v790 = vadd.f32 %v788, %v789
        %v791 = vrot.slane %v790, 2
        %v792 = vadd.f32 %v790, %v791
        %v793 = vrot.slane %v792, 1
        %v794 = vadd.f32 %v792, %v793
        %v795 = vadd.f32 %v603, %v619
        %v796 = vrot.slane %v795, 4
        %v797 = vadd.f32 %v795, %v796
        %v798 = vrot.slane %v797, 2
        %v799 = vadd.f32 %v797, %v798
        %v800 = vrot.slane %v799, 1
        %v801 = vadd.f32 %v799, %v800
        %v802 = vadd.f32 %v604, %v620
        %v803 = vrot.slane %v802, 4
        %v804 = vadd.f32 %v802, %v803
        %v805 = vrot.slane %v804, 2
        %v806 = vadd.f32 %v804, %v805
        %v807 = vrot.slane %v806, 1
        %v808 = vadd.f32 %v806, %v807
        %v809 = vadd.f32 %v605, %v621
        %v810 = vrot.slane %v809, 4
        %v811 = vadd.f32 %v809, %v810
        %v812 = vrot.slane %v811, 2
        %v813 = vadd.f32 %v811, %v812
        %v814 = vrot.slane %v813, 1
        %v815 = vadd.f32 %v813, %v814
        %v816 = vadd.f32 %v606, %v622
        %v817 = vrot.slane %v816, 4
        %v818 = vadd.f32 %v816, %v817
        %v819 = vrot.slane %v818, 2
        %v820 = vadd.f32 %v818, %v819
        %v821 = vrot.slane %v820, 1
        %v822 = vadd.f32 %v820, %v821
        %v823 = vadd.f32 %v607, %v623
        %v824 = vrot.slane %v823, 4
        %v825 = vadd.f32 %v823, %v824
        %v826 = vrot.slane %v825, 2
        %v827 = vadd.f32 %v825, %v826
        %v828 = vrot.slane %v827, 1
        %v829 = vadd.f32 %v827, %v828
        %v830 = vadd.f32 %v608, %v624
        %v831 = vrot.slane %v830, 4
        %v832 = vadd.f32 %v830, %v831
        %v833 = vrot.slane %v832, 2
        %v834 = vadd.f32 %v832, %v833
        %v835 = vrot.slane %v834, 1
        %v836 = vadd.f32 %v834, %v835
        %v837 = vadd.f32 %v609, %v625
        %v838 = vrot.slane %v837, 4
        %v839 = vadd.f32 %v837, %v838
        %v840 = vrot.slane %v839, 2
        %v841 = vadd.f32 %v839, %v840
        %v842 = vrot.slane %v841, 1
        %v843 = vadd.f32 %v841, %v842
        %v844 = vadd.f32 %v610, %v626
        %v845 = vrot.slane %v844, 4
        %v846 = vadd.f32 %v844, %v845
        %v847 = vrot.slane %v846, 2
        %v848 = vadd.f32 %v846, %v847
        %v849 = vrot.slane %v848, 1
        %v850 = vadd.f32 %v848, %v849
        %v851 = vrcp.pop 16.0
        %v852 = vmul.f32 %v633, %v851
        %v853 = vmul.f32 %v640, %v851
        %v854 = vmul.f32 %v647, %v851
        %v855 = vmul.f32 %v654, %v851
        %v856 = vmul.f32 %v661, %v851
        %v857 = vmul.f32 %v668, %v851
        %v858 = vmul.f32 %v675, %v851
        %v859 = vmul.f32 %v682, %v851
        %v860 = vmul.f32 %v689, %v851
        %v861 = vmul.f32 %v696, %v851
        %v862 = vmul.f32 %v703, %v851
        %v863 = vmul.f32 %v710, %v851
        %v864 = vmul.f32 %v717, %v851
        %v865 = vmul.f32 %v724, %v851
        %v866 = vmul.f32 %v731, %v851
        %v867 = vmul.f32 %v738, %v851
        %v868 = vmul.f32 %v745, %v851
        %v869 = vmul.f32 %v752, %v851
        %v870 = vmul.f32 %v759, %v851
        %v871 = vmul.f32 %v766, %v851
        %v872 = vmul.f32 %v773, %v851
        %v873 = vmul.f32 %v780, %v851
        %v874 = vmul.f32 %v787, %v851
        %v875 = vmul.f32 %v794, %v851
        %v876 = vmul.f32 %v801, %v851
        %v877 = vmul.f32 %v808, %v851
        %v878 = vmul.f32 %v815, %v851
        %v879 = vmul.f32 %v822, %v851
        %v880 = vmul.f32 %v829, %v851
        %v881 = vmul.f32 %v836, %v851
        %v882 = vmul.f32 %v843, %v851
        %v883 = vmul.f32 %v850, %v851
        %v884 = vstv %s401
        %v885 = vpow.f32 %v852, %v884
        %v886 = vpow.f32 %v853, %v884
        %v887 = vpow.f32 %v854, %v884
        %v888 = vpow.f32 %v855, %v884
        %v889 = vpow.f32 %v856, %v884
        %v890 = vpow.f32 %v857, %v884
        %v891 = vpow.f32 %v858, %v884
        %v892 = vpow.f32 %v859, %v884
        %v893 = vpow.f32 %v860, %v884
        %v894 = vpow.f32 %v861, %v884
        %v895 = vpow.f32 %v862, %v884
        %v896 = vpow.f32 %v863, %v884
        %v897 = vpow.f32 %v864, %v884
        %v898 = vpow.f32 %v865, %v884
        %v899 = vpow.f32 %v866, %v884
        %v900 = vpow.f32 %v867, %v884
        %v901 = vpow.f32 %v868, %v884
        %v902 = vpow.f32 %v869, %v884
        %v903 = vpow.f32 %v870, %v884
        %v904 = vpow.f32 %v871, %v884
        %v905 = vpow.f32 %v872, %v884
        %v906 = vpow.f32 %v873, %v884
        %v907 = vpow.f32 %v874, %v884
        %v908 = vpow.f32 %v875, %v884
        %v909 = vpow.f32 %v876, %v884
        %v910 = vpow.f32 %v877, %v884
        %v911 = vpow.f32 %v878, %v884
        %v912 = vpow.f32 %v879, %v884
        %v913 = vpow.f32 %v880, %v884
        %v914 = vpow.f32 %v881, %v884
        %v915 = vpow.f32 %v882, %v884
        %v916 = vpow.f32 %v883, %v884
        %v917 = vld [vmem:[%s397] sm:$0xff]
        %v918 = vld [vmem:[%s397 + $0x8] sm:$0xff]
        %v919 = vld [vmem:[%s397 + $0x10] sm:$0xff]
        %v920 = vld [vmem:[%s397 + $0x18] sm:$0xff]
        %v921 = vld [vmem:[%s397 + $0x20] sm:$0xff]
        %v922 = vld [vmem:[%s397 + $0x28] sm:$0xff]
        %v923 = vld [vmem:[%s397 + $0x30] sm:$0xff]
        %v924 = vld [vmem:[%s397 + $0x38] sm:$0xff]
        %v925 = vld [vmem:[%s322] sm:$0xff]
        %v926 = vld [vmem:[%s322 + $0x8] sm:$0xff]
        %v927 = vld [vmem:[%s322 + $0x10] sm:$0xff]
        %v928 = vld [vmem:[%s322 + $0x18] sm:$0xff]
        %v929 = vld [vmem:[%s322 + $0x20] sm:$0xff]
        %v930 = vld [vmem:[%s322 + $0x28] sm:$0xff]
        %v931 = vld [vmem:[%s322 + $0x30] sm:$0xff]
        %v932 = vld [vmem:[%s322 + $0x38] sm:$0xff]
        %v933 = vld [vmem:[%s322 + $0x40] sm:$0xff]
        %v934 = vld [vmem:[%s322 + $0x48] sm:$0xff]
        %v935 = vld [vmem:[%s322 + $0x50] sm:$0xff]
        %v936 = vld [vmem:[%s322 + $0x58] sm:$0xff]
        %v937 = vld [vmem:[%s322 + $0x60] sm:$0xff]
        %v938 = vld [vmem:[%s322 + $0x68] sm:$0xff]
        %v939 = vld [vmem:[%s322 + $0x70] sm:$0xff]
        %v940 = vld [vmem:[%s322 + $0x78] sm:$0xff]
        %v941 = vld [vmem:[%s322 + $0x80] sm:$0xff]
        %v942 = vld [vmem:[%s322 + $0x88] sm:$0xff]
        %v943 = vld [vmem:[%s322 + $0x90] sm:$0xff]
        %v944 = vld [vmem:[%s322 + $0x98] sm:$0xff]
        %v945 = vld [vmem:[%s322 + $0xa0] sm:$0xff]
        %v946 = vld [vmem:[%s322 + $0xa8] sm:$0xff]
        %v947 = vld [vmem:[%s322 + $0xb0] sm:$0xff]
        %v948 = vld [vmem:[%s322 + $0xb8] sm:$0xff]
        %v949 = vld [vmem:[%s322 + $0xc0] sm:$0xff]
        %v950 = vld [vmem:[%s322 + $0xc8] sm:$0xff]
        %v951 = vld [vmem:[%s322 + $0xd0] sm:$0xff]
        %v952 = vld [vmem:[%s322 + $0xd8] sm:$0xff]
        %v953 = vld [vmem:[%s322 + $0xe0] sm:$0xff]
        %v954 = vld [vmem:[%s322 + $0xe8] sm:$0xff]
        %v955 = vld [vmem:[%s322 + $0xf0] sm:$0xff]
        %v956 = vld [vmem:[%s322 + $0xf8] sm:$0xff]
        %v957 = vld [vmem:[%s322 + $0x100] sm:$0xff]
        %v958 = vld [vmem:[%s322 + $0x108] sm:$0xff]
        %v959 = vld [vmem:[%s322 + $0x110] sm:$0xff]
        %v960 = vld [vmem:[%s322 + $0x118] sm:$0xff]
        %v961 = vld [vmem:[%s322 + $0x120] sm:$0xff]
        %v962 = vld [vmem:[%s322 + $0x128] sm:$0xff]
        %v963 = vld [vmem:[%s322 + $0x130] sm:$0xff]
        %v964 = vld [vmem:[%s322 + $0x138] sm:$0xff]
        %v965 = vld [vmem:[%s322 + $0x140] sm:$0xff]
        %v966 = vld [vmem:[%s322 + $0x148] sm:$0xff]
        %v967 = vld [vmem:[%s322 + $0x150] sm:$0xff]
        %v968 = vld [vmem:[%s322 + $0x158] sm:$0xff]
        %v969 = vld [vmem:[%s322 + $0x160] sm:$0xff]
        %v970 = vld [vmem:[%s322 + $0x168] sm:$0xff]
        %v971 = vld [vmem:[%s322 + $0x170] sm:$0xff]
        %v972 = vld [vmem:[%s322 + $0x178] sm:$0xff]
        %v973 = vld [vmem:[%s322 + $0x180] sm:$0xff]
        %v974 = vld [vmem:[%s322 + $0x188] sm:$0xff]
        %v975 = vld [vmem:[%s322 + $0x190] sm:$0xff]
        %v976 = vld [vmem:[%s322 + $0x198] sm:$0xff]
        %v977 = vld [vmem:[%s322 + $0x1a0] sm:$0xff]
        %v978 = vld [vmem:[%s322 + $0x1a8] sm:$0xff]
        %v979 = vld [vmem:[%s322 + $0x1b0] sm:$0xff]
        %v980 = vld [vmem:[%s322 + $0x1b8] sm:$0xff]
        %v981 = vld [vmem:[%s322 + $0x1c0] sm:$0xff]
        %v982 = vld [vmem:[%s322 + $0x1c8] sm:$0xff]
        %v983 = vld [vmem:[%s322 + $0x1d0] sm:$0xff]
        %v984 = vld [vmem:[%s322 + $0x1d8] sm:$0xff]
        %v985 = vld [vmem:[%s322 + $0x1e0] sm:$0xff]
        %v986 = vld [vmem:[%s322 + $0x1e8] sm:$0xff]
        %v987 = vld [vmem:[%s322 + $0x1f0] sm:$0xff]
        %v988 = vld [vmem:[%s322 + $0x1f8] sm:$0xff]
        %v989 = vld [vmem:[%s322 + $0x200] sm:$0xff]
        %v990 = vld [vmem:[%s322 + $0x208] sm:$0xff]
        %v991 = vld [vmem:[%s322 + $0x210] sm:$0xff]
        %v992 = vld [vmem:[%s322 + $0x218] sm:$0xff]
        %v993 = vld [vmem:[%s322 + $0x220] sm:$0xff]
        %v994 = vld [vmem:[%s322 + $0x228] sm:$0xff]
        %v995 = vld [vmem:[%s322 + $0x230] sm:$0xff]
        %v996 = vld [vmem:[%s322 + $0x238] sm:$0xff]
        %v997 = vld [vmem:[%s322 + $0x240] sm:$0xff]
        %v998 = vld [vmem:[%s322 + $0x248] sm:$0xff]
        %v999 = vld [vmem:[%s322 + $0x250] sm:$0xff]
        %v1000 = vld [vmem:[%s322 + $0x258] sm:$0xff]
        %v1001 = vld [vmem:[%s322 + $0x260] sm:$0xff]
        %v1002 = vld [vmem:[%s322 + $0x268] sm:$0xff]
        %v1003 = vld [vmem:[%s322 + $0x270] sm:$0xff]
        %v1004 = vld [vmem:[%s322 + $0x278] sm:$0xff]
        %v1005 = vld [vmem:[%s322 + $0x280] sm:$0xff]
        %v1006 = vld [vmem:[%s322 + $0x288] sm:$0xff]
        %v1007 = vld [vmem:[%s322 + $0x290] sm:$0xff]
        %v1008 = vld [vmem:[%s322 + $0x298] sm:$0xff]
        %v1009 = vld [vmem:[%s322 + $0x2a0] sm:$0xff]
        %v1010 = vld [vmem:[%s322 + $0x2a8] sm:$0xff]
        %v1011 = vld [vmem:[%s322 + $0x2b0] sm:$0xff]
        %v1012 = vld [vmem:[%s322 + $0x2b8] sm:$0xff]
        %v1013 = vld [vmem:[%s322 + $0x2c0] sm:$0xff]
        %v1014 = vld [vmem:[%s322 + $0x2c8] sm:$0xff]
        %v1015 = vld [vmem:[%s322 + $0x2d0] sm:$0xff]
        %v1016 = vld [vmem:[%s322 + $0x2d8] sm:$0xff]
        %v1017 = vld [vmem:[%s322 + $0x2e0] sm:$0xff]
        %v1018 = vld [vmem:[%s322 + $0x2e8] sm:$0xff]
        %v1019 = vld [vmem:[%s322 + $0x2f0] sm:$0xff]
        %v1020 = vld [vmem:[%s322 + $0x2f8] sm:$0xff]
        %v1021 = vld [vmem:[%s322 + $0x300] sm:$0xff]
        %v1022 = vld [vmem:[%s322 + $0x308] sm:$0xff]
        %v1023 = vld [vmem:[%s322 + $0x310] sm:$0xff]
        %v1024 = vld [vmem:[%s322 + $0x318] sm:$0xff]
        %v1025 = vld [vmem:[%s322 + $0x320] sm:$0xff]
        %v1026 = vld [vmem:[%s322 + $0x328] sm:$0xff]
        %v1027 = vld [vmem:[%s322 + $0x330] sm:$0xff]
        %v1028 = vld [vmem:[%s322 + $0x338] sm:$0xff]
        %v1029 = vld [vmem:[%s322 + $0x340] sm:$0xff]
        %v1030 = vld [vmem:[%s322 + $0x348] sm:$0xff]
        %v1031 = vld [vmem:[%s322 + $0x350] sm:$0xff]
        %v1032 = vld [vmem:[%s322 + $0x358] sm:$0xff]
        %v1033 = vld [vmem:[%s322 + $0x360] sm:$0xff]
        %v1034 = vld [vmem:[%s322 + $0x368] sm:$0xff]
        %v1035 = vld [vmem:[%s322 + $0x370] sm:$0xff]
        %v1036 = vld [vmem:[%s322 + $0x378] sm:$0xff]
        %v1037 = vld [vmem:[%s322 + $0x380] sm:$0xff]
        %v1038 = vld [vmem:[%s322 + $0x388] sm:$0xff]
        %v1039 = vld [vmem:[%s322 + $0x390] sm:$0xff]
        %v1040 = vld [vmem:[%s322 + $0x398] sm:$0xff]
        %v1041 = vld [vmem:[%s322 + $0x3a0] sm:$0xff]
        %v1042 = vld [vmem:[%s322 + $0x3a8] sm:$0xff]
        %v1043 = vld [vmem:[%s322 + $0x3b0] sm:$0xff]
        %v1044 = vld [vmem:[%s322 + $0x3b8] sm:$0xff]
        %v1045 = vld [vmem:[%s322 + $0x3c0] sm:$0xff]
        %v1046 = vld [vmem:[%s322 + $0x3c8] sm:$0xff]
        %v1047 = vld [vmem:[%s322 + $0x3d0] sm:$0xff]
        %v1048 = vld [vmem:[%s322 + $0x3d8] sm:$0xff]
        %v1049 = vld [vmem:[%s322 + $0x3e0] sm:$0xff]
        %v1050 = vld [vmem:[%s322 + $0x3e8] sm:$0xff]
        %v1051 = vld [vmem:[%s322 + $0x3f0] sm:$0xff]
        %v1052 = vld [vmem:[%s322 + $0x3f8] sm:$0xff]
        %v1053 = vld [vmem:[%s322 + $0x400] sm:$0xff]
        %v1054 = vld [vmem:[%s322 + $0x408] sm:$0xff]
        %v1055 = vld [vmem:[%s322 + $0x410] sm:$0xff]
        %v1056 = vld [vmem:[%s322 + $0x418] sm:$0xff]
        %v1057 = vld [vmem:[%s322 + $0x420] sm:$0xff]
        %v1058 = vld [vmem:[%s322 + $0x428] sm:$0xff]
        %v1059 = vld [vmem:[%s322 + $0x430] sm:$0xff]
        %v1060 = vld [vmem:[%s322 + $0x438] sm:$0xff]
        %v1061 = vld [vmem:[%s322 + $0x440] sm:$0xff]
        %v1062 = vld [vmem:[%s322 + $0x448] sm:$0xff]
        %v1063 = vld [vmem:[%s322 + $0x450] sm:$0xff]
        %v1064 = vld [vmem:[%s322 + $0x458] sm:$0xff]
        %v1065 = vld [vmem:[%s322 + $0x460] sm:$0xff]
        %v1066 = vld [vmem:[%s322 + $0x468] sm:$0xff]
        %v1067 = vld [vmem:[%s322 + $0x470] sm:$0xff]
        %v1068 = vld [vmem:[%s322 + $0x478] sm:$0xff]
        %v1069 = vld [vmem:[%s322 + $0x480] sm:$0xff]
        %v1070 = vld [vmem:[%s322 + $0x488] sm:$0xff]
        %v1071 = vld [vmem:[%s322 + $0x490] sm:$0xff]
        %v1072 = vld [vmem:[%s322 + $0x498] sm:$0xff]
        %v1073 = vld [vmem:[%s322 + $0x4a0] sm:$0xff]
        %v1074 = vld [vmem:[%s322 + $0x4a8] sm:$0xff]
        %v1075 = vld [vmem:[%s322 + $0x4b0] sm:$0xff]
        %v1076 = vld [vmem:[%s322 + $0x4b8] sm:$0xff]
        %v1077 = vld [vmem:[%s322 + $0x4c0] sm:$0xff]
        %v1078 = vld [vmem:[%s322 + $0x4c8] sm:$0xff]
        %v1079 = vld [vmem:[%s322 + $0x4d0] sm:$0xff]
        %v1080 = vld [vmem:[%s322 + $0x4d8] sm:$0xff]
        %v1081 = vld [vmem:[%s322 + $0x4e0] sm:$0xff]
        %v1082 = vld [vmem:[%s322 + $0x4e8] sm:$0xff]
        %v1083 = vld [vmem:[%s322 + $0x4f0] sm:$0xff]
        %v1084 = vld [vmem:[%s322 + $0x4f8] sm:$0xff]
        %v1085 = vld [vmem:[%s322 + $0x500] sm:$0xff]
        %v1086 = vld [vmem:[%s322 + $0x508] sm:$0xff]
        %v1087 = vld [vmem:[%s322 + $0x510] sm:$0xff]
        %v1088 = vld [vmem:[%s322 + $0x518] sm:$0xff]
        %v1089 = vld [vmem:[%s322 + $0x520] sm:$0xff]
        %v1090 = vld [vmem:[%s322 + $0x528] sm:$0xff]
        %v1091 = vld [vmem:[%s322 + $0x530] sm:$0xff]
        %v1092 = vld [vmem:[%s322 + $0x538] sm:$0xff]
        %v1093 = vld [vmem:[%s322 + $0x540] sm:$0xff]
        %v1094 = vld [vmem:[%s322 + $0x548] sm:$0xff]
        %v1095 = vld [vmem:[%s322 + $0x550] sm:$0xff]
        %v1096 = vld [vmem:[%s322 + $0x558] sm:$0xff]
        %v1097 = vld [vmem:[%s322 + $0x560] sm:$0xff]
        %v1098 = vld [vmem:[%s322 + $0x568] sm:$0xff]
        %v1099 = vld [vmem:[%s322 + $0x570] sm:$0xff]
        %v1100 = vld [vmem:[%s322 + $0x578] sm:$0xff]
        %v1101 = vld [vmem:[%s322 + $0x580] sm:$0xff]
        %v1102 = vld [vmem:[%s322 + $0x588] sm:$0xff]
        %v1103 = vld [vmem:[%s322 + $0x590] sm:$0xff]
        %v1104 = vld [vmem:[%s322 + $0x598] sm:$0xff]
        %v1105 = vld [vmem:[%s322 + $0x5a0] sm:$0xff]
        %v1106 = vld [vmem:[%s322 + $0x5a8] sm:$0xff]
        %v1107 = vld [vmem:[%s322 + $0x5b0] sm:$0xff]
        %v1108 = vld [vmem:[%s322 + $0x5b8] sm:$0xff]
        %v1109 = vld [vmem:[%s322 + $0x5c0] sm:$0xff]
        %v1110 = vld [vmem:[%s322 + $0x5c8] sm:$0xff]
        %v1111 = vld [vmem:[%s322 + $0x5d0] sm:$0xff]
        %v1112 = vld [vmem:[%s322 + $0x5d8] sm:$0xff]
        %v1113 = vld [vmem:[%s322 + $0x5e0] sm:$0xff]
        %v1114 = vld [vmem:[%s322 + $0x5e8] sm:$0xff]
        %v1115 = vld [vmem:[%s322 + $0x5f0] sm:$0xff]
        %v1116 = vld [vmem:[%s322 + $0x5f8] sm:$0xff]
        %v1117 = vld [vmem:[%s322 + $0x600] sm:$0xff]
        %v1118 = vld [vmem:[%s322 + $0x608] sm:$0xff]
        %v1119 = vld [vmem:[%s322 + $0x610] sm:$0xff]
        %v1120 = vld [vmem:[%s322 + $0x618] sm:$0xff]
        %v1121 = vld [vmem:[%s322 + $0x620] sm:$0xff]
        %v1122 = vld [vmem:[%s322 + $0x628] sm:$0xff]
        %v1123 = vld [vmem:[%s322 + $0x630] sm:$0xff]
        %v1124 = vld [vmem:[%s322 + $0x638] sm:$0xff]
        %v1125 = vld [vmem:[%s322 + $0x640] sm:$0xff]
        %v1126 = vld [vmem:[%s322 + $0x648] sm:$0xff]
        %v1127 = vld [vmem:[%s322 + $0x650] sm:$0xff]
        %v1128 = vld [vmem:[%s322 + $0x658] sm:$0xff]
        %v1129 = vld [vmem:[%s322 + $0x660] sm:$0xff]
        %v1130 = vld [vmem:[%s322 + $0x668] sm:$0xff]
        %v1131 = vld [vmem:[%s322 + $0x670] sm:$0xff]
        %v1132 = vld [vmem:[%s322 + $0x678] sm:$0xff]
        %v1133 = vld [vmem:[%s322 + $0x680] sm:$0xff]
        %v1134 = vld [vmem:[%s322 + $0x688] sm:$0xff]
        %v1135 = vld [vmem:[%s322 + $0x690] sm:$0xff]
        %v1136 = vld [vmem:[%s322 + $0x698] sm:$0xff]
        %v1137 = vld [vmem:[%s322 + $0x6a0] sm:$0xff]
        %v1138 = vld [vmem:[%s322 + $0x6a8] sm:$0xff]
        %v1139 = vld [vmem:[%s322 + $0x6b0] sm:$0xff]
        %v1140 = vld [vmem:[%s322 + $0x6b8] sm:$0xff]
        %v1141 = vld [vmem:[%s322 + $0x6c0] sm:$0xff]
        %v1142 = vld [vmem:[%s322 + $0x6c8] sm:$0xff]
        %v1143 = vld [vmem:[%s322 + $0x6d0] sm:$0xff]
        %v1144 = vld [vmem:[%s322 + $0x6d8] sm:$0xff]
        %v1145 = vld [vmem:[%s322 + $0x6e0] sm:$0xff]
        %v1146 = vld [vmem:[%s322 + $0x6e8] sm:$0xff]
        %v1147 = vld [vmem:[%s322 + $0x6f0] sm:$0xff]
        %v1148 = vld [vmem:[%s322 + $0x6f8] sm:$0xff]
        %v1149 = vld [vmem:[%s322 + $0x700] sm:$0xff]
        %v1150 = vld [vmem:[%s322 + $0x708] sm:$0xff]
        %v1151 = vld [vmem:[%s322 + $0x710] sm:$0xff]
        %v1152 = vld [vmem:[%s322 + $0x718] sm:$0xff]
        %v1153 = vld [vmem:[%s322 + $0x720] sm:$0xff]
        %v1154 = vld [vmem:[%s322 + $0x728] sm:$0xff]
        %v1155 = vld [vmem:[%s322 + $0x730] sm:$0xff]
        %v1156 = vld [vmem:[%s322 + $0x738] sm:$0xff]
        %v1157 = vld [vmem:[%s322 + $0x740] sm:$0xff]
        %v1158 = vld [vmem:[%s322 + $0x748] sm:$0xff]
        %v1159 = vld [vmem:[%s322 + $0x750] sm:$0xff]
        %v1160 = vld [vmem:[%s322 + $0x758] sm:$0xff]
        %v1161 = vld [vmem:[%s322 + $0x760] sm:$0xff]
        %v1162 = vld [vmem:[%s322 + $0x768] sm:$0xff]
        %v1163 = vld [vmem:[%s322 + $0x770] sm:$0xff]
        %v1164 = vld [vmem:[%s322 + $0x778] sm:$0xff]
        %v1165 = vld [vmem:[%s322 + $0x780] sm:$0xff]
        %v1166 = vld [vmem:[%s322 + $0x788] sm:$0xff]
        %v1167 = vld [vmem:[%s322 + $0x790] sm:$0xff]
        %v1168 = vld [vmem:[%s322 + $0x798] sm:$0xff]
        %v1169 = vld [vmem:[%s322 + $0x7a0] sm:$0xff]
        %v1170 = vld [vmem:[%s322 + $0x7a8] sm:$0xff]
        %v1171 = vld [vmem:[%s322 + $0x7b0] sm:$0xff]
        %v1172 = vld [vmem:[%s322 + $0x7b8] sm:$0xff]
        %v1173 = vld [vmem:[%s322 + $0x7c0] sm:$0xff]
        %v1174 = vld [vmem:[%s322 + $0x7c8] sm:$0xff]
        %v1175 = vld [vmem:[%s322 + $0x7d0] sm:$0xff]
        %v1176 = vld [vmem:[%s322 + $0x7d8] sm:$0xff]
        %v1177 = vld [vmem:[%s322 + $0x7e0] sm:$0xff]
        %v1178 = vld [vmem:[%s322 + $0x7e8] sm:$0xff]
        %v1179 = vld [vmem:[%s322 + $0x7f0] sm:$0xff]
        %v1180 = vld [vmem:[%s322 + $0x7f8] sm:$0xff]
        %v1181 = vld [vmem:[%s322 + $0x800] sm:$0xff]
        %v1182 = vld [vmem:[%s322 + $0x808] sm:$0xff]
        %v1183 = vld [vmem:[%s322 + $0x810] sm:$0xff]
        %v1184 = vld [vmem:[%s322 + $0x818] sm:$0xff]
        %v1185 = vld [vmem:[%s322 + $0x820] sm:$0xff]
        %v1186 = vld [vmem:[%s322 + $0x828] sm:$0xff]
        %v1187 = vld [vmem:[%s322 + $0x830] sm:$0xff]
        %v1188 = vld [vmem:[%s322 + $0x838] sm:$0xff]
        %v1189 = vld [vmem:[%s322 + $0x840] sm:$0xff]
        %v1190 = vld [vmem:[%s322 + $0x848] sm:$0xff]
        %v1191 = vld [vmem:[%s322 + $0x850] sm:$0xff]
        %v1192 = vld [vmem:[%s322 + $0x858] sm:$0xff]
        %v1193 = vld [vmem:[%s322 + $0x860] sm:$0xff]
        %v1194 = vld [vmem:[%s322 + $0x868] sm:$0xff]
        %v1195 = vld [vmem:[%s322 + $0x870] sm:$0xff]
        %v1196 = vld [vmem:[%s322 + $0x878] sm:$0xff]
        %v1197 = vld [vmem:[%s322 + $0x880] sm:$0xff]
        %v1198 = vld [vmem:[%s322 + $0x888] sm:$0xff]
        %v1199 = vld [vmem:[%s322 + $0x890] sm:$0xff]
        %v1200 = vld [vmem:[%s322 + $0x898] sm:$0xff]
        %v1201 = vld [vmem:[%s322 + $0x8a0] sm:$0xff]
        %v1202 = vld [vmem:[%s322 + $0x8a8] sm:$0xff]
        %v1203 = vld [vmem:[%s322 + $0x8b0] sm:$0xff]
        %v1204 = vld [vmem:[%s322 + $0x8b8] sm:$0xff]
        %v1205 = vld [vmem:[%s322 + $0x8c0] sm:$0xff]
        %v1206 = vld [vmem:[%s322 + $0x8c8] sm:$0xff]
        %v1207 = vld [vmem:[%s322 + $0x8d0] sm:$0xff]
        %v1208 = vld [vmem:[%s322 + $0x8d8] sm:$0xff]
        %v1209 = vld [vmem:[%s322 + $0x8e0] sm:$0xff]
        %v1210 = vld [vmem:[%s322 + $0x8e8] sm:$0xff]
        %v1211 = vld [vmem:[%s322 + $0x8f0] sm:$0xff]
        %v1212 = vld [vmem:[%s322 + $0x8f8] sm:$0xff]
        %v1213 = vld [vmem:[%s322 + $0x900] sm:$0xff]
        %v1214 = vld [vmem:[%s322 + $0x908] sm:$0xff]
        %v1215 = vld [vmem:[%s322 + $0x910] sm:$0xff]
        %v1216 = vld [vmem:[%s322 + $0x918] sm:$0xff]
        %v1217 = vld [vmem:[%s322 + $0x920] sm:$0xff]
        %v1218 = vld [vmem:[%s322 + $0x928] sm:$0xff]
        %v1219 = vld [vmem:[%s322 + $0x930] sm:$0xff]
        %v1220 = vld [vmem:[%s322 + $0x938] sm:$0xff]
        %v1221 = vld [vmem:[%s322 + $0x940] sm:$0xff]
        %v1222 = vld [vmem:[%s322 + $0x948] sm:$0xff]
        %v1223 = vld [vmem:[%s322 + $0x950] sm:$0xff]
        %v1224 = vld [vmem:[%s322 + $0x958] sm:$0xff]
        %v1225 = vld [vmem:[%s322 + $0x960] sm:$0xff]
        %v1226 = vld [vmem:[%s322 + $0x968] sm:$0xff]
        %v1227 = vld [vmem:[%s322 + $0x970] sm:$0xff]
        %v1228 = vld [vmem:[%s322 + $0x978] sm:$0xff]
        %v1229 = vld [vmem:[%s322 + $0x980] sm:$0xff]
        %v1230 = vld [vmem:[%s322 + $0x988] sm:$0xff]
        %v1231 = vld [vmem:[%s322 + $0x990] sm:$0xff]
        %v1232 = vld [vmem:[%s322 + $0x998] sm:$0xff]
        %v1233 = vld [vmem:[%s322 + $0x9a0] sm:$0xff]
        %v1234 = vld [vmem:[%s322 + $0x9a8] sm:$0xff]
        %v1235 = vld [vmem:[%s322 + $0x9b0] sm:$0xff]
        %v1236 = vld [vmem:[%s322 + $0x9b8] sm:$0xff]
        %v1237 = vld [vmem:[%s322 + $0x9c0] sm:$0xff]
        %v1238 = vld [vmem:[%s322 + $0x9c8] sm:$0xff]
        %v1239 = vld [vmem:[%s322 + $0x9d0] sm:$0xff]
        %v1240 = vld [vmem:[%s322 + $0x9d8] sm:$0xff]
        %v1241 = vld [vmem:[%s322 + $0x9e0] sm:$0xff]
        %v1242 = vld [vmem:[%s322 + $0x9e8] sm:$0xff]
        %v1243 = vld [vmem:[%s322 + $0x9f0] sm:$0xff]
        %v1244 = vld [vmem:[%s322 + $0x9f8] sm:$0xff]
        %v1245 = vld [vmem:[%s322 + $0xa00] sm:$0xff]
        %v1246 = vld [vmem:[%s322 + $0xa08] sm:$0xff]
        %v1247 = vld [vmem:[%s322 + $0xa10] sm:$0xff]
        %v1248 = vld [vmem:[%s322 + $0xa18] sm:$0xff]
        %v1249 = vld [vmem:[%s322 + $0xa20] sm:$0xff]
        %v1250 = vld [vmem:[%s322 + $0xa28] sm:$0xff]
        %v1251 = vld [vmem:[%s322 + $0xa30] sm:$0xff]
        %v1252 = vld [vmem:[%s322 + $0xa38] sm:$0xff]
        %v1253 = vld [vmem:[%s322 + $0xa40] sm:$0xff]
        %v1254 = vld [vmem:[%s322 + $0xa48] sm:$0xff]
        %v1255 = vld [vmem:[%s322 + $0xa50] sm:$0xff]
        %v1256 = vld [vmem:[%s322 + $0xa58] sm:$0xff]
        %v1257 = vld [vmem:[%s322 + $0xa60] sm:$0xff]
        %v1258 = vld [vmem:[%s322 + $0xa68] sm:$0xff]
        %v1259 = vld [vmem:[%s322 + $0xa70] sm:$0xff]
        %v1260 = vld [vmem:[%s322 + $0xa78] sm:$0xff]
        %v1261 = vld [vmem:[%s322 + $0xa80] sm:$0xff]
        %v1262 = vld [vmem:[%s322 + $0xa88] sm:$0xff]
        %v1263 = vld [vmem:[%s322 + $0xa90] sm:$0xff]
        %v1264 = vld [vmem:[%s322 + $0xa98] sm:$0xff]
        %v1265 = vld [vmem:[%s322 + $0xaa0] sm:$0xff]
        %v1266 = vld [vmem:[%s322 + $0xaa8] sm:$0xff]
        %v1267 = vld [vmem:[%s322 + $0xab0] sm:$0xff]
        %v1268 = vld [vmem:[%s322 + $0xab8] sm:$0xff]
        %v1269 = vld [vmem:[%s322 + $0xac0] sm:$0xff]
        %v1270 = vld [vmem:[%s322 + $0xac8] sm:$0xff]
        %v1271 = vld [vmem:[%s322 + $0xad0] sm:$0xff]
        %v1272 = vld [vmem:[%s322 + $0xad8] sm:$0xff]
        %v1273 = vld [vmem:[%s322 + $0xae0] sm:$0xff]
        %v1274 = vld [vmem:[%s322 + $0xae8] sm:$0xff]
        %v1275 = vld [vmem:[%s322 + $0xaf0] sm:$0xff]
        %v1276 = vld [vmem:[%s322 + $0xaf8] sm:$0xff]
        %v1277 = vld [vmem:[%s322 + $0xb00] sm:$0xff]
        %v1278 = vld [vmem:[%s322 + $0xb08] sm:$0xff]
        %v1279 = vld [vmem:[%s322 + $0xb10] sm:$0xff]
        %v1280 = vld [vmem:[%s322 + $0xb18] sm:$0xff]
        %v1281 = vld [vmem:[%s322 + $0xb20] sm:$0xff]
        %v1282 = vld [vmem:[%s322 + $0xb28] sm:$0xff]
        %v1283 = vld [vmem:[%s322 + $0xb30] sm:$0xff]
        %v1284 = vld [vmem:[%s322 + $0xb38] sm:$0xff]
        %v1285 = vld [vmem:[%s322 + $0xb40] sm:$0xff]
        %v1286 = vld [vmem:[%s322 + $0xb48] sm:$0xff]
        %v1287 = vld [vmem:[%s322 + $0xb50] sm:$0xff]
        %v1288 = vld [vmem:[%s322 + $0xb58] sm:$0xff]
        %v1289 = vld [vmem:[%s322 + $0xb60] sm:$0xff]
        %v1290 = vld [vmem:[%s322 + $0xb68] sm:$0xff]
        %v1291 = vld [vmem:[%s322 + $0xb70] sm:$0xff]
        %v1292 = vld [vmem:[%s322 + $0xb78] sm:$0xff]
        %v1293 = vld [vmem:[%s322 + $0xb80] sm:$0xff]
        %v1294 = vld [vmem:[%s322 + $0xb88] sm:$0xff]
        %v1295 = vld [vmem:[%s322 + $0xb90] sm:$0xff]
        %v1296 = vld [vmem:[%s322 + $0xb98] sm:$0xff]
        %v1297 = vld [vmem:[%s322 + $0xba0] sm:$0xff]
        %v1298 = vld [vmem:[%s322 + $0xba8] sm:$0xff]
        %v1299 = vld [vmem:[%s322 + $0xbb0] sm:$0xff]
        %v1300 = vld [vmem:[%s322 + $0xbb8] sm:$0xff]
        %v1301 = vld [vmem:[%s322 + $0xbc0] sm:$0xff]
        %v1302 = vld [vmem:[%s322 + $0xbc8] sm:$0xff]
        %v1303 = vld [vmem:[%s322 + $0xbd0] sm:$0xff]
        %v1304 = vld [vmem:[%s322 + $0xbd8] sm:$0xff]
        %v1305 = vld [vmem:[%s322 + $0xbe0] sm:$0xff]
        %v1306 = vld [vmem:[%s322 + $0xbe8] sm:$0xff]
        %v1307 = vld [vmem:[%s322 + $0xbf0] sm:$0xff]
        %v1308 = vld [vmem:[%s322 + $0xbf8] sm:$0xff]
        %v1309 = vld [vmem:[%s322 + $0xc00] sm:$0xff]
        %v1310 = vld [vmem:[%s322 + $0xc08] sm:$0xff]
        %v1311 = vld [vmem:[%s322 + $0xc10] sm:$0xff]
        %v1312 = vld [vmem:[%s322 + $0xc18] sm:$0xff]
        %v1313 = vld [vmem:[%s322 + $0xc20] sm:$0xff]
        %v1314 = vld [vmem:[%s322 + $0xc28] sm:$0xff]
        %v1315 = vld [vmem:[%s322 + $0xc30] sm:$0xff]
        %v1316 = vld [vmem:[%s322 + $0xc38] sm:$0xff]
        %v1317 = vld [vmem:[%s322 + $0xc40] sm:$0xff]
        %v1318 = vld [vmem:[%s322 + $0xc48] sm:$0xff]
        %v1319 = vld [vmem:[%s322 + $0xc50] sm:$0xff]
        %v1320 = vld [vmem:[%s322 + $0xc58] sm:$0xff]
        %v1321 = vld [vmem:[%s322 + $0xc60] sm:$0xff]
        %v1322 = vld [vmem:[%s322 + $0xc68] sm:$0xff]
        %v1323 = vld [vmem:[%s322 + $0xc70] sm:$0xff]
        %v1324 = vld [vmem:[%s322 + $0xc78] sm:$0xff]
        %v1325 = vld [vmem:[%s322 + $0xc80] sm:$0xff]
        %v1326 = vld [vmem:[%s322 + $0xc88] sm:$0xff]
        %v1327 = vld [vmem:[%s322 + $0xc90] sm:$0xff]
        %v1328 = vld [vmem:[%s322 + $0xc98] sm:$0xff]
        %v1329 = vld [vmem:[%s322 + $0xca0] sm:$0xff]
        %v1330 = vld [vmem:[%s322 + $0xca8] sm:$0xff]
        %v1331 = vld [vmem:[%s322 + $0xcb0] sm:$0xff]
        %v1332 = vld [vmem:[%s322 + $0xcb8] sm:$0xff]
        %v1333 = vld [vmem:[%s322 + $0xcc0] sm:$0xff]
        %v1334 = vld [vmem:[%s322 + $0xcc8] sm:$0xff]
        %v1335 = vld [vmem:[%s322 + $0xcd0] sm:$0xff]
        %v1336 = vld [vmem:[%s322 + $0xcd8] sm:$0xff]
        %v1337 = vld [vmem:[%s322 + $0xce0] sm:$0xff]
        %v1338 = vld [vmem:[%s322 + $0xce8] sm:$0xff]
        %v1339 = vld [vmem:[%s322 + $0xcf0] sm:$0xff]
        %v1340 = vld [vmem:[%s322 + $0xcf8] sm:$0xff]
        %v1341 = vld [vmem:[%s322 + $0xd00] sm:$0xff]
        %v1342 = vld [vmem:[%s322 + $0xd08] sm:$0xff]
        %v1343 = vld [vmem:[%s322 + $0xd10] sm:$0xff]
        %v1344 = vld [vmem:[%s322 + $0xd18] sm:$0xff]
        %v1345 = vld [vmem:[%s322 + $0xd20] sm:$0xff]
        %v1346 = vld [vmem:[%s322 + $0xd28] sm:$0xff]
        %v1347 = vld [vmem:[%s322 + $0xd30] sm:$0xff]
        %v1348 = vld [vmem:[%s322 + $0xd38] sm:$0xff]
        %v1349 = vld [vmem:[%s322 + $0xd40] sm:$0xff]
        %v1350 = vld [vmem:[%s322 + $0xd48] sm:$0xff]
        %v1351 = vld [vmem:[%s322 + $0xd50] sm:$0xff]
        %v1352 = vld [vmem:[%s322 + $0xd58] sm:$0xff]
        %v1353 = vld [vmem:[%s322 + $0xd60] sm:$0xff]
        %v1354 = vld [vmem:[%s322 + $0xd68] sm:$0xff]
        %v1355 = vld [vmem:[%s322 + $0xd70] sm:$0xff]
        %v1356 = vld [vmem:[%s322 + $0xd78] sm:$0xff]
        %v1357 = vld [vmem:[%s322 + $0xd80] sm:$0xff]
        %v1358 = vld [vmem:[%s322 + $0xd88] sm:$0xff]
        %v1359 = vld [vmem:[%s322 + $0xd90] sm:$0xff]
        %v1360 = vld [vmem:[%s322 + $0xd98] sm:$0xff]
        %v1361 = vld [vmem:[%s322 + $0xda0] sm:$0xff]
        %v1362 = vld [vmem:[%s322 + $0xda8] sm:$0xff]
        %v1363 = vld [vmem:[%s322 + $0xdb0] sm:$0xff]
        %v1364 = vld [vmem:[%s322 + $0xdb8] sm:$0xff]
        %v1365 = vld [vmem:[%s322 + $0xdc0] sm:$0xff]
        %v1366 = vld [vmem:[%s322 + $0xdc8] sm:$0xff]
        %v1367 = vld [vmem:[%s322 + $0xdd0] sm:$0xff]
        %v1368 = vld [vmem:[%s322 + $0xdd8] sm:$0xff]
        %v1369 = vld [vmem:[%s322 + $0xde0] sm:$0xff]
        %v1370 = vld [vmem:[%s322 + $0xde8] sm:$0xff]
        %v1371 = vld [vmem:[%s322 + $0xdf0] sm:$0xff]
        %v1372 = vld [vmem:[%s322 + $0xdf8] sm:$0xff]
        %v1373 = vld [vmem:[%s322 + $0xe00] sm:$0xff]
        %v1374 = vld [vmem:[%s322 + $0xe08] sm:$0xff]
        %v1375 = vld [vmem:[%s322 + $0xe10] sm:$0xff]
        %v1376 = vld [vmem:[%s322 + $0xe18] sm:$0xff]
        %v1377 = vld [vmem:[%s322 + $0xe20] sm:$0xff]
        %v1378 = vld [vmem:[%s322 + $0xe28] sm:$0xff]
        %v1379 = vld [vmem:[%s322 + $0xe30] sm:$0xff]
        %v1380 = vld [vmem:[%s322 + $0xe38] sm:$0xff]
        %v1381 = vld [vmem:[%s322 + $0xe40] sm:$0xff]
        %v1382 = vld [vmem:[%s322 + $0xe48] sm:$0xff]
        %v1383 = vld [vmem:[%s322 + $0xe50] sm:$0xff]
        %v1384 = vld [vmem:[%s322 + $0xe58] sm:$0xff]
        %v1385 = vld [vmem:[%s322 + $0xe60] sm:$0xff]
        %v1386 = vld [vmem:[%s322 + $0xe68] sm:$0xff]
        %v1387 = vld [vmem:[%s322 + $0xe70] sm:$0xff]
        %v1388 = vld [vmem:[%s322 + $0xe78] sm:$0xff]
        %v1389 = vld [vmem:[%s322 + $0xe80] sm:$0xff]
        %v1390 = vld [vmem:[%s322 + $0xe88] sm:$0xff]
        %v1391 = vld [vmem:[%s322 + $0xe90] sm:$0xff]
        %v1392 = vld [vmem:[%s322 + $0xe98] sm:$0xff]
        %v1393 = vld [vmem:[%s322 + $0xea0] sm:$0xff]
        %v1394 = vld [vmem:[%s322 + $0xea8] sm:$0xff]
        %v1395 = vld [vmem:[%s322 + $0xeb0] sm:$0xff]
        %v1396 = vld [vmem:[%s322 + $0xeb8] sm:$0xff]
        %v1397 = vld [vmem:[%s322 + $0xec0] sm:$0xff]
        %v1398 = vld [vmem:[%s322 + $0xec8] sm:$0xff]
        %v1399 = vld [vmem:[%s322 + $0xed0] sm:$0xff]
        %v1400 = vld [vmem:[%s322 + $0xed8] sm:$0xff]
        %v1401 = vld [vmem:[%s322 + $0xee0] sm:$0xff]
        %v1402 = vld [vmem:[%s322 + $0xee8] sm:$0xff]
        %v1403 = vld [vmem:[%s322 + $0xef0] sm:$0xff]
        %v1404 = vld [vmem:[%s322 + $0xef8] sm:$0xff]
        %v1405 = vld [vmem:[%s322 + $0xf00] sm:$0xff]
        %v1406 = vld [vmem:[%s322 + $0xf08] sm:$0xff]
        %v1407 = vld [vmem:[%s322 + $0xf10] sm:$0xff]
        %v1408 = vld [vmem:[%s322 + $0xf18] sm:$0xff]
        %v1409 = vld [vmem:[%s322 + $0xf20] sm:$0xff]
        %v1410 = vld [vmem:[%s322 + $0xf28] sm:$0xff]
        %v1411 = vld [vmem:[%s322 + $0xf30] sm:$0xff]
        %v1412 = vld [vmem:[%s322 + $0xf38] sm:$0xff]
        %v1413 = vld [vmem:[%s322 + $0xf40] sm:$0xff]
        %v1414 = vld [vmem:[%s322 + $0xf48] sm:$0xff]
        %v1415 = vld [vmem:[%s322 + $0xf50] sm:$0xff]
        %v1416 = vld [vmem:[%s322 + $0xf58] sm:$0xff]
        %v1417 = vld [vmem:[%s322 + $0xf60] sm:$0xff]
        %v1418 = vld [vmem:[%s322 + $0xf68] sm:$0xff]
        %v1419 = vld [vmem:[%s322 + $0xf70] sm:$0xff]
        %v1420 = vld [vmem:[%s322 + $0xf78] sm:$0xff]
        %v1421 = vld [vmem:[%s322 + $0xf80] sm:$0xff]
        %v1422 = vld [vmem:[%s322 + $0xf88] sm:$0xff]
        %v1423 = vld [vmem:[%s322 + $0xf90] sm:$0xff]
        %v1424 = vld [vmem:[%s322 + $0xf98] sm:$0xff]
        %v1425 = vld [vmem:[%s322 + $0xfa0] sm:$0xff]
        %v1426 = vld [vmem:[%s322 + $0xfa8] sm:$0xff]
        %v1427 = vld [vmem:[%s322 + $0xfb0] sm:$0xff]
        %v1428 = vld [vmem:[%s322 + $0xfb8] sm:$0xff]
        %v1429 = vld [vmem:[%s322 + $0xfc0] sm:$0xff]
        %v1430 = vld [vmem:[%s322 + $0xfc8] sm:$0xff]
        %v1431 = vld [vmem:[%s322 + $0xfd0] sm:$0xff]
        %v1432 = vld [vmem:[%s322 + $0xfd8] sm:$0xff]
        %v1433 = vld [vmem:[%s322 + $0xfe0] sm:$0xff]
        %v1434 = vld [vmem:[%s322 + $0xfe8] sm:$0xff]
        %v1435 = vld [vmem:[%s322 + $0xff0] sm:$0xff]
        %v1436 = vld [vmem:[%s322 + $0xff8] sm:$0xff]
        %v1437 = vunpack.c.l.s8.bf16 %v925
        %v1438 = vunpack.c.l.s8.bf16 %v926
        %v1439 = vunpack.c.l.s8.bf16 %v927
        %v1440 = vunpack.c.l.s8.bf16 %v928
        %v1441 = vunpack.c.l.s8.bf16 %v929
        %v1442 = vunpack.c.l.s8.bf16 %v930
        %v1443 = vunpack.c.l.s8.bf16 %v931
        %v1444 = vunpack.c.l.s8.bf16 %v932
        %v1445 = vunpack.c.h.s8.bf16 %v925
        %v1446 = vunpack.c.h.s8.bf16 %v926
        %v1447 = vunpack.c.h.s8.bf16 %v927
        %v1448 = vunpack.c.h.s8.bf16 %v928
        %v1449 = vunpack.c.h.s8.bf16 %v929
        %v1450 = vunpack.c.h.s8.bf16 %v930
        %v1451 = vunpack.c.h.s8.bf16 %v931
        %v1452 = vunpack.c.h.s8.bf16 %v932
        %v1453 = vunpack.c.l.s8.bf16 %v933
        %v1454 = vunpack.c.l.s8.bf16 %v934
        %v1455 = vunpack.c.l.s8.bf16 %v935
        %v1456 = vunpack.c.l.s8.bf16 %v936
        %v1457 = vunpack.c.l.s8.bf16 %v937
        %v1458 = vunpack.c.l.s8.bf16 %v938
        %v1459 = vunpack.c.l.s8.bf16 %v939
        %v1460 = vunpack.c.l.s8.bf16 %v940
        %v1461 = vunpack.c.h.s8.bf16 %v933
        %v1462 = vunpack.c.h.s8.bf16 %v934
        %v1463 = vunpack.c.h.s8.bf16 %v935
        %v1464 = vunpack.c.h.s8.bf16 %v936
        %v1465 = vunpack.c.h.s8.bf16 %v937
        %v1466 = vunpack.c.h.s8.bf16 %v938
        %v1467 = vunpack.c.h.s8.bf16 %v939
        %v1468 = vunpack.c.h.s8.bf16 %v940
        %v1469 = vunpack.c.l.s8.bf16 %v941
        %v1470 = vunpack.c.l.s8.bf16 %v942
        %v1471 = vunpack.c.l.s8.bf16 %v943
        %v1472 = vunpack.c.l.s8.bf16 %v944
        %v1473 = vunpack.c.l.s8.bf16 %v945
        %v1474 = vunpack.c.l.s8.bf16 %v946
        %v1475 = vunpack.c.l.s8.bf16 %v947
        %v1476 = vunpack.c.l.s8.bf16 %v948
        %v1477 = vunpack.c.h.s8.bf16 %v941
        %v1478 = vunpack.c.h.s8.bf16 %v942
        %v1479 = vunpack.c.h.s8.bf16 %v943
        %v1480 = vunpack.c.h.s8.bf16 %v944
        %v1481 = vunpack.c.h.s8.bf16 %v945
        %v1482 = vunpack.c.h.s8.bf16 %v946
        %v1483 = vunpack.c.h.s8.bf16 %v947
        %v1484 = vunpack.c.h.s8.bf16 %v948
        %v1485 = vunpack.c.l.s8.bf16 %v949
        %v1486 = vunpack.c.l.s8.bf16 %v950
        %v1487 = vunpack.c.l.s8.bf16 %v951
        %v1488 = vunpack.c.l.s8.bf16 %v952
        %v1489 = vunpack.c.l.s8.bf16 %v953
        %v1490 = vunpack.c.l.s8.bf16 %v954
        %v1491 = vunpack.c.l.s8.bf16 %v955
        %v1492 = vunpack.c.l.s8.bf16 %v956
        %v1493 = vunpack.c.h.s8.bf16 %v949
        %v1494 = vunpack.c.h.s8.bf16 %v950
        %v1495 = vunpack.c.h.s8.bf16 %v951
        %v1496 = vunpack.c.h.s8.bf16 %v952
        %v1497 = vunpack.c.h.s8.bf16 %v953
        %v1498 = vunpack.c.h.s8.bf16 %v954
        %v1499 = vunpack.c.h.s8.bf16 %v955
        %v1500 = vunpack.c.h.s8.bf16 %v956
        %v1501 = vunpack.c.l.s8.bf16 %v957
        %v1502 = vunpack.c.l.s8.bf16 %v958
        %v1503 = vunpack.c.l.s8.bf16 %v959
        %v1504 = vunpack.c.l.s8.bf16 %v960
        %v1505 = vunpack.c.l.s8.bf16 %v961
        %v1506 = vunpack.c.l.s8.bf16 %v962
        %v1507 = vunpack.c.l.s8.bf16 %v963
        %v1508 = vunpack.c.l.s8.bf16 %v964
        %v1509 = vunpack.c.h.s8.bf16 %v957
        %v1510 = vunpack.c.h.s8.bf16 %v958
        %v1511 = vunpack.c.h.s8.bf16 %v959
        %v1512 = vunpack.c.h.s8.bf16 %v960
        %v1513 = vunpack.c.h.s8.bf16 %v961
        %v1514 = vunpack.c.h.s8.bf16 %v962
        %v1515 = vunpack.c.h.s8.bf16 %v963
        %v1516 = vunpack.c.h.s8.bf16 %v964
        %v1517 = vunpack.c.l.s8.bf16 %v965
        %v1518 = vunpack.c.l.s8.bf16 %v966
        %v1519 = vunpack.c.l.s8.bf16 %v967
        %v1520 = vunpack.c.l.s8.bf16 %v968
        %v1521 = vunpack.c.l.s8.bf16 %v969
        %v1522 = vunpack.c.l.s8.bf16 %v970
        %v1523 = vunpack.c.l.s8.bf16 %v971
        %v1524 = vunpack.c.l.s8.bf16 %v972
        %v1525 = vunpack.c.h.s8.bf16 %v965
        %v1526 = vunpack.c.h.s8.bf16 %v966
        %v1527 = vunpack.c.h.s8.bf16 %v967
        %v1528 = vunpack.c.h.s8.bf16 %v968
        %v1529 = vunpack.c.h.s8.bf16 %v969
        %v1530 = vunpack.c.h.s8.bf16 %v970
        %v1531 = vunpack.c.h.s8.bf16 %v971
        %v1532 = vunpack.c.h.s8.bf16 %v972
        %v1533 = vunpack.c.l.s8.bf16 %v973
        %v1534 = vunpack.c.l.s8.bf16 %v974
        %v1535 = vunpack.c.l.s8.bf16 %v975
        %v1536 = vunpack.c.l.s8.bf16 %v976
        %v1537 = vunpack.c.l.s8.bf16 %v977
        %v1538 = vunpack.c.l.s8.bf16 %v978
        %v1539 = vunpack.c.l.s8.bf16 %v979
        %v1540 = vunpack.c.l.s8.bf16 %v980
        %v1541 = vunpack.c.h.s8.bf16 %v973
        %v1542 = vunpack.c.h.s8.bf16 %v974
        %v1543 = vunpack.c.h.s8.bf16 %v975
        %v1544 = vunpack.c.h.s8.bf16 %v976
        %v1545 = vunpack.c.h.s8.bf16 %v977
        %v1546 = vunpack.c.h.s8.bf16 %v978
        %v1547 = vunpack.c.h.s8.bf16 %v979
        %v1548 = vunpack.c.h.s8.bf16 %v980
        %v1549 = vunpack.c.l.s8.bf16 %v981
        %v1550 = vunpack.c.l.s8.bf16 %v982
        %v1551 = vunpack.c.l.s8.bf16 %v983
        %v1552 = vunpack.c.l.s8.bf16 %v984
        %v1553 = vunpack.c.l.s8.bf16 %v985
        %v1554 = vunpack.c.l.s8.bf16 %v986
        %v1555 = vunpack.c.l.s8.bf16 %v987
        %v1556 = vunpack.c.l.s8.bf16 %v988
        %v1557 = vunpack.c.h.s8.bf16 %v981
        %v1558 = vunpack.c.h.s8.bf16 %v982
        %v1559 = vunpack.c.h.s8.bf16 %v983
        %v1560 = vunpack.c.h.s8.bf16 %v984
        %v1561 = vunpack.c.h.s8.bf16 %v985
        %v1562 = vunpack.c.h.s8.bf16 %v986
        %v1563 = vunpack.c.h.s8.bf16 %v987
        %v1564 = vunpack.c.h.s8.bf16 %v988
        %v1565 = vunpack.c.l.s8.bf16 %v989
        %v1566 = vunpack.c.l.s8.bf16 %v990
        %v1567 = vunpack.c.l.s8.bf16 %v991
        %v1568 = vunpack.c.l.s8.bf16 %v992
        %v1569 = vunpack.c.l.s8.bf16 %v993
        %v1570 = vunpack.c.l.s8.bf16 %v994
        %v1571 = vunpack.c.l.s8.bf16 %v995
        %v1572 = vunpack.c.l.s8.bf16 %v996
        %v1573 = vunpack.c.h.s8.bf16 %v989
        %v1574 = vunpack.c.h.s8.bf16 %v990
        %v1575 = vunpack.c.h.s8.bf16 %v991
        %v1576 = vunpack.c.h.s8.bf16 %v992
        %v1577 = vunpack.c.h.s8.bf16 %v993
        %v1578 = vunpack.c.h.s8.bf16 %v994
        %v1579 = vunpack.c.h.s8.bf16 %v995
        %v1580 = vunpack.c.h.s8.bf16 %v996
        %v1581 = vunpack.c.l.s8.bf16 %v997
        %v1582 = vunpack.c.l.s8.bf16 %v998
        %v1583 = vunpack.c.l.s8.bf16 %v999
        %v1584 = vunpack.c.l.s8.bf16 %v1000
        %v1585 = vunpack.c.l.s8.bf16 %v1001
        %v1586 = vunpack.c.l.s8.bf16 %v1002
        %v1587 = vunpack.c.l.s8.bf16 %v1003
        %v1588 = vunpack.c.l.s8.bf16 %v1004
        %v1589 = vunpack.c.h.s8.bf16 %v997
        %v1590 = vunpack.c.h.s8.bf16 %v998
        %v1591 = vunpack.c.h.s8.bf16 %v999
        %v1592 = vunpack.c.h.s8.bf16 %v1000
        %v1593 = vunpack.c.h.s8.bf16 %v1001
        %v1594 = vunpack.c.h.s8.bf16 %v1002
        %v1595 = vunpack.c.h.s8.bf16 %v1003
        %v1596 = vunpack.c.h.s8.bf16 %v1004
        %v1597 = vunpack.c.l.s8.bf16 %v1005
        %v1598 = vunpack.c.l.s8.bf16 %v1006
        %v1599 = vunpack.c.l.s8.bf16 %v1007
        %v1600 = vunpack.c.l.s8.bf16 %v1008
        %v1601 = vunpack.c.l.s8.bf16 %v1009
        %v1602 = vunpack.c.l.s8.bf16 %v1010
        %v1603 = vunpack.c.l.s8.bf16 %v1011
        %v1604 = vunpack.c.l.s8.bf16 %v1012
        %v1605 = vunpack.c.h.s8.bf16 %v1005
        %v1606 = vunpack.c.h.s8.bf16 %v1006
        %v1607 = vunpack.c.h.s8.bf16 %v1007
        %v1608 = vunpack.c.h.s8.bf16 %v1008
        %v1609 = vunpack.c.h.s8.bf16 %v1009
        %v1610 = vunpack.c.h.s8.bf16 %v1010
        %v1611 = vunpack.c.h.s8.bf16 %v1011
        %v1612 = vunpack.c.h.s8.bf16 %v1012
        %v1613 = vunpack.c.l.s8.bf16 %v1013
        %v1614 = vunpack.c.l.s8.bf16 %v1014
        %v1615 = vunpack.c.l.s8.bf16 %v1015
        %v1616 = vunpack.c.l.s8.bf16 %v1016
        %v1617 = vunpack.c.l.s8.bf16 %v1017
        %v1618 = vunpack.c.l.s8.bf16 %v1018
        %v1619 = vunpack.c.l.s8.bf16 %v1019
        %v1620 = vunpack.c.l.s8.bf16 %v1020
        %v1621 = vunpack.c.h.s8.bf16 %v1013
        %v1622 = vunpack.c.h.s8.bf16 %v1014
        %v1623 = vunpack.c.h.s8.bf16 %v1015
        %v1624 = vunpack.c.h.s8.bf16 %v1016
        %v1625 = vunpack.c.h.s8.bf16 %v1017
        %v1626 = vunpack.c.h.s8.bf16 %v1018
        %v1627 = vunpack.c.h.s8.bf16 %v1019
        %v1628 = vunpack.c.h.s8.bf16 %v1020
        %v1629 = vunpack.c.l.s8.bf16 %v1021
        %v1630 = vunpack.c.l.s8.bf16 %v1022
        %v1631 = vunpack.c.l.s8.bf16 %v1023
        %v1632 = vunpack.c.l.s8.bf16 %v1024
        %v1633 = vunpack.c.l.s8.bf16 %v1025
        %v1634 = vunpack.c.l.s8.bf16 %v1026
        %v1635 = vunpack.c.l.s8.bf16 %v1027
        %v1636 = vunpack.c.l.s8.bf16 %v1028
        %v1637 = vunpack.c.h.s8.bf16 %v1021
        %v1638 = vunpack.c.h.s8.bf16 %v1022
        %v1639 = vunpack.c.h.s8.bf16 %v1023
        %v1640 = vunpack.c.h.s8.bf16 %v1024
        %v1641 = vunpack.c.h.s8.bf16 %v1025
        %v1642 = vunpack.c.h.s8.bf16 %v1026
        %v1643 = vunpack.c.h.s8.bf16 %v1027
        %v1644 = vunpack.c.h.s8.bf16 %v1028
        %v1645 = vunpack.c.l.s8.bf16 %v1029
        %v1646 = vunpack.c.l.s8.bf16 %v1030
        %v1647 = vunpack.c.l.s8.bf16 %v1031
        %v1648 = vunpack.c.l.s8.bf16 %v1032
        %v1649 = vunpack.c.l.s8.bf16 %v1033
        %v1650 = vunpack.c.l.s8.bf16 %v1034
        %v1651 = vunpack.c.l.s8.bf16 %v1035
        %v1652 = vunpack.c.l.s8.bf16 %v1036
        %v1653 = vunpack.c.h.s8.bf16 %v1029
        %v1654 = vunpack.c.h.s8.bf16 %v1030
        %v1655 = vunpack.c.h.s8.bf16 %v1031
        %v1656 = vunpack.c.h.s8.bf16 %v1032
        %v1657 = vunpack.c.h.s8.bf16 %v1033
        %v1658 = vunpack.c.h.s8.bf16 %v1034
        %v1659 = vunpack.c.h.s8.bf16 %v1035
        %v1660 = vunpack.c.h.s8.bf16 %v1036
        %v1661 = vunpack.c.l.s8.bf16 %v1037
        %v1662 = vunpack.c.l.s8.bf16 %v1038
        %v1663 = vunpack.c.l.s8.bf16 %v1039
        %v1664 = vunpack.c.l.s8.bf16 %v1040
        %v1665 = vunpack.c.l.s8.bf16 %v1041
        %v1666 = vunpack.c.l.s8.bf16 %v1042
        %v1667 = vunpack.c.l.s8.bf16 %v1043
        %v1668 = vunpack.c.l.s8.bf16 %v1044
        %v1669 = vunpack.c.h.s8.bf16 %v1037
        %v1670 = vunpack.c.h.s8.bf16 %v1038
        %v1671 = vunpack.c.h.s8.bf16 %v1039
        %v1672 = vunpack.c.h.s8.bf16 %v1040
        %v1673 = vunpack.c.h.s8.bf16 %v1041
        %v1674 = vunpack.c.h.s8.bf16 %v1042
        %v1675 = vunpack.c.h.s8.bf16 %v1043
        %v1676 = vunpack.c.h.s8.bf16 %v1044
        %v1677 = vunpack.c.l.s8.bf16 %v1045
        %v1678 = vunpack.c.l.s8.bf16 %v1046
        %v1679 = vunpack.c.l.s8.bf16 %v1047
        %v1680 = vunpack.c.l.s8.bf16 %v1048
        %v1681 = vunpack.c.l.s8.bf16 %v1049
        %v1682 = vunpack.c.l.s8.bf16 %v1050
        %v1683 = vunpack.c.l.s8.bf16 %v1051
        %v1684 = vunpack.c.l.s8.bf16 %v1052
        %v1685 = vunpack.c.h.s8.bf16 %v1045
        %v1686 = vunpack.c.h.s8.bf16 %v1046
        %v1687 = vunpack.c.h.s8.bf16 %v1047
        %v1688 = vunpack.c.h.s8.bf16 %v1048
        %v1689 = vunpack.c.h.s8.bf16 %v1049
        %v1690 = vunpack.c.h.s8.bf16 %v1050
        %v1691 = vunpack.c.h.s8.bf16 %v1051
        %v1692 = vunpack.c.h.s8.bf16 %v1052
        %v1693 = vunpack.c.l.s8.bf16 %v1053
        %v1694 = vunpack.c.l.s8.bf16 %v1054
        %v1695 = vunpack.c.l.s8.bf16 %v1055
        %v1696 = vunpack.c.l.s8.bf16 %v1056
        %v1697 = vunpack.c.l.s8.bf16 %v1057
        %v1698 = vunpack.c.l.s8.bf16 %v1058
        %v1699 = vunpack.c.l.s8.bf16 %v1059
        %v1700 = vunpack.c.l.s8.bf16 %v1060
        %v1701 = vunpack.c.h.s8.bf16 %v1053
        %v1702 = vunpack.c.h.s8.bf16 %v1054
        %v1703 = vunpack.c.h.s8.bf16 %v1055
        %v1704 = vunpack.c.h.s8.bf16 %v1056
        %v1705 = vunpack.c.h.s8.bf16 %v1057
        %v1706 = vunpack.c.h.s8.bf16 %v1058
        %v1707 = vunpack.c.h.s8.bf16 %v1059
        %v1708 = vunpack.c.h.s8.bf16 %v1060
        %v1709 = vunpack.c.l.s8.bf16 %v1061
        %v1710 = vunpack.c.l.s8.bf16 %v1062
        %v1711 = vunpack.c.l.s8.bf16 %v1063
        %v1712 = vunpack.c.l.s8.bf16 %v1064
        %v1713 = vunpack.c.l.s8.bf16 %v1065
        %v1714 = vunpack.c.l.s8.bf16 %v1066
        %v1715 = vunpack.c.l.s8.bf16 %v1067
        %v1716 = vunpack.c.l.s8.bf16 %v1068
        %v1717 = vunpack.c.h.s8.bf16 %v1061
        %v1718 = vunpack.c.h.s8.bf16 %v1062
        %v1719 = vunpack.c.h.s8.bf16 %v1063
        %v1720 = vunpack.c.h.s8.bf16 %v1064
        %v1721 = vunpack.c.h.s8.bf16 %v1065
        %v1722 = vunpack.c.h.s8.bf16 %v1066
        %v1723 = vunpack.c.h.s8.bf16 %v1067
        %v1724 = vunpack.c.h.s8.bf16 %v1068
        %v1725 = vunpack.c.l.s8.bf16 %v1069
        %v1726 = vunpack.c.l.s8.bf16 %v1070
        %v1727 = vunpack.c.l.s8.bf16 %v1071
        %v1728 = vunpack.c.l.s8.bf16 %v1072
        %v1729 = vunpack.c.l.s8.bf16 %v1073
        %v1730 = vunpack.c.l.s8.bf16 %v1074
        %v1731 = vunpack.c.l.s8.bf16 %v1075
        %v1732 = vunpack.c.l.s8.bf16 %v1076
        %v1733 = vunpack.c.h.s8.bf16 %v1069
        %v1734 = vunpack.c.h.s8.bf16 %v1070
        %v1735 = vunpack.c.h.s8.bf16 %v1071
        %v1736 = vunpack.c.h.s8.bf16 %v1072
        %v1737 = vunpack.c.h.s8.bf16 %v1073
        %v1738 = vunpack.c.h.s8.bf16 %v1074
        %v1739 = vunpack.c.h.s8.bf16 %v1075
        %v1740 = vunpack.c.h.s8.bf16 %v1076
        %v1741 = vunpack.c.l.s8.bf16 %v1077
        %v1742 = vunpack.c.l.s8.bf16 %v1078
        %v1743 = vunpack.c.l.s8.bf16 %v1079
        %v1744 = vunpack.c.l.s8.bf16 %v1080
        %v1745 = vunpack.c.l.s8.bf16 %v1081
        %v1746 = vunpack.c.l.s8.bf16 %v1082
        %v1747 = vunpack.c.l.s8.bf16 %v1083
        %v1748 = vunpack.c.l.s8.bf16 %v1084
        %v1749 = vunpack.c.h.s8.bf16 %v1077
        %v1750 = vunpack.c.h.s8.bf16 %v1078
        %v1751 = vunpack.c.h.s8.bf16 %v1079
        %v1752 = vunpack.c.h.s8.bf16 %v1080
        %v1753 = vunpack.c.h.s8.bf16 %v1081
        %v1754 = vunpack.c.h.s8.bf16 %v1082
        %v1755 = vunpack.c.h.s8.bf16 %v1083
        %v1756 = vunpack.c.h.s8.bf16 %v1084
        %v1757 = vunpack.c.l.s8.bf16 %v1085
        %v1758 = vunpack.c.l.s8.bf16 %v1086
        %v1759 = vunpack.c.l.s8.bf16 %v1087
        %v1760 = vunpack.c.l.s8.bf16 %v1088
        %v1761 = vunpack.c.l.s8.bf16 %v1089
        %v1762 = vunpack.c.l.s8.bf16 %v1090
        %v1763 = vunpack.c.l.s8.bf16 %v1091
        %v1764 = vunpack.c.l.s8.bf16 %v1092
        %v1765 = vunpack.c.h.s8.bf16 %v1085
        %v1766 = vunpack.c.h.s8.bf16 %v1086
        %v1767 = vunpack.c.h.s8.bf16 %v1087
        %v1768 = vunpack.c.h.s8.bf16 %v1088
        %v1769 = vunpack.c.h.s8.bf16 %v1089
        %v1770 = vunpack.c.h.s8.bf16 %v1090
        %v1771 = vunpack.c.h.s8.bf16 %v1091
        %v1772 = vunpack.c.h.s8.bf16 %v1092
        %v1773 = vunpack.c.l.s8.bf16 %v1093
        %v1774 = vunpack.c.l.s8.bf16 %v1094
        %v1775 = vunpack.c.l.s8.bf16 %v1095
        %v1776 = vunpack.c.l.s8.bf16 %v1096
        %v1777 = vunpack.c.l.s8.bf16 %v1097
        %v1778 = vunpack.c.l.s8.bf16 %v1098
        %v1779 = vunpack.c.l.s8.bf16 %v1099
        %v1780 = vunpack.c.l.s8.bf16 %v1100
        %v1781 = vunpack.c.h.s8.bf16 %v1093
        %v1782 = vunpack.c.h.s8.bf16 %v1094
        %v1783 = vunpack.c.h.s8.bf16 %v1095
        %v1784 = vunpack.c.h.s8.bf16 %v1096
        %v1785 = vunpack.c.h.s8.bf16 %v1097
        %v1786 = vunpack.c.h.s8.bf16 %v1098
        %v1787 = vunpack.c.h.s8.bf16 %v1099
        %v1788 = vunpack.c.h.s8.bf16 %v1100
        %v1789 = vunpack.c.l.s8.bf16 %v1101
        %v1790 = vunpack.c.l.s8.bf16 %v1102
        %v1791 = vunpack.c.l.s8.bf16 %v1103
        %v1792 = vunpack.c.l.s8.bf16 %v1104
        %v1793 = vunpack.c.l.s8.bf16 %v1105
        %v1794 = vunpack.c.l.s8.bf16 %v1106
        %v1795 = vunpack.c.l.s8.bf16 %v1107
        %v1796 = vunpack.c.l.s8.bf16 %v1108
        %v1797 = vunpack.c.h.s8.bf16 %v1101
        %v1798 = vunpack.c.h.s8.bf16 %v1102
        %v1799 = vunpack.c.h.s8.bf16 %v1103
        %v1800 = vunpack.c.h.s8.bf16 %v1104
        %v1801 = vunpack.c.h.s8.bf16 %v1105
        %v1802 = vunpack.c.h.s8.bf16 %v1106
        %v1803 = vunpack.c.h.s8.bf16 %v1107
        %v1804 = vunpack.c.h.s8.bf16 %v1108
        %v1805 = vunpack.c.l.s8.bf16 %v1109
        %v1806 = vunpack.c.l.s8.bf16 %v1110
        %v1807 = vunpack.c.l.s8.bf16 %v1111
        %v1808 = vunpack.c.l.s8.bf16 %v1112
        %v1809 = vunpack.c.l.s8.bf16 %v1113
        %v1810 = vunpack.c.l.s8.bf16 %v1114
        %v1811 = vunpack.c.l.s8.bf16 %v1115
        %v1812 = vunpack.c.l.s8.bf16 %v1116
        %v1813 = vunpack.c.h.s8.bf16 %v1109
        %v1814 = vunpack.c.h.s8.bf16 %v1110
        %v1815 = vunpack.c.h.s8.bf16 %v1111
        %v1816 = vunpack.c.h.s8.bf16 %v1112
        %v1817 = vunpack.c.h.s8.bf16 %v1113
        %v1818 = vunpack.c.h.s8.bf16 %v1114
        %v1819 = vunpack.c.h.s8.bf16 %v1115
        %v1820 = vunpack.c.h.s8.bf16 %v1116
        %v1821 = vunpack.c.l.s8.bf16 %v1117
        %v1822 = vunpack.c.l.s8.bf16 %v1118
        %v1823 = vunpack.c.l.s8.bf16 %v1119
        %v1824 = vunpack.c.l.s8.bf16 %v1120
        %v1825 = vunpack.c.l.s8.bf16 %v1121
        %v1826 = vunpack.c.l.s8.bf16 %v1122
        %v1827 = vunpack.c.l.s8.bf16 %v1123
        %v1828 = vunpack.c.l.s8.bf16 %v1124
        %v1829 = vunpack.c.h.s8.bf16 %v1117
        %v1830 = vunpack.c.h.s8.bf16 %v1118
        %v1831 = vunpack.c.h.s8.bf16 %v1119
        %v1832 = vunpack.c.h.s8.bf16 %v1120
        %v1833 = vunpack.c.h.s8.bf16 %v1121
        %v1834 = vunpack.c.h.s8.bf16 %v1122
        %v1835 = vunpack.c.h.s8.bf16 %v1123
        %v1836 = vunpack.c.h.s8.bf16 %v1124
        %v1837 = vunpack.c.l.s8.bf16 %v1125
        %v1838 = vunpack.c.l.s8.bf16 %v1126
        %v1839 = vunpack.c.l.s8.bf16 %v1127
        %v1840 = vunpack.c.l.s8.bf16 %v1128
        %v1841 = vunpack.c.l.s8.bf16 %v1129
        %v1842 = vunpack.c.l.s8.bf16 %v1130
        %v1843 = vunpack.c.l.s8.bf16 %v1131
        %v1844 = vunpack.c.l.s8.bf16 %v1132
        %v1845 = vunpack.c.h.s8.bf16 %v1125
        %v1846 = vunpack.c.h.s8.bf16 %v1126
        %v1847 = vunpack.c.h.s8.bf16 %v1127
        %v1848 = vunpack.c.h.s8.bf16 %v1128
        %v1849 = vunpack.c.h.s8.bf16 %v1129
        %v1850 = vunpack.c.h.s8.bf16 %v1130
        %v1851 = vunpack.c.h.s8.bf16 %v1131
        %v1852 = vunpack.c.h.s8.bf16 %v1132
        %v1853 = vunpack.c.l.s8.bf16 %v1133
        %v1854 = vunpack.c.l.s8.bf16 %v1134
        %v1855 = vunpack.c.l.s8.bf16 %v1135
        %v1856 = vunpack.c.l.s8.bf16 %v1136
        %v1857 = vunpack.c.l.s8.bf16 %v1137
        %v1858 = vunpack.c.l.s8.bf16 %v1138
        %v1859 = vunpack.c.l.s8.bf16 %v1139
        %v1860 = vunpack.c.l.s8.bf16 %v1140
        %v1861 = vunpack.c.h.s8.bf16 %v1133
        %v1862 = vunpack.c.h.s8.bf16 %v1134
        %v1863 = vunpack.c.h.s8.bf16 %v1135
        %v1864 = vunpack.c.h.s8.bf16 %v1136
        %v1865 = vunpack.c.h.s8.bf16 %v1137
        %v1866 = vunpack.c.h.s8.bf16 %v1138
        %v1867 = vunpack.c.h.s8.bf16 %v1139
        %v1868 = vunpack.c.h.s8.bf16 %v1140
        %v1869 = vunpack.c.l.s8.bf16 %v1141
        %v1870 = vunpack.c.l.s8.bf16 %v1142
        %v1871 = vunpack.c.l.s8.bf16 %v1143
        %v1872 = vunpack.c.l.s8.bf16 %v1144
        %v1873 = vunpack.c.l.s8.bf16 %v1145
        %v1874 = vunpack.c.l.s8.bf16 %v1146
        %v1875 = vunpack.c.l.s8.bf16 %v1147
        %v1876 = vunpack.c.l.s8.bf16 %v1148
        %v1877 = vunpack.c.h.s8.bf16 %v1141
        %v1878 = vunpack.c.h.s8.bf16 %v1142
        %v1879 = vunpack.c.h.s8.bf16 %v1143
        %v1880 = vunpack.c.h.s8.bf16 %v1144
        %v1881 = vunpack.c.h.s8.bf16 %v1145
        %v1882 = vunpack.c.h.s8.bf16 %v1146
        %v1883 = vunpack.c.h.s8.bf16 %v1147
        %v1884 = vunpack.c.h.s8.bf16 %v1148
        %v1885 = vunpack.c.l.s8.bf16 %v1149
        %v1886 = vunpack.c.l.s8.bf16 %v1150
        %v1887 = vunpack.c.l.s8.bf16 %v1151
        %v1888 = vunpack.c.l.s8.bf16 %v1152
        %v1889 = vunpack.c.l.s8.bf16 %v1153
        %v1890 = vunpack.c.l.s8.bf16 %v1154
        %v1891 = vunpack.c.l.s8.bf16 %v1155
        %v1892 = vunpack.c.l.s8.bf16 %v1156
        %v1893 = vunpack.c.h.s8.bf16 %v1149
        %v1894 = vunpack.c.h.s8.bf16 %v1150
        %v1895 = vunpack.c.h.s8.bf16 %v1151
        %v1896 = vunpack.c.h.s8.bf16 %v1152
        %v1897 = vunpack.c.h.s8.bf16 %v1153
        %v1898 = vunpack.c.h.s8.bf16 %v1154
        %v1899 = vunpack.c.h.s8.bf16 %v1155
        %v1900 = vunpack.c.h.s8.bf16 %v1156
        %v1901 = vunpack.c.l.s8.bf16 %v1157
        %v1902 = vunpack.c.l.s8.bf16 %v1158
        %v1903 = vunpack.c.l.s8.bf16 %v1159
        %v1904 = vunpack.c.l.s8.bf16 %v1160
        %v1905 = vunpack.c.l.s8.bf16 %v1161
        %v1906 = vunpack.c.l.s8.bf16 %v1162
        %v1907 = vunpack.c.l.s8.bf16 %v1163
        %v1908 = vunpack.c.l.s8.bf16 %v1164
        %v1909 = vunpack.c.h.s8.bf16 %v1157
        %v1910 = vunpack.c.h.s8.bf16 %v1158
        %v1911 = vunpack.c.h.s8.bf16 %v1159
        %v1912 = vunpack.c.h.s8.bf16 %v1160
        %v1913 = vunpack.c.h.s8.bf16 %v1161
        %v1914 = vunpack.c.h.s8.bf16 %v1162
        %v1915 = vunpack.c.h.s8.bf16 %v1163
        %v1916 = vunpack.c.h.s8.bf16 %v1164
        %v1917 = vunpack.c.l.s8.bf16 %v1165
        %v1918 = vunpack.c.l.s8.bf16 %v1166
        %v1919 = vunpack.c.l.s8.bf16 %v1167
        %v1920 = vunpack.c.l.s8.bf16 %v1168
        %v1921 = vunpack.c.l.s8.bf16 %v1169
        %v1922 = vunpack.c.l.s8.bf16 %v1170
        %v1923 = vunpack.c.l.s8.bf16 %v1171
        %v1924 = vunpack.c.l.s8.bf16 %v1172
        %v1925 = vunpack.c.h.s8.bf16 %v1165
        %v1926 = vunpack.c.h.s8.bf16 %v1166
        %v1927 = vunpack.c.h.s8.bf16 %v1167
        %v1928 = vunpack.c.h.s8.bf16 %v1168
        %v1929 = vunpack.c.h.s8.bf16 %v1169
        %v1930 = vunpack.c.h.s8.bf16 %v1170
        %v1931 = vunpack.c.h.s8.bf16 %v1171
        %v1932 = vunpack.c.h.s8.bf16 %v1172
        %v1933 = vunpack.c.l.s8.bf16 %v1173
        %v1934 = vunpack.c.l.s8.bf16 %v1174
        %v1935 = vunpack.c.l.s8.bf16 %v1175
        %v1936 = vunpack.c.l.s8.bf16 %v1176
        %v1937 = vunpack.c.l.s8.bf16 %v1177
        %v1938 = vunpack.c.l.s8.bf16 %v1178
        %v1939 = vunpack.c.l.s8.bf16 %v1179
        %v1940 = vunpack.c.l.s8.bf16 %v1180
        %v1941 = vunpack.c.h.s8.bf16 %v1173
        %v1942 = vunpack.c.h.s8.bf16 %v1174
        %v1943 = vunpack.c.h.s8.bf16 %v1175
        %v1944 = vunpack.c.h.s8.bf16 %v1176
        %v1945 = vunpack.c.h.s8.bf16 %v1177
        %v1946 = vunpack.c.h.s8.bf16 %v1178
        %v1947 = vunpack.c.h.s8.bf16 %v1179
        %v1948 = vunpack.c.h.s8.bf16 %v1180
        %v1949 = vunpack.c.l.s8.bf16 %v1181
        %v1950 = vunpack.c.l.s8.bf16 %v1182
        %v1951 = vunpack.c.l.s8.bf16 %v1183
        %v1952 = vunpack.c.l.s8.bf16 %v1184
        %v1953 = vunpack.c.l.s8.bf16 %v1185
        %v1954 = vunpack.c.l.s8.bf16 %v1186
        %v1955 = vunpack.c.l.s8.bf16 %v1187
        %v1956 = vunpack.c.l.s8.bf16 %v1188
        %v1957 = vunpack.c.h.s8.bf16 %v1181
        %v1958 = vunpack.c.h.s8.bf16 %v1182
        %v1959 = vunpack.c.h.s8.bf16 %v1183
        %v1960 = vunpack.c.h.s8.bf16 %v1184
        %v1961 = vunpack.c.h.s8.bf16 %v1185
        %v1962 = vunpack.c.h.s8.bf16 %v1186
        %v1963 = vunpack.c.h.s8.bf16 %v1187
        %v1964 = vunpack.c.h.s8.bf16 %v1188
        %v1965 = vunpack.c.l.s8.bf16 %v1189
        %v1966 = vunpack.c.l.s8.bf16 %v1190
        %v1967 = vunpack.c.l.s8.bf16 %v1191
        %v1968 = vunpack.c.l.s8.bf16 %v1192
        %v1969 = vunpack.c.l.s8.bf16 %v1193
        %v1970 = vunpack.c.l.s8.bf16 %v1194
        %v1971 = vunpack.c.l.s8.bf16 %v1195
        %v1972 = vunpack.c.l.s8.bf16 %v1196
        %v1973 = vunpack.c.h.s8.bf16 %v1189
        %v1974 = vunpack.c.h.s8.bf16 %v1190
        %v1975 = vunpack.c.h.s8.bf16 %v1191
        %v1976 = vunpack.c.h.s8.bf16 %v1192
        %v1977 = vunpack.c.h.s8.bf16 %v1193
        %v1978 = vunpack.c.h.s8.bf16 %v1194
        %v1979 = vunpack.c.h.s8.bf16 %v1195
        %v1980 = vunpack.c.h.s8.bf16 %v1196
        %v1981 = vunpack.c.l.s8.bf16 %v1197
        %v1982 = vunpack.c.l.s8.bf16 %v1198
        %v1983 = vunpack.c.l.s8.bf16 %v1199
        %v1984 = vunpack.c.l.s8.bf16 %v1200
        %v1985 = vunpack.c.l.s8.bf16 %v1201
        %v1986 = vunpack.c.l.s8.bf16 %v1202
        %v1987 = vunpack.c.l.s8.bf16 %v1203
        %v1988 = vunpack.c.l.s8.bf16 %v1204
        %v1989 = vunpack.c.h.s8.bf16 %v1197
        %v1990 = vunpack.c.h.s8.bf16 %v1198
        %v1991 = vunpack.c.h.s8.bf16 %v1199
        %v1992 = vunpack.c.h.s8.bf16 %v1200
        %v1993 = vunpack.c.h.s8.bf16 %v1201
        %v1994 = vunpack.c.h.s8.bf16 %v1202
        %v1995 = vunpack.c.h.s8.bf16 %v1203
        %v1996 = vunpack.c.h.s8.bf16 %v1204
        %v1997 = vunpack.c.l.s8.bf16 %v1205
        %v1998 = vunpack.c.l.s8.bf16 %v1206
        %v1999 = vunpack.c.l.s8.bf16 %v1207
        %v2000 = vunpack.c.l.s8.bf16 %v1208
        %v2001 = vunpack.c.l.s8.bf16 %v1209
        %v2002 = vunpack.c.l.s8.bf16 %v1210
        %v2003 = vunpack.c.l.s8.bf16 %v1211
        %v2004 = vunpack.c.l.s8.bf16 %v1212
        %v2005 = vunpack.c.h.s8.bf16 %v1205
        %v2006 = vunpack.c.h.s8.bf16 %v1206
        %v2007 = vunpack.c.h.s8.bf16 %v1207
        %v2008 = vunpack.c.h.s8.bf16 %v1208
        %v2009 = vunpack.c.h.s8.bf16 %v1209
        %v2010 = vunpack.c.h.s8.bf16 %v1210
        %v2011 = vunpack.c.h.s8.bf16 %v1211
        %v2012 = vunpack.c.h.s8.bf16 %v1212
        %v2013 = vunpack.c.l.s8.bf16 %v1213
        %v2014 = vunpack.c.l.s8.bf16 %v1214
        %v2015 = vunpack.c.l.s8.bf16 %v1215
        %v2016 = vunpack.c.l.s8.bf16 %v1216
        %v2017 = vunpack.c.l.s8.bf16 %v1217
        %v2018 = vunpack.c.l.s8.bf16 %v1218
        %v2019 = vunpack.c.l.s8.bf16 %v1219
        %v2020 = vunpack.c.l.s8.bf16 %v1220
        %v2021 = vunpack.c.h.s8.bf16 %v1213
        %v2022 = vunpack.c.h.s8.bf16 %v1214
        %v2023 = vunpack.c.h.s8.bf16 %v1215
        %v2024 = vunpack.c.h.s8.bf16 %v1216
        %v2025 = vunpack.c.h.s8.bf16 %v1217
        %v2026 = vunpack.c.h.s8.bf16 %v1218
        %v2027 = vunpack.c.h.s8.bf16 %v1219
        %v2028 = vunpack.c.h.s8.bf16 %v1220
        %v2029 = vunpack.c.l.s8.bf16 %v1221
        %v2030 = vunpack.c.l.s8.bf16 %v1222
        %v2031 = vunpack.c.l.s8.bf16 %v1223
        %v2032 = vunpack.c.l.s8.bf16 %v1224
        %v2033 = vunpack.c.l.s8.bf16 %v1225
        %v2034 = vunpack.c.l.s8.bf16 %v1226
        %v2035 = vunpack.c.l.s8.bf16 %v1227
        %v2036 = vunpack.c.l.s8.bf16 %v1228
        %v2037 = vunpack.c.h.s8.bf16 %v1221
        %v2038 = vunpack.c.h.s8.bf16 %v1222
        %v2039 = vunpack.c.h.s8.bf16 %v1223
        %v2040 = vunpack.c.h.s8.bf16 %v1224
        %v2041 = vunpack.c.h.s8.bf16 %v1225
        %v2042 = vunpack.c.h.s8.bf16 %v1226
        %v2043 = vunpack.c.h.s8.bf16 %v1227
        %v2044 = vunpack.c.h.s8.bf16 %v1228
        %v2045 = vunpack.c.l.s8.bf16 %v1229
        %v2046 = vunpack.c.l.s8.bf16 %v1230
        %v2047 = vunpack.c.l.s8.bf16 %v1231
        %v2048 = vunpack.c.l.s8.bf16 %v1232
        %v2049 = vunpack.c.l.s8.bf16 %v1233
        %v2050 = vunpack.c.l.s8.bf16 %v1234
        %v2051 = vunpack.c.l.s8.bf16 %v1235
        %v2052 = vunpack.c.l.s8.bf16 %v1236
        %v2053 = vunpack.c.h.s8.bf16 %v1229
        %v2054 = vunpack.c.h.s8.bf16 %v1230
        %v2055 = vunpack.c.h.s8.bf16 %v1231
        %v2056 = vunpack.c.h.s8.bf16 %v1232
        %v2057 = vunpack.c.h.s8.bf16 %v1233
        %v2058 = vunpack.c.h.s8.bf16 %v1234
        %v2059 = vunpack.c.h.s8.bf16 %v1235
        %v2060 = vunpack.c.h.s8.bf16 %v1236
        %v2061 = vunpack.c.l.s8.bf16 %v1237
        %v2062 = vunpack.c.l.s8.bf16 %v1238
        %v2063 = vunpack.c.l.s8.bf16 %v1239
        %v2064 = vunpack.c.l.s8.bf16 %v1240
        %v2065 = vunpack.c.l.s8.bf16 %v1241
        %v2066 = vunpack.c.l.s8.bf16 %v1242
        %v2067 = vunpack.c.l.s8.bf16 %v1243
        %v2068 = vunpack.c.l.s8.bf16 %v1244
        %v2069 = vunpack.c.h.s8.bf16 %v1237
        %v2070 = vunpack.c.h.s8.bf16 %v1238
        %v2071 = vunpack.c.h.s8.bf16 %v1239
        %v2072 = vunpack.c.h.s8.bf16 %v1240
        %v2073 = vunpack.c.h.s8.bf16 %v1241
        %v2074 = vunpack.c.h.s8.bf16 %v1242
        %v2075 = vunpack.c.h.s8.bf16 %v1243
        %v2076 = vunpack.c.h.s8.bf16 %v1244
        %v2077 = vunpack.c.l.s8.bf16 %v1245
        %v2078 = vunpack.c.l.s8.bf16 %v1246
        %v2079 = vunpack.c.l.s8.bf16 %v1247
        %v2080 = vunpack.c.l.s8.bf16 %v1248
        %v2081 = vunpack.c.l.s8.bf16 %v1249
        %v2082 = vunpack.c.l.s8.bf16 %v1250
        %v2083 = vunpack.c.l.s8.bf16 %v1251
        %v2084 = vunpack.c.l.s8.bf16 %v1252
        %v2085 = vunpack.c.h.s8.bf16 %v1245
        %v2086 = vunpack.c.h.s8.bf16 %v1246
        %v2087 = vunpack.c.h.s8.bf16 %v1247
        %v2088 = vunpack.c.h.s8.bf16 %v1248
        %v2089 = vunpack.c.h.s8.bf16 %v1249
        %v2090 = vunpack.c.h.s8.bf16 %v1250
        %v2091 = vunpack.c.h.s8.bf16 %v1251
        %v2092 = vunpack.c.h.s8.bf16 %v1252
        %v2093 = vunpack.c.l.s8.bf16 %v1253
        %v2094 = vunpack.c.l.s8.bf16 %v1254
        %v2095 = vunpack.c.l.s8.bf16 %v1255
        %v2096 = vunpack.c.l.s8.bf16 %v1256
        %v2097 = vunpack.c.l.s8.bf16 %v1257
        %v2098 = vunpack.c.l.s8.bf16 %v1258
        %v2099 = vunpack.c.l.s8.bf16 %v1259
        %v2100 = vunpack.c.l.s8.bf16 %v1260
        %v2101 = vunpack.c.h.s8.bf16 %v1253
        %v2102 = vunpack.c.h.s8.bf16 %v1254
        %v2103 = vunpack.c.h.s8.bf16 %v1255
        %v2104 = vunpack.c.h.s8.bf16 %v1256
        %v2105 = vunpack.c.h.s8.bf16 %v1257
        %v2106 = vunpack.c.h.s8.bf16 %v1258
        %v2107 = vunpack.c.h.s8.bf16 %v1259
        %v2108 = vunpack.c.h.s8.bf16 %v1260
        %v2109 = vunpack.c.l.s8.bf16 %v1261
        %v2110 = vunpack.c.l.s8.bf16 %v1262
        %v2111 = vunpack.c.l.s8.bf16 %v1263
        %v2112 = vunpack.c.l.s8.bf16 %v1264
        %v2113 = vunpack.c.l.s8.bf16 %v1265
        %v2114 = vunpack.c.l.s8.bf16 %v1266
        %v2115 = vunpack.c.l.s8.bf16 %v1267
        %v2116 = vunpack.c.l.s8.bf16 %v1268
        %v2117 = vunpack.c.h.s8.bf16 %v1261
        %v2118 = vunpack.c.h.s8.bf16 %v1262
        %v2119 = vunpack.c.h.s8.bf16 %v1263
        %v2120 = vunpack.c.h.s8.bf16 %v1264
        %v2121 = vunpack.c.h.s8.bf16 %v1265
        %v2122 = vunpack.c.h.s8.bf16 %v1266
        %v2123 = vunpack.c.h.s8.bf16 %v1267
        %v2124 = vunpack.c.h.s8.bf16 %v1268
        %v2125 = vunpack.c.l.s8.bf16 %v1269
        %v2126 = vunpack.c.l.s8.bf16 %v1270
        %v2127 = vunpack.c.l.s8.bf16 %v1271
        %v2128 = vunpack.c.l.s8.bf16 %v1272
        %v2129 = vunpack.c.l.s8.bf16 %v1273
        %v2130 = vunpack.c.l.s8.bf16 %v1274
        %v2131 = vunpack.c.l.s8.bf16 %v1275
        %v2132 = vunpack.c.l.s8.bf16 %v1276
        %v2133 = vunpack.c.h.s8.bf16 %v1269
        %v2134 = vunpack.c.h.s8.bf16 %v1270
        %v2135 = vunpack.c.h.s8.bf16 %v1271
        %v2136 = vunpack.c.h.s8.bf16 %v1272
        %v2137 = vunpack.c.h.s8.bf16 %v1273
        %v2138 = vunpack.c.h.s8.bf16 %v1274
        %v2139 = vunpack.c.h.s8.bf16 %v1275
        %v2140 = vunpack.c.h.s8.bf16 %v1276
        %v2141 = vunpack.c.l.s8.bf16 %v1277
        %v2142 = vunpack.c.l.s8.bf16 %v1278
        %v2143 = vunpack.c.l.s8.bf16 %v1279
        %v2144 = vunpack.c.l.s8.bf16 %v1280
        %v2145 = vunpack.c.l.s8.bf16 %v1281
        %v2146 = vunpack.c.l.s8.bf16 %v1282
        %v2147 = vunpack.c.l.s8.bf16 %v1283
        %v2148 = vunpack.c.l.s8.bf16 %v1284
        %v2149 = vunpack.c.h.s8.bf16 %v1277
        %v2150 = vunpack.c.h.s8.bf16 %v1278
        %v2151 = vunpack.c.h.s8.bf16 %v1279
        %v2152 = vunpack.c.h.s8.bf16 %v1280
        %v2153 = vunpack.c.h.s8.bf16 %v1281
        %v2154 = vunpack.c.h.s8.bf16 %v1282
        %v2155 = vunpack.c.h.s8.bf16 %v1283
        %v2156 = vunpack.c.h.s8.bf16 %v1284
        %v2157 = vunpack.c.l.s8.bf16 %v1285
        %v2158 = vunpack.c.l.s8.bf16 %v1286
        %v2159 = vunpack.c.l.s8.bf16 %v1287
        %v2160 = vunpack.c.l.s8.bf16 %v1288
        %v2161 = vunpack.c.l.s8.bf16 %v1289
        %v2162 = vunpack.c.l.s8.bf16 %v1290
        %v2163 = vunpack.c.l.s8.bf16 %v1291
        %v2164 = vunpack.c.l.s8.bf16 %v1292
        %v2165 = vunpack.c.h.s8.bf16 %v1285
        %v2166 = vunpack.c.h.s8.bf16 %v1286
        %v2167 = vunpack.c.h.s8.bf16 %v1287
        %v2168 = vunpack.c.h.s8.bf16 %v1288
        %v2169 = vunpack.c.h.s8.bf16 %v1289
        %v2170 = vunpack.c.h.s8.bf16 %v1290
        %v2171 = vunpack.c.h.s8.bf16 %v1291
        %v2172 = vunpack.c.h.s8.bf16 %v1292
        %v2173 = vunpack.c.l.s8.bf16 %v1293
        %v2174 = vunpack.c.l.s8.bf16 %v1294
        %v2175 = vunpack.c.l.s8.bf16 %v1295
        %v2176 = vunpack.c.l.s8.bf16 %v1296
        %v2177 = vunpack.c.l.s8.bf16 %v1297
        %v2178 = vunpack.c.l.s8.bf16 %v1298
        %v2179 = vunpack.c.l.s8.bf16 %v1299
        %v2180 = vunpack.c.l.s8.bf16 %v1300
        %v2181 = vunpack.c.h.s8.bf16 %v1293
        %v2182 = vunpack.c.h.s8.bf16 %v1294
        %v2183 = vunpack.c.h.s8.bf16 %v1295
        %v2184 = vunpack.c.h.s8.bf16 %v1296
        %v2185 = vunpack.c.h.s8.bf16 %v1297
        %v2186 = vunpack.c.h.s8.bf16 %v1298
        %v2187 = vunpack.c.h.s8.bf16 %v1299
        %v2188 = vunpack.c.h.s8.bf16 %v1300
        %v2189 = vunpack.c.l.s8.bf16 %v1301
        %v2190 = vunpack.c.l.s8.bf16 %v1302
        %v2191 = vunpack.c.l.s8.bf16 %v1303
        %v2192 = vunpack.c.l.s8.bf16 %v1304
        %v2193 = vunpack.c.l.s8.bf16 %v1305
        %v2194 = vunpack.c.l.s8.bf16 %v1306
        %v2195 = vunpack.c.l.s8.bf16 %v1307
        %v2196 = vunpack.c.l.s8.bf16 %v1308
        %v2197 = vunpack.c.h.s8.bf16 %v1301
        %v2198 = vunpack.c.h.s8.bf16 %v1302
        %v2199 = vunpack.c.h.s8.bf16 %v1303
        %v2200 = vunpack.c.h.s8.bf16 %v1304
        %v2201 = vunpack.c.h.s8.bf16 %v1305
        %v2202 = vunpack.c.h.s8.bf16 %v1306
        %v2203 = vunpack.c.h.s8.bf16 %v1307
        %v2204 = vunpack.c.h.s8.bf16 %v1308
        %v2205 = vunpack.c.l.s8.bf16 %v1309
        %v2206 = vunpack.c.l.s8.bf16 %v1310
        %v2207 = vunpack.c.l.s8.bf16 %v1311
        %v2208 = vunpack.c.l.s8.bf16 %v1312
        %v2209 = vunpack.c.l.s8.bf16 %v1313
        %v2210 = vunpack.c.l.s8.bf16 %v1314
        %v2211 = vunpack.c.l.s8.bf16 %v1315
        %v2212 = vunpack.c.l.s8.bf16 %v1316
        %v2213 = vunpack.c.h.s8.bf16 %v1309
        %v2214 = vunpack.c.h.s8.bf16 %v1310
        %v2215 = vunpack.c.h.s8.bf16 %v1311
        %v2216 = vunpack.c.h.s8.bf16 %v1312
        %v2217 = vunpack.c.h.s8.bf16 %v1313
        %v2218 = vunpack.c.h.s8.bf16 %v1314
        %v2219 = vunpack.c.h.s8.bf16 %v1315
        %v2220 = vunpack.c.h.s8.bf16 %v1316
        %v2221 = vunpack.c.l.s8.bf16 %v1317
        %v2222 = vunpack.c.l.s8.bf16 %v1318
        %v2223 = vunpack.c.l.s8.bf16 %v1319
        %v2224 = vunpack.c.l.s8.bf16 %v1320
        %v2225 = vunpack.c.l.s8.bf16 %v1321
        %v2226 = vunpack.c.l.s8.bf16 %v1322
        %v2227 = vunpack.c.l.s8.bf16 %v1323
        %v2228 = vunpack.c.l.s8.bf16 %v1324
        %v2229 = vunpack.c.h.s8.bf16 %v1317
        %v2230 = vunpack.c.h.s8.bf16 %v1318
        %v2231 = vunpack.c.h.s8.bf16 %v1319
        %v2232 = vunpack.c.h.s8.bf16 %v1320
        %v2233 = vunpack.c.h.s8.bf16 %v1321
        %v2234 = vunpack.c.h.s8.bf16 %v1322
        %v2235 = vunpack.c.h.s8.bf16 %v1323
        %v2236 = vunpack.c.h.s8.bf16 %v1324
        %v2237 = vunpack.c.l.s8.bf16 %v1325
        %v2238 = vunpack.c.l.s8.bf16 %v1326
        %v2239 = vunpack.c.l.s8.bf16 %v1327
        %v2240 = vunpack.c.l.s8.bf16 %v1328
        %v2241 = vunpack.c.l.s8.bf16 %v1329
        %v2242 = vunpack.c.l.s8.bf16 %v1330
        %v2243 = vunpack.c.l.s8.bf16 %v1331
        %v2244 = vunpack.c.l.s8.bf16 %v1332
        %v2245 = vunpack.c.h.s8.bf16 %v1325
        %v2246 = vunpack.c.h.s8.bf16 %v1326
        %v2247 = vunpack.c.h.s8.bf16 %v1327
        %v2248 = vunpack.c.h.s8.bf16 %v1328
        %v2249 = vunpack.c.h.s8.bf16 %v1329
        %v2250 = vunpack.c.h.s8.bf16 %v1330
        %v2251 = vunpack.c.h.s8.bf16 %v1331
        %v2252 = vunpack.c.h.s8.bf16 %v1332
        %v2253 = vunpack.c.l.s8.bf16 %v1333
        %v2254 = vunpack.c.l.s8.bf16 %v1334
        %v2255 = vunpack.c.l.s8.bf16 %v1335
        %v2256 = vunpack.c.l.s8.bf16 %v1336
        %v2257 = vunpack.c.l.s8.bf16 %v1337
        %v2258 = vunpack.c.l.s8.bf16 %v1338
        %v2259 = vunpack.c.l.s8.bf16 %v1339
        %v2260 = vunpack.c.l.s8.bf16 %v1340
        %v2261 = vunpack.c.h.s8.bf16 %v1333
        %v2262 = vunpack.c.h.s8.bf16 %v1334
        %v2263 = vunpack.c.h.s8.bf16 %v1335
        %v2264 = vunpack.c.h.s8.bf16 %v1336
        %v2265 = vunpack.c.h.s8.bf16 %v1337
        %v2266 = vunpack.c.h.s8.bf16 %v1338
        %v2267 = vunpack.c.h.s8.bf16 %v1339
        %v2268 = vunpack.c.h.s8.bf16 %v1340
        %v2269 = vunpack.c.l.s8.bf16 %v1341
        %v2270 = vunpack.c.l.s8.bf16 %v1342
        %v2271 = vunpack.c.l.s8.bf16 %v1343
        %v2272 = vunpack.c.l.s8.bf16 %v1344
        %v2273 = vunpack.c.l.s8.bf16 %v1345
        %v2274 = vunpack.c.l.s8.bf16 %v1346
        %v2275 = vunpack.c.l.s8.bf16 %v1347
        %v2276 = vunpack.c.l.s8.bf16 %v1348
        %v2277 = vunpack.c.h.s8.bf16 %v1341
        %v2278 = vunpack.c.h.s8.bf16 %v1342
        %v2279 = vunpack.c.h.s8.bf16 %v1343
        %v2280 = vunpack.c.h.s8.bf16 %v1344
        %v2281 = vunpack.c.h.s8.bf16 %v1345
        %v2282 = vunpack.c.h.s8.bf16 %v1346
        %v2283 = vunpack.c.h.s8.bf16 %v1347
        %v2284 = vunpack.c.h.s8.bf16 %v1348
        %v2285 = vunpack.c.l.s8.bf16 %v1349
        %v2286 = vunpack.c.l.s8.bf16 %v1350
        %v2287 = vunpack.c.l.s8.bf16 %v1351
        %v2288 = vunpack.c.l.s8.bf16 %v1352
        %v2289 = vunpack.c.l.s8.bf16 %v1353
        %v2290 = vunpack.c.l.s8.bf16 %v1354
        %v2291 = vunpack.c.l.s8.bf16 %v1355
        %v2292 = vunpack.c.l.s8.bf16 %v1356
        %v2293 = vunpack.c.h.s8.bf16 %v1349
        %v2294 = vunpack.c.h.s8.bf16 %v1350
        %v2295 = vunpack.c.h.s8.bf16 %v1351
        %v2296 = vunpack.c.h.s8.bf16 %v1352
        %v2297 = vunpack.c.h.s8.bf16 %v1353
        %v2298 = vunpack.c.h.s8.bf16 %v1354
        %v2299 = vunpack.c.h.s8.bf16 %v1355
        %v2300 = vunpack.c.h.s8.bf16 %v1356
        %v2301 = vunpack.c.l.s8.bf16 %v1357
        %v2302 = vunpack.c.l.s8.bf16 %v1358
        %v2303 = vunpack.c.l.s8.bf16 %v1359
        %v2304 = vunpack.c.l.s8.bf16 %v1360
        %v2305 = vunpack.c.l.s8.bf16 %v1361
        %v2306 = vunpack.c.l.s8.bf16 %v1362
        %v2307 = vunpack.c.l.s8.bf16 %v1363
        %v2308 = vunpack.c.l.s8.bf16 %v1364
        %v2309 = vunpack.c.h.s8.bf16 %v1357
        %v2310 = vunpack.c.h.s8.bf16 %v1358
        %v2311 = vunpack.c.h.s8.bf16 %v1359
        %v2312 = vunpack.c.h.s8.bf16 %v1360
        %v2313 = vunpack.c.h.s8.bf16 %v1361
        %v2314 = vunpack.c.h.s8.bf16 %v1362
        %v2315 = vunpack.c.h.s8.bf16 %v1363
        %v2316 = vunpack.c.h.s8.bf16 %v1364
        %v2317 = vunpack.c.l.s8.bf16 %v1365
        %v2318 = vunpack.c.l.s8.bf16 %v1366
        %v2319 = vunpack.c.l.s8.bf16 %v1367
        %v2320 = vunpack.c.l.s8.bf16 %v1368
        %v2321 = vunpack.c.l.s8.bf16 %v1369
        %v2322 = vunpack.c.l.s8.bf16 %v1370
        %v2323 = vunpack.c.l.s8.bf16 %v1371
        %v2324 = vunpack.c.l.s8.bf16 %v1372
        %v2325 = vunpack.c.h.s8.bf16 %v1365
        %v2326 = vunpack.c.h.s8.bf16 %v1366
        %v2327 = vunpack.c.h.s8.bf16 %v1367
        %v2328 = vunpack.c.h.s8.bf16 %v1368
        %v2329 = vunpack.c.h.s8.bf16 %v1369
        %v2330 = vunpack.c.h.s8.bf16 %v1370
        %v2331 = vunpack.c.h.s8.bf16 %v1371
        %v2332 = vunpack.c.h.s8.bf16 %v1372
        %v2333 = vunpack.c.l.s8.bf16 %v1373
        %v2334 = vunpack.c.l.s8.bf16 %v1374
        %v2335 = vunpack.c.l.s8.bf16 %v1375
        %v2336 = vunpack.c.l.s8.bf16 %v1376
        %v2337 = vunpack.c.l.s8.bf16 %v1377
        %v2338 = vunpack.c.l.s8.bf16 %v1378
        %v2339 = vunpack.c.l.s8.bf16 %v1379
        %v2340 = vunpack.c.l.s8.bf16 %v1380
        %v2341 = vunpack.c.h.s8.bf16 %v1373
        %v2342 = vunpack.c.h.s8.bf16 %v1374
        %v2343 = vunpack.c.h.s8.bf16 %v1375
        %v2344 = vunpack.c.h.s8.bf16 %v1376
        %v2345 = vunpack.c.h.s8.bf16 %v1377
        %v2346 = vunpack.c.h.s8.bf16 %v1378
        %v2347 = vunpack.c.h.s8.bf16 %v1379
        %v2348 = vunpack.c.h.s8.bf16 %v1380
        %v2349 = vunpack.c.l.s8.bf16 %v1381
        %v2350 = vunpack.c.l.s8.bf16 %v1382
        %v2351 = vunpack.c.l.s8.bf16 %v1383
        %v2352 = vunpack.c.l.s8.bf16 %v1384
        %v2353 = vunpack.c.l.s8.bf16 %v1385
        %v2354 = vunpack.c.l.s8.bf16 %v1386
        %v2355 = vunpack.c.l.s8.bf16 %v1387
        %v2356 = vunpack.c.l.s8.bf16 %v1388
        %v2357 = vunpack.c.h.s8.bf16 %v1381
        %v2358 = vunpack.c.h.s8.bf16 %v1382
        %v2359 = vunpack.c.h.s8.bf16 %v1383
        %v2360 = vunpack.c.h.s8.bf16 %v1384
        %v2361 = vunpack.c.h.s8.bf16 %v1385
        %v2362 = vunpack.c.h.s8.bf16 %v1386
        %v2363 = vunpack.c.h.s8.bf16 %v1387
        %v2364 = vunpack.c.h.s8.bf16 %v1388
        %v2365 = vunpack.c.l.s8.bf16 %v1389
        %v2366 = vunpack.c.l.s8.bf16 %v1390
        %v2367 = vunpack.c.l.s8.bf16 %v1391
        %v2368 = vunpack.c.l.s8.bf16 %v1392
        %v2369 = vunpack.c.l.s8.bf16 %v1393
        %v2370 = vunpack.c.l.s8.bf16 %v1394
        %v2371 = vunpack.c.l.s8.bf16 %v1395
        %v2372 = vunpack.c.l.s8.bf16 %v1396
        %v2373 = vunpack.c.h.s8.bf16 %v1389
        %v2374 = vunpack.c.h.s8.bf16 %v1390
        %v2375 = vunpack.c.h.s8.bf16 %v1391
        %v2376 = vunpack.c.h.s8.bf16 %v1392
        %v2377 = vunpack.c.h.s8.bf16 %v1393
        %v2378 = vunpack.c.h.s8.bf16 %v1394
        %v2379 = vunpack.c.h.s8.bf16 %v1395
        %v2380 = vunpack.c.h.s8.bf16 %v1396
        %v2381 = vunpack.c.l.s8.bf16 %v1397
        %v2382 = vunpack.c.l.s8.bf16 %v1398
        %v2383 = vunpack.c.l.s8.bf16 %v1399
        %v2384 = vunpack.c.l.s8.bf16 %v1400
        %v2385 = vunpack.c.l.s8.bf16 %v1401
        %v2386 = vunpack.c.l.s8.bf16 %v1402
        %v2387 = vunpack.c.l.s8.bf16 %v1403
        %v2388 = vunpack.c.l.s8.bf16 %v1404
        %v2389 = vunpack.c.h.s8.bf16 %v1397
        %v2390 = vunpack.c.h.s8.bf16 %v1398
        %v2391 = vunpack.c.h.s8.bf16 %v1399
        %v2392 = vunpack.c.h.s8.bf16 %v1400
        %v2393 = vunpack.c.h.s8.bf16 %v1401
        %v2394 = vunpack.c.h.s8.bf16 %v1402
        %v2395 = vunpack.c.h.s8.bf16 %v1403
        %v2396 = vunpack.c.h.s8.bf16 %v1404
        %v2397 = vunpack.c.l.s8.bf16 %v1405
        %v2398 = vunpack.c.l.s8.bf16 %v1406
        %v2399 = vunpack.c.l.s8.bf16 %v1407
        %v2400 = vunpack.c.l.s8.bf16 %v1408
        %v2401 = vunpack.c.l.s8.bf16 %v1409
        %v2402 = vunpack.c.l.s8.bf16 %v1410
        %v2403 = vunpack.c.l.s8.bf16 %v1411
        %v2404 = vunpack.c.l.s8.bf16 %v1412
        %v2405 = vunpack.c.h.s8.bf16 %v1405
        %v2406 = vunpack.c.h.s8.bf16 %v1406
        %v2407 = vunpack.c.h.s8.bf16 %v1407
        %v2408 = vunpack.c.h.s8.bf16 %v1408
        %v2409 = vunpack.c.h.s8.bf16 %v1409
        %v2410 = vunpack.c.h.s8.bf16 %v1410
        %v2411 = vunpack.c.h.s8.bf16 %v1411
        %v2412 = vunpack.c.h.s8.bf16 %v1412
        %v2413 = vunpack.c.l.s8.bf16 %v1413
        %v2414 = vunpack.c.l.s8.bf16 %v1414
        %v2415 = vunpack.c.l.s8.bf16 %v1415
        %v2416 = vunpack.c.l.s8.bf16 %v1416
        %v2417 = vunpack.c.l.s8.bf16 %v1417
        %v2418 = vunpack.c.l.s8.bf16 %v1418
        %v2419 = vunpack.c.l.s8.bf16 %v1419
        %v2420 = vunpack.c.l.s8.bf16 %v1420
        %v2421 = vunpack.c.h.s8.bf16 %v1413
        %v2422 = vunpack.c.h.s8.bf16 %v1414
        %v2423 = vunpack.c.h.s8.bf16 %v1415
        %v2424 = vunpack.c.h.s8.bf16 %v1416
        %v2425 = vunpack.c.h.s8.bf16 %v1417
        %v2426 = vunpack.c.h.s8.bf16 %v1418
        %v2427 = vunpack.c.h.s8.bf16 %v1419
        %v2428 = vunpack.c.h.s8.bf16 %v1420
        %v2429 = vunpack.c.l.s8.bf16 %v1421
        %v2430 = vunpack.c.l.s8.bf16 %v1422
        %v2431 = vunpack.c.l.s8.bf16 %v1423
        %v2432 = vunpack.c.l.s8.bf16 %v1424
        %v2433 = vunpack.c.l.s8.bf16 %v1425
        %v2434 = vunpack.c.l.s8.bf16 %v1426
        %v2435 = vunpack.c.l.s8.bf16 %v1427
        %v2436 = vunpack.c.l.s8.bf16 %v1428
        %v2437 = vunpack.c.h.s8.bf16 %v1421
        %v2438 = vunpack.c.h.s8.bf16 %v1422
        %v2439 = vunpack.c.h.s8.bf16 %v1423
        %v2440 = vunpack.c.h.s8.bf16 %v1424
        %v2441 = vunpack.c.h.s8.bf16 %v1425
        %v2442 = vunpack.c.h.s8.bf16 %v1426
        %v2443 = vunpack.c.h.s8.bf16 %v1427
        %v2444 = vunpack.c.h.s8.bf16 %v1428
        %v2445 = vunpack.c.l.s8.bf16 %v1429
        %v2446 = vunpack.c.l.s8.bf16 %v1430
        %v2447 = vunpack.c.l.s8.bf16 %v1431
        %v2448 = vunpack.c.l.s8.bf16 %v1432
        %v2449 = vunpack.c.l.s8.bf16 %v1433
        %v2450 = vunpack.c.l.s8.bf16 %v1434
        %v2451 = vunpack.c.l.s8.bf16 %v1435
        %v2452 = vunpack.c.l.s8.bf16 %v1436
        %v2453 = vunpack.c.h.s8.bf16 %v1429
        %v2454 = vunpack.c.h.s8.bf16 %v1430
        %v2455 = vunpack.c.h.s8.bf16 %v1431
        %v2456 = vunpack.c.h.s8.bf16 %v1432
        %v2457 = vunpack.c.h.s8.bf16 %v1433
        %v2458 = vunpack.c.h.s8.bf16 %v1434
        %v2459 = vunpack.c.h.s8.bf16 %v1435
        %v2460 = vunpack.c.h.s8.bf16 %v1436
        %v2461 = vpack.c.bf16 %v885, %v885
        %v2462 = vpack.c.bf16 %v886, %v886
        %v2463 = vpack.c.bf16 %v887, %v887
        %v2464 = vpack.c.bf16 %v888, %v888
        %v2465 = vpack.c.bf16 %v889, %v889
        %v2466 = vpack.c.bf16 %v890, %v890
        %v2467 = vpack.c.bf16 %v891, %v891
        %v2468 = vpack.c.bf16 %v892, %v892
        %v2469 = vpack.c.bf16 %v893, %v893
        %v2470 = vpack.c.bf16 %v894, %v894
        %v2471 = vpack.c.bf16 %v895, %v895
        %v2472 = vpack.c.bf16 %v896, %v896
        %v2473 = vpack.c.bf16 %v897, %v897
        %v2474 = vpack.c.bf16 %v898, %v898
        %v2475 = vpack.c.bf16 %v899, %v899
        %v2476 = vpack.c.bf16 %v900, %v900
        %v2477 = vpack.c.bf16 %v901, %v901
        %v2478 = vpack.c.bf16 %v902, %v902
        %v2479 = vpack.c.bf16 %v903, %v903
        %v2480 = vpack.c.bf16 %v904, %v904
        %v2481 = vpack.c.bf16 %v905, %v905
        %v2482 = vpack.c.bf16 %v906, %v906
        %v2483 = vpack.c.bf16 %v907, %v907
        %v2484 = vpack.c.bf16 %v908, %v908
        %v2485 = vpack.c.bf16 %v909, %v909
        %v2486 = vpack.c.bf16 %v910, %v910
        %v2487 = vpack.c.bf16 %v911, %v911
        %v2488 = vpack.c.bf16 %v912, %v912
        %v2489 = vpack.c.bf16 %v913, %v913
        %v2490 = vpack.c.bf16 %v914, %v914
        %v2491 = vpack.c.bf16 %v915, %v915
        %v2492 = vpack.c.bf16 %v916, %v916
        %v2525 = vunpack.c.l.b16 %v2461
        %v2526 = vunpack.c.l.b16 %v2462
        %v2527 = vunpack.c.l.b16 %v2463
        %v2528 = vunpack.c.l.b16 %v2464
        %v2529 = vunpack.c.l.b16 %v2465
        %v2530 = vunpack.c.l.b16 %v2466
        %v2531 = vunpack.c.l.b16 %v2467
        %v2532 = vunpack.c.l.b16 %v2468
        %v2533 = vunpack.c.l.b16 %v2469
        %v2534 = vunpack.c.l.b16 %v2470
        %v2535 = vunpack.c.l.b16 %v2471
        %v2536 = vunpack.c.l.b16 %v2472
        %v2537 = vunpack.c.l.b16 %v2473
        %v2538 = vunpack.c.l.b16 %v2474
        %v2539 = vunpack.c.l.b16 %v2475
        %v2540 = vunpack.c.l.b16 %v2476
        %v2541 = vunpack.c.l.b16 %v2477
        %v2542 = vunpack.c.l.b16 %v2478
        %v2543 = vunpack.c.l.b16 %v2479
        %v2544 = vunpack.c.l.b16 %v2480
        %v2545 = vunpack.c.l.b16 %v2481
        %v2546 = vunpack.c.l.b16 %v2482
        %v2547 = vunpack.c.l.b16 %v2483
        %v2548 = vunpack.c.l.b16 %v2484
        %v2549 = vunpack.c.l.b16 %v2485
        %v2550 = vunpack.c.l.b16 %v2486
        %v2551 = vunpack.c.l.b16 %v2487
        %v2552 = vunpack.c.l.b16 %v2488
        %v2553 = vunpack.c.l.b16 %v2489
        %v2554 = vunpack.c.l.b16 %v2490
        %v2555 = vunpack.c.l.b16 %v2491
        %v2556 = vunpack.c.l.b16 %v2492
        %vm2557 = vcmask 1041409
        %v2558 = vsel %vm2557, %v2541, %v2525
        %v2559 = vsel %vm2557, %v2542, %v2526
        %v2560 = vsel %vm2557, %v2543, %v2527
        %v2561 = vsel %vm2557, %v2544, %v2528
        %v2562 = vsel %vm2557, %v2545, %v2529
        %v2563 = vsel %vm2557, %v2546, %v2530
        %v2564 = vsel %vm2557, %v2547, %v2531
        %v2565 = vsel %vm2557, %v2548, %v2532
        %v2566 = vsel %vm2557, %v2549, %v2533
        %v2567 = vsel %vm2557, %v2550, %v2534
        %v2568 = vsel %vm2557, %v2551, %v2535
        %v2569 = vsel %vm2557, %v2552, %v2536
        %v2570 = vsel %vm2557, %v2553, %v2537
        %v2571 = vsel %vm2557, %v2554, %v2538
        %v2572 = vsel %vm2557, %v2555, %v2539
        %v2573 = vsel %vm2557, %v2556, %v2540
        %v2574 = vpack.c.b16 %v2558, %v2558
        %v2575 = vpack.c.b16 %v2559, %v2559
        %v2576 = vpack.c.b16 %v2560, %v2560
        %v2577 = vpack.c.b16 %v2561, %v2561
        %v2578 = vpack.c.b16 %v2562, %v2562
        %v2579 = vpack.c.b16 %v2563, %v2563
        %v2580 = vpack.c.b16 %v2564, %v2564
        %v2581 = vpack.c.b16 %v2565, %v2565
        %v2582 = vpack.c.b16 %v2566, %v2566
        %v2583 = vpack.c.b16 %v2567, %v2567
        %v2584 = vpack.c.b16 %v2568, %v2568
        %v2585 = vpack.c.b16 %v2569, %v2569
        %v2586 = vpack.c.b16 %v2570, %v2570
        %v2587 = vpack.c.b16 %v2571, %v2571
        %v2588 = vpack.c.b16 %v2572, %v2572
        %v2589 = vpack.c.b16 %v2573, %v2573
        %2606 = vmatprep.subr.bf16.mxu0 %v1494
        %2607 = vmatpush1.bf16.msra.mxu0 %v1493
        %2608 = vmatprep.subr.bf16.mxu0 %v1486
        %2609 = vmatpush1.bf16.msra.mxu0 %v1485
        %2610 = vmatprep.subr.bf16.mxu0 %v1478
        %2611 = vmatpush1.bf16.msra.mxu0 %v1477
        %2612 = vmatprep.subr.bf16.mxu0 %v1470
        %2613 = vmatpush1.bf16.msra.mxu0 %v1469
        %2614 = vmatprep.subr.bf16.mxu0 %v1462
        %2615 = vmatpush1.bf16.msra.mxu0 %v1461
        %2616 = vmatprep.subr.bf16.mxu0 %v1454
        %2617 = vmatpush1.bf16.msra.mxu0 %v1453
        %2618 = vmatprep.subr.bf16.mxu0 %v1446
        %2619 = vmatpush1.bf16.msra.mxu0 %v1445
        %2620 = vmatprep.subr.bf16.mxu0 %v1438
        %2621 = vmatpush1.bf16.msra.mxu0 %v1437
        %2622 = vmatprep.subr.bf16.mxu0 %v1558
        %2623 = vmatpush2.bf16.msra.mxu0 %v1557
        %2624 = vmatprep.subr.bf16.mxu0 %v1550
        %2625 = vmatpush2.bf16.msra.mxu0 %v1549
        %2626 = vmatprep.subr.bf16.mxu0 %v1542
        %2627 = vmatpush2.bf16.msra.mxu0 %v1541
        %2628 = vmatprep.subr.bf16.mxu0 %v1534
        %2629 = vmatpush2.bf16.msra.mxu0 %v1533
        %2630 = vmatprep.subr.bf16.mxu0 %v1526
        %2631 = vmatpush2.bf16.msra.mxu0 %v1525
        %2632 = vmatprep.subr.bf16.mxu0 %v1518
        %2633 = vmatpush2.bf16.msra.mxu0 %v1517
        %2634 = vmatprep.subr.bf16.mxu0 %v1510
        %2635 = vmatpush2.bf16.msra.mxu0 %v1509
        %2636 = vmatprep.subr.bf16.mxu0 %v1502
        %2637 = vmatpush2.bf16.msra.mxu0 %v1501
        %2638 = vmatprep.mubr.bf16.mxu0 %v2575
        %2639 = vmatmul.mubr.bf16.gmra.mxu0 %v2574
        %v2640 = vpop.f32.mrf.mxu0
        %v2641 = vadd.f32 0.0, %v2640
        %v2642 = vpop.f32.mrf.mxu0
        %v2643 = vadd.f32 0.0, %v2642
        %v2644 = vpop.f32.mrf.mxu0
        %v2645 = vpop.f32.mrf.mxu0
        %2646 = vdwg.mxu0
        %2647 = vmatprep.subr.bf16.mxu0 %v1622
        %2648 = vmatpush1.bf16.msra.mxu0 %v1621
        %2649 = vmatprep.subr.bf16.mxu0 %v1614
        %2650 = vmatpush1.bf16.msra.mxu0 %v1613
        %2651 = vmatprep.subr.bf16.mxu0 %v1606
        %2652 = vmatpush1.bf16.msra.mxu0 %v1605
        %2653 = vmatprep.subr.bf16.mxu0 %v1598
        %2654 = vmatpush1.bf16.msra.mxu0 %v1597
        %2655 = vmatprep.subr.bf16.mxu0 %v1590
        %2656 = vmatpush1.bf16.msra.mxu0 %v1589
        %2657 = vmatprep.subr.bf16.mxu0 %v1582
        %2658 = vmatpush1.bf16.msra.mxu0 %v1581
        %2659 = vmatprep.subr.bf16.mxu0 %v1574
        %2660 = vmatpush1.bf16.msra.mxu0 %v1573
        %2661 = vmatprep.subr.bf16.mxu0 %v1566
        %2662 = vmatpush1.bf16.msra.mxu0 %v1565
        %2663 = vmatprep.subr.bf16.mxu0 %v1686
        %2664 = vmatpush2.bf16.msra.mxu0 %v1685
        %2665 = vmatprep.subr.bf16.mxu0 %v1678
        %2666 = vmatpush2.bf16.msra.mxu0 %v1677
        %2667 = vmatprep.subr.bf16.mxu0 %v1670
        %2668 = vmatpush2.bf16.msra.mxu0 %v1669
        %2669 = vmatprep.subr.bf16.mxu0 %v1662
        %2670 = vmatpush2.bf16.msra.mxu0 %v1661
        %2671 = vmatprep.subr.bf16.mxu0 %v1654
        %2672 = vmatpush2.bf16.msra.mxu0 %v1653
        %2673 = vmatprep.subr.bf16.mxu0 %v1646
        %2674 = vmatpush2.bf16.msra.mxu0 %v1645
        %2675 = vmatprep.subr.bf16.mxu0 %v1638
        %2676 = vmatpush2.bf16.msra.mxu0 %v1637
        %2677 = vmatprep.subr.bf16.mxu0 %v1630
        %2678 = vmatpush2.bf16.msra.mxu0 %v1629
        %2679 = vmatprep.mubr.bf16.mxu0 %v2577
        %2680 = vmatmul.mubr.bf16.gmra.mxu0 %v2576
        %v2681 = vpop.f32.mrf.mxu0
        %v2682 = vadd.f32 %v2641, %v2681
        %v2683 = vpop.f32.mrf.mxu0
        %v2684 = vadd.f32 %v2643, %v2683
        %v2685 = vpop.f32.mrf.mxu0
        %v2686 = vpop.f32.mrf.mxu0
        %2687 = vdwg.mxu0
        %2688 = vmatprep.subr.bf16.mxu0 %v1750
        %2689 = vmatpush1.bf16.msra.mxu0 %v1749
        %2690 = vmatprep.subr.bf16.mxu0 %v1742
        %2691 = vmatpush1.bf16.msra.mxu0 %v1741
        %2692 = vmatprep.subr.bf16.mxu0 %v1734
        %2693 = vmatpush1.bf16.msra.mxu0 %v1733
        %2694 = vmatprep.subr.bf16.mxu0 %v1726
        %2695 = vmatpush1.bf16.msra.mxu0 %v1725
        %2696 = vmatprep.subr.bf16.mxu0 %v1718
        %2697 = vmatpush1.bf16.msra.mxu0 %v1717
        %2698 = vmatprep.subr.bf16.mxu0 %v1710
        %2699 = vmatpush1.bf16.msra.mxu0 %v1709
        %2700 = vmatprep.subr.bf16.mxu0 %v1702
        %2701 = vmatpush1.bf16.msra.mxu0 %v1701
        %2702 = vmatprep.subr.bf16.mxu0 %v1694
        %2703 = vmatpush1.bf16.msra.mxu0 %v1693
        %2704 = vmatprep.subr.bf16.mxu0 %v1814
        %2705 = vmatpush2.bf16.msra.mxu0 %v1813
        %2706 = vmatprep.subr.bf16.mxu0 %v1806
        %2707 = vmatpush2.bf16.msra.mxu0 %v1805
        %2708 = vmatprep.subr.bf16.mxu0 %v1798
        %2709 = vmatpush2.bf16.msra.mxu0 %v1797
        %2710 = vmatprep.subr.bf16.mxu0 %v1790
        %2711 = vmatpush2.bf16.msra.mxu0 %v1789
        %2712 = vmatprep.subr.bf16.mxu0 %v1782
        %2713 = vmatpush2.bf16.msra.mxu0 %v1781
        %2714 = vmatprep.subr.bf16.mxu0 %v1774
        %2715 = vmatpush2.bf16.msra.mxu0 %v1773
        %2716 = vmatprep.subr.bf16.mxu0 %v1766
        %2717 = vmatpush2.bf16.msra.mxu0 %v1765
        %2718 = vmatprep.subr.bf16.mxu0 %v1758
        %2719 = vmatpush2.bf16.msra.mxu0 %v1757
        %2720 = vmatprep.mubr.bf16.mxu0 %v2579
        %2721 = vmatmul.mubr.bf16.gmra.mxu0 %v2578
        %v2722 = vpop.f32.mrf.mxu0
        %v2723 = vadd.f32 %v2682, %v2722
        %v2724 = vpop.f32.mrf.mxu0
        %v2725 = vadd.f32 %v2684, %v2724
        %v2726 = vpop.f32.mrf.mxu0
        %v2727 = vpop.f32.mrf.mxu0
        %2728 = vdwg.mxu0
        %2729 = vmatprep.subr.bf16.mxu0 %v1878
        %2730 = vmatpush1.bf16.msra.mxu0 %v1877
        %2731 = vmatprep.subr.bf16.mxu0 %v1870
        %2732 = vmatpush1.bf16.msra.mxu0 %v1869
        %2733 = vmatprep.subr.bf16.mxu0 %v1862
        %2734 = vmatpush1.bf16.msra.mxu0 %v1861
        %2735 = vmatprep.subr.bf16.mxu0 %v1854
        %2736 = vmatpush1.bf16.msra.mxu0 %v1853
        %2737 = vmatprep.subr.bf16.mxu0 %v1846
        %2738 = vmatpush1.bf16.msra.mxu0 %v1845
        %2739 = vmatprep.subr.bf16.mxu0 %v1838
        %2740 = vmatpush1.bf16.msra.mxu0 %v1837
        %2741 = vmatprep.subr.bf16.mxu0 %v1830
        %2742 = vmatpush1.bf16.msra.mxu0 %v1829
        %2743 = vmatprep.subr.bf16.mxu0 %v1822
        %2744 = vmatpush1.bf16.msra.mxu0 %v1821
        %2745 = vmatprep.subr.bf16.mxu0 %v1942
        %2746 = vmatpush2.bf16.msra.mxu0 %v1941
        %2747 = vmatprep.subr.bf16.mxu0 %v1934
        %2748 = vmatpush2.bf16.msra.mxu0 %v1933
        %2749 = vmatprep.subr.bf16.mxu0 %v1926
        %2750 = vmatpush2.bf16.msra.mxu0 %v1925
        %2751 = vmatprep.subr.bf16.mxu0 %v1918
        %2752 = vmatpush2.bf16.msra.mxu0 %v1917
        %2753 = vmatprep.subr.bf16.mxu0 %v1910
        %2754 = vmatpush2.bf16.msra.mxu0 %v1909
        %2755 = vmatprep.subr.bf16.mxu0 %v1902
        %2756 = vmatpush2.bf16.msra.mxu0 %v1901
        %2757 = vmatprep.subr.bf16.mxu0 %v1894
        %2758 = vmatpush2.bf16.msra.mxu0 %v1893
        %2759 = vmatprep.subr.bf16.mxu0 %v1886
        %2760 = vmatpush2.bf16.msra.mxu0 %v1885
        %2761 = vmatprep.mubr.bf16.mxu0 %v2581
        %2762 = vmatmul.mubr.bf16.gmra.mxu0 %v2580
        %v2763 = vpop.f32.mrf.mxu0
        %v2764 = vadd.f32 %v2723, %v2763
        %v2765 = vpop.f32.mrf.mxu0
        %v2766 = vadd.f32 %v2725, %v2765
        %v2767 = vpop.f32.mrf.mxu0
        %v2768 = vpop.f32.mrf.mxu0
        %2769 = vdwg.mxu0
        %2770 = vmatprep.subr.bf16.mxu0 %v2006
        %2771 = vmatpush1.bf16.msra.mxu0 %v2005
        %2772 = vmatprep.subr.bf16.mxu0 %v1998
        %2773 = vmatpush1.bf16.msra.mxu0 %v1997
        %2774 = vmatprep.subr.bf16.mxu0 %v1990
        %2775 = vmatpush1.bf16.msra.mxu0 %v1989
        %2776 = vmatprep.subr.bf16.mxu0 %v1982
        %2777 = vmatpush1.bf16.msra.mxu0 %v1981
        %2778 = vmatprep.subr.bf16.mxu0 %v1974
        %2779 = vmatpush1.bf16.msra.mxu0 %v1973
        %2780 = vmatprep.subr.bf16.mxu0 %v1966
        %2781 = vmatpush1.bf16.msra.mxu0 %v1965
        %2782 = vmatprep.subr.bf16.mxu0 %v1958
        %2783 = vmatpush1.bf16.msra.mxu0 %v1957
        %2784 = vmatprep.subr.bf16.mxu0 %v1950
        %2785 = vmatpush1.bf16.msra.mxu0 %v1949
        %2786 = vmatprep.subr.bf16.mxu0 %v2070
        %2787 = vmatpush2.bf16.msra.mxu0 %v2069
        %2788 = vmatprep.subr.bf16.mxu0 %v2062
        %2789 = vmatpush2.bf16.msra.mxu0 %v2061
        %2790 = vmatprep.subr.bf16.mxu0 %v2054
        %2791 = vmatpush2.bf16.msra.mxu0 %v2053
        %2792 = vmatprep.subr.bf16.mxu0 %v2046
        %2793 = vmatpush2.bf16.msra.mxu0 %v2045
        %2794 = vmatprep.subr.bf16.mxu0 %v2038
        %2795 = vmatpush2.bf16.msra.mxu0 %v2037
        %2796 = vmatprep.subr.bf16.mxu0 %v2030
        %2797 = vmatpush2.bf16.msra.mxu0 %v2029
        %2798 = vmatprep.subr.bf16.mxu0 %v2022
        %2799 = vmatpush2.bf16.msra.mxu0 %v2021
        %2800 = vmatprep.subr.bf16.mxu0 %v2014
        %2801 = vmatpush2.bf16.msra.mxu0 %v2013
        %2802 = vmatprep.mubr.bf16.mxu0 %v2583
        %2803 = vmatmul.mubr.bf16.gmra.mxu0 %v2582
        %v2804 = vpop.f32.mrf.mxu0
        %v2805 = vadd.f32 %v2764, %v2804
        %v2806 = vpop.f32.mrf.mxu0
        %v2807 = vadd.f32 %v2766, %v2806
        %v2808 = vpop.f32.mrf.mxu0
        %v2809 = vpop.f32.mrf.mxu0
        %2810 = vdwg.mxu0
        %2811 = vmatprep.subr.bf16.mxu0 %v2134
        %2812 = vmatpush1.bf16.msra.mxu0 %v2133
        %2813 = vmatprep.subr.bf16.mxu0 %v2126
        %2814 = vmatpush1.bf16.msra.mxu0 %v2125
        %2815 = vmatprep.subr.bf16.mxu0 %v2118
        %2816 = vmatpush1.bf16.msra.mxu0 %v2117
        %2817 = vmatprep.subr.bf16.mxu0 %v2110
        %2818 = vmatpush1.bf16.msra.mxu0 %v2109
        %2819 = vmatprep.subr.bf16.mxu0 %v2102
        %2820 = vmatpush1.bf16.msra.mxu0 %v2101
        %2821 = vmatprep.subr.bf16.mxu0 %v2094
        %2822 = vmatpush1.bf16.msra.mxu0 %v2093
        %2823 = vmatprep.subr.bf16.mxu0 %v2086
        %2824 = vmatpush1.bf16.msra.mxu0 %v2085
        %2825 = vmatprep.subr.bf16.mxu0 %v2078
        %2826 = vmatpush1.bf16.msra.mxu0 %v2077
        %2827 = vmatprep.subr.bf16.mxu0 %v2198
        %2828 = vmatpush2.bf16.msra.mxu0 %v2197
        %2829 = vmatprep.subr.bf16.mxu0 %v2190
        %2830 = vmatpush2.bf16.msra.mxu0 %v2189
        %2831 = vmatprep.subr.bf16.mxu0 %v2182
        %2832 = vmatpush2.bf16.msra.mxu0 %v2181
        %2833 = vmatprep.subr.bf16.mxu0 %v2174
        %2834 = vmatpush2.bf16.msra.mxu0 %v2173
        %2835 = vmatprep.subr.bf16.mxu0 %v2166
        %2836 = vmatpush2.bf16.msra.mxu0 %v2165
        %2837 = vmatprep.subr.bf16.mxu0 %v2158
        %2838 = vmatpush2.bf16.msra.mxu0 %v2157
        %2839 = vmatprep.subr.bf16.mxu0 %v2150
        %2840 = vmatpush2.bf16.msra.mxu0 %v2149
        %2841 = vmatprep.subr.bf16.mxu0 %v2142
        %2842 = vmatpush2.bf16.msra.mxu0 %v2141
        %2843 = vmatprep.mubr.bf16.mxu0 %v2585
        %2844 = vmatmul.mubr.bf16.gmra.mxu0 %v2584
        %v2845 = vpop.f32.mrf.mxu0
        %v2846 = vadd.f32 %v2805, %v2845
        %v2847 = vpop.f32.mrf.mxu0
        %v2848 = vadd.f32 %v2807, %v2847
        %v2849 = vpop.f32.mrf.mxu0
        %v2850 = vpop.f32.mrf.mxu0
        %2851 = vdwg.mxu0
        %2852 = vmatprep.subr.bf16.mxu0 %v2262
        %2853 = vmatpush1.bf16.msra.mxu0 %v2261
        %2854 = vmatprep.subr.bf16.mxu0 %v2254
        %2855 = vmatpush1.bf16.msra.mxu0 %v2253
        %2856 = vmatprep.subr.bf16.mxu0 %v2246
        %2857 = vmatpush1.bf16.msra.mxu0 %v2245
        %2858 = vmatprep.subr.bf16.mxu0 %v2238
        %2859 = vmatpush1.bf16.msra.mxu0 %v2237
        %2860 = vmatprep.subr.bf16.mxu0 %v2230
        %2861 = vmatpush1.bf16.msra.mxu0 %v2229
        %2862 = vmatprep.subr.bf16.mxu0 %v2222
        %2863 = vmatpush1.bf16.msra.mxu0 %v2221
        %2864 = vmatprep.subr.bf16.mxu0 %v2214
        %2865 = vmatpush1.bf16.msra.mxu0 %v2213
        %2866 = vmatprep.subr.bf16.mxu0 %v2206
        %2867 = vmatpush1.bf16.msra.mxu0 %v2205
        %2868 = vmatprep.subr.bf16.mxu0 %v2326
        %2869 = vmatpush2.bf16.msra.mxu0 %v2325
        %2870 = vmatprep.subr.bf16.mxu0 %v2318
        %2871 = vmatpush2.bf16.msra.mxu0 %v2317
        %2872 = vmatprep.subr.bf16.mxu0 %v2310
        %2873 = vmatpush2.bf16.msra.mxu0 %v2309
        %2874 = vmatprep.subr.bf16.mxu0 %v2302
        %2875 = vmatpush2.bf16.msra.mxu0 %v2301
        %2876 = vmatprep.subr.bf16.mxu0 %v2294
        %2877 = vmatpush2.bf16.msra.mxu0 %v2293
        %2878 = vmatprep.subr.bf16.mxu0 %v2286
        %2879 = vmatpush2.bf16.msra.mxu0 %v2285
        %2880 = vmatprep.subr.bf16.mxu0 %v2278
        %2881 = vmatpush2.bf16.msra.mxu0 %v2277
        %2882 = vmatprep.subr.bf16.mxu0 %v2270
        %2883 = vmatpush2.bf16.msra.mxu0 %v2269
        %2884 = vmatprep.mubr.bf16.mxu0 %v2587
        %2885 = vmatmul.mubr.bf16.gmra.mxu0 %v2586
        %v2886 = vpop.f32.mrf.mxu0
        %v2887 = vadd.f32 %v2846, %v2886
        %v2888 = vpop.f32.mrf.mxu0
        %v2889 = vadd.f32 %v2848, %v2888
        %v2890 = vpop.f32.mrf.mxu0
        %v2891 = vpop.f32.mrf.mxu0
        %2892 = vdwg.mxu0
        %2893 = vmatprep.subr.bf16.mxu0 %v2390
        %2894 = vmatpush1.bf16.msra.mxu0 %v2389
        %2895 = vmatprep.subr.bf16.mxu0 %v2382
        %2896 = vmatpush1.bf16.msra.mxu0 %v2381
        %2897 = vmatprep.subr.bf16.mxu0 %v2374
        %2898 = vmatpush1.bf16.msra.mxu0 %v2373
        %2899 = vmatprep.subr.bf16.mxu0 %v2366
        %2900 = vmatpush1.bf16.msra.mxu0 %v2365
        %2901 = vmatprep.subr.bf16.mxu0 %v2358
        %2902 = vmatpush1.bf16.msra.mxu0 %v2357
        %2903 = vmatprep.subr.bf16.mxu0 %v2350
        %2904 = vmatpush1.bf16.msra.mxu0 %v2349
        %2905 = vmatprep.subr.bf16.mxu0 %v2342
        %2906 = vmatpush1.bf16.msra.mxu0 %v2341
        %2907 = vmatprep.subr.bf16.mxu0 %v2334
        %2908 = vmatpush1.bf16.msra.mxu0 %v2333
        %2909 = vmatprep.subr.bf16.mxu0 %v2454
        %2910 = vmatpush2.bf16.msra.mxu0 %v2453
        %2911 = vmatprep.subr.bf16.mxu0 %v2446
        %2912 = vmatpush2.bf16.msra.mxu0 %v2445
        %2913 = vmatprep.subr.bf16.mxu0 %v2438
        %2914 = vmatpush2.bf16.msra.mxu0 %v2437
        %2915 = vmatprep.subr.bf16.mxu0 %v2430
        %2916 = vmatpush2.bf16.msra.mxu0 %v2429
        %2917 = vmatprep.subr.bf16.mxu0 %v2422
        %2918 = vmatpush2.bf16.msra.mxu0 %v2421
        %2919 = vmatprep.subr.bf16.mxu0 %v2414
        %2920 = vmatpush2.bf16.msra.mxu0 %v2413
        %2921 = vmatprep.subr.bf16.mxu0 %v2406
        %2922 = vmatpush2.bf16.msra.mxu0 %v2405
        %2923 = vmatprep.subr.bf16.mxu0 %v2398
        %2924 = vmatpush2.bf16.msra.mxu0 %v2397
        %2925 = vmatprep.mubr.bf16.mxu0 %v2589
        %2926 = vmatmul.mubr.bf16.gmra.mxu0 %v2588
        %v2927 = vpop.f32.mrf.mxu0
        %v2928 = vadd.f32 %v2887, %v2927
        %v2929 = vpop.f32.mrf.mxu0
        %v2930 = vadd.f32 %v2889, %v2929
        %v2931 = vpop.f32.mrf.mxu0
        %v2932 = vpop.f32.mrf.mxu0
        %2933 = vdwg.mxu0
        %2934 = vmatprep.subr.bf16.mxu0 %v1496
        %2935 = vmatpush1.bf16.msra.mxu0 %v1495
        %2936 = vmatprep.subr.bf16.mxu0 %v1488
        %2937 = vmatpush1.bf16.msra.mxu0 %v1487
        %2938 = vmatprep.subr.bf16.mxu0 %v1480
        %2939 = vmatpush1.bf16.msra.mxu0 %v1479
        %2940 = vmatprep.subr.bf16.mxu0 %v1472
        %2941 = vmatpush1.bf16.msra.mxu0 %v1471
        %2942 = vmatprep.subr.bf16.mxu0 %v1464
        %2943 = vmatpush1.bf16.msra.mxu0 %v1463
        %2944 = vmatprep.subr.bf16.mxu0 %v1456
        %2945 = vmatpush1.bf16.msra.mxu0 %v1455
        %2946 = vmatprep.subr.bf16.mxu0 %v1448
        %2947 = vmatpush1.bf16.msra.mxu0 %v1447
        %2948 = vmatprep.subr.bf16.mxu0 %v1440
        %2949 = vmatpush1.bf16.msra.mxu0 %v1439
        %2950 = vmatprep.subr.bf16.mxu0 %v1560
        %2951 = vmatpush2.bf16.msra.mxu0 %v1559
        %2952 = vmatprep.subr.bf16.mxu0 %v1552
        %2953 = vmatpush2.bf16.msra.mxu0 %v1551
        %2954 = vmatprep.subr.bf16.mxu0 %v1544
        %2955 = vmatpush2.bf16.msra.mxu0 %v1543
        %2956 = vmatprep.subr.bf16.mxu0 %v1536
        %2957 = vmatpush2.bf16.msra.mxu0 %v1535
        %2958 = vmatprep.subr.bf16.mxu0 %v1528
        %2959 = vmatpush2.bf16.msra.mxu0 %v1527
        %2960 = vmatprep.subr.bf16.mxu0 %v1520
        %2961 = vmatpush2.bf16.msra.mxu0 %v1519
        %2962 = vmatprep.subr.bf16.mxu0 %v1512
        %2963 = vmatpush2.bf16.msra.mxu0 %v1511
        %2964 = vmatprep.subr.bf16.mxu0 %v1504
        %2965 = vmatpush2.bf16.msra.mxu0 %v1503
        %2966 = vmatprep.mubr.bf16.mxu0 %v2575
        %2967 = vmatmul.mubr.bf16.gmra.mxu0 %v2574
        %v2968 = vpop.f32.mrf.mxu0
        %v2969 = vadd.f32 0.0, %v2968
        %v2970 = vpop.f32.mrf.mxu0
        %v2971 = vadd.f32 0.0, %v2970
        %v2972 = vpop.f32.mrf.mxu0
        %v2973 = vpop.f32.mrf.mxu0
        %2974 = vdwg.mxu0
        %2975 = vmatprep.subr.bf16.mxu0 %v1624
        %2976 = vmatpush1.bf16.msra.mxu0 %v1623
        %2977 = vmatprep.subr.bf16.mxu0 %v1616
        %2978 = vmatpush1.bf16.msra.mxu0 %v1615
        %2979 = vmatprep.subr.bf16.mxu0 %v1608
        %2980 = vmatpush1.bf16.msra.mxu0 %v1607
        %2981 = vmatprep.subr.bf16.mxu0 %v1600
        %2982 = vmatpush1.bf16.msra.mxu0 %v1599
        %2983 = vmatprep.subr.bf16.mxu0 %v1592
        %2984 = vmatpush1.bf16.msra.mxu0 %v1591
        %2985 = vmatprep.subr.bf16.mxu0 %v1584
        %2986 = vmatpush1.bf16.msra.mxu0 %v1583
        %2987 = vmatprep.subr.bf16.mxu0 %v1576
        %2988 = vmatpush1.bf16.msra.mxu0 %v1575
        %2989 = vmatprep.subr.bf16.mxu0 %v1568
        %2990 = vmatpush1.bf16.msra.mxu0 %v1567
        %2991 = vmatprep.subr.bf16.mxu0 %v1688
        %2992 = vmatpush2.bf16.msra.mxu0 %v1687
        %2993 = vmatprep.subr.bf16.mxu0 %v1680
        %2994 = vmatpush2.bf16.msra.mxu0 %v1679
        %2995 = vmatprep.subr.bf16.mxu0 %v1672
        %2996 = vmatpush2.bf16.msra.mxu0 %v1671
        %2997 = vmatprep.subr.bf16.mxu0 %v1664
        %2998 = vmatpush2.bf16.msra.mxu0 %v1663
        %2999 = vmatprep.subr.bf16.mxu0 %v1656
        %3000 = vmatpush2.bf16.msra.mxu0 %v1655
        %3001 = vmatprep.subr.bf16.mxu0 %v1648
        %3002 = vmatpush2.bf16.msra.mxu0 %v1647
        %3003 = vmatprep.subr.bf16.mxu0 %v1640
        %3004 = vmatpush2.bf16.msra.mxu0 %v1639
        %3005 = vmatprep.subr.bf16.mxu0 %v1632
        %3006 = vmatpush2.bf16.msra.mxu0 %v1631
        %3007 = vmatprep.mubr.bf16.mxu0 %v2577
        %3008 = vmatmul.mubr.bf16.gmra.mxu0 %v2576
        %v3009 = vpop.f32.mrf.mxu0
        %v3010 = vadd.f32 %v2969, %v3009
        %v3011 = vpop.f32.mrf.mxu0
        %v3012 = vadd.f32 %v2971, %v3011
        %v3013 = vpop.f32.mrf.mxu0
        %v3014 = vpop.f32.mrf.mxu0
        %3015 = vdwg.mxu0
        %3016 = vmatprep.subr.bf16.mxu0 %v1752
        %3017 = vmatpush1.bf16.msra.mxu0 %v1751
        %3018 = vmatprep.subr.bf16.mxu0 %v1744
        %3019 = vmatpush1.bf16.msra.mxu0 %v1743
        %3020 = vmatprep.subr.bf16.mxu0 %v1736
        %3021 = vmatpush1.bf16.msra.mxu0 %v1735
        %3022 = vmatprep.subr.bf16.mxu0 %v1728
        %3023 = vmatpush1.bf16.msra.mxu0 %v1727
        %3024 = vmatprep.subr.bf16.mxu0 %v1720
        %3025 = vmatpush1.bf16.msra.mxu0 %v1719
        %3026 = vmatprep.subr.bf16.mxu0 %v1712
        %3027 = vmatpush1.bf16.msra.mxu0 %v1711
        %3028 = vmatprep.subr.bf16.mxu0 %v1704
        %3029 = vmatpush1.bf16.msra.mxu0 %v1703
        %3030 = vmatprep.subr.bf16.mxu0 %v1696
        %3031 = vmatpush1.bf16.msra.mxu0 %v1695
        %3032 = vmatprep.subr.bf16.mxu0 %v1816
        %3033 = vmatpush2.bf16.msra.mxu0 %v1815
        %3034 = vmatprep.subr.bf16.mxu0 %v1808
        %3035 = vmatpush2.bf16.msra.mxu0 %v1807
        %3036 = vmatprep.subr.bf16.mxu0 %v1800
        %3037 = vmatpush2.bf16.msra.mxu0 %v1799
        %3038 = vmatprep.subr.bf16.mxu0 %v1792
        %3039 = vmatpush2.bf16.msra.mxu0 %v1791
        %3040 = vmatprep.subr.bf16.mxu0 %v1784
        %3041 = vmatpush2.bf16.msra.mxu0 %v1783
        %3042 = vmatprep.subr.bf16.mxu0 %v1776
        %3043 = vmatpush2.bf16.msra.mxu0 %v1775
        %3044 = vmatprep.subr.bf16.mxu0 %v1768
        %3045 = vmatpush2.bf16.msra.mxu0 %v1767
        %3046 = vmatprep.subr.bf16.mxu0 %v1760
        %3047 = vmatpush2.bf16.msra.mxu0 %v1759
        %3048 = vmatprep.mubr.bf16.mxu0 %v2579
        %3049 = vmatmul.mubr.bf16.gmra.mxu0 %v2578
        %v3050 = vpop.f32.mrf.mxu0
        %v3051 = vadd.f32 %v3010, %v3050
        %v3052 = vpop.f32.mrf.mxu0
        %v3053 = vadd.f32 %v3012, %v3052
        %v3054 = vpop.f32.mrf.mxu0
        %v3055 = vpop.f32.mrf.mxu0
        %3056 = vdwg.mxu0
        %3057 = vmatprep.subr.bf16.mxu0 %v1880
        %3058 = vmatpush1.bf16.msra.mxu0 %v1879
        %3059 = vmatprep.subr.bf16.mxu0 %v1872
        %3060 = vmatpush1.bf16.msra.mxu0 %v1871
        %3061 = vmatprep.subr.bf16.mxu0 %v1864
        %3062 = vmatpush1.bf16.msra.mxu0 %v1863
        %3063 = vmatprep.subr.bf16.mxu0 %v1856
        %3064 = vmatpush1.bf16.msra.mxu0 %v1855
        %3065 = vmatprep.subr.bf16.mxu0 %v1848
        %3066 = vmatpush1.bf16.msra.mxu0 %v1847
        %3067 = vmatprep.subr.bf16.mxu0 %v1840
        %3068 = vmatpush1.bf16.msra.mxu0 %v1839
        %3069 = vmatprep.subr.bf16.mxu0 %v1832
        %3070 = vmatpush1.bf16.msra.mxu0 %v1831
        %3071 = vmatprep.subr.bf16.mxu0 %v1824
        %3072 = vmatpush1.bf16.msra.mxu0 %v1823
        %3073 = vmatprep.subr.bf16.mxu0 %v1944
        %3074 = vmatpush2.bf16.msra.mxu0 %v1943
        %3075 = vmatprep.subr.bf16.mxu0 %v1936
        %3076 = vmatpush2.bf16.msra.mxu0 %v1935
        %3077 = vmatprep.subr.bf16.mxu0 %v1928
        %3078 = vmatpush2.bf16.msra.mxu0 %v1927
        %3079 = vmatprep.subr.bf16.mxu0 %v1920
        %3080 = vmatpush2.bf16.msra.mxu0 %v1919
        %3081 = vmatprep.subr.bf16.mxu0 %v1912
        %3082 = vmatpush2.bf16.msra.mxu0 %v1911
        %3083 = vmatprep.subr.bf16.mxu0 %v1904
        %3084 = vmatpush2.bf16.msra.mxu0 %v1903
        %3085 = vmatprep.subr.bf16.mxu0 %v1896
        %3086 = vmatpush2.bf16.msra.mxu0 %v1895
        %3087 = vmatprep.subr.bf16.mxu0 %v1888
        %3088 = vmatpush2.bf16.msra.mxu0 %v1887
        %3089 = vmatprep.mubr.bf16.mxu0 %v2581
        %3090 = vmatmul.mubr.bf16.gmra.mxu0 %v2580
        %v3091 = vpop.f32.mrf.mxu0
        %v3092 = vadd.f32 %v3051, %v3091
        %v3093 = vpop.f32.mrf.mxu0
        %v3094 = vadd.f32 %v3053, %v3093
        %v3095 = vpop.f32.mrf.mxu0
        %v3096 = vpop.f32.mrf.mxu0
        %3097 = vdwg.mxu0
        %3098 = vmatprep.subr.bf16.mxu0 %v2008
        %3099 = vmatpush1.bf16.msra.mxu0 %v2007
        %3100 = vmatprep.subr.bf16.mxu0 %v2000
        %3101 = vmatpush1.bf16.msra.mxu0 %v1999
        %3102 = vmatprep.subr.bf16.mxu0 %v1992
        %3103 = vmatpush1.bf16.msra.mxu0 %v1991
        %3104 = vmatprep.subr.bf16.mxu0 %v1984
        %3105 = vmatpush1.bf16.msra.mxu0 %v1983
        %3106 = vmatprep.subr.bf16.mxu0 %v1976
        %3107 = vmatpush1.bf16.msra.mxu0 %v1975
        %3108 = vmatprep.subr.bf16.mxu0 %v1968
        %3109 = vmatpush1.bf16.msra.mxu0 %v1967
        %3110 = vmatprep.subr.bf16.mxu0 %v1960
        %3111 = vmatpush1.bf16.msra.mxu0 %v1959
        %3112 = vmatprep.subr.bf16.mxu0 %v1952
        %3113 = vmatpush1.bf16.msra.mxu0 %v1951
        %3114 = vmatprep.subr.bf16.mxu0 %v2072
        %3115 = vmatpush2.bf16.msra.mxu0 %v2071
        %3116 = vmatprep.subr.bf16.mxu0 %v2064
        %3117 = vmatpush2.bf16.msra.mxu0 %v2063
        %3118 = vmatprep.subr.bf16.mxu0 %v2056
        %3119 = vmatpush2.bf16.msra.mxu0 %v2055
        %3120 = vmatprep.subr.bf16.mxu0 %v2048
        %3121 = vmatpush2.bf16.msra.mxu0 %v2047
        %3122 = vmatprep.subr.bf16.mxu0 %v2040
        %3123 = vmatpush2.bf16.msra.mxu0 %v2039
        %3124 = vmatprep.subr.bf16.mxu0 %v2032
        %3125 = vmatpush2.bf16.msra.mxu0 %v2031
        %3126 = vmatprep.subr.bf16.mxu0 %v2024
        %3127 = vmatpush2.bf16.msra.mxu0 %v2023
        %3128 = vmatprep.subr.bf16.mxu0 %v2016
        %3129 = vmatpush2.bf16.msra.mxu0 %v2015
        %3130 = vmatprep.mubr.bf16.mxu0 %v2583
        %3131 = vmatmul.mubr.bf16.gmra.mxu0 %v2582
        %v3132 = vpop.f32.mrf.mxu0
        %v3133 = vadd.f32 %v3092, %v3132
        %v3134 = vpop.f32.mrf.mxu0
        %v3135 = vadd.f32 %v3094, %v3134
        %v3136 = vpop.f32.mrf.mxu0
        %v3137 = vpop.f32.mrf.mxu0
        %3138 = vdwg.mxu0
        %3139 = vmatprep.subr.bf16.mxu0 %v2136
        %3140 = vmatpush1.bf16.msra.mxu0 %v2135
        %3141 = vmatprep.subr.bf16.mxu0 %v2128
        %3142 = vmatpush1.bf16.msra.mxu0 %v2127
        %3143 = vmatprep.subr.bf16.mxu0 %v2120
        %3144 = vmatpush1.bf16.msra.mxu0 %v2119
        %3145 = vmatprep.subr.bf16.mxu0 %v2112
        %3146 = vmatpush1.bf16.msra.mxu0 %v2111
        %3147 = vmatprep.subr.bf16.mxu0 %v2104
        %3148 = vmatpush1.bf16.msra.mxu0 %v2103
        %3149 = vmatprep.subr.bf16.mxu0 %v2096
        %3150 = vmatpush1.bf16.msra.mxu0 %v2095
        %3151 = vmatprep.subr.bf16.mxu0 %v2088
        %3152 = vmatpush1.bf16.msra.mxu0 %v2087
        %3153 = vmatprep.subr.bf16.mxu0 %v2080
        %3154 = vmatpush1.bf16.msra.mxu0 %v2079
        %3155 = vmatprep.subr.bf16.mxu0 %v2200
        %3156 = vmatpush2.bf16.msra.mxu0 %v2199
        %3157 = vmatprep.subr.bf16.mxu0 %v2192
        %3158 = vmatpush2.bf16.msra.mxu0 %v2191
        %3159 = vmatprep.subr.bf16.mxu0 %v2184
        %3160 = vmatpush2.bf16.msra.mxu0 %v2183
        %3161 = vmatprep.subr.bf16.mxu0 %v2176
        %3162 = vmatpush2.bf16.msra.mxu0 %v2175
        %3163 = vmatprep.subr.bf16.mxu0 %v2168
        %3164 = vmatpush2.bf16.msra.mxu0 %v2167
        %3165 = vmatprep.subr.bf16.mxu0 %v2160
        %3166 = vmatpush2.bf16.msra.mxu0 %v2159
        %3167 = vmatprep.subr.bf16.mxu0 %v2152
        %3168 = vmatpush2.bf16.msra.mxu0 %v2151
        %3169 = vmatprep.subr.bf16.mxu0 %v2144
        %3170 = vmatpush2.bf16.msra.mxu0 %v2143
        %3171 = vmatprep.mubr.bf16.mxu0 %v2585
        %3172 = vmatmul.mubr.bf16.gmra.mxu0 %v2584
        %v3173 = vpop.f32.mrf.mxu0
        %v3174 = vadd.f32 %v3133, %v3173
        %v3175 = vpop.f32.mrf.mxu0
        %v3176 = vadd.f32 %v3135, %v3175
        %v3177 = vpop.f32.mrf.mxu0
        %v3178 = vpop.f32.mrf.mxu0
        %3179 = vdwg.mxu0
        %3180 = vmatprep.subr.bf16.mxu0 %v2264
        %3181 = vmatpush1.bf16.msra.mxu0 %v2263
        %3182 = vmatprep.subr.bf16.mxu0 %v2256
        %3183 = vmatpush1.bf16.msra.mxu0 %v2255
        %3184 = vmatprep.subr.bf16.mxu0 %v2248
        %3185 = vmatpush1.bf16.msra.mxu0 %v2247
        %3186 = vmatprep.subr.bf16.mxu0 %v2240
        %3187 = vmatpush1.bf16.msra.mxu0 %v2239
        %3188 = vmatprep.subr.bf16.mxu0 %v2232
        %3189 = vmatpush1.bf16.msra.mxu0 %v2231
        %3190 = vmatprep.subr.bf16.mxu0 %v2224
        %3191 = vmatpush1.bf16.msra.mxu0 %v2223
        %3192 = vmatprep.subr.bf16.mxu0 %v2216
        %3193 = vmatpush1.bf16.msra.mxu0 %v2215
        %3194 = vmatprep.subr.bf16.mxu0 %v2208
        %3195 = vmatpush1.bf16.msra.mxu0 %v2207
        %3196 = vmatprep.subr.bf16.mxu0 %v2328
        %3197 = vmatpush2.bf16.msra.mxu0 %v2327
        %3198 = vmatprep.subr.bf16.mxu0 %v2320
        %3199 = vmatpush2.bf16.msra.mxu0 %v2319
        %3200 = vmatprep.subr.bf16.mxu0 %v2312
        %3201 = vmatpush2.bf16.msra.mxu0 %v2311
        %3202 = vmatprep.subr.bf16.mxu0 %v2304
        %3203 = vmatpush2.bf16.msra.mxu0 %v2303
        %3204 = vmatprep.subr.bf16.mxu0 %v2296
        %3205 = vmatpush2.bf16.msra.mxu0 %v2295
        %3206 = vmatprep.subr.bf16.mxu0 %v2288
        %3207 = vmatpush2.bf16.msra.mxu0 %v2287
        %3208 = vmatprep.subr.bf16.mxu0 %v2280
        %3209 = vmatpush2.bf16.msra.mxu0 %v2279
        %3210 = vmatprep.subr.bf16.mxu0 %v2272
        %3211 = vmatpush2.bf16.msra.mxu0 %v2271
        %3212 = vmatprep.mubr.bf16.mxu0 %v2587
        %3213 = vmatmul.mubr.bf16.gmra.mxu0 %v2586
        %v3214 = vpop.f32.mrf.mxu0
        %v3215 = vadd.f32 %v3174, %v3214
        %v3216 = vpop.f32.mrf.mxu0
        %v3217 = vadd.f32 %v3176, %v3216
        %v3218 = vpop.f32.mrf.mxu0
        %v3219 = vpop.f32.mrf.mxu0
        %3220 = vdwg.mxu0
        %3221 = vmatprep.subr.bf16.mxu0 %v2392
        %3222 = vmatpush1.bf16.msra.mxu0 %v2391
        %3223 = vmatprep.subr.bf16.mxu0 %v2384
        %3224 = vmatpush1.bf16.msra.mxu0 %v2383
        %3225 = vmatprep.subr.bf16.mxu0 %v2376
        %3226 = vmatpush1.bf16.msra.mxu0 %v2375
        %3227 = vmatprep.subr.bf16.mxu0 %v2368
        %3228 = vmatpush1.bf16.msra.mxu0 %v2367
        %3229 = vmatprep.subr.bf16.mxu0 %v2360
        %3230 = vmatpush1.bf16.msra.mxu0 %v2359
        %3231 = vmatprep.subr.bf16.mxu0 %v2352
        %3232 = vmatpush1.bf16.msra.mxu0 %v2351
        %3233 = vmatprep.subr.bf16.mxu0 %v2344
        %3234 = vmatpush1.bf16.msra.mxu0 %v2343
        %3235 = vmatprep.subr.bf16.mxu0 %v2336
        %3236 = vmatpush1.bf16.msra.mxu0 %v2335
        %3237 = vmatprep.subr.bf16.mxu0 %v2456
        %3238 = vmatpush2.bf16.msra.mxu0 %v2455
        %3239 = vmatprep.subr.bf16.mxu0 %v2448
        %3240 = vmatpush2.bf16.msra.mxu0 %v2447
        %3241 = vmatprep.subr.bf16.mxu0 %v2440
        %3242 = vmatpush2.bf16.msra.mxu0 %v2439
        %3243 = vmatprep.subr.bf16.mxu0 %v2432
        %3244 = vmatpush2.bf16.msra.mxu0 %v2431
        %3245 = vmatprep.subr.bf16.mxu0 %v2424
        %3246 = vmatpush2.bf16.msra.mxu0 %v2423
        %3247 = vmatprep.subr.bf16.mxu0 %v2416
        %3248 = vmatpush2.bf16.msra.mxu0 %v2415
        %3249 = vmatprep.subr.bf16.mxu0 %v2408
        %3250 = vmatpush2.bf16.msra.mxu0 %v2407
        %3251 = vmatprep.subr.bf16.mxu0 %v2400
        %3252 = vmatpush2.bf16.msra.mxu0 %v2399
        %3253 = vmatprep.mubr.bf16.mxu0 %v2589
        %3254 = vmatmul.mubr.bf16.gmra.mxu0 %v2588
        %v3255 = vpop.f32.mrf.mxu0
        %v3256 = vadd.f32 %v3215, %v3255
        %v3257 = vpop.f32.mrf.mxu0
        %v3258 = vadd.f32 %v3217, %v3257
        %v3259 = vpop.f32.mrf.mxu0
        %v3260 = vpop.f32.mrf.mxu0
        %3261 = vdwg.mxu0
        %3262 = vmatprep.subr.bf16.mxu0 %v1498
        %3263 = vmatpush1.bf16.msra.mxu0 %v1497
        %3264 = vmatprep.subr.bf16.mxu0 %v1490
        %3265 = vmatpush1.bf16.msra.mxu0 %v1489
        %3266 = vmatprep.subr.bf16.mxu0 %v1482
        %3267 = vmatpush1.bf16.msra.mxu0 %v1481
        %3268 = vmatprep.subr.bf16.mxu0 %v1474
        %3269 = vmatpush1.bf16.msra.mxu0 %v1473
        %3270 = vmatprep.subr.bf16.mxu0 %v1466
        %3271 = vmatpush1.bf16.msra.mxu0 %v1465
        %3272 = vmatprep.subr.bf16.mxu0 %v1458
        %3273 = vmatpush1.bf16.msra.mxu0 %v1457
        %3274 = vmatprep.subr.bf16.mxu0 %v1450
        %3275 = vmatpush1.bf16.msra.mxu0 %v1449
        %3276 = vmatprep.subr.bf16.mxu0 %v1442
        %3277 = vmatpush1.bf16.msra.mxu0 %v1441
        %3278 = vmatprep.subr.bf16.mxu0 %v1562
        %3279 = vmatpush2.bf16.msra.mxu0 %v1561
        %3280 = vmatprep.subr.bf16.mxu0 %v1554
        %3281 = vmatpush2.bf16.msra.mxu0 %v1553
        %3282 = vmatprep.subr.bf16.mxu0 %v1546
        %3283 = vmatpush2.bf16.msra.mxu0 %v1545
        %3284 = vmatprep.subr.bf16.mxu0 %v1538
        %3285 = vmatpush2.bf16.msra.mxu0 %v1537
        %3286 = vmatprep.subr.bf16.mxu0 %v1530
        %3287 = vmatpush2.bf16.msra.mxu0 %v1529
        %3288 = vmatprep.subr.bf16.mxu0 %v1522
        %3289 = vmatpush2.bf16.msra.mxu0 %v1521
        %3290 = vmatprep.subr.bf16.mxu0 %v1514
        %3291 = vmatpush2.bf16.msra.mxu0 %v1513
        %3292 = vmatprep.subr.bf16.mxu0 %v1506
        %3293 = vmatpush2.bf16.msra.mxu0 %v1505
        %3294 = vmatprep.mubr.bf16.mxu0 %v2575
        %3295 = vmatmul.mubr.bf16.gmra.mxu0 %v2574
        %v3296 = vpop.f32.mrf.mxu0
        %v3297 = vadd.f32 0.0, %v3296
        %v3298 = vpop.f32.mrf.mxu0
        %v3299 = vadd.f32 0.0, %v3298
        %v3300 = vpop.f32.mrf.mxu0
        %v3301 = vpop.f32.mrf.mxu0
        %3302 = vdwg.mxu0
        %3303 = vmatprep.subr.bf16.mxu0 %v1626
        %3304 = vmatpush1.bf16.msra.mxu0 %v1625
        %3305 = vmatprep.subr.bf16.mxu0 %v1618
        %3306 = vmatpush1.bf16.msra.mxu0 %v1617
        %3307 = vmatprep.subr.bf16.mxu0 %v1610
        %3308 = vmatpush1.bf16.msra.mxu0 %v1609
        %3309 = vmatprep.subr.bf16.mxu0 %v1602
        %3310 = vmatpush1.bf16.msra.mxu0 %v1601
        %3311 = vmatprep.subr.bf16.mxu0 %v1594
        %3312 = vmatpush1.bf16.msra.mxu0 %v1593
        %3313 = vmatprep.subr.bf16.mxu0 %v1586
        %3314 = vmatpush1.bf16.msra.mxu0 %v1585
        %3315 = vmatprep.subr.bf16.mxu0 %v1578
        %3316 = vmatpush1.bf16.msra.mxu0 %v1577
        %3317 = vmatprep.subr.bf16.mxu0 %v1570
        %3318 = vmatpush1.bf16.msra.mxu0 %v1569
        %3319 = vmatprep.subr.bf16.mxu0 %v1690
        %3320 = vmatpush2.bf16.msra.mxu0 %v1689
        %3321 = vmatprep.subr.bf16.mxu0 %v1682
        %3322 = vmatpush2.bf16.msra.mxu0 %v1681
        %3323 = vmatprep.subr.bf16.mxu0 %v1674
        %3324 = vmatpush2.bf16.msra.mxu0 %v1673
        %3325 = vmatprep.subr.bf16.mxu0 %v1666
        %3326 = vmatpush2.bf16.msra.mxu0 %v1665
        %3327 = vmatprep.subr.bf16.mxu0 %v1658
        %3328 = vmatpush2.bf16.msra.mxu0 %v1657
        %3329 = vmatprep.subr.bf16.mxu0 %v1650
        %3330 = vmatpush2.bf16.msra.mxu0 %v1649
        %3331 = vmatprep.subr.bf16.mxu0 %v1642
        %3332 = vmatpush2.bf16.msra.mxu0 %v1641
        %3333 = vmatprep.subr.bf16.mxu0 %v1634
        %3334 = vmatpush2.bf16.msra.mxu0 %v1633
        %3335 = vmatprep.mubr.bf16.mxu0 %v2577
        %3336 = vmatmul.mubr.bf16.gmra.mxu0 %v2576
        %v3337 = vpop.f32.mrf.mxu0
        %v3338 = vadd.f32 %v3297, %v3337
        %v3339 = vpop.f32.mrf.mxu0
        %v3340 = vadd.f32 %v3299, %v3339
        %v3341 = vpop.f32.mrf.mxu0
        %v3342 = vpop.f32.mrf.mxu0
        %3343 = vdwg.mxu0
        %3344 = vmatprep.subr.bf16.mxu0 %v1754
        %3345 = vmatpush1.bf16.msra.mxu0 %v1753
        %3346 = vmatprep.subr.bf16.mxu0 %v1746
        %3347 = vmatpush1.bf16.msra.mxu0 %v1745
        %3348 = vmatprep.subr.bf16.mxu0 %v1738
        %3349 = vmatpush1.bf16.msra.mxu0 %v1737
        %3350 = vmatprep.subr.bf16.mxu0 %v1730
        %3351 = vmatpush1.bf16.msra.mxu0 %v1729
        %3352 = vmatprep.subr.bf16.mxu0 %v1722
        %3353 = vmatpush1.bf16.msra.mxu0 %v1721
        %3354 = vmatprep.subr.bf16.mxu0 %v1714
        %3355 = vmatpush1.bf16.msra.mxu0 %v1713
        %3356 = vmatprep.subr.bf16.mxu0 %v1706
        %3357 = vmatpush1.bf16.msra.mxu0 %v1705
        %3358 = vmatprep.subr.bf16.mxu0 %v1698
        %3359 = vmatpush1.bf16.msra.mxu0 %v1697
        %3360 = vmatprep.subr.bf16.mxu0 %v1818
        %3361 = vmatpush2.bf16.msra.mxu0 %v1817
        %3362 = vmatprep.subr.bf16.mxu0 %v1810
        %3363 = vmatpush2.bf16.msra.mxu0 %v1809
        %3364 = vmatprep.subr.bf16.mxu0 %v1802
        %3365 = vmatpush2.bf16.msra.mxu0 %v1801
        %3366 = vmatprep.subr.bf16.mxu0 %v1794
        %3367 = vmatpush2.bf16.msra.mxu0 %v1793
        %3368 = vmatprep.subr.bf16.mxu0 %v1786
        %3369 = vmatpush2.bf16.msra.mxu0 %v1785
        %3370 = vmatprep.subr.bf16.mxu0 %v1778
        %3371 = vmatpush2.bf16.msra.mxu0 %v1777
        %3372 = vmatprep.subr.bf16.mxu0 %v1770
        %3373 = vmatpush2.bf16.msra.mxu0 %v1769
        %3374 = vmatprep.subr.bf16.mxu0 %v1762
        %3375 = vmatpush2.bf16.msra.mxu0 %v1761
        %3376 = vmatprep.mubr.bf16.mxu0 %v2579
        %3377 = vmatmul.mubr.bf16.gmra.mxu0 %v2578
        %v3378 = vpop.f32.mrf.mxu0
        %v3379 = vadd.f32 %v3338, %v3378
        %v3380 = vpop.f32.mrf.mxu0
        %v3381 = vadd.f32 %v3340, %v3380
        %v3382 = vpop.f32.mrf.mxu0
        %v3383 = vpop.f32.mrf.mxu0
        %3384 = vdwg.mxu0
        %3385 = vmatprep.subr.bf16.mxu0 %v1882
        %3386 = vmatpush1.bf16.msra.mxu0 %v1881
        %3387 = vmatprep.subr.bf16.mxu0 %v1874
        %3388 = vmatpush1.bf16.msra.mxu0 %v1873
        %3389 = vmatprep.subr.bf16.mxu0 %v1866
        %3390 = vmatpush1.bf16.msra.mxu0 %v1865
        %3391 = vmatprep.subr.bf16.mxu0 %v1858
        %3392 = vmatpush1.bf16.msra.mxu0 %v1857
        %3393 = vmatprep.subr.bf16.mxu0 %v1850
        %3394 = vmatpush1.bf16.msra.mxu0 %v1849
        %3395 = vmatprep.subr.bf16.mxu0 %v1842
        %3396 = vmatpush1.bf16.msra.mxu0 %v1841
        %3397 = vmatprep.subr.bf16.mxu0 %v1834
        %3398 = vmatpush1.bf16.msra.mxu0 %v1833
        %3399 = vmatprep.subr.bf16.mxu0 %v1826
        %3400 = vmatpush1.bf16.msra.mxu0 %v1825
        %3401 = vmatprep.subr.bf16.mxu0 %v1946
        %3402 = vmatpush2.bf16.msra.mxu0 %v1945
        %3403 = vmatprep.subr.bf16.mxu0 %v1938
        %3404 = vmatpush2.bf16.msra.mxu0 %v1937
        %3405 = vmatprep.subr.bf16.mxu0 %v1930
        %3406 = vmatpush2.bf16.msra.mxu0 %v1929
        %3407 = vmatprep.subr.bf16.mxu0 %v1922
        %3408 = vmatpush2.bf16.msra.mxu0 %v1921
        %3409 = vmatprep.subr.bf16.mxu0 %v1914
        %3410 = vmatpush2.bf16.msra.mxu0 %v1913
        %3411 = vmatprep.subr.bf16.mxu0 %v1906
        %3412 = vmatpush2.bf16.msra.mxu0 %v1905
        %3413 = vmatprep.subr.bf16.mxu0 %v1898
        %3414 = vmatpush2.bf16.msra.mxu0 %v1897
        %3415 = vmatprep.subr.bf16.mxu0 %v1890
        %3416 = vmatpush2.bf16.msra.mxu0 %v1889
        %3417 = vmatprep.mubr.bf16.mxu0 %v2581
        %3418 = vmatmul.mubr.bf16.gmra.mxu0 %v2580
        %v3419 = vpop.f32.mrf.mxu0
        %v3420 = vadd.f32 %v3379, %v3419
        %v3421 = vpop.f32.mrf.mxu0
        %v3422 = vadd.f32 %v3381, %v3421
        %v3423 = vpop.f32.mrf.mxu0
        %v3424 = vpop.f32.mrf.mxu0
        %3425 = vdwg.mxu0
        %3426 = vmatprep.subr.bf16.mxu0 %v2010
        %3427 = vmatpush1.bf16.msra.mxu0 %v2009
        %3428 = vmatprep.subr.bf16.mxu0 %v2002
        %3429 = vmatpush1.bf16.msra.mxu0 %v2001
        %3430 = vmatprep.subr.bf16.mxu0 %v1994
        %3431 = vmatpush1.bf16.msra.mxu0 %v1993
        %3432 = vmatprep.subr.bf16.mxu0 %v1986
        %3433 = vmatpush1.bf16.msra.mxu0 %v1985
        %3434 = vmatprep.subr.bf16.mxu0 %v1978
        %3435 = vmatpush1.bf16.msra.mxu0 %v1977
        %3436 = vmatprep.subr.bf16.mxu0 %v1970
        %3437 = vmatpush1.bf16.msra.mxu0 %v1969
        %3438 = vmatprep.subr.bf16.mxu0 %v1962
        %3439 = vmatpush1.bf16.msra.mxu0 %v1961
        %3440 = vmatprep.subr.bf16.mxu0 %v1954
        %3441 = vmatpush1.bf16.msra.mxu0 %v1953
        %3442 = vmatprep.subr.bf16.mxu0 %v2074
        %3443 = vmatpush2.bf16.msra.mxu0 %v2073
        %3444 = vmatprep.subr.bf16.mxu0 %v2066
        %3445 = vmatpush2.bf16.msra.mxu0 %v2065
        %3446 = vmatprep.subr.bf16.mxu0 %v2058
        %3447 = vmatpush2.bf16.msra.mxu0 %v2057
        %3448 = vmatprep.subr.bf16.mxu0 %v2050
        %3449 = vmatpush2.bf16.msra.mxu0 %v2049
        %3450 = vmatprep.subr.bf16.mxu0 %v2042
        %3451 = vmatpush2.bf16.msra.mxu0 %v2041
        %3452 = vmatprep.subr.bf16.mxu0 %v2034
        %3453 = vmatpush2.bf16.msra.mxu0 %v2033
        %3454 = vmatprep.subr.bf16.mxu0 %v2026
        %3455 = vmatpush2.bf16.msra.mxu0 %v2025
        %3456 = vmatprep.subr.bf16.mxu0 %v2018
        %3457 = vmatpush2.bf16.msra.mxu0 %v2017
        %3458 = vmatprep.mubr.bf16.mxu0 %v2583
        %3459 = vmatmul.mubr.bf16.gmra.mxu0 %v2582
        %v3460 = vpop.f32.mrf.mxu0
        %v3461 = vadd.f32 %v3420, %v3460
        %v3462 = vpop.f32.mrf.mxu0
        %v3463 = vadd.f32 %v3422, %v3462
        %v3464 = vpop.f32.mrf.mxu0
        %v3465 = vpop.f32.mrf.mxu0
        %3466 = vdwg.mxu0
        %3467 = vmatprep.subr.bf16.mxu0 %v2138
        %3468 = vmatpush1.bf16.msra.mxu0 %v2137
        %3469 = vmatprep.subr.bf16.mxu0 %v2130
        %3470 = vmatpush1.bf16.msra.mxu0 %v2129
        %3471 = vmatprep.subr.bf16.mxu0 %v2122
        %3472 = vmatpush1.bf16.msra.mxu0 %v2121
        %3473 = vmatprep.subr.bf16.mxu0 %v2114
        %3474 = vmatpush1.bf16.msra.mxu0 %v2113
        %3475 = vmatprep.subr.bf16.mxu0 %v2106
        %3476 = vmatpush1.bf16.msra.mxu0 %v2105
        %3477 = vmatprep.subr.bf16.mxu0 %v2098
        %3478 = vmatpush1.bf16.msra.mxu0 %v2097
        %3479 = vmatprep.subr.bf16.mxu0 %v2090
        %3480 = vmatpush1.bf16.msra.mxu0 %v2089
        %3481 = vmatprep.subr.bf16.mxu0 %v2082
        %3482 = vmatpush1.bf16.msra.mxu0 %v2081
        %3483 = vmatprep.subr.bf16.mxu0 %v2202
        %3484 = vmatpush2.bf16.msra.mxu0 %v2201
        %3485 = vmatprep.subr.bf16.mxu0 %v2194
        %3486 = vmatpush2.bf16.msra.mxu0 %v2193
        %3487 = vmatprep.subr.bf16.mxu0 %v2186
        %3488 = vmatpush2.bf16.msra.mxu0 %v2185
        %3489 = vmatprep.subr.bf16.mxu0 %v2178
        %3490 = vmatpush2.bf16.msra.mxu0 %v2177
        %3491 = vmatprep.subr.bf16.mxu0 %v2170
        %3492 = vmatpush2.bf16.msra.mxu0 %v2169
        %3493 = vmatprep.subr.bf16.mxu0 %v2162
        %3494 = vmatpush2.bf16.msra.mxu0 %v2161
        %3495 = vmatprep.subr.bf16.mxu0 %v2154
        %3496 = vmatpush2.bf16.msra.mxu0 %v2153
        %3497 = vmatprep.subr.bf16.mxu0 %v2146
        %3498 = vmatpush2.bf16.msra.mxu0 %v2145
        %3499 = vmatprep.mubr.bf16.mxu0 %v2585
        %3500 = vmatmul.mubr.bf16.gmra.mxu0 %v2584
        %v3501 = vpop.f32.mrf.mxu0
        %v3502 = vadd.f32 %v3461, %v3501
        %v3503 = vpop.f32.mrf.mxu0
        %v3504 = vadd.f32 %v3463, %v3503
        %v3505 = vpop.f32.mrf.mxu0
        %v3506 = vpop.f32.mrf.mxu0
        %3507 = vdwg.mxu0
        %3508 = vmatprep.subr.bf16.mxu0 %v2266
        %3509 = vmatpush1.bf16.msra.mxu0 %v2265
        %3510 = vmatprep.subr.bf16.mxu0 %v2258
        %3511 = vmatpush1.bf16.msra.mxu0 %v2257
        %3512 = vmatprep.subr.bf16.mxu0 %v2250
        %3513 = vmatpush1.bf16.msra.mxu0 %v2249
        %3514 = vmatprep.subr.bf16.mxu0 %v2242
        %3515 = vmatpush1.bf16.msra.mxu0 %v2241
        %3516 = vmatprep.subr.bf16.mxu0 %v2234
        %3517 = vmatpush1.bf16.msra.mxu0 %v2233
        %3518 = vmatprep.subr.bf16.mxu0 %v2226
        %3519 = vmatpush1.bf16.msra.mxu0 %v2225
        %3520 = vmatprep.subr.bf16.mxu0 %v2218
        %3521 = vmatpush1.bf16.msra.mxu0 %v2217
        %3522 = vmatprep.subr.bf16.mxu0 %v2210
        %3523 = vmatpush1.bf16.msra.mxu0 %v2209
        %3524 = vmatprep.subr.bf16.mxu0 %v2330
        %3525 = vmatpush2.bf16.msra.mxu0 %v2329
        %3526 = vmatprep.subr.bf16.mxu0 %v2322
        %3527 = vmatpush2.bf16.msra.mxu0 %v2321
        %3528 = vmatprep.subr.bf16.mxu0 %v2314
        %3529 = vmatpush2.bf16.msra.mxu0 %v2313
        %3530 = vmatprep.subr.bf16.mxu0 %v2306
        %3531 = vmatpush2.bf16.msra.mxu0 %v2305
        %3532 = vmatprep.subr.bf16.mxu0 %v2298
        %3533 = vmatpush2.bf16.msra.mxu0 %v2297
        %3534 = vmatprep.subr.bf16.mxu0 %v2290
        %3535 = vmatpush2.bf16.msra.mxu0 %v2289
        %3536 = vmatprep.subr.bf16.mxu0 %v2282
        %3537 = vmatpush2.bf16.msra.mxu0 %v2281
        %3538 = vmatprep.subr.bf16.mxu0 %v2274
        %3539 = vmatpush2.bf16.msra.mxu0 %v2273
        %3540 = vmatprep.mubr.bf16.mxu0 %v2587
        %3541 = vmatmul.mubr.bf16.gmra.mxu0 %v2586
        %v3542 = vpop.f32.mrf.mxu0
        %v3543 = vadd.f32 %v3502, %v3542
        %v3544 = vpop.f32.mrf.mxu0
        %v3545 = vadd.f32 %v3504, %v3544
        %v3546 = vpop.f32.mrf.mxu0
        %v3547 = vpop.f32.mrf.mxu0
        %3548 = vdwg.mxu0
        %3549 = vmatprep.subr.bf16.mxu0 %v2394
        %3550 = vmatpush1.bf16.msra.mxu0 %v2393
        %3551 = vmatprep.subr.bf16.mxu0 %v2386
        %3552 = vmatpush1.bf16.msra.mxu0 %v2385
        %3553 = vmatprep.subr.bf16.mxu0 %v2378
        %3554 = vmatpush1.bf16.msra.mxu0 %v2377
        %3555 = vmatprep.subr.bf16.mxu0 %v2370
        %3556 = vmatpush1.bf16.msra.mxu0 %v2369
        %3557 = vmatprep.subr.bf16.mxu0 %v2362
        %3558 = vmatpush1.bf16.msra.mxu0 %v2361
        %3559 = vmatprep.subr.bf16.mxu0 %v2354
        %3560 = vmatpush1.bf16.msra.mxu0 %v2353
        %3561 = vmatprep.subr.bf16.mxu0 %v2346
        %3562 = vmatpush1.bf16.msra.mxu0 %v2345
        %3563 = vmatprep.subr.bf16.mxu0 %v2338
        %3564 = vmatpush1.bf16.msra.mxu0 %v2337
        %3565 = vmatprep.subr.bf16.mxu0 %v2458
        %3566 = vmatpush2.bf16.msra.mxu0 %v2457
        %3567 = vmatprep.subr.bf16.mxu0 %v2450
        %3568 = vmatpush2.bf16.msra.mxu0 %v2449
        %3569 = vmatprep.subr.bf16.mxu0 %v2442
        %3570 = vmatpush2.bf16.msra.mxu0 %v2441
        %3571 = vmatprep.subr.bf16.mxu0 %v2434
        %3572 = vmatpush2.bf16.msra.mxu0 %v2433
        %3573 = vmatprep.subr.bf16.mxu0 %v2426
        %3574 = vmatpush2.bf16.msra.mxu0 %v2425
        %3575 = vmatprep.subr.bf16.mxu0 %v2418
        %3576 = vmatpush2.bf16.msra.mxu0 %v2417
        %3577 = vmatprep.subr.bf16.mxu0 %v2410
        %3578 = vmatpush2.bf16.msra.mxu0 %v2409
        %3579 = vmatprep.subr.bf16.mxu0 %v2402
        %3580 = vmatpush2.bf16.msra.mxu0 %v2401
        %3581 = vmatprep.mubr.bf16.mxu0 %v2589
        %3582 = vmatmul.mubr.bf16.gmra.mxu0 %v2588
        %v3583 = vpop.f32.mrf.mxu0
        %v3584 = vadd.f32 %v3543, %v3583
        %v3585 = vpop.f32.mrf.mxu0
        %v3586 = vadd.f32 %v3545, %v3585
        %v3587 = vpop.f32.mrf.mxu0
        %v3588 = vpop.f32.mrf.mxu0
        %3589 = vdwg.mxu0
        %3590 = vmatprep.subr.bf16.mxu0 %v1500
        %3591 = vmatpush1.bf16.msra.mxu0 %v1499
        %3592 = vmatprep.subr.bf16.mxu0 %v1492
        %3593 = vmatpush1.bf16.msra.mxu0 %v1491
        %3594 = vmatprep.subr.bf16.mxu0 %v1484
        %3595 = vmatpush1.bf16.msra.mxu0 %v1483
        %3596 = vmatprep.subr.bf16.mxu0 %v1476
        %3597 = vmatpush1.bf16.msra.mxu0 %v1475
        %3598 = vmatprep.subr.bf16.mxu0 %v1468
        %3599 = vmatpush1.bf16.msra.mxu0 %v1467
        %3600 = vmatprep.subr.bf16.mxu0 %v1460
        %3601 = vmatpush1.bf16.msra.mxu0 %v1459
        %3602 = vmatprep.subr.bf16.mxu0 %v1452
        %3603 = vmatpush1.bf16.msra.mxu0 %v1451
        %3604 = vmatprep.subr.bf16.mxu0 %v1444
        %3605 = vmatpush1.bf16.msra.mxu0 %v1443
        %3606 = vmatprep.subr.bf16.mxu0 %v1564
        %3607 = vmatpush2.bf16.msra.mxu0 %v1563
        %3608 = vmatprep.subr.bf16.mxu0 %v1556
        %3609 = vmatpush2.bf16.msra.mxu0 %v1555
        %3610 = vmatprep.subr.bf16.mxu0 %v1548
        %3611 = vmatpush2.bf16.msra.mxu0 %v1547
        %3612 = vmatprep.subr.bf16.mxu0 %v1540
        %3613 = vmatpush2.bf16.msra.mxu0 %v1539
        %3614 = vmatprep.subr.bf16.mxu0 %v1532
        %3615 = vmatpush2.bf16.msra.mxu0 %v1531
        %3616 = vmatprep.subr.bf16.mxu0 %v1524
        %3617 = vmatpush2.bf16.msra.mxu0 %v1523
        %3618 = vmatprep.subr.bf16.mxu0 %v1516
        %3619 = vmatpush2.bf16.msra.mxu0 %v1515
        %3620 = vmatprep.subr.bf16.mxu0 %v1508
        %3621 = vmatpush2.bf16.msra.mxu0 %v1507
        %3622 = vmatprep.mubr.bf16.mxu0 %v2575
        %3623 = vmatmul.mubr.bf16.gmra.mxu0 %v2574
        %v3624 = vpop.f32.mrf.mxu0
        %v3625 = vadd.f32 0.0, %v3624
        %v3626 = vpop.f32.mrf.mxu0
        %v3627 = vadd.f32 0.0, %v3626
        %v3628 = vpop.f32.mrf.mxu0
        %v3629 = vpop.f32.mrf.mxu0
        %3630 = vdwg.mxu0
        %3631 = vmatprep.subr.bf16.mxu0 %v1628
        %3632 = vmatpush1.bf16.msra.mxu0 %v1627
        %3633 = vmatprep.subr.bf16.mxu0 %v1620
        %3634 = vmatpush1.bf16.msra.mxu0 %v1619
        %3635 = vmatprep.subr.bf16.mxu0 %v1612
        %3636 = vmatpush1.bf16.msra.mxu0 %v1611
        %3637 = vmatprep.subr.bf16.mxu0 %v1604
        %3638 = vmatpush1.bf16.msra.mxu0 %v1603
        %3639 = vmatprep.subr.bf16.mxu0 %v1596
        %3640 = vmatpush1.bf16.msra.mxu0 %v1595
        %3641 = vmatprep.subr.bf16.mxu0 %v1588
        %3642 = vmatpush1.bf16.msra.mxu0 %v1587
        %3643 = vmatprep.subr.bf16.mxu0 %v1580
        %3644 = vmatpush1.bf16.msra.mxu0 %v1579
        %3645 = vmatprep.subr.bf16.mxu0 %v1572
        %3646 = vmatpush1.bf16.msra.mxu0 %v1571
        %3647 = vmatprep.subr.bf16.mxu0 %v1692
        %3648 = vmatpush2.bf16.msra.mxu0 %v1691
        %3649 = vmatprep.subr.bf16.mxu0 %v1684
        %3650 = vmatpush2.bf16.msra.mxu0 %v1683
        %3651 = vmatprep.subr.bf16.mxu0 %v1676
        %3652 = vmatpush2.bf16.msra.mxu0 %v1675
        %3653 = vmatprep.subr.bf16.mxu0 %v1668
        %3654 = vmatpush2.bf16.msra.mxu0 %v1667
        %3655 = vmatprep.subr.bf16.mxu0 %v1660
        %3656 = vmatpush2.bf16.msra.mxu0 %v1659
        %3657 = vmatprep.subr.bf16.mxu0 %v1652
        %3658 = vmatpush2.bf16.msra.mxu0 %v1651
        %3659 = vmatprep.subr.bf16.mxu0 %v1644
        %3660 = vmatpush2.bf16.msra.mxu0 %v1643
        %3661 = vmatprep.subr.bf16.mxu0 %v1636
        %3662 = vmatpush2.bf16.msra.mxu0 %v1635
        %3663 = vmatprep.mubr.bf16.mxu0 %v2577
        %3664 = vmatmul.mubr.bf16.gmra.mxu0 %v2576
        %v3665 = vpop.f32.mrf.mxu0
        %v3666 = vadd.f32 %v3625, %v3665
        %v3667 = vpop.f32.mrf.mxu0
        %v3668 = vadd.f32 %v3627, %v3667
        %v3669 = vpop.f32.mrf.mxu0
        %v3670 = vpop.f32.mrf.mxu0
        %3671 = vdwg.mxu0
        %3672 = vmatprep.subr.bf16.mxu0 %v1756
        %3673 = vmatpush1.bf16.msra.mxu0 %v1755
        %3674 = vmatprep.subr.bf16.mxu0 %v1748
        %3675 = vmatpush1.bf16.msra.mxu0 %v1747
        %3676 = vmatprep.subr.bf16.mxu0 %v1740
        %3677 = vmatpush1.bf16.msra.mxu0 %v1739
        %3678 = vmatprep.subr.bf16.mxu0 %v1732
        %3679 = vmatpush1.bf16.msra.mxu0 %v1731
        %3680 = vmatprep.subr.bf16.mxu0 %v1724
        %3681 = vmatpush1.bf16.msra.mxu0 %v1723
        %3682 = vmatprep.subr.bf16.mxu0 %v1716
        %3683 = vmatpush1.bf16.msra.mxu0 %v1715
        %3684 = vmatprep.subr.bf16.mxu0 %v1708
        %3685 = vmatpush1.bf16.msra.mxu0 %v1707
        %3686 = vmatprep.subr.bf16.mxu0 %v1700
        %3687 = vmatpush1.bf16.msra.mxu0 %v1699
        %3688 = vmatprep.subr.bf16.mxu0 %v1820
        %3689 = vmatpush2.bf16.msra.mxu0 %v1819
        %3690 = vmatprep.subr.bf16.mxu0 %v1812
        %3691 = vmatpush2.bf16.msra.mxu0 %v1811
        %3692 = vmatprep.subr.bf16.mxu0 %v1804
        %3693 = vmatpush2.bf16.msra.mxu0 %v1803
        %3694 = vmatprep.subr.bf16.mxu0 %v1796
        %3695 = vmatpush2.bf16.msra.mxu0 %v1795
        %3696 = vmatprep.subr.bf16.mxu0 %v1788
        %3697 = vmatpush2.bf16.msra.mxu0 %v1787
        %3698 = vmatprep.subr.bf16.mxu0 %v1780
        %3699 = vmatpush2.bf16.msra.mxu0 %v1779
        %3700 = vmatprep.subr.bf16.mxu0 %v1772
        %3701 = vmatpush2.bf16.msra.mxu0 %v1771
        %3702 = vmatprep.subr.bf16.mxu0 %v1764
        %3703 = vmatpush2.bf16.msra.mxu0 %v1763
        %3704 = vmatprep.mubr.bf16.mxu0 %v2579
        %3705 = vmatmul.mubr.bf16.gmra.mxu0 %v2578
        %v3706 = vpop.f32.mrf.mxu0
        %v3707 = vadd.f32 %v3666, %v3706
        %v3708 = vpop.f32.mrf.mxu0
        %v3709 = vadd.f32 %v3668, %v3708
        %v3710 = vpop.f32.mrf.mxu0
        %v3711 = vpop.f32.mrf.mxu0
        %3712 = vdwg.mxu0
        %3713 = vmatprep.subr.bf16.mxu0 %v1884
        %3714 = vmatpush1.bf16.msra.mxu0 %v1883
        %3715 = vmatprep.subr.bf16.mxu0 %v1876
        %3716 = vmatpush1.bf16.msra.mxu0 %v1875
        %3717 = vmatprep.subr.bf16.mxu0 %v1868
        %3718 = vmatpush1.bf16.msra.mxu0 %v1867
        %3719 = vmatprep.subr.bf16.mxu0 %v1860
        %3720 = vmatpush1.bf16.msra.mxu0 %v1859
        %3721 = vmatprep.subr.bf16.mxu0 %v1852
        %3722 = vmatpush1.bf16.msra.mxu0 %v1851
        %3723 = vmatprep.subr.bf16.mxu0 %v1844
        %3724 = vmatpush1.bf16.msra.mxu0 %v1843
        %3725 = vmatprep.subr.bf16.mxu0 %v1836
        %3726 = vmatpush1.bf16.msra.mxu0 %v1835
        %3727 = vmatprep.subr.bf16.mxu0 %v1828
        %3728 = vmatpush1.bf16.msra.mxu0 %v1827
        %3729 = vmatprep.subr.bf16.mxu0 %v1948
        %3730 = vmatpush2.bf16.msra.mxu0 %v1947
        %3731 = vmatprep.subr.bf16.mxu0 %v1940
        %3732 = vmatpush2.bf16.msra.mxu0 %v1939
        %3733 = vmatprep.subr.bf16.mxu0 %v1932
        %3734 = vmatpush2.bf16.msra.mxu0 %v1931
        %3735 = vmatprep.subr.bf16.mxu0 %v1924
        %3736 = vmatpush2.bf16.msra.mxu0 %v1923
        %3737 = vmatprep.subr.bf16.mxu0 %v1916
        %3738 = vmatpush2.bf16.msra.mxu0 %v1915
        %3739 = vmatprep.subr.bf16.mxu0 %v1908
        %3740 = vmatpush2.bf16.msra.mxu0 %v1907
        %3741 = vmatprep.subr.bf16.mxu0 %v1900
        %3742 = vmatpush2.bf16.msra.mxu0 %v1899
        %3743 = vmatprep.subr.bf16.mxu0 %v1892
        %3744 = vmatpush2.bf16.msra.mxu0 %v1891
        %3745 = vmatprep.mubr.bf16.mxu0 %v2581
        %3746 = vmatmul.mubr.bf16.gmra.mxu0 %v2580
        %v3747 = vpop.f32.mrf.mxu0
        %v3748 = vadd.f32 %v3707, %v3747
        %v3749 = vpop.f32.mrf.mxu0
        %v3750 = vadd.f32 %v3709, %v3749
        %v3751 = vpop.f32.mrf.mxu0
        %v3752 = vpop.f32.mrf.mxu0
        %3753 = vdwg.mxu0
        %3754 = vmatprep.subr.bf16.mxu0 %v2012
        %3755 = vmatpush1.bf16.msra.mxu0 %v2011
        %3756 = vmatprep.subr.bf16.mxu0 %v2004
        %3757 = vmatpush1.bf16.msra.mxu0 %v2003
        %3758 = vmatprep.subr.bf16.mxu0 %v1996
        %3759 = vmatpush1.bf16.msra.mxu0 %v1995
        %3760 = vmatprep.subr.bf16.mxu0 %v1988
        %3761 = vmatpush1.bf16.msra.mxu0 %v1987
        %3762 = vmatprep.subr.bf16.mxu0 %v1980
        %3763 = vmatpush1.bf16.msra.mxu0 %v1979
        %3764 = vmatprep.subr.bf16.mxu0 %v1972
        %3765 = vmatpush1.bf16.msra.mxu0 %v1971
        %3766 = vmatprep.subr.bf16.mxu0 %v1964
        %3767 = vmatpush1.bf16.msra.mxu0 %v1963
        %3768 = vmatprep.subr.bf16.mxu0 %v1956
        %3769 = vmatpush1.bf16.msra.mxu0 %v1955
        %3770 = vmatprep.subr.bf16.mxu0 %v2076
        %3771 = vmatpush2.bf16.msra.mxu0 %v2075
        %3772 = vmatprep.subr.bf16.mxu0 %v2068
        %3773 = vmatpush2.bf16.msra.mxu0 %v2067
        %3774 = vmatprep.subr.bf16.mxu0 %v2060
        %3775 = vmatpush2.bf16.msra.mxu0 %v2059
        %3776 = vmatprep.subr.bf16.mxu0 %v2052
        %3777 = vmatpush2.bf16.msra.mxu0 %v2051
        %3778 = vmatprep.subr.bf16.mxu0 %v2044
        %3779 = vmatpush2.bf16.msra.mxu0 %v2043
        %3780 = vmatprep.subr.bf16.mxu0 %v2036
        %3781 = vmatpush2.bf16.msra.mxu0 %v2035
        %3782 = vmatprep.subr.bf16.mxu0 %v2028
        %3783 = vmatpush2.bf16.msra.mxu0 %v2027
        %3784 = vmatprep.subr.bf16.mxu0 %v2020
        %3785 = vmatpush2.bf16.msra.mxu0 %v2019
        %3786 = vmatprep.mubr.bf16.mxu0 %v2583
        %3787 = vmatmul.mubr.bf16.gmra.mxu0 %v2582
        %v3788 = vpop.f32.mrf.mxu0
        %v3789 = vadd.f32 %v3748, %v3788
        %v3790 = vpop.f32.mrf.mxu0
        %v3791 = vadd.f32 %v3750, %v3790
        %v3792 = vpop.f32.mrf.mxu0
        %v3793 = vpop.f32.mrf.mxu0
        %3794 = vdwg.mxu0
        %3795 = vmatprep.subr.bf16.mxu0 %v2140
        %3796 = vmatpush1.bf16.msra.mxu0 %v2139
        %3797 = vmatprep.subr.bf16.mxu0 %v2132
        %3798 = vmatpush1.bf16.msra.mxu0 %v2131
        %3799 = vmatprep.subr.bf16.mxu0 %v2124
        %3800 = vmatpush1.bf16.msra.mxu0 %v2123
        %3801 = vmatprep.subr.bf16.mxu0 %v2116
        %3802 = vmatpush1.bf16.msra.mxu0 %v2115
        %3803 = vmatprep.subr.bf16.mxu0 %v2108
        %3804 = vmatpush1.bf16.msra.mxu0 %v2107
        %3805 = vmatprep.subr.bf16.mxu0 %v2100
        %3806 = vmatpush1.bf16.msra.mxu0 %v2099
        %3807 = vmatprep.subr.bf16.mxu0 %v2092
        %3808 = vmatpush1.bf16.msra.mxu0 %v2091
        %3809 = vmatprep.subr.bf16.mxu0 %v2084
        %3810 = vmatpush1.bf16.msra.mxu0 %v2083
        %3811 = vmatprep.subr.bf16.mxu0 %v2204
        %3812 = vmatpush2.bf16.msra.mxu0 %v2203
        %3813 = vmatprep.subr.bf16.mxu0 %v2196
        %3814 = vmatpush2.bf16.msra.mxu0 %v2195
        %3815 = vmatprep.subr.bf16.mxu0 %v2188
        %3816 = vmatpush2.bf16.msra.mxu0 %v2187
        %3817 = vmatprep.subr.bf16.mxu0 %v2180
        %3818 = vmatpush2.bf16.msra.mxu0 %v2179
        %3819 = vmatprep.subr.bf16.mxu0 %v2172
        %3820 = vmatpush2.bf16.msra.mxu0 %v2171
        %3821 = vmatprep.subr.bf16.mxu0 %v2164
        %3822 = vmatpush2.bf16.msra.mxu0 %v2163
        %3823 = vmatprep.subr.bf16.mxu0 %v2156
        %3824 = vmatpush2.bf16.msra.mxu0 %v2155
        %3825 = vmatprep.subr.bf16.mxu0 %v2148
        %3826 = vmatpush2.bf16.msra.mxu0 %v2147
        %3827 = vmatprep.mubr.bf16.mxu0 %v2585
        %3828 = vmatmul.mubr.bf16.gmra.mxu0 %v2584
        %v3829 = vpop.f32.mrf.mxu0
        %v3830 = vadd.f32 %v3789, %v3829
        %v3831 = vpop.f32.mrf.mxu0
        %v3832 = vadd.f32 %v3791, %v3831
        %v3833 = vpop.f32.mrf.mxu0
        %v3834 = vpop.f32.mrf.mxu0
        %3835 = vdwg.mxu0
        %3836 = vmatprep.subr.bf16.mxu0 %v2268
        %3837 = vmatpush1.bf16.msra.mxu0 %v2267
        %3838 = vmatprep.subr.bf16.mxu0 %v2260
        %3839 = vmatpush1.bf16.msra.mxu0 %v2259
        %3840 = vmatprep.subr.bf16.mxu0 %v2252
        %3841 = vmatpush1.bf16.msra.mxu0 %v2251
        %3842 = vmatprep.subr.bf16.mxu0 %v2244
        %3843 = vmatpush1.bf16.msra.mxu0 %v2243
        %3844 = vmatprep.subr.bf16.mxu0 %v2236
        %3845 = vmatpush1.bf16.msra.mxu0 %v2235
        %3846 = vmatprep.subr.bf16.mxu0 %v2228
        %3847 = vmatpush1.bf16.msra.mxu0 %v2227
        %3848 = vmatprep.subr.bf16.mxu0 %v2220
        %3849 = vmatpush1.bf16.msra.mxu0 %v2219
        %3850 = vmatprep.subr.bf16.mxu0 %v2212
        %3851 = vmatpush1.bf16.msra.mxu0 %v2211
        %3852 = vmatprep.subr.bf16.mxu0 %v2332
        %3853 = vmatpush2.bf16.msra.mxu0 %v2331
        %3854 = vmatprep.subr.bf16.mxu0 %v2324
        %3855 = vmatpush2.bf16.msra.mxu0 %v2323
        %3856 = vmatprep.subr.bf16.mxu0 %v2316
        %3857 = vmatpush2.bf16.msra.mxu0 %v2315
        %3858 = vmatprep.subr.bf16.mxu0 %v2308
        %3859 = vmatpush2.bf16.msra.mxu0 %v2307
        %3860 = vmatprep.subr.bf16.mxu0 %v2300
        %3861 = vmatpush2.bf16.msra.mxu0 %v2299
        %3862 = vmatprep.subr.bf16.mxu0 %v2292
        %3863 = vmatpush2.bf16.msra.mxu0 %v2291
        %3864 = vmatprep.subr.bf16.mxu0 %v2284
        %3865 = vmatpush2.bf16.msra.mxu0 %v2283
        %3866 = vmatprep.subr.bf16.mxu0 %v2276
        %3867 = vmatpush2.bf16.msra.mxu0 %v2275
        %3868 = vmatprep.mubr.bf16.mxu0 %v2587
        %3869 = vmatmul.mubr.bf16.gmra.mxu0 %v2586
        %v3870 = vpop.f32.mrf.mxu0
        %v3871 = vadd.f32 %v3830, %v3870
        %v3872 = vpop.f32.mrf.mxu0
        %v3873 = vadd.f32 %v3832, %v3872
        %v3874 = vpop.f32.mrf.mxu0
        %v3875 = vpop.f32.mrf.mxu0
        %3876 = vdwg.mxu0
        %3877 = vmatprep.subr.bf16.mxu0 %v2396
        %3878 = vmatpush1.bf16.msra.mxu0 %v2395
        %3879 = vmatprep.subr.bf16.mxu0 %v2388
        %3880 = vmatpush1.bf16.msra.mxu0 %v2387
        %3881 = vmatprep.subr.bf16.mxu0 %v2380
        %3882 = vmatpush1.bf16.msra.mxu0 %v2379
        %3883 = vmatprep.subr.bf16.mxu0 %v2372
        %3884 = vmatpush1.bf16.msra.mxu0 %v2371
        %3885 = vmatprep.subr.bf16.mxu0 %v2364
        %3886 = vmatpush1.bf16.msra.mxu0 %v2363
        %3887 = vmatprep.subr.bf16.mxu0 %v2356
        %3888 = vmatpush1.bf16.msra.mxu0 %v2355
        %3889 = vmatprep.subr.bf16.mxu0 %v2348
        %3890 = vmatpush1.bf16.msra.mxu0 %v2347
        %3891 = vmatprep.subr.bf16.mxu0 %v2340
        %3892 = vmatpush1.bf16.msra.mxu0 %v2339
        %3893 = vmatprep.subr.bf16.mxu0 %v2460
        %3894 = vmatpush2.bf16.msra.mxu0 %v2459
        %3895 = vmatprep.subr.bf16.mxu0 %v2452
        %3896 = vmatpush2.bf16.msra.mxu0 %v2451
        %3897 = vmatprep.subr.bf16.mxu0 %v2444
        %3898 = vmatpush2.bf16.msra.mxu0 %v2443
        %3899 = vmatprep.subr.bf16.mxu0 %v2436
        %3900 = vmatpush2.bf16.msra.mxu0 %v2435
        %3901 = vmatprep.subr.bf16.mxu0 %v2428
        %3902 = vmatpush2.bf16.msra.mxu0 %v2427
        %3903 = vmatprep.subr.bf16.mxu0 %v2420
        %3904 = vmatpush2.bf16.msra.mxu0 %v2419
        %3905 = vmatprep.subr.bf16.mxu0 %v2412
        %3906 = vmatpush2.bf16.msra.mxu0 %v2411
        %3907 = vmatprep.subr.bf16.mxu0 %v2404
        %3908 = vmatpush2.bf16.msra.mxu0 %v2403
        %3909 = vmatprep.mubr.bf16.mxu0 %v2589
        %3910 = vmatmul.mubr.bf16.gmra.mxu0 %v2588
        %v3911 = vpop.f32.mrf.mxu0
        %v3912 = vadd.f32 %v3871, %v3911
        %v3913 = vpop.f32.mrf.mxu0
        %v3914 = vadd.f32 %v3873, %v3913
        %v3915 = vpop.f32.mrf.mxu0
        %v3916 = vpop.f32.mrf.mxu0
        %3917 = vdwg.mxu0
        %v3919 = vlaneseq
        %v3920 = vshrl.u32 %v3919, 7
        %v3921 = vsub.s32 0, %v3920
        %v3922 = vrot.slane %v917, %v3921
        %v3923 = vlaneseq
        %v3924 = vshrl.u32 %v3923, 7
        %v3925 = vsub.s32 1, %v3924
        %v3926 = vrot.slane %v917, %v3925
        %v3927 = vlaneseq
        %v3928 = vshrl.u32 %v3927, 7
        %v3929 = vsub.s32 2, %v3928
        %v3930 = vrot.slane %v917, %v3929
        %v3931 = vlaneseq
        %v3932 = vshrl.u32 %v3931, 7
        %v3933 = vsub.s32 3, %v3932
        %v3934 = vrot.slane %v917, %v3933
        %v3935 = vlaneseq
        %v3936 = vshrl.u32 %v3935, 7
        %v3937 = vsub.s32 4, %v3936
        %v3938 = vrot.slane %v917, %v3937
        %v3939 = vlaneseq
        %v3940 = vshrl.u32 %v3939, 7
        %v3941 = vsub.s32 5, %v3940
        %v3942 = vrot.slane %v917, %v3941
        %v3943 = vlaneseq
        %v3944 = vshrl.u32 %v3943, 7
        %v3945 = vsub.s32 6, %v3944
        %v3946 = vrot.slane %v917, %v3945
        %v3947 = vlaneseq
        %v3948 = vshrl.u32 %v3947, 7
        %v3949 = vsub.s32 7, %v3948
        %v3950 = vrot.slane %v917, %v3949
        %v3959 = vmul.f32 %v2928, %v3922
        %v3960 = vmul.f32 %v2930, %v3926
        %v3961 = vmul.f32 %v3256, %v3930
        %v3962 = vmul.f32 %v3258, %v3934
        %v3963 = vmul.f32 %v3584, %v3938
        %v3964 = vmul.f32 %v3586, %v3942
        %v3965 = vmul.f32 %v3912, %v3946
        %v3966 = vmul.f32 %v3914, %v3950
        %v3968 = vlaneseq
        %v3969 = vshrl.u32 %v3968, 7
        %v3970 = vsub.s32 0, %v3969
        %v3971 = vrot.slane %v918, %v3970
        %v3972 = vlaneseq
        %v3973 = vshrl.u32 %v3972, 7
        %v3974 = vsub.s32 1, %v3973
        %v3975 = vrot.slane %v918, %v3974
        %v3976 = vlaneseq
        %v3977 = vshrl.u32 %v3976, 7
        %v3978 = vsub.s32 2, %v3977
        %v3979 = vrot.slane %v918, %v3978
        %v3980 = vlaneseq
        %v3981 = vshrl.u32 %v3980, 7
        %v3982 = vsub.s32 3, %v3981
        %v3983 = vrot.slane %v918, %v3982
        %v3984 = vlaneseq
        %v3985 = vshrl.u32 %v3984, 7
        %v3986 = vsub.s32 4, %v3985
        %v3987 = vrot.slane %v918, %v3986
        %v3988 = vlaneseq
        %v3989 = vshrl.u32 %v3988, 7
        %v3990 = vsub.s32 5, %v3989
        %v3991 = vrot.slane %v918, %v3990
        %v3992 = vlaneseq
        %v3993 = vshrl.u32 %v3992, 7
        %v3994 = vsub.s32 6, %v3993
        %v3995 = vrot.slane %v918, %v3994
        %v3996 = vlaneseq
        %v3997 = vshrl.u32 %v3996, 7
        %v3998 = vsub.s32 7, %v3997
        %v3999 = vrot.slane %v918, %v3998
        %v4008 = vadd.f32 %v3959, %v3971
        %v4009 = vadd.f32 %v3960, %v3975
        %v4010 = vadd.f32 %v3961, %v3979
        %v4011 = vadd.f32 %v3962, %v3983
        %v4012 = vadd.f32 %v3963, %v3987
        %v4013 = vadd.f32 %v3964, %v3991
        %v4014 = vadd.f32 %v3965, %v3995
        %v4015 = vadd.f32 %v3966, %v3999
        %v4016 = vmax.f32 %v4008, 0.0
        %v4017 = vmax.f32 %v4009, 0.0
        %v4018 = vmax.f32 %v4010, 0.0
        %v4019 = vmax.f32 %v4011, 0.0
        %v4020 = vmax.f32 %v4012, 0.0
        %v4021 = vmax.f32 %v4013, 0.0
        %v4022 = vmax.f32 %v4014, 0.0
        %v4023 = vmax.f32 %v4015, 0.0
        %v4024 = vld [vmem:[%s331] sm:$0xff]
        %v4025 = vld [vmem:[%s331 + $0x8] sm:$0xff]
        %v4026 = vld [vmem:[%s331 + $0x10] sm:$0xff]
        %v4027 = vld [vmem:[%s331 + $0x18] sm:$0xff]
        %v4028 = vld [vmem:[%s331 + $0x20] sm:$0xff]
        %v4029 = vld [vmem:[%s331 + $0x28] sm:$0xff]
        %v4030 = vld [vmem:[%s331 + $0x30] sm:$0xff]
        %v4031 = vld [vmem:[%s331 + $0x38] sm:$0xff]
        %v4032 = vld [vmem:[%s331 + $0x40] sm:$0xff]
        %v4033 = vld [vmem:[%s331 + $0x48] sm:$0xff]
        %v4034 = vld [vmem:[%s331 + $0x50] sm:$0xff]
        %v4035 = vld [vmem:[%s331 + $0x58] sm:$0xff]
        %v4036 = vld [vmem:[%s331 + $0x60] sm:$0xff]
        %v4037 = vld [vmem:[%s331 + $0x68] sm:$0xff]
        %v4038 = vld [vmem:[%s331 + $0x70] sm:$0xff]
        %v4039 = vld [vmem:[%s331 + $0x78] sm:$0xff]
        %v4040 = vld [vmem:[%s331 + $0x80] sm:$0xff]
        %v4041 = vld [vmem:[%s331 + $0x88] sm:$0xff]
        %v4042 = vld [vmem:[%s331 + $0x90] sm:$0xff]
        %v4043 = vld [vmem:[%s331 + $0x98] sm:$0xff]
        %v4044 = vld [vmem:[%s331 + $0xa0] sm:$0xff]
        %v4045 = vld [vmem:[%s331 + $0xa8] sm:$0xff]
        %v4046 = vld [vmem:[%s331 + $0xb0] sm:$0xff]
        %v4047 = vld [vmem:[%s331 + $0xb8] sm:$0xff]
        %v4048 = vld [vmem:[%s331 + $0xc0] sm:$0xff]
        %v4049 = vld [vmem:[%s331 + $0xc8] sm:$0xff]
        %v4050 = vld [vmem:[%s331 + $0xd0] sm:$0xff]
        %v4051 = vld [vmem:[%s331 + $0xd8] sm:$0xff]
        %v4052 = vld [vmem:[%s331 + $0xe0] sm:$0xff]
        %v4053 = vld [vmem:[%s331 + $0xe8] sm:$0xff]
        %v4054 = vld [vmem:[%s331 + $0xf0] sm:$0xff]
        %v4055 = vld [vmem:[%s331 + $0xf8] sm:$0xff]
        %v4056 = vld [vmem:[%s331 + $0x100] sm:$0xff]
        %v4057 = vld [vmem:[%s331 + $0x108] sm:$0xff]
        %v4058 = vld [vmem:[%s331 + $0x110] sm:$0xff]
        %v4059 = vld [vmem:[%s331 + $0x118] sm:$0xff]
        %v4060 = vld [vmem:[%s331 + $0x120] sm:$0xff]
        %v4061 = vld [vmem:[%s331 + $0x128] sm:$0xff]
        %v4062 = vld [vmem:[%s331 + $0x130] sm:$0xff]
        %v4063 = vld [vmem:[%s331 + $0x138] sm:$0xff]
        %v4064 = vld [vmem:[%s331 + $0x140] sm:$0xff]
        %v4065 = vld [vmem:[%s331 + $0x148] sm:$0xff]
        %v4066 = vld [vmem:[%s331 + $0x150] sm:$0xff]
        %v4067 = vld [vmem:[%s331 + $0x158] sm:$0xff]
        %v4068 = vld [vmem:[%s331 + $0x160] sm:$0xff]
        %v4069 = vld [vmem:[%s331 + $0x168] sm:$0xff]
        %v4070 = vld [vmem:[%s331 + $0x170] sm:$0xff]
        %v4071 = vld [vmem:[%s331 + $0x178] sm:$0xff]
        %v4072 = vld [vmem:[%s331 + $0x180] sm:$0xff]
        %v4073 = vld [vmem:[%s331 + $0x188] sm:$0xff]
        %v4074 = vld [vmem:[%s331 + $0x190] sm:$0xff]
        %v4075 = vld [vmem:[%s331 + $0x198] sm:$0xff]
        %v4076 = vld [vmem:[%s331 + $0x1a0] sm:$0xff]
        %v4077 = vld [vmem:[%s331 + $0x1a8] sm:$0xff]
        %v4078 = vld [vmem:[%s331 + $0x1b0] sm:$0xff]
        %v4079 = vld [vmem:[%s331 + $0x1b8] sm:$0xff]
        %v4080 = vld [vmem:[%s331 + $0x1c0] sm:$0xff]
        %v4081 = vld [vmem:[%s331 + $0x1c8] sm:$0xff]
        %v4082 = vld [vmem:[%s331 + $0x1d0] sm:$0xff]
        %v4083 = vld [vmem:[%s331 + $0x1d8] sm:$0xff]
        %v4084 = vld [vmem:[%s331 + $0x1e0] sm:$0xff]
        %v4085 = vld [vmem:[%s331 + $0x1e8] sm:$0xff]
        %v4086 = vld [vmem:[%s331 + $0x1f0] sm:$0xff]
        %v4087 = vld [vmem:[%s331 + $0x1f8] sm:$0xff]
        %v4088 = vld [vmem:[%s331 + $0x200] sm:$0xff]
        %v4089 = vld [vmem:[%s331 + $0x208] sm:$0xff]
        %v4090 = vld [vmem:[%s331 + $0x210] sm:$0xff]
        %v4091 = vld [vmem:[%s331 + $0x218] sm:$0xff]
        %v4092 = vld [vmem:[%s331 + $0x220] sm:$0xff]
        %v4093 = vld [vmem:[%s331 + $0x228] sm:$0xff]
        %v4094 = vld [vmem:[%s331 + $0x230] sm:$0xff]
        %v4095 = vld [vmem:[%s331 + $0x238] sm:$0xff]
        %v4096 = vld [vmem:[%s331 + $0x240] sm:$0xff]
        %v4097 = vld [vmem:[%s331 + $0x248] sm:$0xff]
        %v4098 = vld [vmem:[%s331 + $0x250] sm:$0xff]
        %v4099 = vld [vmem:[%s331 + $0x258] sm:$0xff]
        %v4100 = vld [vmem:[%s331 + $0x260] sm:$0xff]
        %v4101 = vld [vmem:[%s331 + $0x268] sm:$0xff]
        %v4102 = vld [vmem:[%s331 + $0x270] sm:$0xff]
        %v4103 = vld [vmem:[%s331 + $0x278] sm:$0xff]
        %v4104 = vld [vmem:[%s331 + $0x280] sm:$0xff]
        %v4105 = vld [vmem:[%s331 + $0x288] sm:$0xff]
        %v4106 = vld [vmem:[%s331 + $0x290] sm:$0xff]
        %v4107 = vld [vmem:[%s331 + $0x298] sm:$0xff]
        %v4108 = vld [vmem:[%s331 + $0x2a0] sm:$0xff]
        %v4109 = vld [vmem:[%s331 + $0x2a8] sm:$0xff]
        %v4110 = vld [vmem:[%s331 + $0x2b0] sm:$0xff]
        %v4111 = vld [vmem:[%s331 + $0x2b8] sm:$0xff]
        %v4112 = vld [vmem:[%s331 + $0x2c0] sm:$0xff]
        %v4113 = vld [vmem:[%s331 + $0x2c8] sm:$0xff]
        %v4114 = vld [vmem:[%s331 + $0x2d0] sm:$0xff]
        %v4115 = vld [vmem:[%s331 + $0x2d8] sm:$0xff]
        %v4116 = vld [vmem:[%s331 + $0x2e0] sm:$0xff]
        %v4117 = vld [vmem:[%s331 + $0x2e8] sm:$0xff]
        %v4118 = vld [vmem:[%s331 + $0x2f0] sm:$0xff]
        %v4119 = vld [vmem:[%s331 + $0x2f8] sm:$0xff]
        %v4120 = vld [vmem:[%s331 + $0x300] sm:$0xff]
        %v4121 = vld [vmem:[%s331 + $0x308] sm:$0xff]
        %v4122 = vld [vmem:[%s331 + $0x310] sm:$0xff]
        %v4123 = vld [vmem:[%s331 + $0x318] sm:$0xff]
        %v4124 = vld [vmem:[%s331 + $0x320] sm:$0xff]
        %v4125 = vld [vmem:[%s331 + $0x328] sm:$0xff]
        %v4126 = vld [vmem:[%s331 + $0x330] sm:$0xff]
        %v4127 = vld [vmem:[%s331 + $0x338] sm:$0xff]
        %v4128 = vld [vmem:[%s331 + $0x340] sm:$0xff]
        %v4129 = vld [vmem:[%s331 + $0x348] sm:$0xff]
        %v4130 = vld [vmem:[%s331 + $0x350] sm:$0xff]
        %v4131 = vld [vmem:[%s331 + $0x358] sm:$0xff]
        %v4132 = vld [vmem:[%s331 + $0x360] sm:$0xff]
        %v4133 = vld [vmem:[%s331 + $0x368] sm:$0xff]
        %v4134 = vld [vmem:[%s331 + $0x370] sm:$0xff]
        %v4135 = vld [vmem:[%s331 + $0x378] sm:$0xff]
        %v4136 = vld [vmem:[%s331 + $0x380] sm:$0xff]
        %v4137 = vld [vmem:[%s331 + $0x388] sm:$0xff]
        %v4138 = vld [vmem:[%s331 + $0x390] sm:$0xff]
        %v4139 = vld [vmem:[%s331 + $0x398] sm:$0xff]
        %v4140 = vld [vmem:[%s331 + $0x3a0] sm:$0xff]
        %v4141 = vld [vmem:[%s331 + $0x3a8] sm:$0xff]
        %v4142 = vld [vmem:[%s331 + $0x3b0] sm:$0xff]
        %v4143 = vld [vmem:[%s331 + $0x3b8] sm:$0xff]
        %v4144 = vld [vmem:[%s331 + $0x3c0] sm:$0xff]
        %v4145 = vld [vmem:[%s331 + $0x3c8] sm:$0xff]
        %v4146 = vld [vmem:[%s331 + $0x3d0] sm:$0xff]
        %v4147 = vld [vmem:[%s331 + $0x3d8] sm:$0xff]
        %v4148 = vld [vmem:[%s331 + $0x3e0] sm:$0xff]
        %v4149 = vld [vmem:[%s331 + $0x3e8] sm:$0xff]
        %v4150 = vld [vmem:[%s331 + $0x3f0] sm:$0xff]
        %v4151 = vld [vmem:[%s331 + $0x3f8] sm:$0xff]
        %v4152 = vld [vmem:[%s331 + $0x400] sm:$0xff]
        %v4153 = vld [vmem:[%s331 + $0x408] sm:$0xff]
        %v4154 = vld [vmem:[%s331 + $0x410] sm:$0xff]
        %v4155 = vld [vmem:[%s331 + $0x418] sm:$0xff]
        %v4156 = vld [vmem:[%s331 + $0x420] sm:$0xff]
        %v4157 = vld [vmem:[%s331 + $0x428] sm:$0xff]
        %v4158 = vld [vmem:[%s331 + $0x430] sm:$0xff]
        %v4159 = vld [vmem:[%s331 + $0x438] sm:$0xff]
        %v4160 = vld [vmem:[%s331 + $0x440] sm:$0xff]
        %v4161 = vld [vmem:[%s331 + $0x448] sm:$0xff]
        %v4162 = vld [vmem:[%s331 + $0x450] sm:$0xff]
        %v4163 = vld [vmem:[%s331 + $0x458] sm:$0xff]
        %v4164 = vld [vmem:[%s331 + $0x460] sm:$0xff]
        %v4165 = vld [vmem:[%s331 + $0x468] sm:$0xff]
        %v4166 = vld [vmem:[%s331 + $0x470] sm:$0xff]
        %v4167 = vld [vmem:[%s331 + $0x478] sm:$0xff]
        %v4168 = vld [vmem:[%s331 + $0x480] sm:$0xff]
        %v4169 = vld [vmem:[%s331 + $0x488] sm:$0xff]
        %v4170 = vld [vmem:[%s331 + $0x490] sm:$0xff]
        %v4171 = vld [vmem:[%s331 + $0x498] sm:$0xff]
        %v4172 = vld [vmem:[%s331 + $0x4a0] sm:$0xff]
        %v4173 = vld [vmem:[%s331 + $0x4a8] sm:$0xff]
        %v4174 = vld [vmem:[%s331 + $0x4b0] sm:$0xff]
        %v4175 = vld [vmem:[%s331 + $0x4b8] sm:$0xff]
        %v4176 = vld [vmem:[%s331 + $0x4c0] sm:$0xff]
        %v4177 = vld [vmem:[%s331 + $0x4c8] sm:$0xff]
        %v4178 = vld [vmem:[%s331 + $0x4d0] sm:$0xff]
        %v4179 = vld [vmem:[%s331 + $0x4d8] sm:$0xff]
        %v4180 = vld [vmem:[%s331 + $0x4e0] sm:$0xff]
        %v4181 = vld [vmem:[%s331 + $0x4e8] sm:$0xff]
        %v4182 = vld [vmem:[%s331 + $0x4f0] sm:$0xff]
        %v4183 = vld [vmem:[%s331 + $0x4f8] sm:$0xff]
        %v4184 = vld [vmem:[%s331 + $0x500] sm:$0xff]
        %v4185 = vld [vmem:[%s331 + $0x508] sm:$0xff]
        %v4186 = vld [vmem:[%s331 + $0x510] sm:$0xff]
        %v4187 = vld [vmem:[%s331 + $0x518] sm:$0xff]
        %v4188 = vld [vmem:[%s331 + $0x520] sm:$0xff]
        %v4189 = vld [vmem:[%s331 + $0x528] sm:$0xff]
        %v4190 = vld [vmem:[%s331 + $0x530] sm:$0xff]
        %v4191 = vld [vmem:[%s331 + $0x538] sm:$0xff]
        %v4192 = vld [vmem:[%s331 + $0x540] sm:$0xff]
        %v4193 = vld [vmem:[%s331 + $0x548] sm:$0xff]
        %v4194 = vld [vmem:[%s331 + $0x550] sm:$0xff]
        %v4195 = vld [vmem:[%s331 + $0x558] sm:$0xff]
        %v4196 = vld [vmem:[%s331 + $0x560] sm:$0xff]
        %v4197 = vld [vmem:[%s331 + $0x568] sm:$0xff]
        %v4198 = vld [vmem:[%s331 + $0x570] sm:$0xff]
        %v4199 = vld [vmem:[%s331 + $0x578] sm:$0xff]
        %v4200 = vld [vmem:[%s331 + $0x580] sm:$0xff]
        %v4201 = vld [vmem:[%s331 + $0x588] sm:$0xff]
        %v4202 = vld [vmem:[%s331 + $0x590] sm:$0xff]
        %v4203 = vld [vmem:[%s331 + $0x598] sm:$0xff]
        %v4204 = vld [vmem:[%s331 + $0x5a0] sm:$0xff]
        %v4205 = vld [vmem:[%s331 + $0x5a8] sm:$0xff]
        %v4206 = vld [vmem:[%s331 + $0x5b0] sm:$0xff]
        %v4207 = vld [vmem:[%s331 + $0x5b8] sm:$0xff]
        %v4208 = vld [vmem:[%s331 + $0x5c0] sm:$0xff]
        %v4209 = vld [vmem:[%s331 + $0x5c8] sm:$0xff]
        %v4210 = vld [vmem:[%s331 + $0x5d0] sm:$0xff]
        %v4211 = vld [vmem:[%s331 + $0x5d8] sm:$0xff]
        %v4212 = vld [vmem:[%s331 + $0x5e0] sm:$0xff]
        %v4213 = vld [vmem:[%s331 + $0x5e8] sm:$0xff]
        %v4214 = vld [vmem:[%s331 + $0x5f0] sm:$0xff]
        %v4215 = vld [vmem:[%s331 + $0x5f8] sm:$0xff]
        %v4216 = vld [vmem:[%s331 + $0x600] sm:$0xff]
        %v4217 = vld [vmem:[%s331 + $0x608] sm:$0xff]
        %v4218 = vld [vmem:[%s331 + $0x610] sm:$0xff]
        %v4219 = vld [vmem:[%s331 + $0x618] sm:$0xff]
        %v4220 = vld [vmem:[%s331 + $0x620] sm:$0xff]
        %v4221 = vld [vmem:[%s331 + $0x628] sm:$0xff]
        %v4222 = vld [vmem:[%s331 + $0x630] sm:$0xff]
        %v4223 = vld [vmem:[%s331 + $0x638] sm:$0xff]
        %v4224 = vld [vmem:[%s331 + $0x640] sm:$0xff]
        %v4225 = vld [vmem:[%s331 + $0x648] sm:$0xff]
        %v4226 = vld [vmem:[%s331 + $0x650] sm:$0xff]
        %v4227 = vld [vmem:[%s331 + $0x658] sm:$0xff]
        %v4228 = vld [vmem:[%s331 + $0x660] sm:$0xff]
        %v4229 = vld [vmem:[%s331 + $0x668] sm:$0xff]
        %v4230 = vld [vmem:[%s331 + $0x670] sm:$0xff]
        %v4231 = vld [vmem:[%s331 + $0x678] sm:$0xff]
        %v4232 = vld [vmem:[%s331 + $0x680] sm:$0xff]
        %v4233 = vld [vmem:[%s331 + $0x688] sm:$0xff]
        %v4234 = vld [vmem:[%s331 + $0x690] sm:$0xff]
        %v4235 = vld [vmem:[%s331 + $0x698] sm:$0xff]
        %v4236 = vld [vmem:[%s331 + $0x6a0] sm:$0xff]
        %v4237 = vld [vmem:[%s331 + $0x6a8] sm:$0xff]
        %v4238 = vld [vmem:[%s331 + $0x6b0] sm:$0xff]
        %v4239 = vld [vmem:[%s331 + $0x6b8] sm:$0xff]
        %v4240 = vld [vmem:[%s331 + $0x6c0] sm:$0xff]
        %v4241 = vld [vmem:[%s331 + $0x6c8] sm:$0xff]
        %v4242 = vld [vmem:[%s331 + $0x6d0] sm:$0xff]
        %v4243 = vld [vmem:[%s331 + $0x6d8] sm:$0xff]
        %v4244 = vld [vmem:[%s331 + $0x6e0] sm:$0xff]
        %v4245 = vld [vmem:[%s331 + $0x6e8] sm:$0xff]
        %v4246 = vld [vmem:[%s331 + $0x6f0] sm:$0xff]
        %v4247 = vld [vmem:[%s331 + $0x6f8] sm:$0xff]
        %v4248 = vld [vmem:[%s331 + $0x700] sm:$0xff]
        %v4249 = vld [vmem:[%s331 + $0x708] sm:$0xff]
        %v4250 = vld [vmem:[%s331 + $0x710] sm:$0xff]
        %v4251 = vld [vmem:[%s331 + $0x718] sm:$0xff]
        %v4252 = vld [vmem:[%s331 + $0x720] sm:$0xff]
        %v4253 = vld [vmem:[%s331 + $0x728] sm:$0xff]
        %v4254 = vld [vmem:[%s331 + $0x730] sm:$0xff]
        %v4255 = vld [vmem:[%s331 + $0x738] sm:$0xff]
        %v4256 = vld [vmem:[%s331 + $0x740] sm:$0xff]
        %v4257 = vld [vmem:[%s331 + $0x748] sm:$0xff]
        %v4258 = vld [vmem:[%s331 + $0x750] sm:$0xff]
        %v4259 = vld [vmem:[%s331 + $0x758] sm:$0xff]
        %v4260 = vld [vmem:[%s331 + $0x760] sm:$0xff]
        %v4261 = vld [vmem:[%s331 + $0x768] sm:$0xff]
        %v4262 = vld [vmem:[%s331 + $0x770] sm:$0xff]
        %v4263 = vld [vmem:[%s331 + $0x778] sm:$0xff]
        %v4264 = vld [vmem:[%s331 + $0x780] sm:$0xff]
        %v4265 = vld [vmem:[%s331 + $0x788] sm:$0xff]
        %v4266 = vld [vmem:[%s331 + $0x790] sm:$0xff]
        %v4267 = vld [vmem:[%s331 + $0x798] sm:$0xff]
        %v4268 = vld [vmem:[%s331 + $0x7a0] sm:$0xff]
        %v4269 = vld [vmem:[%s331 + $0x7a8] sm:$0xff]
        %v4270 = vld [vmem:[%s331 + $0x7b0] sm:$0xff]
        %v4271 = vld [vmem:[%s331 + $0x7b8] sm:$0xff]
        %v4272 = vld [vmem:[%s331 + $0x7c0] sm:$0xff]
        %v4273 = vld [vmem:[%s331 + $0x7c8] sm:$0xff]
        %v4274 = vld [vmem:[%s331 + $0x7d0] sm:$0xff]
        %v4275 = vld [vmem:[%s331 + $0x7d8] sm:$0xff]
        %v4276 = vld [vmem:[%s331 + $0x7e0] sm:$0xff]
        %v4277 = vld [vmem:[%s331 + $0x7e8] sm:$0xff]
        %v4278 = vld [vmem:[%s331 + $0x7f0] sm:$0xff]
        %v4279 = vld [vmem:[%s331 + $0x7f8] sm:$0xff]
        %v4280 = vld [vmem:[%s331 + $0x800] sm:$0xff]
        %v4281 = vld [vmem:[%s331 + $0x808] sm:$0xff]
        %v4282 = vld [vmem:[%s331 + $0x810] sm:$0xff]
        %v4283 = vld [vmem:[%s331 + $0x818] sm:$0xff]
        %v4284 = vld [vmem:[%s331 + $0x820] sm:$0xff]
        %v4285 = vld [vmem:[%s331 + $0x828] sm:$0xff]
        %v4286 = vld [vmem:[%s331 + $0x830] sm:$0xff]
        %v4287 = vld [vmem:[%s331 + $0x838] sm:$0xff]
        %v4288 = vld [vmem:[%s331 + $0x840] sm:$0xff]
        %v4289 = vld [vmem:[%s331 + $0x848] sm:$0xff]
        %v4290 = vld [vmem:[%s331 + $0x850] sm:$0xff]
        %v4291 = vld [vmem:[%s331 + $0x858] sm:$0xff]
        %v4292 = vld [vmem:[%s331 + $0x860] sm:$0xff]
        %v4293 = vld [vmem:[%s331 + $0x868] sm:$0xff]
        %v4294 = vld [vmem:[%s331 + $0x870] sm:$0xff]
        %v4295 = vld [vmem:[%s331 + $0x878] sm:$0xff]
        %v4296 = vld [vmem:[%s331 + $0x880] sm:$0xff]
        %v4297 = vld [vmem:[%s331 + $0x888] sm:$0xff]
        %v4298 = vld [vmem:[%s331 + $0x890] sm:$0xff]
        %v4299 = vld [vmem:[%s331 + $0x898] sm:$0xff]
        %v4300 = vld [vmem:[%s331 + $0x8a0] sm:$0xff]
        %v4301 = vld [vmem:[%s331 + $0x8a8] sm:$0xff]
        %v4302 = vld [vmem:[%s331 + $0x8b0] sm:$0xff]
        %v4303 = vld [vmem:[%s331 + $0x8b8] sm:$0xff]
        %v4304 = vld [vmem:[%s331 + $0x8c0] sm:$0xff]
        %v4305 = vld [vmem:[%s331 + $0x8c8] sm:$0xff]
        %v4306 = vld [vmem:[%s331 + $0x8d0] sm:$0xff]
        %v4307 = vld [vmem:[%s331 + $0x8d8] sm:$0xff]
        %v4308 = vld [vmem:[%s331 + $0x8e0] sm:$0xff]
        %v4309 = vld [vmem:[%s331 + $0x8e8] sm:$0xff]
        %v4310 = vld [vmem:[%s331 + $0x8f0] sm:$0xff]
        %v4311 = vld [vmem:[%s331 + $0x8f8] sm:$0xff]
        %v4312 = vld [vmem:[%s331 + $0x900] sm:$0xff]
        %v4313 = vld [vmem:[%s331 + $0x908] sm:$0xff]
        %v4314 = vld [vmem:[%s331 + $0x910] sm:$0xff]
        %v4315 = vld [vmem:[%s331 + $0x918] sm:$0xff]
        %v4316 = vld [vmem:[%s331 + $0x920] sm:$0xff]
        %v4317 = vld [vmem:[%s331 + $0x928] sm:$0xff]
        %v4318 = vld [vmem:[%s331 + $0x930] sm:$0xff]
        %v4319 = vld [vmem:[%s331 + $0x938] sm:$0xff]
        %v4320 = vld [vmem:[%s331 + $0x940] sm:$0xff]
        %v4321 = vld [vmem:[%s331 + $0x948] sm:$0xff]
        %v4322 = vld [vmem:[%s331 + $0x950] sm:$0xff]
        %v4323 = vld [vmem:[%s331 + $0x958] sm:$0xff]
        %v4324 = vld [vmem:[%s331 + $0x960] sm:$0xff]
        %v4325 = vld [vmem:[%s331 + $0x968] sm:$0xff]
        %v4326 = vld [vmem:[%s331 + $0x970] sm:$0xff]
        %v4327 = vld [vmem:[%s331 + $0x978] sm:$0xff]
        %v4328 = vld [vmem:[%s331 + $0x980] sm:$0xff]
        %v4329 = vld [vmem:[%s331 + $0x988] sm:$0xff]
        %v4330 = vld [vmem:[%s331 + $0x990] sm:$0xff]
        %v4331 = vld [vmem:[%s331 + $0x998] sm:$0xff]
        %v4332 = vld [vmem:[%s331 + $0x9a0] sm:$0xff]
        %v4333 = vld [vmem:[%s331 + $0x9a8] sm:$0xff]
        %v4334 = vld [vmem:[%s331 + $0x9b0] sm:$0xff]
        %v4335 = vld [vmem:[%s331 + $0x9b8] sm:$0xff]
        %v4336 = vld [vmem:[%s331 + $0x9c0] sm:$0xff]
        %v4337 = vld [vmem:[%s331 + $0x9c8] sm:$0xff]
        %v4338 = vld [vmem:[%s331 + $0x9d0] sm:$0xff]
        %v4339 = vld [vmem:[%s331 + $0x9d8] sm:$0xff]
        %v4340 = vld [vmem:[%s331 + $0x9e0] sm:$0xff]
        %v4341 = vld [vmem:[%s331 + $0x9e8] sm:$0xff]
        %v4342 = vld [vmem:[%s331 + $0x9f0] sm:$0xff]
        %v4343 = vld [vmem:[%s331 + $0x9f8] sm:$0xff]
        %v4344 = vld [vmem:[%s331 + $0xa00] sm:$0xff]
        %v4345 = vld [vmem:[%s331 + $0xa08] sm:$0xff]
        %v4346 = vld [vmem:[%s331 + $0xa10] sm:$0xff]
        %v4347 = vld [vmem:[%s331 + $0xa18] sm:$0xff]
        %v4348 = vld [vmem:[%s331 + $0xa20] sm:$0xff]
        %v4349 = vld [vmem:[%s331 + $0xa28] sm:$0xff]
        %v4350 = vld [vmem:[%s331 + $0xa30] sm:$0xff]
        %v4351 = vld [vmem:[%s331 + $0xa38] sm:$0xff]
        %v4352 = vld [vmem:[%s331 + $0xa40] sm:$0xff]
        %v4353 = vld [vmem:[%s331 + $0xa48] sm:$0xff]
        %v4354 = vld [vmem:[%s331 + $0xa50] sm:$0xff]
        %v4355 = vld [vmem:[%s331 + $0xa58] sm:$0xff]
        %v4356 = vld [vmem:[%s331 + $0xa60] sm:$0xff]
        %v4357 = vld [vmem:[%s331 + $0xa68] sm:$0xff]
        %v4358 = vld [vmem:[%s331 + $0xa70] sm:$0xff]
        %v4359 = vld [vmem:[%s331 + $0xa78] sm:$0xff]
        %v4360 = vld [vmem:[%s331 + $0xa80] sm:$0xff]
        %v4361 = vld [vmem:[%s331 + $0xa88] sm:$0xff]
        %v4362 = vld [vmem:[%s331 + $0xa90] sm:$0xff]
        %v4363 = vld [vmem:[%s331 + $0xa98] sm:$0xff]
        %v4364 = vld [vmem:[%s331 + $0xaa0] sm:$0xff]
        %v4365 = vld [vmem:[%s331 + $0xaa8] sm:$0xff]
        %v4366 = vld [vmem:[%s331 + $0xab0] sm:$0xff]
        %v4367 = vld [vmem:[%s331 + $0xab8] sm:$0xff]
        %v4368 = vld [vmem:[%s331 + $0xac0] sm:$0xff]
        %v4369 = vld [vmem:[%s331 + $0xac8] sm:$0xff]
        %v4370 = vld [vmem:[%s331 + $0xad0] sm:$0xff]
        %v4371 = vld [vmem:[%s331 + $0xad8] sm:$0xff]
        %v4372 = vld [vmem:[%s331 + $0xae0] sm:$0xff]
        %v4373 = vld [vmem:[%s331 + $0xae8] sm:$0xff]
        %v4374 = vld [vmem:[%s331 + $0xaf0] sm:$0xff]
        %v4375 = vld [vmem:[%s331 + $0xaf8] sm:$0xff]
        %v4376 = vld [vmem:[%s331 + $0xb00] sm:$0xff]
        %v4377 = vld [vmem:[%s331 + $0xb08] sm:$0xff]
        %v4378 = vld [vmem:[%s331 + $0xb10] sm:$0xff]
        %v4379 = vld [vmem:[%s331 + $0xb18] sm:$0xff]
        %v4380 = vld [vmem:[%s331 + $0xb20] sm:$0xff]
        %v4381 = vld [vmem:[%s331 + $0xb28] sm:$0xff]
        %v4382 = vld [vmem:[%s331 + $0xb30] sm:$0xff]
        %v4383 = vld [vmem:[%s331 + $0xb38] sm:$0xff]
        %v4384 = vld [vmem:[%s331 + $0xb40] sm:$0xff]
        %v4385 = vld [vmem:[%s331 + $0xb48] sm:$0xff]
        %v4386 = vld [vmem:[%s331 + $0xb50] sm:$0xff]
        %v4387 = vld [vmem:[%s331 + $0xb58] sm:$0xff]
        %v4388 = vld [vmem:[%s331 + $0xb60] sm:$0xff]
        %v4389 = vld [vmem:[%s331 + $0xb68] sm:$0xff]
        %v4390 = vld [vmem:[%s331 + $0xb70] sm:$0xff]
        %v4391 = vld [vmem:[%s331 + $0xb78] sm:$0xff]
        %v4392 = vld [vmem:[%s331 + $0xb80] sm:$0xff]
        %v4393 = vld [vmem:[%s331 + $0xb88] sm:$0xff]
        %v4394 = vld [vmem:[%s331 + $0xb90] sm:$0xff]
        %v4395 = vld [vmem:[%s331 + $0xb98] sm:$0xff]
        %v4396 = vld [vmem:[%s331 + $0xba0] sm:$0xff]
        %v4397 = vld [vmem:[%s331 + $0xba8] sm:$0xff]
        %v4398 = vld [vmem:[%s331 + $0xbb0] sm:$0xff]
        %v4399 = vld [vmem:[%s331 + $0xbb8] sm:$0xff]
        %v4400 = vld [vmem:[%s331 + $0xbc0] sm:$0xff]
        %v4401 = vld [vmem:[%s331 + $0xbc8] sm:$0xff]
        %v4402 = vld [vmem:[%s331 + $0xbd0] sm:$0xff]
        %v4403 = vld [vmem:[%s331 + $0xbd8] sm:$0xff]
        %v4404 = vld [vmem:[%s331 + $0xbe0] sm:$0xff]
        %v4405 = vld [vmem:[%s331 + $0xbe8] sm:$0xff]
        %v4406 = vld [vmem:[%s331 + $0xbf0] sm:$0xff]
        %v4407 = vld [vmem:[%s331 + $0xbf8] sm:$0xff]
        %v4408 = vld [vmem:[%s331 + $0xc00] sm:$0xff]
        %v4409 = vld [vmem:[%s331 + $0xc08] sm:$0xff]
        %v4410 = vld [vmem:[%s331 + $0xc10] sm:$0xff]
        %v4411 = vld [vmem:[%s331 + $0xc18] sm:$0xff]
        %v4412 = vld [vmem:[%s331 + $0xc20] sm:$0xff]
        %v4413 = vld [vmem:[%s331 + $0xc28] sm:$0xff]
        %v4414 = vld [vmem:[%s331 + $0xc30] sm:$0xff]
        %v4415 = vld [vmem:[%s331 + $0xc38] sm:$0xff]
        %v4416 = vld [vmem:[%s331 + $0xc40] sm:$0xff]
        %v4417 = vld [vmem:[%s331 + $0xc48] sm:$0xff]
        %v4418 = vld [vmem:[%s331 + $0xc50] sm:$0xff]
        %v4419 = vld [vmem:[%s331 + $0xc58] sm:$0xff]
        %v4420 = vld [vmem:[%s331 + $0xc60] sm:$0xff]
        %v4421 = vld [vmem:[%s331 + $0xc68] sm:$0xff]
        %v4422 = vld [vmem:[%s331 + $0xc70] sm:$0xff]
        %v4423 = vld [vmem:[%s331 + $0xc78] sm:$0xff]
        %v4424 = vld [vmem:[%s331 + $0xc80] sm:$0xff]
        %v4425 = vld [vmem:[%s331 + $0xc88] sm:$0xff]
        %v4426 = vld [vmem:[%s331 + $0xc90] sm:$0xff]
        %v4427 = vld [vmem:[%s331 + $0xc98] sm:$0xff]
        %v4428 = vld [vmem:[%s331 + $0xca0] sm:$0xff]
        %v4429 = vld [vmem:[%s331 + $0xca8] sm:$0xff]
        %v4430 = vld [vmem:[%s331 + $0xcb0] sm:$0xff]
        %v4431 = vld [vmem:[%s331 + $0xcb8] sm:$0xff]
        %v4432 = vld [vmem:[%s331 + $0xcc0] sm:$0xff]
        %v4433 = vld [vmem:[%s331 + $0xcc8] sm:$0xff]
        %v4434 = vld [vmem:[%s331 + $0xcd0] sm:$0xff]
        %v4435 = vld [vmem:[%s331 + $0xcd8] sm:$0xff]
        %v4436 = vld [vmem:[%s331 + $0xce0] sm:$0xff]
        %v4437 = vld [vmem:[%s331 + $0xce8] sm:$0xff]
        %v4438 = vld [vmem:[%s331 + $0xcf0] sm:$0xff]
        %v4439 = vld [vmem:[%s331 + $0xcf8] sm:$0xff]
        %v4440 = vld [vmem:[%s331 + $0xd00] sm:$0xff]
        %v4441 = vld [vmem:[%s331 + $0xd08] sm:$0xff]
        %v4442 = vld [vmem:[%s331 + $0xd10] sm:$0xff]
        %v4443 = vld [vmem:[%s331 + $0xd18] sm:$0xff]
        %v4444 = vld [vmem:[%s331 + $0xd20] sm:$0xff]
        %v4445 = vld [vmem:[%s331 + $0xd28] sm:$0xff]
        %v4446 = vld [vmem:[%s331 + $0xd30] sm:$0xff]
        %v4447 = vld [vmem:[%s331 + $0xd38] sm:$0xff]
        %v4448 = vld [vmem:[%s331 + $0xd40] sm:$0xff]
        %v4449 = vld [vmem:[%s331 + $0xd48] sm:$0xff]
        %v4450 = vld [vmem:[%s331 + $0xd50] sm:$0xff]
        %v4451 = vld [vmem:[%s331 + $0xd58] sm:$0xff]
        %v4452 = vld [vmem:[%s331 + $0xd60] sm:$0xff]
        %v4453 = vld [vmem:[%s331 + $0xd68] sm:$0xff]
        %v4454 = vld [vmem:[%s331 + $0xd70] sm:$0xff]
        %v4455 = vld [vmem:[%s331 + $0xd78] sm:$0xff]
        %v4456 = vld [vmem:[%s331 + $0xd80] sm:$0xff]
        %v4457 = vld [vmem:[%s331 + $0xd88] sm:$0xff]
        %v4458 = vld [vmem:[%s331 + $0xd90] sm:$0xff]
        %v4459 = vld [vmem:[%s331 + $0xd98] sm:$0xff]
        %v4460 = vld [vmem:[%s331 + $0xda0] sm:$0xff]
        %v4461 = vld [vmem:[%s331 + $0xda8] sm:$0xff]
        %v4462 = vld [vmem:[%s331 + $0xdb0] sm:$0xff]
        %v4463 = vld [vmem:[%s331 + $0xdb8] sm:$0xff]
        %v4464 = vld [vmem:[%s331 + $0xdc0] sm:$0xff]
        %v4465 = vld [vmem:[%s331 + $0xdc8] sm:$0xff]
        %v4466 = vld [vmem:[%s331 + $0xdd0] sm:$0xff]
        %v4467 = vld [vmem:[%s331 + $0xdd8] sm:$0xff]
        %v4468 = vld [vmem:[%s331 + $0xde0] sm:$0xff]
        %v4469 = vld [vmem:[%s331 + $0xde8] sm:$0xff]
        %v4470 = vld [vmem:[%s331 + $0xdf0] sm:$0xff]
        %v4471 = vld [vmem:[%s331 + $0xdf8] sm:$0xff]
        %v4472 = vld [vmem:[%s331 + $0xe00] sm:$0xff]
        %v4473 = vld [vmem:[%s331 + $0xe08] sm:$0xff]
        %v4474 = vld [vmem:[%s331 + $0xe10] sm:$0xff]
        %v4475 = vld [vmem:[%s331 + $0xe18] sm:$0xff]
        %v4476 = vld [vmem:[%s331 + $0xe20] sm:$0xff]
        %v4477 = vld [vmem:[%s331 + $0xe28] sm:$0xff]
        %v4478 = vld [vmem:[%s331 + $0xe30] sm:$0xff]
        %v4479 = vld [vmem:[%s331 + $0xe38] sm:$0xff]
        %v4480 = vld [vmem:[%s331 + $0xe40] sm:$0xff]
        %v4481 = vld [vmem:[%s331 + $0xe48] sm:$0xff]
        %v4482 = vld [vmem:[%s331 + $0xe50] sm:$0xff]
        %v4483 = vld [vmem:[%s331 + $0xe58] sm:$0xff]
        %v4484 = vld [vmem:[%s331 + $0xe60] sm:$0xff]
        %v4485 = vld [vmem:[%s331 + $0xe68] sm:$0xff]
        %v4486 = vld [vmem:[%s331 + $0xe70] sm:$0xff]
        %v4487 = vld [vmem:[%s331 + $0xe78] sm:$0xff]
        %v4488 = vld [vmem:[%s331 + $0xe80] sm:$0xff]
        %v4489 = vld [vmem:[%s331 + $0xe88] sm:$0xff]
        %v4490 = vld [vmem:[%s331 + $0xe90] sm:$0xff]
        %v4491 = vld [vmem:[%s331 + $0xe98] sm:$0xff]
        %v4492 = vld [vmem:[%s331 + $0xea0] sm:$0xff]
        %v4493 = vld [vmem:[%s331 + $0xea8] sm:$0xff]
        %v4494 = vld [vmem:[%s331 + $0xeb0] sm:$0xff]
        %v4495 = vld [vmem:[%s331 + $0xeb8] sm:$0xff]
        %v4496 = vld [vmem:[%s331 + $0xec0] sm:$0xff]
        %v4497 = vld [vmem:[%s331 + $0xec8] sm:$0xff]
        %v4498 = vld [vmem:[%s331 + $0xed0] sm:$0xff]
        %v4499 = vld [vmem:[%s331 + $0xed8] sm:$0xff]
        %v4500 = vld [vmem:[%s331 + $0xee0] sm:$0xff]
        %v4501 = vld [vmem:[%s331 + $0xee8] sm:$0xff]
        %v4502 = vld [vmem:[%s331 + $0xef0] sm:$0xff]
        %v4503 = vld [vmem:[%s331 + $0xef8] sm:$0xff]
        %v4504 = vld [vmem:[%s331 + $0xf00] sm:$0xff]
        %v4505 = vld [vmem:[%s331 + $0xf08] sm:$0xff]
        %v4506 = vld [vmem:[%s331 + $0xf10] sm:$0xff]
        %v4507 = vld [vmem:[%s331 + $0xf18] sm:$0xff]
        %v4508 = vld [vmem:[%s331 + $0xf20] sm:$0xff]
        %v4509 = vld [vmem:[%s331 + $0xf28] sm:$0xff]
        %v4510 = vld [vmem:[%s331 + $0xf30] sm:$0xff]
        %v4511 = vld [vmem:[%s331 + $0xf38] sm:$0xff]
        %v4512 = vld [vmem:[%s331 + $0xf40] sm:$0xff]
        %v4513 = vld [vmem:[%s331 + $0xf48] sm:$0xff]
        %v4514 = vld [vmem:[%s331 + $0xf50] sm:$0xff]
        %v4515 = vld [vmem:[%s331 + $0xf58] sm:$0xff]
        %v4516 = vld [vmem:[%s331 + $0xf60] sm:$0xff]
        %v4517 = vld [vmem:[%s331 + $0xf68] sm:$0xff]
        %v4518 = vld [vmem:[%s331 + $0xf70] sm:$0xff]
        %v4519 = vld [vmem:[%s331 + $0xf78] sm:$0xff]
        %v4520 = vld [vmem:[%s331 + $0xf80] sm:$0xff]
        %v4521 = vld [vmem:[%s331 + $0xf88] sm:$0xff]
        %v4522 = vld [vmem:[%s331 + $0xf90] sm:$0xff]
        %v4523 = vld [vmem:[%s331 + $0xf98] sm:$0xff]
        %v4524 = vld [vmem:[%s331 + $0xfa0] sm:$0xff]
        %v4525 = vld [vmem:[%s331 + $0xfa8] sm:$0xff]
        %v4526 = vld [vmem:[%s331 + $0xfb0] sm:$0xff]
        %v4527 = vld [vmem:[%s331 + $0xfb8] sm:$0xff]
        %v4528 = vld [vmem:[%s331 + $0xfc0] sm:$0xff]
        %v4529 = vld [vmem:[%s331 + $0xfc8] sm:$0xff]
        %v4530 = vld [vmem:[%s331 + $0xfd0] sm:$0xff]
        %v4531 = vld [vmem:[%s331 + $0xfd8] sm:$0xff]
        %v4532 = vld [vmem:[%s331 + $0xfe0] sm:$0xff]
        %v4533 = vld [vmem:[%s331 + $0xfe8] sm:$0xff]
        %v4534 = vld [vmem:[%s331 + $0xff0] sm:$0xff]
        %v4535 = vld [vmem:[%s331 + $0xff8] sm:$0xff]
        %v4536 = vunpack.c.l.s8.bf16 %v4024
        %v4537 = vunpack.c.l.s8.bf16 %v4025
        %v4538 = vunpack.c.l.s8.bf16 %v4026
        %v4539 = vunpack.c.l.s8.bf16 %v4027
        %v4540 = vunpack.c.l.s8.bf16 %v4028
        %v4541 = vunpack.c.l.s8.bf16 %v4029
        %v4542 = vunpack.c.l.s8.bf16 %v4030
        %v4543 = vunpack.c.l.s8.bf16 %v4031
        %v4544 = vunpack.c.l.s8.bf16 %v4032
        %v4545 = vunpack.c.l.s8.bf16 %v4033
        %v4546 = vunpack.c.l.s8.bf16 %v4034
        %v4547 = vunpack.c.l.s8.bf16 %v4035
        %v4548 = vunpack.c.l.s8.bf16 %v4036
        %v4549 = vunpack.c.l.s8.bf16 %v4037
        %v4550 = vunpack.c.l.s8.bf16 %v4038
        %v4551 = vunpack.c.l.s8.bf16 %v4039
        %v4552 = vunpack.c.h.s8.bf16 %v4024
        %v4553 = vunpack.c.h.s8.bf16 %v4025
        %v4554 = vunpack.c.h.s8.bf16 %v4026
        %v4555 = vunpack.c.h.s8.bf16 %v4027
        %v4556 = vunpack.c.h.s8.bf16 %v4028
        %v4557 = vunpack.c.h.s8.bf16 %v4029
        %v4558 = vunpack.c.h.s8.bf16 %v4030
        %v4559 = vunpack.c.h.s8.bf16 %v4031
        %v4560 = vunpack.c.h.s8.bf16 %v4032
        %v4561 = vunpack.c.h.s8.bf16 %v4033
        %v4562 = vunpack.c.h.s8.bf16 %v4034
        %v4563 = vunpack.c.h.s8.bf16 %v4035
        %v4564 = vunpack.c.h.s8.bf16 %v4036
        %v4565 = vunpack.c.h.s8.bf16 %v4037
        %v4566 = vunpack.c.h.s8.bf16 %v4038
        %v4567 = vunpack.c.h.s8.bf16 %v4039
        %v4568 = vunpack.c.l.s8.bf16 %v4040
        %v4569 = vunpack.c.l.s8.bf16 %v4041
        %v4570 = vunpack.c.l.s8.bf16 %v4042
        %v4571 = vunpack.c.l.s8.bf16 %v4043
        %v4572 = vunpack.c.l.s8.bf16 %v4044
        %v4573 = vunpack.c.l.s8.bf16 %v4045
        %v4574 = vunpack.c.l.s8.bf16 %v4046
        %v4575 = vunpack.c.l.s8.bf16 %v4047
        %v4576 = vunpack.c.l.s8.bf16 %v4048
        %v4577 = vunpack.c.l.s8.bf16 %v4049
        %v4578 = vunpack.c.l.s8.bf16 %v4050
        %v4579 = vunpack.c.l.s8.bf16 %v4051
        %v4580 = vunpack.c.l.s8.bf16 %v4052
        %v4581 = vunpack.c.l.s8.bf16 %v4053
        %v4582 = vunpack.c.l.s8.bf16 %v4054
        %v4583 = vunpack.c.l.s8.bf16 %v4055
        %v4584 = vunpack.c.h.s8.bf16 %v4040
        %v4585 = vunpack.c.h.s8.bf16 %v4041
        %v4586 = vunpack.c.h.s8.bf16 %v4042
        %v4587 = vunpack.c.h.s8.bf16 %v4043
        %v4588 = vunpack.c.h.s8.bf16 %v4044
        %v4589 = vunpack.c.h.s8.bf16 %v4045
        %v4590 = vunpack.c.h.s8.bf16 %v4046
        %v4591 = vunpack.c.h.s8.bf16 %v4047
        %v4592 = vunpack.c.h.s8.bf16 %v4048
        %v4593 = vunpack.c.h.s8.bf16 %v4049
        %v4594 = vunpack.c.h.s8.bf16 %v4050
        %v4595 = vunpack.c.h.s8.bf16 %v4051
        %v4596 = vunpack.c.h.s8.bf16 %v4052
        %v4597 = vunpack.c.h.s8.bf16 %v4053
        %v4598 = vunpack.c.h.s8.bf16 %v4054
        %v4599 = vunpack.c.h.s8.bf16 %v4055
        %v4600 = vunpack.c.l.s8.bf16 %v4056
        %v4601 = vunpack.c.l.s8.bf16 %v4057
        %v4602 = vunpack.c.l.s8.bf16 %v4058
        %v4603 = vunpack.c.l.s8.bf16 %v4059
        %v4604 = vunpack.c.l.s8.bf16 %v4060
        %v4605 = vunpack.c.l.s8.bf16 %v4061
        %v4606 = vunpack.c.l.s8.bf16 %v4062
        %v4607 = vunpack.c.l.s8.bf16 %v4063
        %v4608 = vunpack.c.l.s8.bf16 %v4064
        %v4609 = vunpack.c.l.s8.bf16 %v4065
        %v4610 = vunpack.c.l.s8.bf16 %v4066
        %v4611 = vunpack.c.l.s8.bf16 %v4067
        %v4612 = vunpack.c.l.s8.bf16 %v4068
        %v4613 = vunpack.c.l.s8.bf16 %v4069
        %v4614 = vunpack.c.l.s8.bf16 %v4070
        %v4615 = vunpack.c.l.s8.bf16 %v4071
        %v4616 = vunpack.c.h.s8.bf16 %v4056
        %v4617 = vunpack.c.h.s8.bf16 %v4057
        %v4618 = vunpack.c.h.s8.bf16 %v4058
        %v4619 = vunpack.c.h.s8.bf16 %v4059
        %v4620 = vunpack.c.h.s8.bf16 %v4060
        %v4621 = vunpack.c.h.s8.bf16 %v4061
        %v4622 = vunpack.c.h.s8.bf16 %v4062
        %v4623 = vunpack.c.h.s8.bf16 %v4063
        %v4624 = vunpack.c.h.s8.bf16 %v4064
        %v4625 = vunpack.c.h.s8.bf16 %v4065
        %v4626 = vunpack.c.h.s8.bf16 %v4066
        %v4627 = vunpack.c.h.s8.bf16 %v4067
        %v4628 = vunpack.c.h.s8.bf16 %v4068
        %v4629 = vunpack.c.h.s8.bf16 %v4069
        %v4630 = vunpack.c.h.s8.bf16 %v4070
        %v4631 = vunpack.c.h.s8.bf16 %v4071
        %v4632 = vunpack.c.l.s8.bf16 %v4072
        %v4633 = vunpack.c.l.s8.bf16 %v4073
        %v4634 = vunpack.c.l.s8.bf16 %v4074
        %v4635 = vunpack.c.l.s8.bf16 %v4075
        %v4636 = vunpack.c.l.s8.bf16 %v4076
        %v4637 = vunpack.c.l.s8.bf16 %v4077
        %v4638 = vunpack.c.l.s8.bf16 %v4078
        %v4639 = vunpack.c.l.s8.bf16 %v4079
        %v4640 = vunpack.c.l.s8.bf16 %v4080
        %v4641 = vunpack.c.l.s8.bf16 %v4081
        %v4642 = vunpack.c.l.s8.bf16 %v4082
        %v4643 = vunpack.c.l.s8.bf16 %v4083
        %v4644 = vunpack.c.l.s8.bf16 %v4084
        %v4645 = vunpack.c.l.s8.bf16 %v4085
        %v4646 = vunpack.c.l.s8.bf16 %v4086
        %v4647 = vunpack.c.l.s8.bf16 %v4087
        %v4648 = vunpack.c.h.s8.bf16 %v4072
        %v4649 = vunpack.c.h.s8.bf16 %v4073
        %v4650 = vunpack.c.h.s8.bf16 %v4074
        %v4651 = vunpack.c.h.s8.bf16 %v4075
        %v4652 = vunpack.c.h.s8.bf16 %v4076
        %v4653 = vunpack.c.h.s8.bf16 %v4077
        %v4654 = vunpack.c.h.s8.bf16 %v4078
        %v4655 = vunpack.c.h.s8.bf16 %v4079
        %v4656 = vunpack.c.h.s8.bf16 %v4080
        %v4657 = vunpack.c.h.s8.bf16 %v4081
        %v4658 = vunpack.c.h.s8.bf16 %v4082
        %v4659 = vunpack.c.h.s8.bf16 %v4083
        %v4660 = vunpack.c.h.s8.bf16 %v4084
        %v4661 = vunpack.c.h.s8.bf16 %v4085
        %v4662 = vunpack.c.h.s8.bf16 %v4086
        %v4663 = vunpack.c.h.s8.bf16 %v4087
        %v4664 = vunpack.c.l.s8.bf16 %v4088
        %v4665 = vunpack.c.l.s8.bf16 %v4089
        %v4666 = vunpack.c.l.s8.bf16 %v4090
        %v4667 = vunpack.c.l.s8.bf16 %v4091
        %v4668 = vunpack.c.l.s8.bf16 %v4092
        %v4669 = vunpack.c.l.s8.bf16 %v4093
        %v4670 = vunpack.c.l.s8.bf16 %v4094
        %v4671 = vunpack.c.l.s8.bf16 %v4095
        %v4672 = vunpack.c.l.s8.bf16 %v4096
        %v4673 = vunpack.c.l.s8.bf16 %v4097
        %v4674 = vunpack.c.l.s8.bf16 %v4098
        %v4675 = vunpack.c.l.s8.bf16 %v4099
        %v4676 = vunpack.c.l.s8.bf16 %v4100
        %v4677 = vunpack.c.l.s8.bf16 %v4101
        %v4678 = vunpack.c.l.s8.bf16 %v4102
        %v4679 = vunpack.c.l.s8.bf16 %v4103
        %v4680 = vunpack.c.h.s8.bf16 %v4088
        %v4681 = vunpack.c.h.s8.bf16 %v4089
        %v4682 = vunpack.c.h.s8.bf16 %v4090
        %v4683 = vunpack.c.h.s8.bf16 %v4091
        %v4684 = vunpack.c.h.s8.bf16 %v4092
        %v4685 = vunpack.c.h.s8.bf16 %v4093
        %v4686 = vunpack.c.h.s8.bf16 %v4094
        %v4687 = vunpack.c.h.s8.bf16 %v4095
        %v4688 = vunpack.c.h.s8.bf16 %v4096
        %v4689 = vunpack.c.h.s8.bf16 %v4097
        %v4690 = vunpack.c.h.s8.bf16 %v4098
        %v4691 = vunpack.c.h.s8.bf16 %v4099
        %v4692 = vunpack.c.h.s8.bf16 %v4100
        %v4693 = vunpack.c.h.s8.bf16 %v4101
        %v4694 = vunpack.c.h.s8.bf16 %v4102
        %v4695 = vunpack.c.h.s8.bf16 %v4103
        %v4696 = vunpack.c.l.s8.bf16 %v4104
        %v4697 = vunpack.c.l.s8.bf16 %v4105
        %v4698 = vunpack.c.l.s8.bf16 %v4106
        %v4699 = vunpack.c.l.s8.bf16 %v4107
        %v4700 = vunpack.c.l.s8.bf16 %v4108
        %v4701 = vunpack.c.l.s8.bf16 %v4109
        %v4702 = vunpack.c.l.s8.bf16 %v4110
        %v4703 = vunpack.c.l.s8.bf16 %v4111
        %v4704 = vunpack.c.l.s8.bf16 %v4112
        %v4705 = vunpack.c.l.s8.bf16 %v4113
        %v4706 = vunpack.c.l.s8.bf16 %v4114
        %v4707 = vunpack.c.l.s8.bf16 %v4115
        %v4708 = vunpack.c.l.s8.bf16 %v4116
        %v4709 = vunpack.c.l.s8.bf16 %v4117
        %v4710 = vunpack.c.l.s8.bf16 %v4118
        %v4711 = vunpack.c.l.s8.bf16 %v4119
        %v4712 = vunpack.c.h.s8.bf16 %v4104
        %v4713 = vunpack.c.h.s8.bf16 %v4105
        %v4714 = vunpack.c.h.s8.bf16 %v4106
        %v4715 = vunpack.c.h.s8.bf16 %v4107
        %v4716 = vunpack.c.h.s8.bf16 %v4108
        %v4717 = vunpack.c.h.s8.bf16 %v4109
        %v4718 = vunpack.c.h.s8.bf16 %v4110
        %v4719 = vunpack.c.h.s8.bf16 %v4111
        %v4720 = vunpack.c.h.s8.bf16 %v4112
        %v4721 = vunpack.c.h.s8.bf16 %v4113
        %v4722 = vunpack.c.h.s8.bf16 %v4114
        %v4723 = vunpack.c.h.s8.bf16 %v4115
        %v4724 = vunpack.c.h.s8.bf16 %v4116
        %v4725 = vunpack.c.h.s8.bf16 %v4117
        %v4726 = vunpack.c.h.s8.bf16 %v4118
        %v4727 = vunpack.c.h.s8.bf16 %v4119
        %v4728 = vunpack.c.l.s8.bf16 %v4120
        %v4729 = vunpack.c.l.s8.bf16 %v4121
        %v4730 = vunpack.c.l.s8.bf16 %v4122
        %v4731 = vunpack.c.l.s8.bf16 %v4123
        %v4732 = vunpack.c.l.s8.bf16 %v4124
        %v4733 = vunpack.c.l.s8.bf16 %v4125
        %v4734 = vunpack.c.l.s8.bf16 %v4126
        %v4735 = vunpack.c.l.s8.bf16 %v4127
        %v4736 = vunpack.c.l.s8.bf16 %v4128
        %v4737 = vunpack.c.l.s8.bf16 %v4129
        %v4738 = vunpack.c.l.s8.bf16 %v4130
        %v4739 = vunpack.c.l.s8.bf16 %v4131
        %v4740 = vunpack.c.l.s8.bf16 %v4132
        %v4741 = vunpack.c.l.s8.bf16 %v4133
        %v4742 = vunpack.c.l.s8.bf16 %v4134
        %v4743 = vunpack.c.l.s8.bf16 %v4135
        %v4744 = vunpack.c.h.s8.bf16 %v4120
        %v4745 = vunpack.c.h.s8.bf16 %v4121
        %v4746 = vunpack.c.h.s8.bf16 %v4122
        %v4747 = vunpack.c.h.s8.bf16 %v4123
        %v4748 = vunpack.c.h.s8.bf16 %v4124
        %v4749 = vunpack.c.h.s8.bf16 %v4125
        %v4750 = vunpack.c.h.s8.bf16 %v4126
        %v4751 = vunpack.c.h.s8.bf16 %v4127
        %v4752 = vunpack.c.h.s8.bf16 %v4128
        %v4753 = vunpack.c.h.s8.bf16 %v4129
        %v4754 = vunpack.c.h.s8.bf16 %v4130
        %v4755 = vunpack.c.h.s8.bf16 %v4131
        %v4756 = vunpack.c.h.s8.bf16 %v4132
        %v4757 = vunpack.c.h.s8.bf16 %v4133
        %v4758 = vunpack.c.h.s8.bf16 %v4134
        %v4759 = vunpack.c.h.s8.bf16 %v4135
        %v4760 = vunpack.c.l.s8.bf16 %v4136
        %v4761 = vunpack.c.l.s8.bf16 %v4137
        %v4762 = vunpack.c.l.s8.bf16 %v4138
        %v4763 = vunpack.c.l.s8.bf16 %v4139
        %v4764 = vunpack.c.l.s8.bf16 %v4140
        %v4765 = vunpack.c.l.s8.bf16 %v4141
        %v4766 = vunpack.c.l.s8.bf16 %v4142
        %v4767 = vunpack.c.l.s8.bf16 %v4143
        %v4768 = vunpack.c.l.s8.bf16 %v4144
        %v4769 = vunpack.c.l.s8.bf16 %v4145
        %v4770 = vunpack.c.l.s8.bf16 %v4146
        %v4771 = vunpack.c.l.s8.bf16 %v4147
        %v4772 = vunpack.c.l.s8.bf16 %v4148
        %v4773 = vunpack.c.l.s8.bf16 %v4149
        %v4774 = vunpack.c.l.s8.bf16 %v4150
        %v4775 = vunpack.c.l.s8.bf16 %v4151
        %v4776 = vunpack.c.h.s8.bf16 %v4136
        %v4777 = vunpack.c.h.s8.bf16 %v4137
        %v4778 = vunpack.c.h.s8.bf16 %v4138
        %v4779 = vunpack.c.h.s8.bf16 %v4139
        %v4780 = vunpack.c.h.s8.bf16 %v4140
        %v4781 = vunpack.c.h.s8.bf16 %v4141
        %v4782 = vunpack.c.h.s8.bf16 %v4142
        %v4783 = vunpack.c.h.s8.bf16 %v4143
        %v4784 = vunpack.c.h.s8.bf16 %v4144
        %v4785 = vunpack.c.h.s8.bf16 %v4145
        %v4786 = vunpack.c.h.s8.bf16 %v4146
        %v4787 = vunpack.c.h.s8.bf16 %v4147
        %v4788 = vunpack.c.h.s8.bf16 %v4148
        %v4789 = vunpack.c.h.s8.bf16 %v4149
        %v4790 = vunpack.c.h.s8.bf16 %v4150
        %v4791 = vunpack.c.h.s8.bf16 %v4151
        %v4792 = vunpack.c.l.s8.bf16 %v4152
        %v4793 = vunpack.c.l.s8.bf16 %v4153
        %v4794 = vunpack.c.l.s8.bf16 %v4154
        %v4795 = vunpack.c.l.s8.bf16 %v4155
        %v4796 = vunpack.c.l.s8.bf16 %v4156
        %v4797 = vunpack.c.l.s8.bf16 %v4157
        %v4798 = vunpack.c.l.s8.bf16 %v4158
        %v4799 = vunpack.c.l.s8.bf16 %v4159
        %v4800 = vunpack.c.l.s8.bf16 %v4160
        %v4801 = vunpack.c.l.s8.bf16 %v4161
        %v4802 = vunpack.c.l.s8.bf16 %v4162
        %v4803 = vunpack.c.l.s8.bf16 %v4163
        %v4804 = vunpack.c.l.s8.bf16 %v4164
        %v4805 = vunpack.c.l.s8.bf16 %v4165
        %v4806 = vunpack.c.l.s8.bf16 %v4166
        %v4807 = vunpack.c.l.s8.bf16 %v4167
        %v4808 = vunpack.c.h.s8.bf16 %v4152
        %v4809 = vunpack.c.h.s8.bf16 %v4153
        %v4810 = vunpack.c.h.s8.bf16 %v4154
        %v4811 = vunpack.c.h.s8.bf16 %v4155
        %v4812 = vunpack.c.h.s8.bf16 %v4156
        %v4813 = vunpack.c.h.s8.bf16 %v4157
        %v4814 = vunpack.c.h.s8.bf16 %v4158
        %v4815 = vunpack.c.h.s8.bf16 %v4159
        %v4816 = vunpack.c.h.s8.bf16 %v4160
        %v4817 = vunpack.c.h.s8.bf16 %v4161
        %v4818 = vunpack.c.h.s8.bf16 %v4162
        %v4819 = vunpack.c.h.s8.bf16 %v4163
        %v4820 = vunpack.c.h.s8.bf16 %v4164
        %v4821 = vunpack.c.h.s8.bf16 %v4165
        %v4822 = vunpack.c.h.s8.bf16 %v4166
        %v4823 = vunpack.c.h.s8.bf16 %v4167
        %v4824 = vunpack.c.l.s8.bf16 %v4168
        %v4825 = vunpack.c.l.s8.bf16 %v4169
        %v4826 = vunpack.c.l.s8.bf16 %v4170
        %v4827 = vunpack.c.l.s8.bf16 %v4171
        %v4828 = vunpack.c.l.s8.bf16 %v4172
        %v4829 = vunpack.c.l.s8.bf16 %v4173
        %v4830 = vunpack.c.l.s8.bf16 %v4174
        %v4831 = vunpack.c.l.s8.bf16 %v4175
        %v4832 = vunpack.c.l.s8.bf16 %v4176
        %v4833 = vunpack.c.l.s8.bf16 %v4177
        %v4834 = vunpack.c.l.s8.bf16 %v4178
        %v4835 = vunpack.c.l.s8.bf16 %v4179
        %v4836 = vunpack.c.l.s8.bf16 %v4180
        %v4837 = vunpack.c.l.s8.bf16 %v4181
        %v4838 = vunpack.c.l.s8.bf16 %v4182
        %v4839 = vunpack.c.l.s8.bf16 %v4183
        %v4840 = vunpack.c.h.s8.bf16 %v4168
        %v4841 = vunpack.c.h.s8.bf16 %v4169
        %v4842 = vunpack.c.h.s8.bf16 %v4170
        %v4843 = vunpack.c.h.s8.bf16 %v4171
        %v4844 = vunpack.c.h.s8.bf16 %v4172
        %v4845 = vunpack.c.h.s8.bf16 %v4173
        %v4846 = vunpack.c.h.s8.bf16 %v4174
        %v4847 = vunpack.c.h.s8.bf16 %v4175
        %v4848 = vunpack.c.h.s8.bf16 %v4176
        %v4849 = vunpack.c.h.s8.bf16 %v4177
        %v4850 = vunpack.c.h.s8.bf16 %v4178
        %v4851 = vunpack.c.h.s8.bf16 %v4179
        %v4852 = vunpack.c.h.s8.bf16 %v4180
        %v4853 = vunpack.c.h.s8.bf16 %v4181
        %v4854 = vunpack.c.h.s8.bf16 %v4182
        %v4855 = vunpack.c.h.s8.bf16 %v4183
        %v4856 = vunpack.c.l.s8.bf16 %v4184
        %v4857 = vunpack.c.l.s8.bf16 %v4185
        %v4858 = vunpack.c.l.s8.bf16 %v4186
        %v4859 = vunpack.c.l.s8.bf16 %v4187
        %v4860 = vunpack.c.l.s8.bf16 %v4188
        %v4861 = vunpack.c.l.s8.bf16 %v4189
        %v4862 = vunpack.c.l.s8.bf16 %v4190
        %v4863 = vunpack.c.l.s8.bf16 %v4191
        %v4864 = vunpack.c.l.s8.bf16 %v4192
        %v4865 = vunpack.c.l.s8.bf16 %v4193
        %v4866 = vunpack.c.l.s8.bf16 %v4194
        %v4867 = vunpack.c.l.s8.bf16 %v4195
        %v4868 = vunpack.c.l.s8.bf16 %v4196
        %v4869 = vunpack.c.l.s8.bf16 %v4197
        %v4870 = vunpack.c.l.s8.bf16 %v4198
        %v4871 = vunpack.c.l.s8.bf16 %v4199
        %v4872 = vunpack.c.h.s8.bf16 %v4184
        %v4873 = vunpack.c.h.s8.bf16 %v4185
        %v4874 = vunpack.c.h.s8.bf16 %v4186
        %v4875 = vunpack.c.h.s8.bf16 %v4187
        %v4876 = vunpack.c.h.s8.bf16 %v4188
        %v4877 = vunpack.c.h.s8.bf16 %v4189
        %v4878 = vunpack.c.h.s8.bf16 %v4190
        %v4879 = vunpack.c.h.s8.bf16 %v4191
        %v4880 = vunpack.c.h.s8.bf16 %v4192
        %v4881 = vunpack.c.h.s8.bf16 %v4193
        %v4882 = vunpack.c.h.s8.bf16 %v4194
        %v4883 = vunpack.c.h.s8.bf16 %v4195
        %v4884 = vunpack.c.h.s8.bf16 %v4196
        %v4885 = vunpack.c.h.s8.bf16 %v4197
        %v4886 = vunpack.c.h.s8.bf16 %v4198
        %v4887 = vunpack.c.h.s8.bf16 %v4199
        %v4888 = vunpack.c.l.s8.bf16 %v4200
        %v4889 = vunpack.c.l.s8.bf16 %v4201
        %v4890 = vunpack.c.l.s8.bf16 %v4202
        %v4891 = vunpack.c.l.s8.bf16 %v4203
        %v4892 = vunpack.c.l.s8.bf16 %v4204
        %v4893 = vunpack.c.l.s8.bf16 %v4205
        %v4894 = vunpack.c.l.s8.bf16 %v4206
        %v4895 = vunpack.c.l.s8.bf16 %v4207
        %v4896 = vunpack.c.l.s8.bf16 %v4208
        %v4897 = vunpack.c.l.s8.bf16 %v4209
        %v4898 = vunpack.c.l.s8.bf16 %v4210
        %v4899 = vunpack.c.l.s8.bf16 %v4211
        %v4900 = vunpack.c.l.s8.bf16 %v4212
        %v4901 = vunpack.c.l.s8.bf16 %v4213
        %v4902 = vunpack.c.l.s8.bf16 %v4214
        %v4903 = vunpack.c.l.s8.bf16 %v4215
        %v4904 = vunpack.c.h.s8.bf16 %v4200
        %v4905 = vunpack.c.h.s8.bf16 %v4201
        %v4906 = vunpack.c.h.s8.bf16 %v4202
        %v4907 = vunpack.c.h.s8.bf16 %v4203
        %v4908 = vunpack.c.h.s8.bf16 %v4204
        %v4909 = vunpack.c.h.s8.bf16 %v4205
        %v4910 = vunpack.c.h.s8.bf16 %v4206
        %v4911 = vunpack.c.h.s8.bf16 %v4207
        %v4912 = vunpack.c.h.s8.bf16 %v4208
        %v4913 = vunpack.c.h.s8.bf16 %v4209
        %v4914 = vunpack.c.h.s8.bf16 %v4210
        %v4915 = vunpack.c.h.s8.bf16 %v4211
        %v4916 = vunpack.c.h.s8.bf16 %v4212
        %v4917 = vunpack.c.h.s8.bf16 %v4213
        %v4918 = vunpack.c.h.s8.bf16 %v4214
        %v4919 = vunpack.c.h.s8.bf16 %v4215
        %v4920 = vunpack.c.l.s8.bf16 %v4216
        %v4921 = vunpack.c.l.s8.bf16 %v4217
        %v4922 = vunpack.c.l.s8.bf16 %v4218
        %v4923 = vunpack.c.l.s8.bf16 %v4219
        %v4924 = vunpack.c.l.s8.bf16 %v4220
        %v4925 = vunpack.c.l.s8.bf16 %v4221
        %v4926 = vunpack.c.l.s8.bf16 %v4222
        %v4927 = vunpack.c.l.s8.bf16 %v4223
        %v4928 = vunpack.c.l.s8.bf16 %v4224
        %v4929 = vunpack.c.l.s8.bf16 %v4225
        %v4930 = vunpack.c.l.s8.bf16 %v4226
        %v4931 = vunpack.c.l.s8.bf16 %v4227
        %v4932 = vunpack.c.l.s8.bf16 %v4228
        %v4933 = vunpack.c.l.s8.bf16 %v4229
        %v4934 = vunpack.c.l.s8.bf16 %v4230
        %v4935 = vunpack.c.l.s8.bf16 %v4231
        %v4936 = vunpack.c.h.s8.bf16 %v4216
        %v4937 = vunpack.c.h.s8.bf16 %v4217
        %v4938 = vunpack.c.h.s8.bf16 %v4218
        %v4939 = vunpack.c.h.s8.bf16 %v4219
        %v4940 = vunpack.c.h.s8.bf16 %v4220
        %v4941 = vunpack.c.h.s8.bf16 %v4221
        %v4942 = vunpack.c.h.s8.bf16 %v4222
        %v4943 = vunpack.c.h.s8.bf16 %v4223
        %v4944 = vunpack.c.h.s8.bf16 %v4224
        %v4945 = vunpack.c.h.s8.bf16 %v4225
        %v4946 = vunpack.c.h.s8.bf16 %v4226
        %v4947 = vunpack.c.h.s8.bf16 %v4227
        %v4948 = vunpack.c.h.s8.bf16 %v4228
        %v4949 = vunpack.c.h.s8.bf16 %v4229
        %v4950 = vunpack.c.h.s8.bf16 %v4230
        %v4951 = vunpack.c.h.s8.bf16 %v4231
        %v4952 = vunpack.c.l.s8.bf16 %v4232
        %v4953 = vunpack.c.l.s8.bf16 %v4233
        %v4954 = vunpack.c.l.s8.bf16 %v4234
        %v4955 = vunpack.c.l.s8.bf16 %v4235
        %v4956 = vunpack.c.l.s8.bf16 %v4236
        %v4957 = vunpack.c.l.s8.bf16 %v4237
        %v4958 = vunpack.c.l.s8.bf16 %v4238
        %v4959 = vunpack.c.l.s8.bf16 %v4239
        %v4960 = vunpack.c.l.s8.bf16 %v4240
        %v4961 = vunpack.c.l.s8.bf16 %v4241
        %v4962 = vunpack.c.l.s8.bf16 %v4242
        %v4963 = vunpack.c.l.s8.bf16 %v4243
        %v4964 = vunpack.c.l.s8.bf16 %v4244
        %v4965 = vunpack.c.l.s8.bf16 %v4245
        %v4966 = vunpack.c.l.s8.bf16 %v4246
        %v4967 = vunpack.c.l.s8.bf16 %v4247
        %v4968 = vunpack.c.h.s8.bf16 %v4232
        %v4969 = vunpack.c.h.s8.bf16 %v4233
        %v4970 = vunpack.c.h.s8.bf16 %v4234
        %v4971 = vunpack.c.h.s8.bf16 %v4235
        %v4972 = vunpack.c.h.s8.bf16 %v4236
        %v4973 = vunpack.c.h.s8.bf16 %v4237
        %v4974 = vunpack.c.h.s8.bf16 %v4238
        %v4975 = vunpack.c.h.s8.bf16 %v4239
        %v4976 = vunpack.c.h.s8.bf16 %v4240
        %v4977 = vunpack.c.h.s8.bf16 %v4241
        %v4978 = vunpack.c.h.s8.bf16 %v4242
        %v4979 = vunpack.c.h.s8.bf16 %v4243
        %v4980 = vunpack.c.h.s8.bf16 %v4244
        %v4981 = vunpack.c.h.s8.bf16 %v4245
        %v4982 = vunpack.c.h.s8.bf16 %v4246
        %v4983 = vunpack.c.h.s8.bf16 %v4247
        %v4984 = vunpack.c.l.s8.bf16 %v4248
        %v4985 = vunpack.c.l.s8.bf16 %v4249
        %v4986 = vunpack.c.l.s8.bf16 %v4250
        %v4987 = vunpack.c.l.s8.bf16 %v4251
        %v4988 = vunpack.c.l.s8.bf16 %v4252
        %v4989 = vunpack.c.l.s8.bf16 %v4253
        %v4990 = vunpack.c.l.s8.bf16 %v4254
        %v4991 = vunpack.c.l.s8.bf16 %v4255
        %v4992 = vunpack.c.l.s8.bf16 %v4256
        %v4993 = vunpack.c.l.s8.bf16 %v4257
        %v4994 = vunpack.c.l.s8.bf16 %v4258
        %v4995 = vunpack.c.l.s8.bf16 %v4259
        %v4996 = vunpack.c.l.s8.bf16 %v4260
        %v4997 = vunpack.c.l.s8.bf16 %v4261
        %v4998 = vunpack.c.l.s8.bf16 %v4262
        %v4999 = vunpack.c.l.s8.bf16 %v4263
        %v5000 = vunpack.c.h.s8.bf16 %v4248
        %v5001 = vunpack.c.h.s8.bf16 %v4249
        %v5002 = vunpack.c.h.s8.bf16 %v4250
        %v5003 = vunpack.c.h.s8.bf16 %v4251
        %v5004 = vunpack.c.h.s8.bf16 %v4252
        %v5005 = vunpack.c.h.s8.bf16 %v4253
        %v5006 = vunpack.c.h.s8.bf16 %v4254
        %v5007 = vunpack.c.h.s8.bf16 %v4255
        %v5008 = vunpack.c.h.s8.bf16 %v4256
        %v5009 = vunpack.c.h.s8.bf16 %v4257
        %v5010 = vunpack.c.h.s8.bf16 %v4258
        %v5011 = vunpack.c.h.s8.bf16 %v4259
        %v5012 = vunpack.c.h.s8.bf16 %v4260
        %v5013 = vunpack.c.h.s8.bf16 %v4261
        %v5014 = vunpack.c.h.s8.bf16 %v4262
        %v5015 = vunpack.c.h.s8.bf16 %v4263
        %v5016 = vunpack.c.l.s8.bf16 %v4264
        %v5017 = vunpack.c.l.s8.bf16 %v4265
        %v5018 = vunpack.c.l.s8.bf16 %v4266
        %v5019 = vunpack.c.l.s8.bf16 %v4267
        %v5020 = vunpack.c.l.s8.bf16 %v4268
        %v5021 = vunpack.c.l.s8.bf16 %v4269
        %v5022 = vunpack.c.l.s8.bf16 %v4270
        %v5023 = vunpack.c.l.s8.bf16 %v4271
        %v5024 = vunpack.c.l.s8.bf16 %v4272
        %v5025 = vunpack.c.l.s8.bf16 %v4273
        %v5026 = vunpack.c.l.s8.bf16 %v4274
        %v5027 = vunpack.c.l.s8.bf16 %v4275
        %v5028 = vunpack.c.l.s8.bf16 %v4276
        %v5029 = vunpack.c.l.s8.bf16 %v4277
        %v5030 = vunpack.c.l.s8.bf16 %v4278
        %v5031 = vunpack.c.l.s8.bf16 %v4279
        %v5032 = vunpack.c.h.s8.bf16 %v4264
        %v5033 = vunpack.c.h.s8.bf16 %v4265
        %v5034 = vunpack.c.h.s8.bf16 %v4266
        %v5035 = vunpack.c.h.s8.bf16 %v4267
        %v5036 = vunpack.c.h.s8.bf16 %v4268
        %v5037 = vunpack.c.h.s8.bf16 %v4269
        %v5038 = vunpack.c.h.s8.bf16 %v4270
        %v5039 = vunpack.c.h.s8.bf16 %v4271
        %v5040 = vunpack.c.h.s8.bf16 %v4272
        %v5041 = vunpack.c.h.s8.bf16 %v4273
        %v5042 = vunpack.c.h.s8.bf16 %v4274
        %v5043 = vunpack.c.h.s8.bf16 %v4275
        %v5044 = vunpack.c.h.s8.bf16 %v4276
        %v5045 = vunpack.c.h.s8.bf16 %v4277
        %v5046 = vunpack.c.h.s8.bf16 %v4278
        %v5047 = vunpack.c.h.s8.bf16 %v4279
        %v5048 = vunpack.c.l.s8.bf16 %v4280
        %v5049 = vunpack.c.l.s8.bf16 %v4281
        %v5050 = vunpack.c.l.s8.bf16 %v4282
        %v5051 = vunpack.c.l.s8.bf16 %v4283
        %v5052 = vunpack.c.l.s8.bf16 %v4284
        %v5053 = vunpack.c.l.s8.bf16 %v4285
        %v5054 = vunpack.c.l.s8.bf16 %v4286
        %v5055 = vunpack.c.l.s8.bf16 %v4287
        %v5056 = vunpack.c.l.s8.bf16 %v4288
        %v5057 = vunpack.c.l.s8.bf16 %v4289
        %v5058 = vunpack.c.l.s8.bf16 %v4290
        %v5059 = vunpack.c.l.s8.bf16 %v4291
        %v5060 = vunpack.c.l.s8.bf16 %v4292
        %v5061 = vunpack.c.l.s8.bf16 %v4293
        %v5062 = vunpack.c.l.s8.bf16 %v4294
        %v5063 = vunpack.c.l.s8.bf16 %v4295
        %v5064 = vunpack.c.h.s8.bf16 %v4280
        %v5065 = vunpack.c.h.s8.bf16 %v4281
        %v5066 = vunpack.c.h.s8.bf16 %v4282
        %v5067 = vunpack.c.h.s8.bf16 %v4283
        %v5068 = vunpack.c.h.s8.bf16 %v4284
        %v5069 = vunpack.c.h.s8.bf16 %v4285
        %v5070 = vunpack.c.h.s8.bf16 %v4286
        %v5071 = vunpack.c.h.s8.bf16 %v4287
        %v5072 = vunpack.c.h.s8.bf16 %v4288
        %v5073 = vunpack.c.h.s8.bf16 %v4289
        %v5074 = vunpack.c.h.s8.bf16 %v4290
        %v5075 = vunpack.c.h.s8.bf16 %v4291
        %v5076 = vunpack.c.h.s8.bf16 %v4292
        %v5077 = vunpack.c.h.s8.bf16 %v4293
        %v5078 = vunpack.c.h.s8.bf16 %v4294
        %v5079 = vunpack.c.h.s8.bf16 %v4295
        %v5080 = vunpack.c.l.s8.bf16 %v4296
        %v5081 = vunpack.c.l.s8.bf16 %v4297
        %v5082 = vunpack.c.l.s8.bf16 %v4298
        %v5083 = vunpack.c.l.s8.bf16 %v4299
        %v5084 = vunpack.c.l.s8.bf16 %v4300
        %v5085 = vunpack.c.l.s8.bf16 %v4301
        %v5086 = vunpack.c.l.s8.bf16 %v4302
        %v5087 = vunpack.c.l.s8.bf16 %v4303
        %v5088 = vunpack.c.l.s8.bf16 %v4304
        %v5089 = vunpack.c.l.s8.bf16 %v4305
        %v5090 = vunpack.c.l.s8.bf16 %v4306
        %v5091 = vunpack.c.l.s8.bf16 %v4307
        %v5092 = vunpack.c.l.s8.bf16 %v4308
        %v5093 = vunpack.c.l.s8.bf16 %v4309
        %v5094 = vunpack.c.l.s8.bf16 %v4310
        %v5095 = vunpack.c.l.s8.bf16 %v4311
        %v5096 = vunpack.c.h.s8.bf16 %v4296
        %v5097 = vunpack.c.h.s8.bf16 %v4297
        %v5098 = vunpack.c.h.s8.bf16 %v4298
        %v5099 = vunpack.c.h.s8.bf16 %v4299
        %v5100 = vunpack.c.h.s8.bf16 %v4300
        %v5101 = vunpack.c.h.s8.bf16 %v4301
        %v5102 = vunpack.c.h.s8.bf16 %v4302
        %v5103 = vunpack.c.h.s8.bf16 %v4303
        %v5104 = vunpack.c.h.s8.bf16 %v4304
        %v5105 = vunpack.c.h.s8.bf16 %v4305
        %v5106 = vunpack.c.h.s8.bf16 %v4306
        %v5107 = vunpack.c.h.s8.bf16 %v4307
        %v5108 = vunpack.c.h.s8.bf16 %v4308
        %v5109 = vunpack.c.h.s8.bf16 %v4309
        %v5110 = vunpack.c.h.s8.bf16 %v4310
        %v5111 = vunpack.c.h.s8.bf16 %v4311
        %v5112 = vunpack.c.l.s8.bf16 %v4312
        %v5113 = vunpack.c.l.s8.bf16 %v4313
        %v5114 = vunpack.c.l.s8.bf16 %v4314
        %v5115 = vunpack.c.l.s8.bf16 %v4315
        %v5116 = vunpack.c.l.s8.bf16 %v4316
        %v5117 = vunpack.c.l.s8.bf16 %v4317
        %v5118 = vunpack.c.l.s8.bf16 %v4318
        %v5119 = vunpack.c.l.s8.bf16 %v4319
        %v5120 = vunpack.c.l.s8.bf16 %v4320
        %v5121 = vunpack.c.l.s8.bf16 %v4321
        %v5122 = vunpack.c.l.s8.bf16 %v4322
        %v5123 = vunpack.c.l.s8.bf16 %v4323
        %v5124 = vunpack.c.l.s8.bf16 %v4324
        %v5125 = vunpack.c.l.s8.bf16 %v4325
        %v5126 = vunpack.c.l.s8.bf16 %v4326
        %v5127 = vunpack.c.l.s8.bf16 %v4327
        %v5128 = vunpack.c.h.s8.bf16 %v4312
        %v5129 = vunpack.c.h.s8.bf16 %v4313
        %v5130 = vunpack.c.h.s8.bf16 %v4314
        %v5131 = vunpack.c.h.s8.bf16 %v4315
        %v5132 = vunpack.c.h.s8.bf16 %v4316
        %v5133 = vunpack.c.h.s8.bf16 %v4317
        %v5134 = vunpack.c.h.s8.bf16 %v4318
        %v5135 = vunpack.c.h.s8.bf16 %v4319
        %v5136 = vunpack.c.h.s8.bf16 %v4320
        %v5137 = vunpack.c.h.s8.bf16 %v4321
        %v5138 = vunpack.c.h.s8.bf16 %v4322
        %v5139 = vunpack.c.h.s8.bf16 %v4323
        %v5140 = vunpack.c.h.s8.bf16 %v4324
        %v5141 = vunpack.c.h.s8.bf16 %v4325
        %v5142 = vunpack.c.h.s8.bf16 %v4326
        %v5143 = vunpack.c.h.s8.bf16 %v4327
        %v5144 = vunpack.c.l.s8.bf16 %v4328
        %v5145 = vunpack.c.l.s8.bf16 %v4329
        %v5146 = vunpack.c.l.s8.bf16 %v4330
        %v5147 = vunpack.c.l.s8.bf16 %v4331
        %v5148 = vunpack.c.l.s8.bf16 %v4332
        %v5149 = vunpack.c.l.s8.bf16 %v4333
        %v5150 = vunpack.c.l.s8.bf16 %v4334
        %v5151 = vunpack.c.l.s8.bf16 %v4335
        %v5152 = vunpack.c.l.s8.bf16 %v4336
        %v5153 = vunpack.c.l.s8.bf16 %v4337
        %v5154 = vunpack.c.l.s8.bf16 %v4338
        %v5155 = vunpack.c.l.s8.bf16 %v4339
        %v5156 = vunpack.c.l.s8.bf16 %v4340
        %v5157 = vunpack.c.l.s8.bf16 %v4341
        %v5158 = vunpack.c.l.s8.bf16 %v4342
        %v5159 = vunpack.c.l.s8.bf16 %v4343
        %v5160 = vunpack.c.h.s8.bf16 %v4328
        %v5161 = vunpack.c.h.s8.bf16 %v4329
        %v5162 = vunpack.c.h.s8.bf16 %v4330
        %v5163 = vunpack.c.h.s8.bf16 %v4331
        %v5164 = vunpack.c.h.s8.bf16 %v4332
        %v5165 = vunpack.c.h.s8.bf16 %v4333
        %v5166 = vunpack.c.h.s8.bf16 %v4334
        %v5167 = vunpack.c.h.s8.bf16 %v4335
        %v5168 = vunpack.c.h.s8.bf16 %v4336
        %v5169 = vunpack.c.h.s8.bf16 %v4337
        %v5170 = vunpack.c.h.s8.bf16 %v4338
        %v5171 = vunpack.c.h.s8.bf16 %v4339
        %v5172 = vunpack.c.h.s8.bf16 %v4340
        %v5173 = vunpack.c.h.s8.bf16 %v4341
        %v5174 = vunpack.c.h.s8.bf16 %v4342
        %v5175 = vunpack.c.h.s8.bf16 %v4343
        %v5176 = vunpack.c.l.s8.bf16 %v4344
        %v5177 = vunpack.c.l.s8.bf16 %v4345
        %v5178 = vunpack.c.l.s8.bf16 %v4346
        %v5179 = vunpack.c.l.s8.bf16 %v4347
        %v5180 = vunpack.c.l.s8.bf16 %v4348
        %v5181 = vunpack.c.l.s8.bf16 %v4349
        %v5182 = vunpack.c.l.s8.bf16 %v4350
        %v5183 = vunpack.c.l.s8.bf16 %v4351
        %v5184 = vunpack.c.l.s8.bf16 %v4352
        %v5185 = vunpack.c.l.s8.bf16 %v4353
        %v5186 = vunpack.c.l.s8.bf16 %v4354
        %v5187 = vunpack.c.l.s8.bf16 %v4355
        %v5188 = vunpack.c.l.s8.bf16 %v4356
        %v5189 = vunpack.c.l.s8.bf16 %v4357
        %v5190 = vunpack.c.l.s8.bf16 %v4358
        %v5191 = vunpack.c.l.s8.bf16 %v4359
        %v5192 = vunpack.c.h.s8.bf16 %v4344
        %v5193 = vunpack.c.h.s8.bf16 %v4345
        %v5194 = vunpack.c.h.s8.bf16 %v4346
        %v5195 = vunpack.c.h.s8.bf16 %v4347
        %v5196 = vunpack.c.h.s8.bf16 %v4348
        %v5197 = vunpack.c.h.s8.bf16 %v4349
        %v5198 = vunpack.c.h.s8.bf16 %v4350
        %v5199 = vunpack.c.h.s8.bf16 %v4351
        %v5200 = vunpack.c.h.s8.bf16 %v4352
        %v5201 = vunpack.c.h.s8.bf16 %v4353
        %v5202 = vunpack.c.h.s8.bf16 %v4354
        %v5203 = vunpack.c.h.s8.bf16 %v4355
        %v5204 = vunpack.c.h.s8.bf16 %v4356
        %v5205 = vunpack.c.h.s8.bf16 %v4357
        %v5206 = vunpack.c.h.s8.bf16 %v4358
        %v5207 = vunpack.c.h.s8.bf16 %v4359
        %v5208 = vunpack.c.l.s8.bf16 %v4360
        %v5209 = vunpack.c.l.s8.bf16 %v4361
        %v5210 = vunpack.c.l.s8.bf16 %v4362
        %v5211 = vunpack.c.l.s8.bf16 %v4363
        %v5212 = vunpack.c.l.s8.bf16 %v4364
        %v5213 = vunpack.c.l.s8.bf16 %v4365
        %v5214 = vunpack.c.l.s8.bf16 %v4366
        %v5215 = vunpack.c.l.s8.bf16 %v4367
        %v5216 = vunpack.c.l.s8.bf16 %v4368
        %v5217 = vunpack.c.l.s8.bf16 %v4369
        %v5218 = vunpack.c.l.s8.bf16 %v4370
        %v5219 = vunpack.c.l.s8.bf16 %v4371
        %v5220 = vunpack.c.l.s8.bf16 %v4372
        %v5221 = vunpack.c.l.s8.bf16 %v4373
        %v5222 = vunpack.c.l.s8.bf16 %v4374
        %v5223 = vunpack.c.l.s8.bf16 %v4375
        %v5224 = vunpack.c.h.s8.bf16 %v4360
        %v5225 = vunpack.c.h.s8.bf16 %v4361
        %v5226 = vunpack.c.h.s8.bf16 %v4362
        %v5227 = vunpack.c.h.s8.bf16 %v4363
        %v5228 = vunpack.c.h.s8.bf16 %v4364
        %v5229 = vunpack.c.h.s8.bf16 %v4365
        %v5230 = vunpack.c.h.s8.bf16 %v4366
        %v5231 = vunpack.c.h.s8.bf16 %v4367
        %v5232 = vunpack.c.h.s8.bf16 %v4368
        %v5233 = vunpack.c.h.s8.bf16 %v4369
        %v5234 = vunpack.c.h.s8.bf16 %v4370
        %v5235 = vunpack.c.h.s8.bf16 %v4371
        %v5236 = vunpack.c.h.s8.bf16 %v4372
        %v5237 = vunpack.c.h.s8.bf16 %v4373
        %v5238 = vunpack.c.h.s8.bf16 %v4374
        %v5239 = vunpack.c.h.s8.bf16 %v4375
        %v5240 = vunpack.c.l.s8.bf16 %v4376
        %v5241 = vunpack.c.l.s8.bf16 %v4377
        %v5242 = vunpack.c.l.s8.bf16 %v4378
        %v5243 = vunpack.c.l.s8.bf16 %v4379
        %v5244 = vunpack.c.l.s8.bf16 %v4380
        %v5245 = vunpack.c.l.s8.bf16 %v4381
        %v5246 = vunpack.c.l.s8.bf16 %v4382
        %v5247 = vunpack.c.l.s8.bf16 %v4383
        %v5248 = vunpack.c.l.s8.bf16 %v4384
        %v5249 = vunpack.c.l.s8.bf16 %v4385
        %v5250 = vunpack.c.l.s8.bf16 %v4386
        %v5251 = vunpack.c.l.s8.bf16 %v4387
        %v5252 = vunpack.c.l.s8.bf16 %v4388
        %v5253 = vunpack.c.l.s8.bf16 %v4389
        %v5254 = vunpack.c.l.s8.bf16 %v4390
        %v5255 = vunpack.c.l.s8.bf16 %v4391
        %v5256 = vunpack.c.h.s8.bf16 %v4376
        %v5257 = vunpack.c.h.s8.bf16 %v4377
        %v5258 = vunpack.c.h.s8.bf16 %v4378
        %v5259 = vunpack.c.h.s8.bf16 %v4379
        %v5260 = vunpack.c.h.s8.bf16 %v4380
        %v5261 = vunpack.c.h.s8.bf16 %v4381
        %v5262 = vunpack.c.h.s8.bf16 %v4382
        %v5263 = vunpack.c.h.s8.bf16 %v4383
        %v5264 = vunpack.c.h.s8.bf16 %v4384
        %v5265 = vunpack.c.h.s8.bf16 %v4385
        %v5266 = vunpack.c.h.s8.bf16 %v4386
        %v5267 = vunpack.c.h.s8.bf16 %v4387
        %v5268 = vunpack.c.h.s8.bf16 %v4388
        %v5269 = vunpack.c.h.s8.bf16 %v4389
        %v5270 = vunpack.c.h.s8.bf16 %v4390
        %v5271 = vunpack.c.h.s8.bf16 %v4391
        %v5272 = vunpack.c.l.s8.bf16 %v4392
        %v5273 = vunpack.c.l.s8.bf16 %v4393
        %v5274 = vunpack.c.l.s8.bf16 %v4394
        %v5275 = vunpack.c.l.s8.bf16 %v4395
        %v5276 = vunpack.c.l.s8.bf16 %v4396
        %v5277 = vunpack.c.l.s8.bf16 %v4397
        %v5278 = vunpack.c.l.s8.bf16 %v4398
        %v5279 = vunpack.c.l.s8.bf16 %v4399
        %v5280 = vunpack.c.l.s8.bf16 %v4400
        %v5281 = vunpack.c.l.s8.bf16 %v4401
        %v5282 = vunpack.c.l.s8.bf16 %v4402
        %v5283 = vunpack.c.l.s8.bf16 %v4403
        %v5284 = vunpack.c.l.s8.bf16 %v4404
        %v5285 = vunpack.c.l.s8.bf16 %v4405
        %v5286 = vunpack.c.l.s8.bf16 %v4406
        %v5287 = vunpack.c.l.s8.bf16 %v4407
        %v5288 = vunpack.c.h.s8.bf16 %v4392
        %v5289 = vunpack.c.h.s8.bf16 %v4393
        %v5290 = vunpack.c.h.s8.bf16 %v4394
        %v5291 = vunpack.c.h.s8.bf16 %v4395
        %v5292 = vunpack.c.h.s8.bf16 %v4396
        %v5293 = vunpack.c.h.s8.bf16 %v4397
        %v5294 = vunpack.c.h.s8.bf16 %v4398
        %v5295 = vunpack.c.h.s8.bf16 %v4399
        %v5296 = vunpack.c.h.s8.bf16 %v4400
        %v5297 = vunpack.c.h.s8.bf16 %v4401
        %v5298 = vunpack.c.h.s8.bf16 %v4402
        %v5299 = vunpack.c.h.s8.bf16 %v4403
        %v5300 = vunpack.c.h.s8.bf16 %v4404
        %v5301 = vunpack.c.h.s8.bf16 %v4405
        %v5302 = vunpack.c.h.s8.bf16 %v4406
        %v5303 = vunpack.c.h.s8.bf16 %v4407
        %v5304 = vunpack.c.l.s8.bf16 %v4408
        %v5305 = vunpack.c.l.s8.bf16 %v4409
        %v5306 = vunpack.c.l.s8.bf16 %v4410
        %v5307 = vunpack.c.l.s8.bf16 %v4411
        %v5308 = vunpack.c.l.s8.bf16 %v4412
        %v5309 = vunpack.c.l.s8.bf16 %v4413
        %v5310 = vunpack.c.l.s8.bf16 %v4414
        %v5311 = vunpack.c.l.s8.bf16 %v4415
        %v5312 = vunpack.c.l.s8.bf16 %v4416
        %v5313 = vunpack.c.l.s8.bf16 %v4417
        %v5314 = vunpack.c.l.s8.bf16 %v4418
        %v5315 = vunpack.c.l.s8.bf16 %v4419
        %v5316 = vunpack.c.l.s8.bf16 %v4420
        %v5317 = vunpack.c.l.s8.bf16 %v4421
        %v5318 = vunpack.c.l.s8.bf16 %v4422
        %v5319 = vunpack.c.l.s8.bf16 %v4423
        %v5320 = vunpack.c.h.s8.bf16 %v4408
        %v5321 = vunpack.c.h.s8.bf16 %v4409
        %v5322 = vunpack.c.h.s8.bf16 %v4410
        %v5323 = vunpack.c.h.s8.bf16 %v4411
        %v5324 = vunpack.c.h.s8.bf16 %v4412
        %v5325 = vunpack.c.h.s8.bf16 %v4413
        %v5326 = vunpack.c.h.s8.bf16 %v4414
        %v5327 = vunpack.c.h.s8.bf16 %v4415
        %v5328 = vunpack.c.h.s8.bf16 %v4416
        %v5329 = vunpack.c.h.s8.bf16 %v4417
        %v5330 = vunpack.c.h.s8.bf16 %v4418
        %v5331 = vunpack.c.h.s8.bf16 %v4419
        %v5332 = vunpack.c.h.s8.bf16 %v4420
        %v5333 = vunpack.c.h.s8.bf16 %v4421
        %v5334 = vunpack.c.h.s8.bf16 %v4422
        %v5335 = vunpack.c.h.s8.bf16 %v4423
        %v5336 = vunpack.c.l.s8.bf16 %v4424
        %v5337 = vunpack.c.l.s8.bf16 %v4425
        %v5338 = vunpack.c.l.s8.bf16 %v4426
        %v5339 = vunpack.c.l.s8.bf16 %v4427
        %v5340 = vunpack.c.l.s8.bf16 %v4428
        %v5341 = vunpack.c.l.s8.bf16 %v4429
        %v5342 = vunpack.c.l.s8.bf16 %v4430
        %v5343 = vunpack.c.l.s8.bf16 %v4431
        %v5344 = vunpack.c.l.s8.bf16 %v4432
        %v5345 = vunpack.c.l.s8.bf16 %v4433
        %v5346 = vunpack.c.l.s8.bf16 %v4434
        %v5347 = vunpack.c.l.s8.bf16 %v4435
        %v5348 = vunpack.c.l.s8.bf16 %v4436
        %v5349 = vunpack.c.l.s8.bf16 %v4437
        %v5350 = vunpack.c.l.s8.bf16 %v4438
        %v5351 = vunpack.c.l.s8.bf16 %v4439
        %v5352 = vunpack.c.h.s8.bf16 %v4424
        %v5353 = vunpack.c.h.s8.bf16 %v4425
        %v5354 = vunpack.c.h.s8.bf16 %v4426
        %v5355 = vunpack.c.h.s8.bf16 %v4427
        %v5356 = vunpack.c.h.s8.bf16 %v4428
        %v5357 = vunpack.c.h.s8.bf16 %v4429
        %v5358 = vunpack.c.h.s8.bf16 %v4430
        %v5359 = vunpack.c.h.s8.bf16 %v4431
        %v5360 = vunpack.c.h.s8.bf16 %v4432
        %v5361 = vunpack.c.h.s8.bf16 %v4433
        %v5362 = vunpack.c.h.s8.bf16 %v4434
        %v5363 = vunpack.c.h.s8.bf16 %v4435
        %v5364 = vunpack.c.h.s8.bf16 %v4436
        %v5365 = vunpack.c.h.s8.bf16 %v4437
        %v5366 = vunpack.c.h.s8.bf16 %v4438
        %v5367 = vunpack.c.h.s8.bf16 %v4439
        %v5368 = vunpack.c.l.s8.bf16 %v4440
        %v5369 = vunpack.c.l.s8.bf16 %v4441
        %v5370 = vunpack.c.l.s8.bf16 %v4442
        %v5371 = vunpack.c.l.s8.bf16 %v4443
        %v5372 = vunpack.c.l.s8.bf16 %v4444
        %v5373 = vunpack.c.l.s8.bf16 %v4445
        %v5374 = vunpack.c.l.s8.bf16 %v4446
        %v5375 = vunpack.c.l.s8.bf16 %v4447
        %v5376 = vunpack.c.l.s8.bf16 %v4448
        %v5377 = vunpack.c.l.s8.bf16 %v4449
        %v5378 = vunpack.c.l.s8.bf16 %v4450
        %v5379 = vunpack.c.l.s8.bf16 %v4451
        %v5380 = vunpack.c.l.s8.bf16 %v4452
        %v5381 = vunpack.c.l.s8.bf16 %v4453
        %v5382 = vunpack.c.l.s8.bf16 %v4454
        %v5383 = vunpack.c.l.s8.bf16 %v4455
        %v5384 = vunpack.c.h.s8.bf16 %v4440
        %v5385 = vunpack.c.h.s8.bf16 %v4441
        %v5386 = vunpack.c.h.s8.bf16 %v4442
        %v5387 = vunpack.c.h.s8.bf16 %v4443
        %v5388 = vunpack.c.h.s8.bf16 %v4444
        %v5389 = vunpack.c.h.s8.bf16 %v4445
        %v5390 = vunpack.c.h.s8.bf16 %v4446
        %v5391 = vunpack.c.h.s8.bf16 %v4447
        %v5392 = vunpack.c.h.s8.bf16 %v4448
        %v5393 = vunpack.c.h.s8.bf16 %v4449
        %v5394 = vunpack.c.h.s8.bf16 %v4450
        %v5395 = vunpack.c.h.s8.bf16 %v4451
        %v5396 = vunpack.c.h.s8.bf16 %v4452
        %v5397 = vunpack.c.h.s8.bf16 %v4453
        %v5398 = vunpack.c.h.s8.bf16 %v4454
        %v5399 = vunpack.c.h.s8.bf16 %v4455
        %v5400 = vunpack.c.l.s8.bf16 %v4456
        %v5401 = vunpack.c.l.s8.bf16 %v4457
        %v5402 = vunpack.c.l.s8.bf16 %v4458
        %v5403 = vunpack.c.l.s8.bf16 %v4459
        %v5404 = vunpack.c.l.s8.bf16 %v4460
        %v5405 = vunpack.c.l.s8.bf16 %v4461
        %v5406 = vunpack.c.l.s8.bf16 %v4462
        %v5407 = vunpack.c.l.s8.bf16 %v4463
        %v5408 = vunpack.c.l.s8.bf16 %v4464
        %v5409 = vunpack.c.l.s8.bf16 %v4465
        %v5410 = vunpack.c.l.s8.bf16 %v4466
        %v5411 = vunpack.c.l.s8.bf16 %v4467
        %v5412 = vunpack.c.l.s8.bf16 %v4468
        %v5413 = vunpack.c.l.s8.bf16 %v4469
        %v5414 = vunpack.c.l.s8.bf16 %v4470
        %v5415 = vunpack.c.l.s8.bf16 %v4471
        %v5416 = vunpack.c.h.s8.bf16 %v4456
        %v5417 = vunpack.c.h.s8.bf16 %v4457
        %v5418 = vunpack.c.h.s8.bf16 %v4458
        %v5419 = vunpack.c.h.s8.bf16 %v4459
        %v5420 = vunpack.c.h.s8.bf16 %v4460
        %v5421 = vunpack.c.h.s8.bf16 %v4461
        %v5422 = vunpack.c.h.s8.bf16 %v4462
        %v5423 = vunpack.c.h.s8.bf16 %v4463
        %v5424 = vunpack.c.h.s8.bf16 %v4464
        %v5425 = vunpack.c.h.s8.bf16 %v4465
        %v5426 = vunpack.c.h.s8.bf16 %v4466
        %v5427 = vunpack.c.h.s8.bf16 %v4467
        %v5428 = vunpack.c.h.s8.bf16 %v4468
        %v5429 = vunpack.c.h.s8.bf16 %v4469
        %v5430 = vunpack.c.h.s8.bf16 %v4470
        %v5431 = vunpack.c.h.s8.bf16 %v4471
        %v5432 = vunpack.c.l.s8.bf16 %v4472
        %v5433 = vunpack.c.l.s8.bf16 %v4473
        %v5434 = vunpack.c.l.s8.bf16 %v4474
        %v5435 = vunpack.c.l.s8.bf16 %v4475
        %v5436 = vunpack.c.l.s8.bf16 %v4476
        %v5437 = vunpack.c.l.s8.bf16 %v4477
        %v5438 = vunpack.c.l.s8.bf16 %v4478
        %v5439 = vunpack.c.l.s8.bf16 %v4479
        %v5440 = vunpack.c.l.s8.bf16 %v4480
        %v5441 = vunpack.c.l.s8.bf16 %v4481
        %v5442 = vunpack.c.l.s8.bf16 %v4482
        %v5443 = vunpack.c.l.s8.bf16 %v4483
        %v5444 = vunpack.c.l.s8.bf16 %v4484
        %v5445 = vunpack.c.l.s8.bf16 %v4485
        %v5446 = vunpack.c.l.s8.bf16 %v4486
        %v5447 = vunpack.c.l.s8.bf16 %v4487
        %v5448 = vunpack.c.h.s8.bf16 %v4472
        %v5449 = vunpack.c.h.s8.bf16 %v4473
        %v5450 = vunpack.c.h.s8.bf16 %v4474
        %v5451 = vunpack.c.h.s8.bf16 %v4475
        %v5452 = vunpack.c.h.s8.bf16 %v4476
        %v5453 = vunpack.c.h.s8.bf16 %v4477
        %v5454 = vunpack.c.h.s8.bf16 %v4478
        %v5455 = vunpack.c.h.s8.bf16 %v4479
        %v5456 = vunpack.c.h.s8.bf16 %v4480
        %v5457 = vunpack.c.h.s8.bf16 %v4481
        %v5458 = vunpack.c.h.s8.bf16 %v4482
        %v5459 = vunpack.c.h.s8.bf16 %v4483
        %v5460 = vunpack.c.h.s8.bf16 %v4484
        %v5461 = vunpack.c.h.s8.bf16 %v4485
        %v5462 = vunpack.c.h.s8.bf16 %v4486
        %v5463 = vunpack.c.h.s8.bf16 %v4487
        %v5464 = vunpack.c.l.s8.bf16 %v4488
        %v5465 = vunpack.c.l.s8.bf16 %v4489
        %v5466 = vunpack.c.l.s8.bf16 %v4490
        %v5467 = vunpack.c.l.s8.bf16 %v4491
        %v5468 = vunpack.c.l.s8.bf16 %v4492
        %v5469 = vunpack.c.l.s8.bf16 %v4493
        %v5470 = vunpack.c.l.s8.bf16 %v4494
        %v5471 = vunpack.c.l.s8.bf16 %v4495
        %v5472 = vunpack.c.l.s8.bf16 %v4496
        %v5473 = vunpack.c.l.s8.bf16 %v4497
        %v5474 = vunpack.c.l.s8.bf16 %v4498
        %v5475 = vunpack.c.l.s8.bf16 %v4499
        %v5476 = vunpack.c.l.s8.bf16 %v4500
        %v5477 = vunpack.c.l.s8.bf16 %v4501
        %v5478 = vunpack.c.l.s8.bf16 %v4502
        %v5479 = vunpack.c.l.s8.bf16 %v4503
        %v5480 = vunpack.c.h.s8.bf16 %v4488
        %v5481 = vunpack.c.h.s8.bf16 %v4489
        %v5482 = vunpack.c.h.s8.bf16 %v4490
        %v5483 = vunpack.c.h.s8.bf16 %v4491
        %v5484 = vunpack.c.h.s8.bf16 %v4492
        %v5485 = vunpack.c.h.s8.bf16 %v4493
        %v5486 = vunpack.c.h.s8.bf16 %v4494
        %v5487 = vunpack.c.h.s8.bf16 %v4495
        %v5488 = vunpack.c.h.s8.bf16 %v4496
        %v5489 = vunpack.c.h.s8.bf16 %v4497
        %v5490 = vunpack.c.h.s8.bf16 %v4498
        %v5491 = vunpack.c.h.s8.bf16 %v4499
        %v5492 = vunpack.c.h.s8.bf16 %v4500
        %v5493 = vunpack.c.h.s8.bf16 %v4501
        %v5494 = vunpack.c.h.s8.bf16 %v4502
        %v5495 = vunpack.c.h.s8.bf16 %v4503
        %v5496 = vunpack.c.l.s8.bf16 %v4504
        %v5497 = vunpack.c.l.s8.bf16 %v4505
        %v5498 = vunpack.c.l.s8.bf16 %v4506
        %v5499 = vunpack.c.l.s8.bf16 %v4507
        %v5500 = vunpack.c.l.s8.bf16 %v4508
        %v5501 = vunpack.c.l.s8.bf16 %v4509
        %v5502 = vunpack.c.l.s8.bf16 %v4510
        %v5503 = vunpack.c.l.s8.bf16 %v4511
        %v5504 = vunpack.c.l.s8.bf16 %v4512
        %v5505 = vunpack.c.l.s8.bf16 %v4513
        %v5506 = vunpack.c.l.s8.bf16 %v4514
        %v5507 = vunpack.c.l.s8.bf16 %v4515
        %v5508 = vunpack.c.l.s8.bf16 %v4516
        %v5509 = vunpack.c.l.s8.bf16 %v4517
        %v5510 = vunpack.c.l.s8.bf16 %v4518
        %v5511 = vunpack.c.l.s8.bf16 %v4519
        %v5512 = vunpack.c.h.s8.bf16 %v4504
        %v5513 = vunpack.c.h.s8.bf16 %v4505
        %v5514 = vunpack.c.h.s8.bf16 %v4506
        %v5515 = vunpack.c.h.s8.bf16 %v4507
        %v5516 = vunpack.c.h.s8.bf16 %v4508
        %v5517 = vunpack.c.h.s8.bf16 %v4509
        %v5518 = vunpack.c.h.s8.bf16 %v4510
        %v5519 = vunpack.c.h.s8.bf16 %v4511
        %v5520 = vunpack.c.h.s8.bf16 %v4512
        %v5521 = vunpack.c.h.s8.bf16 %v4513
        %v5522 = vunpack.c.h.s8.bf16 %v4514
        %v5523 = vunpack.c.h.s8.bf16 %v4515
        %v5524 = vunpack.c.h.s8.bf16 %v4516
        %v5525 = vunpack.c.h.s8.bf16 %v4517
        %v5526 = vunpack.c.h.s8.bf16 %v4518
        %v5527 = vunpack.c.h.s8.bf16 %v4519
        %v5528 = vunpack.c.l.s8.bf16 %v4520
        %v5529 = vunpack.c.l.s8.bf16 %v4521
        %v5530 = vunpack.c.l.s8.bf16 %v4522
        %v5531 = vunpack.c.l.s8.bf16 %v4523
        %v5532 = vunpack.c.l.s8.bf16 %v4524
        %v5533 = vunpack.c.l.s8.bf16 %v4525
        %v5534 = vunpack.c.l.s8.bf16 %v4526
        %v5535 = vunpack.c.l.s8.bf16 %v4527
        %v5536 = vunpack.c.l.s8.bf16 %v4528
        %v5537 = vunpack.c.l.s8.bf16 %v4529
        %v5538 = vunpack.c.l.s8.bf16 %v4530
        %v5539 = vunpack.c.l.s8.bf16 %v4531
        %v5540 = vunpack.c.l.s8.bf16 %v4532
        %v5541 = vunpack.c.l.s8.bf16 %v4533
        %v5542 = vunpack.c.l.s8.bf16 %v4534
        %v5543 = vunpack.c.l.s8.bf16 %v4535
        %v5544 = vunpack.c.h.s8.bf16 %v4520
        %v5545 = vunpack.c.h.s8.bf16 %v4521
        %v5546 = vunpack.c.h.s8.bf16 %v4522
        %v5547 = vunpack.c.h.s8.bf16 %v4523
        %v5548 = vunpack.c.h.s8.bf16 %v4524
        %v5549 = vunpack.c.h.s8.bf16 %v4525
        %v5550 = vunpack.c.h.s8.bf16 %v4526
        %v5551 = vunpack.c.h.s8.bf16 %v4527
        %v5552 = vunpack.c.h.s8.bf16 %v4528
        %v5553 = vunpack.c.h.s8.bf16 %v4529
        %v5554 = vunpack.c.h.s8.bf16 %v4530
        %v5555 = vunpack.c.h.s8.bf16 %v4531
        %v5556 = vunpack.c.h.s8.bf16 %v4532
        %v5557 = vunpack.c.h.s8.bf16 %v4533
        %v5558 = vunpack.c.h.s8.bf16 %v4534
        %v5559 = vunpack.c.h.s8.bf16 %v4535
        %v5560 = vpack.c.bf16 %v4016, %v4016
        %v5561 = vpack.c.bf16 %v4017, %v4017
        %v5562 = vpack.c.bf16 %v4018, %v4018
        %v5563 = vpack.c.bf16 %v4019, %v4019
        %v5564 = vpack.c.bf16 %v4020, %v4020
        %v5565 = vpack.c.bf16 %v4021, %v4021
        %v5566 = vpack.c.bf16 %v4022, %v4022
        %v5567 = vpack.c.bf16 %v4023, %v4023
        %5568 = vmatprep.subr.bf16.mxu0 %v4649
        %5569 = vmatpush1.bf16.msra.mxu0 %v4648
        %5570 = vmatprep.subr.bf16.mxu0 %v4633
        %5571 = vmatpush1.bf16.msra.mxu0 %v4632
        %5572 = vmatprep.subr.bf16.mxu0 %v4617
        %5573 = vmatpush1.bf16.msra.mxu0 %v4616
        %5574 = vmatprep.subr.bf16.mxu0 %v4601
        %5575 = vmatpush1.bf16.msra.mxu0 %v4600
        %5576 = vmatprep.subr.bf16.mxu0 %v4585
        %5577 = vmatpush1.bf16.msra.mxu0 %v4584
        %5578 = vmatprep.subr.bf16.mxu0 %v4569
        %5579 = vmatpush1.bf16.msra.mxu0 %v4568
        %5580 = vmatprep.subr.bf16.mxu0 %v4553
        %5581 = vmatpush1.bf16.msra.mxu0 %v4552
        %5582 = vmatprep.subr.bf16.mxu0 %v4537
        %5583 = vmatpush1.bf16.msra.mxu0 %v4536
        %5584 = vmatprep.subr.bf16.mxu0 %v4777
        %5585 = vmatpush2.bf16.msra.mxu0 %v4776
        %5586 = vmatprep.subr.bf16.mxu0 %v4761
        %5587 = vmatpush2.bf16.msra.mxu0 %v4760
        %5588 = vmatprep.subr.bf16.mxu0 %v4745
        %5589 = vmatpush2.bf16.msra.mxu0 %v4744
        %5590 = vmatprep.subr.bf16.mxu0 %v4729
        %5591 = vmatpush2.bf16.msra.mxu0 %v4728
        %5592 = vmatprep.subr.bf16.mxu0 %v4713
        %5593 = vmatpush2.bf16.msra.mxu0 %v4712
        %5594 = vmatprep.subr.bf16.mxu0 %v4697
        %5595 = vmatpush2.bf16.msra.mxu0 %v4696
        %5596 = vmatprep.subr.bf16.mxu0 %v4681
        %5597 = vmatpush2.bf16.msra.mxu0 %v4680
        %5598 = vmatprep.subr.bf16.mxu0 %v4665
        %5599 = vmatpush2.bf16.msra.mxu0 %v4664
        %5600 = vmatprep.mubr.bf16.mxu0 %v5561
        %5601 = vmatmul.mubr.bf16.gmra.mxu0 %v5560
        %v5602 = vpop.f32.mrf.mxu0
        %v5603 = vadd.f32 0.0, %v5602
        %v5604 = vpop.f32.mrf.mxu0
        %v5605 = vadd.f32 0.0, %v5604
        %v5606 = vpop.f32.mrf.mxu0
        %v5607 = vpop.f32.mrf.mxu0
        %5608 = vdwg.mxu0
        %5609 = vmatprep.subr.bf16.mxu0 %v4905
        %5610 = vmatpush1.bf16.msra.mxu0 %v4904
        %5611 = vmatprep.subr.bf16.mxu0 %v4889
        %5612 = vmatpush1.bf16.msra.mxu0 %v4888
        %5613 = vmatprep.subr.bf16.mxu0 %v4873
        %5614 = vmatpush1.bf16.msra.mxu0 %v4872
        %5615 = vmatprep.subr.bf16.mxu0 %v4857
        %5616 = vmatpush1.bf16.msra.mxu0 %v4856
        %5617 = vmatprep.subr.bf16.mxu0 %v4841
        %5618 = vmatpush1.bf16.msra.mxu0 %v4840
        %5619 = vmatprep.subr.bf16.mxu0 %v4825
        %5620 = vmatpush1.bf16.msra.mxu0 %v4824
        %5621 = vmatprep.subr.bf16.mxu0 %v4809
        %5622 = vmatpush1.bf16.msra.mxu0 %v4808
        %5623 = vmatprep.subr.bf16.mxu0 %v4793
        %5624 = vmatpush1.bf16.msra.mxu0 %v4792
        %5625 = vmatprep.subr.bf16.mxu0 %v5033
        %5626 = vmatpush2.bf16.msra.mxu0 %v5032
        %5627 = vmatprep.subr.bf16.mxu0 %v5017
        %5628 = vmatpush2.bf16.msra.mxu0 %v5016
        %5629 = vmatprep.subr.bf16.mxu0 %v5001
        %5630 = vmatpush2.bf16.msra.mxu0 %v5000
        %5631 = vmatprep.subr.bf16.mxu0 %v4985
        %5632 = vmatpush2.bf16.msra.mxu0 %v4984
        %5633 = vmatprep.subr.bf16.mxu0 %v4969
        %5634 = vmatpush2.bf16.msra.mxu0 %v4968
        %5635 = vmatprep.subr.bf16.mxu0 %v4953
        %5636 = vmatpush2.bf16.msra.mxu0 %v4952
        %5637 = vmatprep.subr.bf16.mxu0 %v4937
        %5638 = vmatpush2.bf16.msra.mxu0 %v4936
        %5639 = vmatprep.subr.bf16.mxu0 %v4921
        %5640 = vmatpush2.bf16.msra.mxu0 %v4920
        %5641 = vmatprep.mubr.bf16.mxu0 %v5563
        %5642 = vmatmul.mubr.bf16.gmra.mxu0 %v5562
        %v5643 = vpop.f32.mrf.mxu0
        %v5644 = vadd.f32 %v5603, %v5643
        %v5645 = vpop.f32.mrf.mxu0
        %v5646 = vadd.f32 %v5605, %v5645
        %v5647 = vpop.f32.mrf.mxu0
        %v5648 = vpop.f32.mrf.mxu0
        %5649 = vdwg.mxu0
        %5650 = vmatprep.subr.bf16.mxu0 %v5161
        %5651 = vmatpush1.bf16.msra.mxu0 %v5160
        %5652 = vmatprep.subr.bf16.mxu0 %v5145
        %5653 = vmatpush1.bf16.msra.mxu0 %v5144
        %5654 = vmatprep.subr.bf16.mxu0 %v5129
        %5655 = vmatpush1.bf16.msra.mxu0 %v5128
        %5656 = vmatprep.subr.bf16.mxu0 %v5113
        %5657 = vmatpush1.bf16.msra.mxu0 %v5112
        %5658 = vmatprep.subr.bf16.mxu0 %v5097
        %5659 = vmatpush1.bf16.msra.mxu0 %v5096
        %5660 = vmatprep.subr.bf16.mxu0 %v5081
        %5661 = vmatpush1.bf16.msra.mxu0 %v5080
        %5662 = vmatprep.subr.bf16.mxu0 %v5065
        %5663 = vmatpush1.bf16.msra.mxu0 %v5064
        %5664 = vmatprep.subr.bf16.mxu0 %v5049
        %5665 = vmatpush1.bf16.msra.mxu0 %v5048
        %5666 = vmatprep.subr.bf16.mxu0 %v5289
        %5667 = vmatpush2.bf16.msra.mxu0 %v5288
        %5668 = vmatprep.subr.bf16.mxu0 %v5273
        %5669 = vmatpush2.bf16.msra.mxu0 %v5272
        %5670 = vmatprep.subr.bf16.mxu0 %v5257
        %5671 = vmatpush2.bf16.msra.mxu0 %v5256
        %5672 = vmatprep.subr.bf16.mxu0 %v5241
        %5673 = vmatpush2.bf16.msra.mxu0 %v5240
        %5674 = vmatprep.subr.bf16.mxu0 %v5225
        %5675 = vmatpush2.bf16.msra.mxu0 %v5224
        %5676 = vmatprep.subr.bf16.mxu0 %v5209
        %5677 = vmatpush2.bf16.msra.mxu0 %v5208
        %5678 = vmatprep.subr.bf16.mxu0 %v5193
        %5679 = vmatpush2.bf16.msra.mxu0 %v5192
        %5680 = vmatprep.subr.bf16.mxu0 %v5177
        %5681 = vmatpush2.bf16.msra.mxu0 %v5176
        %5682 = vmatprep.mubr.bf16.mxu0 %v5565
        %5683 = vmatmul.mubr.bf16.gmra.mxu0 %v5564
        %v5684 = vpop.f32.mrf.mxu0
        %v5685 = vadd.f32 %v5644, %v5684
        %v5686 = vpop.f32.mrf.mxu0
        %v5687 = vadd.f32 %v5646, %v5686
        %v5688 = vpop.f32.mrf.mxu0
        %v5689 = vpop.f32.mrf.mxu0
        %5690 = vdwg.mxu0
        %5691 = vmatprep.subr.bf16.mxu0 %v5417
        %5692 = vmatpush1.bf16.msra.mxu0 %v5416
        %5693 = vmatprep.subr.bf16.mxu0 %v5401
        %5694 = vmatpush1.bf16.msra.mxu0 %v5400
        %5695 = vmatprep.subr.bf16.mxu0 %v5385
        %5696 = vmatpush1.bf16.msra.mxu0 %v5384
        %5697 = vmatprep.subr.bf16.mxu0 %v5369
        %5698 = vmatpush1.bf16.msra.mxu0 %v5368
        %5699 = vmatprep.subr.bf16.mxu0 %v5353
        %5700 = vmatpush1.bf16.msra.mxu0 %v5352
        %5701 = vmatprep.subr.bf16.mxu0 %v5337
        %5702 = vmatpush1.bf16.msra.mxu0 %v5336
        %5703 = vmatprep.subr.bf16.mxu0 %v5321
        %5704 = vmatpush1.bf16.msra.mxu0 %v5320
        %5705 = vmatprep.subr.bf16.mxu0 %v5305
        %5706 = vmatpush1.bf16.msra.mxu0 %v5304
        %5707 = vmatprep.subr.bf16.mxu0 %v5545
        %5708 = vmatpush2.bf16.msra.mxu0 %v5544
        %5709 = vmatprep.subr.bf16.mxu0 %v5529
        %5710 = vmatpush2.bf16.msra.mxu0 %v5528
        %5711 = vmatprep.subr.bf16.mxu0 %v5513
        %5712 = vmatpush2.bf16.msra.mxu0 %v5512
        %5713 = vmatprep.subr.bf16.mxu0 %v5497
        %5714 = vmatpush2.bf16.msra.mxu0 %v5496
        %5715 = vmatprep.subr.bf16.mxu0 %v5481
        %5716 = vmatpush2.bf16.msra.mxu0 %v5480
        %5717 = vmatprep.subr.bf16.mxu0 %v5465
        %5718 = vmatpush2.bf16.msra.mxu0 %v5464
        %5719 = vmatprep.subr.bf16.mxu0 %v5449
        %5720 = vmatpush2.bf16.msra.mxu0 %v5448
        %5721 = vmatprep.subr.bf16.mxu0 %v5433
        %5722 = vmatpush2.bf16.msra.mxu0 %v5432
        %5723 = vmatprep.mubr.bf16.mxu0 %v5567
        %5724 = vmatmul.mubr.bf16.gmra.mxu0 %v5566
        %v5725 = vpop.f32.mrf.mxu0
        %v5726 = vadd.f32 %v5685, %v5725
        %v5727 = vpop.f32.mrf.mxu0
        %v5728 = vadd.f32 %v5687, %v5727
        %v5729 = vpop.f32.mrf.mxu0
        %v5730 = vpop.f32.mrf.mxu0
        %5731 = vdwg.mxu0
        %5732 = vmatprep.subr.bf16.mxu0 %v4651
        %5733 = vmatpush1.bf16.msra.mxu0 %v4650
        %5734 = vmatprep.subr.bf16.mxu0 %v4635
        %5735 = vmatpush1.bf16.msra.mxu0 %v4634
        %5736 = vmatprep.subr.bf16.mxu0 %v4619
        %5737 = vmatpush1.bf16.msra.mxu0 %v4618
        %5738 = vmatprep.subr.bf16.mxu0 %v4603
        %5739 = vmatpush1.bf16.msra.mxu0 %v4602
        %5740 = vmatprep.subr.bf16.mxu0 %v4587
        %5741 = vmatpush1.bf16.msra.mxu0 %v4586
        %5742 = vmatprep.subr.bf16.mxu0 %v4571
        %5743 = vmatpush1.bf16.msra.mxu0 %v4570
        %5744 = vmatprep.subr.bf16.mxu0 %v4555
        %5745 = vmatpush1.bf16.msra.mxu0 %v4554
        %5746 = vmatprep.subr.bf16.mxu0 %v4539
        %5747 = vmatpush1.bf16.msra.mxu0 %v4538
        %5748 = vmatprep.subr.bf16.mxu0 %v4779
        %5749 = vmatpush2.bf16.msra.mxu0 %v4778
        %5750 = vmatprep.subr.bf16.mxu0 %v4763
        %5751 = vmatpush2.bf16.msra.mxu0 %v4762
        %5752 = vmatprep.subr.bf16.mxu0 %v4747
        %5753 = vmatpush2.bf16.msra.mxu0 %v4746
        %5754 = vmatprep.subr.bf16.mxu0 %v4731
        %5755 = vmatpush2.bf16.msra.mxu0 %v4730
        %5756 = vmatprep.subr.bf16.mxu0 %v4715
        %5757 = vmatpush2.bf16.msra.mxu0 %v4714
        %5758 = vmatprep.subr.bf16.mxu0 %v4699
        %5759 = vmatpush2.bf16.msra.mxu0 %v4698
        %5760 = vmatprep.subr.bf16.mxu0 %v4683
        %5761 = vmatpush2.bf16.msra.mxu0 %v4682
        %5762 = vmatprep.subr.bf16.mxu0 %v4667
        %5763 = vmatpush2.bf16.msra.mxu0 %v4666
        %5764 = vmatprep.mubr.bf16.mxu0 %v5561
        %5765 = vmatmul.mubr.bf16.gmra.mxu0 %v5560
        %v5766 = vpop.f32.mrf.mxu0
        %v5767 = vadd.f32 0.0, %v5766
        %v5768 = vpop.f32.mrf.mxu0
        %v5769 = vadd.f32 0.0, %v5768
        %v5770 = vpop.f32.mrf.mxu0
        %v5771 = vpop.f32.mrf.mxu0
        %5772 = vdwg.mxu0
        %5773 = vmatprep.subr.bf16.mxu0 %v4907
        %5774 = vmatpush1.bf16.msra.mxu0 %v4906
        %5775 = vmatprep.subr.bf16.mxu0 %v4891
        %5776 = vmatpush1.bf16.msra.mxu0 %v4890
        %5777 = vmatprep.subr.bf16.mxu0 %v4875
        %5778 = vmatpush1.bf16.msra.mxu0 %v4874
        %5779 = vmatprep.subr.bf16.mxu0 %v4859
        %5780 = vmatpush1.bf16.msra.mxu0 %v4858
        %5781 = vmatprep.subr.bf16.mxu0 %v4843
        %5782 = vmatpush1.bf16.msra.mxu0 %v4842
        %5783 = vmatprep.subr.bf16.mxu0 %v4827
        %5784 = vmatpush1.bf16.msra.mxu0 %v4826
        %5785 = vmatprep.subr.bf16.mxu0 %v4811
        %5786 = vmatpush1.bf16.msra.mxu0 %v4810
        %5787 = vmatprep.subr.bf16.mxu0 %v4795
        %5788 = vmatpush1.bf16.msra.mxu0 %v4794
        %5789 = vmatprep.subr.bf16.mxu0 %v5035
        %5790 = vmatpush2.bf16.msra.mxu0 %v5034
        %5791 = vmatprep.subr.bf16.mxu0 %v5019
        %5792 = vmatpush2.bf16.msra.mxu0 %v5018
        %5793 = vmatprep.subr.bf16.mxu0 %v5003
        %5794 = vmatpush2.bf16.msra.mxu0 %v5002
        %5795 = vmatprep.subr.bf16.mxu0 %v4987
        %5796 = vmatpush2.bf16.msra.mxu0 %v4986
        %5797 = vmatprep.subr.bf16.mxu0 %v4971
        %5798 = vmatpush2.bf16.msra.mxu0 %v4970
        %5799 = vmatprep.subr.bf16.mxu0 %v4955
        %5800 = vmatpush2.bf16.msra.mxu0 %v4954
        %5801 = vmatprep.subr.bf16.mxu0 %v4939
        %5802 = vmatpush2.bf16.msra.mxu0 %v4938
        %5803 = vmatprep.subr.bf16.mxu0 %v4923
        %5804 = vmatpush2.bf16.msra.mxu0 %v4922
        %5805 = vmatprep.mubr.bf16.mxu0 %v5563
        %5806 = vmatmul.mubr.bf16.gmra.mxu0 %v5562
        %v5807 = vpop.f32.mrf.mxu0
        %v5808 = vadd.f32 %v5767, %v5807
        %v5809 = vpop.f32.mrf.mxu0
        %v5810 = vadd.f32 %v5769, %v5809
        %v5811 = vpop.f32.mrf.mxu0
        %v5812 = vpop.f32.mrf.mxu0
        %5813 = vdwg.mxu0
        %5814 = vmatprep.subr.bf16.mxu0 %v5163
        %5815 = vmatpush1.bf16.msra.mxu0 %v5162
        %5816 = vmatprep.subr.bf16.mxu0 %v5147
        %5817 = vmatpush1.bf16.msra.mxu0 %v5146
        %5818 = vmatprep.subr.bf16.mxu0 %v5131
        %5819 = vmatpush1.bf16.msra.mxu0 %v5130
        %5820 = vmatprep.subr.bf16.mxu0 %v5115
        %5821 = vmatpush1.bf16.msra.mxu0 %v5114
        %5822 = vmatprep.subr.bf16.mxu0 %v5099
        %5823 = vmatpush1.bf16.msra.mxu0 %v5098
        %5824 = vmatprep.subr.bf16.mxu0 %v5083
        %5825 = vmatpush1.bf16.msra.mxu0 %v5082
        %5826 = vmatprep.subr.bf16.mxu0 %v5067
        %5827 = vmatpush1.bf16.msra.mxu0 %v5066
        %5828 = vmatprep.subr.bf16.mxu0 %v5051
        %5829 = vmatpush1.bf16.msra.mxu0 %v5050
        %5830 = vmatprep.subr.bf16.mxu0 %v5291
        %5831 = vmatpush2.bf16.msra.mxu0 %v5290
        %5832 = vmatprep.subr.bf16.mxu0 %v5275
        %5833 = vmatpush2.bf16.msra.mxu0 %v5274
        %5834 = vmatprep.subr.bf16.mxu0 %v5259
        %5835 = vmatpush2.bf16.msra.mxu0 %v5258
        %5836 = vmatprep.subr.bf16.mxu0 %v5243
        %5837 = vmatpush2.bf16.msra.mxu0 %v5242
        %5838 = vmatprep.subr.bf16.mxu0 %v5227
        %5839 = vmatpush2.bf16.msra.mxu0 %v5226
        %5840 = vmatprep.subr.bf16.mxu0 %v5211
        %5841 = vmatpush2.bf16.msra.mxu0 %v5210
        %5842 = vmatprep.subr.bf16.mxu0 %v5195
        %5843 = vmatpush2.bf16.msra.mxu0 %v5194
        %5844 = vmatprep.subr.bf16.mxu0 %v5179
        %5845 = vmatpush2.bf16.msra.mxu0 %v5178
        %5846 = vmatprep.mubr.bf16.mxu0 %v5565
        %5847 = vmatmul.mubr.bf16.gmra.mxu0 %v5564
        %v5848 = vpop.f32.mrf.mxu0
        %v5849 = vadd.f32 %v5808, %v5848
        %v5850 = vpop.f32.mrf.mxu0
        %v5851 = vadd.f32 %v5810, %v5850
        %v5852 = vpop.f32.mrf.mxu0
        %v5853 = vpop.f32.mrf.mxu0
        %5854 = vdwg.mxu0
        %5855 = vmatprep.subr.bf16.mxu0 %v5419
        %5856 = vmatpush1.bf16.msra.mxu0 %v5418
        %5857 = vmatprep.subr.bf16.mxu0 %v5403
        %5858 = vmatpush1.bf16.msra.mxu0 %v5402
        %5859 = vmatprep.subr.bf16.mxu0 %v5387
        %5860 = vmatpush1.bf16.msra.mxu0 %v5386
        %5861 = vmatprep.subr.bf16.mxu0 %v5371
        %5862 = vmatpush1.bf16.msra.mxu0 %v5370
        %5863 = vmatprep.subr.bf16.mxu0 %v5355
        %5864 = vmatpush1.bf16.msra.mxu0 %v5354
        %5865 = vmatprep.subr.bf16.mxu0 %v5339
        %5866 = vmatpush1.bf16.msra.mxu0 %v5338
        %5867 = vmatprep.subr.bf16.mxu0 %v5323
        %5868 = vmatpush1.bf16.msra.mxu0 %v5322
        %5869 = vmatprep.subr.bf16.mxu0 %v5307
        %5870 = vmatpush1.bf16.msra.mxu0 %v5306
        %5871 = vmatprep.subr.bf16.mxu0 %v5547
        %5872 = vmatpush2.bf16.msra.mxu0 %v5546
        %5873 = vmatprep.subr.bf16.mxu0 %v5531
        %5874 = vmatpush2.bf16.msra.mxu0 %v5530
        %5875 = vmatprep.subr.bf16.mxu0 %v5515
        %5876 = vmatpush2.bf16.msra.mxu0 %v5514
        %5877 = vmatprep.subr.bf16.mxu0 %v5499
        %5878 = vmatpush2.bf16.msra.mxu0 %v5498
        %5879 = vmatprep.subr.bf16.mxu0 %v5483
        %5880 = vmatpush2.bf16.msra.mxu0 %v5482
        %5881 = vmatprep.subr.bf16.mxu0 %v5467
        %5882 = vmatpush2.bf16.msra.mxu0 %v5466
        %5883 = vmatprep.subr.bf16.mxu0 %v5451
        %5884 = vmatpush2.bf16.msra.mxu0 %v5450
        %5885 = vmatprep.subr.bf16.mxu0 %v5435
        %5886 = vmatpush2.bf16.msra.mxu0 %v5434
        %5887 = vmatprep.mubr.bf16.mxu0 %v5567
        %5888 = vmatmul.mubr.bf16.gmra.mxu0 %v5566
        %v5889 = vpop.f32.mrf.mxu0
        %v5890 = vadd.f32 %v5849, %v5889
        %v5891 = vpop.f32.mrf.mxu0
        %v5892 = vadd.f32 %v5851, %v5891
        %v5893 = vpop.f32.mrf.mxu0
        %v5894 = vpop.f32.mrf.mxu0
        %5895 = vdwg.mxu0
        %5896 = vmatprep.subr.bf16.mxu0 %v4653
        %5897 = vmatpush1.bf16.msra.mxu0 %v4652
        %5898 = vmatprep.subr.bf16.mxu0 %v4637
        %5899 = vmatpush1.bf16.msra.mxu0 %v4636
        %5900 = vmatprep.subr.bf16.mxu0 %v4621
        %5901 = vmatpush1.bf16.msra.mxu0 %v4620
        %5902 = vmatprep.subr.bf16.mxu0 %v4605
        %5903 = vmatpush1.bf16.msra.mxu0 %v4604
        %5904 = vmatprep.subr.bf16.mxu0 %v4589
        %5905 = vmatpush1.bf16.msra.mxu0 %v4588
        %5906 = vmatprep.subr.bf16.mxu0 %v4573
        %5907 = vmatpush1.bf16.msra.mxu0 %v4572
        %5908 = vmatprep.subr.bf16.mxu0 %v4557
        %5909 = vmatpush1.bf16.msra.mxu0 %v4556
        %5910 = vmatprep.subr.bf16.mxu0 %v4541
        %5911 = vmatpush1.bf16.msra.mxu0 %v4540
        %5912 = vmatprep.subr.bf16.mxu0 %v4781
        %5913 = vmatpush2.bf16.msra.mxu0 %v4780
        %5914 = vmatprep.subr.bf16.mxu0 %v4765
        %5915 = vmatpush2.bf16.msra.mxu0 %v4764
        %5916 = vmatprep.subr.bf16.mxu0 %v4749
        %5917 = vmatpush2.bf16.msra.mxu0 %v4748
        %5918 = vmatprep.subr.bf16.mxu0 %v4733
        %5919 = vmatpush2.bf16.msra.mxu0 %v4732
        %5920 = vmatprep.subr.bf16.mxu0 %v4717
        %5921 = vmatpush2.bf16.msra.mxu0 %v4716
        %5922 = vmatprep.subr.bf16.mxu0 %v4701
        %5923 = vmatpush2.bf16.msra.mxu0 %v4700
        %5924 = vmatprep.subr.bf16.mxu0 %v4685
        %5925 = vmatpush2.bf16.msra.mxu0 %v4684
        %5926 = vmatprep.subr.bf16.mxu0 %v4669
        %5927 = vmatpush2.bf16.msra.mxu0 %v4668
        %5928 = vmatprep.mubr.bf16.mxu0 %v5561
        %5929 = vmatmul.mubr.bf16.gmra.mxu0 %v5560
        %v5930 = vpop.f32.mrf.mxu0
        %v5931 = vadd.f32 0.0, %v5930
        %v5932 = vpop.f32.mrf.mxu0
        %v5933 = vadd.f32 0.0, %v5932
        %v5934 = vpop.f32.mrf.mxu0
        %v5935 = vpop.f32.mrf.mxu0
        %5936 = vdwg.mxu0
        %5937 = vmatprep.subr.bf16.mxu0 %v4909
        %5938 = vmatpush1.bf16.msra.mxu0 %v4908
        %5939 = vmatprep.subr.bf16.mxu0 %v4893
        %5940 = vmatpush1.bf16.msra.mxu0 %v4892
        %5941 = vmatprep.subr.bf16.mxu0 %v4877
        %5942 = vmatpush1.bf16.msra.mxu0 %v4876
        %5943 = vmatprep.subr.bf16.mxu0 %v4861
        %5944 = vmatpush1.bf16.msra.mxu0 %v4860
        %5945 = vmatprep.subr.bf16.mxu0 %v4845
        %5946 = vmatpush1.bf16.msra.mxu0 %v4844
        %5947 = vmatprep.subr.bf16.mxu0 %v4829
        %5948 = vmatpush1.bf16.msra.mxu0 %v4828
        %5949 = vmatprep.subr.bf16.mxu0 %v4813
        %5950 = vmatpush1.bf16.msra.mxu0 %v4812
        %5951 = vmatprep.subr.bf16.mxu0 %v4797
        %5952 = vmatpush1.bf16.msra.mxu0 %v4796
        %5953 = vmatprep.subr.bf16.mxu0 %v5037
        %5954 = vmatpush2.bf16.msra.mxu0 %v5036
        %5955 = vmatprep.subr.bf16.mxu0 %v5021
        %5956 = vmatpush2.bf16.msra.mxu0 %v5020
        %5957 = vmatprep.subr.bf16.mxu0 %v5005
        %5958 = vmatpush2.bf16.msra.mxu0 %v5004
        %5959 = vmatprep.subr.bf16.mxu0 %v4989
        %5960 = vmatpush2.bf16.msra.mxu0 %v4988
        %5961 = vmatprep.subr.bf16.mxu0 %v4973
        %5962 = vmatpush2.bf16.msra.mxu0 %v4972
        %5963 = vmatprep.subr.bf16.mxu0 %v4957
        %5964 = vmatpush2.bf16.msra.mxu0 %v4956
        %5965 = vmatprep.subr.bf16.mxu0 %v4941
        %5966 = vmatpush2.bf16.msra.mxu0 %v4940
        %5967 = vmatprep.subr.bf16.mxu0 %v4925
        %5968 = vmatpush2.bf16.msra.mxu0 %v4924
        %5969 = vmatprep.mubr.bf16.mxu0 %v5563
        %5970 = vmatmul.mubr.bf16.gmra.mxu0 %v5562
        %v5971 = vpop.f32.mrf.mxu0
        %v5972 = vadd.f32 %v5931, %v5971
        %v5973 = vpop.f32.mrf.mxu0
        %v5974 = vadd.f32 %v5933, %v5973
        %v5975 = vpop.f32.mrf.mxu0
        %v5976 = vpop.f32.mrf.mxu0
        %5977 = vdwg.mxu0
        %5978 = vmatprep.subr.bf16.mxu0 %v5165
        %5979 = vmatpush1.bf16.msra.mxu0 %v5164
        %5980 = vmatprep.subr.bf16.mxu0 %v5149
        %5981 = vmatpush1.bf16.msra.mxu0 %v5148
        %5982 = vmatprep.subr.bf16.mxu0 %v5133
        %5983 = vmatpush1.bf16.msra.mxu0 %v5132
        %5984 = vmatprep.subr.bf16.mxu0 %v5117
        %5985 = vmatpush1.bf16.msra.mxu0 %v5116
        %5986 = vmatprep.subr.bf16.mxu0 %v5101
        %5987 = vmatpush1.bf16.msra.mxu0 %v5100
        %5988 = vmatprep.subr.bf16.mxu0 %v5085
        %5989 = vmatpush1.bf16.msra.mxu0 %v5084
        %5990 = vmatprep.subr.bf16.mxu0 %v5069
        %5991 = vmatpush1.bf16.msra.mxu0 %v5068
        %5992 = vmatprep.subr.bf16.mxu0 %v5053
        %5993 = vmatpush1.bf16.msra.mxu0 %v5052
        %5994 = vmatprep.subr.bf16.mxu0 %v5293
        %5995 = vmatpush2.bf16.msra.mxu0 %v5292
        %5996 = vmatprep.subr.bf16.mxu0 %v5277
        %5997 = vmatpush2.bf16.msra.mxu0 %v5276
        %5998 = vmatprep.subr.bf16.mxu0 %v5261
        %5999 = vmatpush2.bf16.msra.mxu0 %v5260
        %6000 = vmatprep.subr.bf16.mxu0 %v5245
        %6001 = vmatpush2.bf16.msra.mxu0 %v5244
        %6002 = vmatprep.subr.bf16.mxu0 %v5229
        %6003 = vmatpush2.bf16.msra.mxu0 %v5228
        %6004 = vmatprep.subr.bf16.mxu0 %v5213
        %6005 = vmatpush2.bf16.msra.mxu0 %v5212
        %6006 = vmatprep.subr.bf16.mxu0 %v5197
        %6007 = vmatpush2.bf16.msra.mxu0 %v5196
        %6008 = vmatprep.subr.bf16.mxu0 %v5181
        %6009 = vmatpush2.bf16.msra.mxu0 %v5180
        %6010 = vmatprep.mubr.bf16.mxu0 %v5565
        %6011 = vmatmul.mubr.bf16.gmra.mxu0 %v5564
        %v6012 = vpop.f32.mrf.mxu0
        %v6013 = vadd.f32 %v5972, %v6012
        %v6014 = vpop.f32.mrf.mxu0
        %v6015 = vadd.f32 %v5974, %v6014
        %v6016 = vpop.f32.mrf.mxu0
        %v6017 = vpop.f32.mrf.mxu0
        %6018 = vdwg.mxu0
        %6019 = vmatprep.subr.bf16.mxu0 %v5421
        %6020 = vmatpush1.bf16.msra.mxu0 %v5420
        %6021 = vmatprep.subr.bf16.mxu0 %v5405
        %6022 = vmatpush1.bf16.msra.mxu0 %v5404
        %6023 = vmatprep.subr.bf16.mxu0 %v5389
        %6024 = vmatpush1.bf16.msra.mxu0 %v5388
        %6025 = vmatprep.subr.bf16.mxu0 %v5373
        %6026 = vmatpush1.bf16.msra.mxu0 %v5372
        %6027 = vmatprep.subr.bf16.mxu0 %v5357
        %6028 = vmatpush1.bf16.msra.mxu0 %v5356
        %6029 = vmatprep.subr.bf16.mxu0 %v5341
        %6030 = vmatpush1.bf16.msra.mxu0 %v5340
        %6031 = vmatprep.subr.bf16.mxu0 %v5325
        %6032 = vmatpush1.bf16.msra.mxu0 %v5324
        %6033 = vmatprep.subr.bf16.mxu0 %v5309
        %6034 = vmatpush1.bf16.msra.mxu0 %v5308
        %6035 = vmatprep.subr.bf16.mxu0 %v5549
        %6036 = vmatpush2.bf16.msra.mxu0 %v5548
        %6037 = vmatprep.subr.bf16.mxu0 %v5533
        %6038 = vmatpush2.bf16.msra.mxu0 %v5532
        %6039 = vmatprep.subr.bf16.mxu0 %v5517
        %6040 = vmatpush2.bf16.msra.mxu0 %v5516
        %6041 = vmatprep.subr.bf16.mxu0 %v5501
        %6042 = vmatpush2.bf16.msra.mxu0 %v5500
        %6043 = vmatprep.subr.bf16.mxu0 %v5485
        %6044 = vmatpush2.bf16.msra.mxu0 %v5484
        %6045 = vmatprep.subr.bf16.mxu0 %v5469
        %6046 = vmatpush2.bf16.msra.mxu0 %v5468
        %6047 = vmatprep.subr.bf16.mxu0 %v5453
        %6048 = vmatpush2.bf16.msra.mxu0 %v5452
        %6049 = vmatprep.subr.bf16.mxu0 %v5437
        %6050 = vmatpush2.bf16.msra.mxu0 %v5436
        %6051 = vmatprep.mubr.bf16.mxu0 %v5567
        %6052 = vmatmul.mubr.bf16.gmra.mxu0 %v5566
        %v6053 = vpop.f32.mrf.mxu0
        %v6054 = vadd.f32 %v6013, %v6053
        %v6055 = vpop.f32.mrf.mxu0
        %v6056 = vadd.f32 %v6015, %v6055
        %v6057 = vpop.f32.mrf.mxu0
        %v6058 = vpop.f32.mrf.mxu0
        %6059 = vdwg.mxu0
        %6060 = vmatprep.subr.bf16.mxu0 %v4655
        %6061 = vmatpush1.bf16.msra.mxu0 %v4654
        %6062 = vmatprep.subr.bf16.mxu0 %v4639
        %6063 = vmatpush1.bf16.msra.mxu0 %v4638
        %6064 = vmatprep.subr.bf16.mxu0 %v4623
        %6065 = vmatpush1.bf16.msra.mxu0 %v4622
        %6066 = vmatprep.subr.bf16.mxu0 %v4607
        %6067 = vmatpush1.bf16.msra.mxu0 %v4606
        %6068 = vmatprep.subr.bf16.mxu0 %v4591
        %6069 = vmatpush1.bf16.msra.mxu0 %v4590
        %6070 = vmatprep.subr.bf16.mxu0 %v4575
        %6071 = vmatpush1.bf16.msra.mxu0 %v4574
        %6072 = vmatprep.subr.bf16.mxu0 %v4559
        %6073 = vmatpush1.bf16.msra.mxu0 %v4558
        %6074 = vmatprep.subr.bf16.mxu0 %v4543
        %6075 = vmatpush1.bf16.msra.mxu0 %v4542
        %6076 = vmatprep.subr.bf16.mxu0 %v4783
        %6077 = vmatpush2.bf16.msra.mxu0 %v4782
        %6078 = vmatprep.subr.bf16.mxu0 %v4767
        %6079 = vmatpush2.bf16.msra.mxu0 %v4766
        %6080 = vmatprep.subr.bf16.mxu0 %v4751
        %6081 = vmatpush2.bf16.msra.mxu0 %v4750
        %6082 = vmatprep.subr.bf16.mxu0 %v4735
        %6083 = vmatpush2.bf16.msra.mxu0 %v4734
        %6084 = vmatprep.subr.bf16.mxu0 %v4719
        %6085 = vmatpush2.bf16.msra.mxu0 %v4718
        %6086 = vmatprep.subr.bf16.mxu0 %v4703
        %6087 = vmatpush2.bf16.msra.mxu0 %v4702
        %6088 = vmatprep.subr.bf16.mxu0 %v4687
        %6089 = vmatpush2.bf16.msra.mxu0 %v4686
        %6090 = vmatprep.subr.bf16.mxu0 %v4671
        %6091 = vmatpush2.bf16.msra.mxu0 %v4670
        %6092 = vmatprep.mubr.bf16.mxu0 %v5561
        %6093 = vmatmul.mubr.bf16.gmra.mxu0 %v5560
        %v6094 = vpop.f32.mrf.mxu0
        %v6095 = vadd.f32 0.0, %v6094
        %v6096 = vpop.f32.mrf.mxu0
        %v6097 = vadd.f32 0.0, %v6096
        %v6098 = vpop.f32.mrf.mxu0
        %v6099 = vpop.f32.mrf.mxu0
        %6100 = vdwg.mxu0
        %6101 = vmatprep.subr.bf16.mxu0 %v4911
        %6102 = vmatpush1.bf16.msra.mxu0 %v4910
        %6103 = vmatprep.subr.bf16.mxu0 %v4895
        %6104 = vmatpush1.bf16.msra.mxu0 %v4894
        %6105 = vmatprep.subr.bf16.mxu0 %v4879
        %6106 = vmatpush1.bf16.msra.mxu0 %v4878
        %6107 = vmatprep.subr.bf16.mxu0 %v4863
        %6108 = vmatpush1.bf16.msra.mxu0 %v4862
        %6109 = vmatprep.subr.bf16.mxu0 %v4847
        %6110 = vmatpush1.bf16.msra.mxu0 %v4846
        %6111 = vmatprep.subr.bf16.mxu0 %v4831
        %6112 = vmatpush1.bf16.msra.mxu0 %v4830
        %6113 = vmatprep.subr.bf16.mxu0 %v4815
        %6114 = vmatpush1.bf16.msra.mxu0 %v4814
        %6115 = vmatprep.subr.bf16.mxu0 %v4799
        %6116 = vmatpush1.bf16.msra.mxu0 %v4798
        %6117 = vmatprep.subr.bf16.mxu0 %v5039
        %6118 = vmatpush2.bf16.msra.mxu0 %v5038
        %6119 = vmatprep.subr.bf16.mxu0 %v5023
        %6120 = vmatpush2.bf16.msra.mxu0 %v5022
        %6121 = vmatprep.subr.bf16.mxu0 %v5007
        %6122 = vmatpush2.bf16.msra.mxu0 %v5006
        %6123 = vmatprep.subr.bf16.mxu0 %v4991
        %6124 = vmatpush2.bf16.msra.mxu0 %v4990
        %6125 = vmatprep.subr.bf16.mxu0 %v4975
        %6126 = vmatpush2.bf16.msra.mxu0 %v4974
        %6127 = vmatprep.subr.bf16.mxu0 %v4959
        %6128 = vmatpush2.bf16.msra.mxu0 %v4958
        %6129 = vmatprep.subr.bf16.mxu0 %v4943
        %6130 = vmatpush2.bf16.msra.mxu0 %v4942
        %6131 = vmatprep.subr.bf16.mxu0 %v4927
        %6132 = vmatpush2.bf16.msra.mxu0 %v4926
        %6133 = vmatprep.mubr.bf16.mxu0 %v5563
        %6134 = vmatmul.mubr.bf16.gmra.mxu0 %v5562
        %v6135 = vpop.f32.mrf.mxu0
        %v6136 = vadd.f32 %v6095, %v6135
        %v6137 = vpop.f32.mrf.mxu0
        %v6138 = vadd.f32 %v6097, %v6137
        %v6139 = vpop.f32.mrf.mxu0
        %v6140 = vpop.f32.mrf.mxu0
        %6141 = vdwg.mxu0
        %6142 = vmatprep.subr.bf16.mxu0 %v5167
        %6143 = vmatpush1.bf16.msra.mxu0 %v5166
        %6144 = vmatprep.subr.bf16.mxu0 %v5151
        %6145 = vmatpush1.bf16.msra.mxu0 %v5150
        %6146 = vmatprep.subr.bf16.mxu0 %v5135
        %6147 = vmatpush1.bf16.msra.mxu0 %v5134
        %6148 = vmatprep.subr.bf16.mxu0 %v5119
        %6149 = vmatpush1.bf16.msra.mxu0 %v5118
        %6150 = vmatprep.subr.bf16.mxu0 %v5103
        %6151 = vmatpush1.bf16.msra.mxu0 %v5102
        %6152 = vmatprep.subr.bf16.mxu0 %v5087
        %6153 = vmatpush1.bf16.msra.mxu0 %v5086
        %6154 = vmatprep.subr.bf16.mxu0 %v5071
        %6155 = vmatpush1.bf16.msra.mxu0 %v5070
        %6156 = vmatprep.subr.bf16.mxu0 %v5055
        %6157 = vmatpush1.bf16.msra.mxu0 %v5054
        %6158 = vmatprep.subr.bf16.mxu0 %v5295
        %6159 = vmatpush2.bf16.msra.mxu0 %v5294
        %6160 = vmatprep.subr.bf16.mxu0 %v5279
        %6161 = vmatpush2.bf16.msra.mxu0 %v5278
        %6162 = vmatprep.subr.bf16.mxu0 %v5263
        %6163 = vmatpush2.bf16.msra.mxu0 %v5262
        %6164 = vmatprep.subr.bf16.mxu0 %v5247
        %6165 = vmatpush2.bf16.msra.mxu0 %v5246
        %6166 = vmatprep.subr.bf16.mxu0 %v5231
        %6167 = vmatpush2.bf16.msra.mxu0 %v5230
        %6168 = vmatprep.subr.bf16.mxu0 %v5215
        %6169 = vmatpush2.bf16.msra.mxu0 %v5214
        %6170 = vmatprep.subr.bf16.mxu0 %v5199
        %6171 = vmatpush2.bf16.msra.mxu0 %v5198
        %6172 = vmatprep.subr.bf16.mxu0 %v5183
        %6173 = vmatpush2.bf16.msra.mxu0 %v5182
        %6174 = vmatprep.mubr.bf16.mxu0 %v5565
        %6175 = vmatmul.mubr.bf16.gmra.mxu0 %v5564
        %v6176 = vpop.f32.mrf.mxu0
        %v6177 = vadd.f32 %v6136, %v6176
        %v6178 = vpop.f32.mrf.mxu0
        %v6179 = vadd.f32 %v6138, %v6178
        %v6180 = vpop.f32.mrf.mxu0
        %v6181 = vpop.f32.mrf.mxu0
        %6182 = vdwg.mxu0
        %6183 = vmatprep.subr.bf16.mxu0 %v5423
        %6184 = vmatpush1.bf16.msra.mxu0 %v5422
        %6185 = vmatprep.subr.bf16.mxu0 %v5407
        %6186 = vmatpush1.bf16.msra.mxu0 %v5406
        %6187 = vmatprep.subr.bf16.mxu0 %v5391
        %6188 = vmatpush1.bf16.msra.mxu0 %v5390
        %6189 = vmatprep.subr.bf16.mxu0 %v5375
        %6190 = vmatpush1.bf16.msra.mxu0 %v5374
        %6191 = vmatprep.subr.bf16.mxu0 %v5359
        %6192 = vmatpush1.bf16.msra.mxu0 %v5358
        %6193 = vmatprep.subr.bf16.mxu0 %v5343
        %6194 = vmatpush1.bf16.msra.mxu0 %v5342
        %6195 = vmatprep.subr.bf16.mxu0 %v5327
        %6196 = vmatpush1.bf16.msra.mxu0 %v5326
        %6197 = vmatprep.subr.bf16.mxu0 %v5311
        %6198 = vmatpush1.bf16.msra.mxu0 %v5310
        %6199 = vmatprep.subr.bf16.mxu0 %v5551
        %6200 = vmatpush2.bf16.msra.mxu0 %v5550
        %6201 = vmatprep.subr.bf16.mxu0 %v5535
        %6202 = vmatpush2.bf16.msra.mxu0 %v5534
        %6203 = vmatprep.subr.bf16.mxu0 %v5519
        %6204 = vmatpush2.bf16.msra.mxu0 %v5518
        %6205 = vmatprep.subr.bf16.mxu0 %v5503
        %6206 = vmatpush2.bf16.msra.mxu0 %v5502
        %6207 = vmatprep.subr.bf16.mxu0 %v5487
        %6208 = vmatpush2.bf16.msra.mxu0 %v5486
        %6209 = vmatprep.subr.bf16.mxu0 %v5471
        %6210 = vmatpush2.bf16.msra.mxu0 %v5470
        %6211 = vmatprep.subr.bf16.mxu0 %v5455
        %6212 = vmatpush2.bf16.msra.mxu0 %v5454
        %6213 = vmatprep.subr.bf16.mxu0 %v5439
        %6214 = vmatpush2.bf16.msra.mxu0 %v5438
        %6215 = vmatprep.mubr.bf16.mxu0 %v5567
        %6216 = vmatmul.mubr.bf16.gmra.mxu0 %v5566
        %v6217 = vpop.f32.mrf.mxu0
        %v6218 = vadd.f32 %v6177, %v6217
        %v6219 = vpop.f32.mrf.mxu0
        %v6220 = vadd.f32 %v6179, %v6219
        %v6221 = vpop.f32.mrf.mxu0
        %v6222 = vpop.f32.mrf.mxu0
        %6223 = vdwg.mxu0
        %6224 = vmatprep.subr.bf16.mxu0 %v4657
        %6225 = vmatpush1.bf16.msra.mxu0 %v4656
        %6226 = vmatprep.subr.bf16.mxu0 %v4641
        %6227 = vmatpush1.bf16.msra.mxu0 %v4640
        %6228 = vmatprep.subr.bf16.mxu0 %v4625
        %6229 = vmatpush1.bf16.msra.mxu0 %v4624
        %6230 = vmatprep.subr.bf16.mxu0 %v4609
        %6231 = vmatpush1.bf16.msra.mxu0 %v4608
        %6232 = vmatprep.subr.bf16.mxu0 %v4593
        %6233 = vmatpush1.bf16.msra.mxu0 %v4592
        %6234 = vmatprep.subr.bf16.mxu0 %v4577
        %6235 = vmatpush1.bf16.msra.mxu0 %v4576
        %6236 = vmatprep.subr.bf16.mxu0 %v4561
        %6237 = vmatpush1.bf16.msra.mxu0 %v4560
        %6238 = vmatprep.subr.bf16.mxu0 %v4545
        %6239 = vmatpush1.bf16.msra.mxu0 %v4544
        %6240 = vmatprep.subr.bf16.mxu0 %v4785
        %6241 = vmatpush2.bf16.msra.mxu0 %v4784
        %6242 = vmatprep.subr.bf16.mxu0 %v4769
        %6243 = vmatpush2.bf16.msra.mxu0 %v4768
        %6244 = vmatprep.subr.bf16.mxu0 %v4753
        %6245 = vmatpush2.bf16.msra.mxu0 %v4752
        %6246 = vmatprep.subr.bf16.mxu0 %v4737
        %6247 = vmatpush2.bf16.msra.mxu0 %v4736
        %6248 = vmatprep.subr.bf16.mxu0 %v4721
        %6249 = vmatpush2.bf16.msra.mxu0 %v4720
        %6250 = vmatprep.subr.bf16.mxu0 %v4705
        %6251 = vmatpush2.bf16.msra.mxu0 %v4704
        %6252 = vmatprep.subr.bf16.mxu0 %v4689
        %6253 = vmatpush2.bf16.msra.mxu0 %v4688
        %6254 = vmatprep.subr.bf16.mxu0 %v4673
        %6255 = vmatpush2.bf16.msra.mxu0 %v4672
        %6256 = vmatprep.mubr.bf16.mxu0 %v5561
        %6257 = vmatmul.mubr.bf16.gmra.mxu0 %v5560
        %v6258 = vpop.f32.mrf.mxu0
        %v6259 = vadd.f32 0.0, %v6258
        %v6260 = vpop.f32.mrf.mxu0
        %v6261 = vadd.f32 0.0, %v6260
        %v6262 = vpop.f32.mrf.mxu0
        %v6263 = vpop.f32.mrf.mxu0
        %6264 = vdwg.mxu0
        %6265 = vmatprep.subr.bf16.mxu0 %v4913
        %6266 = vmatpush1.bf16.msra.mxu0 %v4912
        %6267 = vmatprep.subr.bf16.mxu0 %v4897
        %6268 = vmatpush1.bf16.msra.mxu0 %v4896
        %6269 = vmatprep.subr.bf16.mxu0 %v4881
        %6270 = vmatpush1.bf16.msra.mxu0 %v4880
        %6271 = vmatprep.subr.bf16.mxu0 %v4865
        %6272 = vmatpush1.bf16.msra.mxu0 %v4864
        %6273 = vmatprep.subr.bf16.mxu0 %v4849
        %6274 = vmatpush1.bf16.msra.mxu0 %v4848
        %6275 = vmatprep.subr.bf16.mxu0 %v4833
        %6276 = vmatpush1.bf16.msra.mxu0 %v4832
        %6277 = vmatprep.subr.bf16.mxu0 %v4817
        %6278 = vmatpush1.bf16.msra.mxu0 %v4816
        %6279 = vmatprep.subr.bf16.mxu0 %v4801
        %6280 = vmatpush1.bf16.msra.mxu0 %v4800
        %6281 = vmatprep.subr.bf16.mxu0 %v5041
        %6282 = vmatpush2.bf16.msra.mxu0 %v5040
        %6283 = vmatprep.subr.bf16.mxu0 %v5025
        %6284 = vmatpush2.bf16.msra.mxu0 %v5024
        %6285 = vmatprep.subr.bf16.mxu0 %v5009
        %6286 = vmatpush2.bf16.msra.mxu0 %v5008
        %6287 = vmatprep.subr.bf16.mxu0 %v4993
        %6288 = vmatpush2.bf16.msra.mxu0 %v4992
        %6289 = vmatprep.subr.bf16.mxu0 %v4977
        %6290 = vmatpush2.bf16.msra.mxu0 %v4976
        %6291 = vmatprep.subr.bf16.mxu0 %v4961
        %6292 = vmatpush2.bf16.msra.mxu0 %v4960
        %6293 = vmatprep.subr.bf16.mxu0 %v4945
        %6294 = vmatpush2.bf16.msra.mxu0 %v4944
        %6295 = vmatprep.subr.bf16.mxu0 %v4929
        %6296 = vmatpush2.bf16.msra.mxu0 %v4928
        %6297 = vmatprep.mubr.bf16.mxu0 %v5563
        %6298 = vmatmul.mubr.bf16.gmra.mxu0 %v5562
        %v6299 = vpop.f32.mrf.mxu0
        %v6300 = vadd.f32 %v6259, %v6299
        %v6301 = vpop.f32.mrf.mxu0
        %v6302 = vadd.f32 %v6261, %v6301
        %v6303 = vpop.f32.mrf.mxu0
        %v6304 = vpop.f32.mrf.mxu0
        %6305 = vdwg.mxu0
        %6306 = vmatprep.subr.bf16.mxu0 %v5169
        %6307 = vmatpush1.bf16.msra.mxu0 %v5168
        %6308 = vmatprep.subr.bf16.mxu0 %v5153
        %6309 = vmatpush1.bf16.msra.mxu0 %v5152
        %6310 = vmatprep.subr.bf16.mxu0 %v5137
        %6311 = vmatpush1.bf16.msra.mxu0 %v5136
        %6312 = vmatprep.subr.bf16.mxu0 %v5121
        %6313 = vmatpush1.bf16.msra.mxu0 %v5120
        %6314 = vmatprep.subr.bf16.mxu0 %v5105
        %6315 = vmatpush1.bf16.msra.mxu0 %v5104
        %6316 = vmatprep.subr.bf16.mxu0 %v5089
        %6317 = vmatpush1.bf16.msra.mxu0 %v5088
        %6318 = vmatprep.subr.bf16.mxu0 %v5073
        %6319 = vmatpush1.bf16.msra.mxu0 %v5072
        %6320 = vmatprep.subr.bf16.mxu0 %v5057
        %6321 = vmatpush1.bf16.msra.mxu0 %v5056
        %6322 = vmatprep.subr.bf16.mxu0 %v5297
        %6323 = vmatpush2.bf16.msra.mxu0 %v5296
        %6324 = vmatprep.subr.bf16.mxu0 %v5281
        %6325 = vmatpush2.bf16.msra.mxu0 %v5280
        %6326 = vmatprep.subr.bf16.mxu0 %v5265
        %6327 = vmatpush2.bf16.msra.mxu0 %v5264
        %6328 = vmatprep.subr.bf16.mxu0 %v5249
        %6329 = vmatpush2.bf16.msra.mxu0 %v5248
        %6330 = vmatprep.subr.bf16.mxu0 %v5233
        %6331 = vmatpush2.bf16.msra.mxu0 %v5232
        %6332 = vmatprep.subr.bf16.mxu0 %v5217
        %6333 = vmatpush2.bf16.msra.mxu0 %v5216
        %6334 = vmatprep.subr.bf16.mxu0 %v5201
        %6335 = vmatpush2.bf16.msra.mxu0 %v5200
        %6336 = vmatprep.subr.bf16.mxu0 %v5185
        %6337 = vmatpush2.bf16.msra.mxu0 %v5184
        %6338 = vmatprep.mubr.bf16.mxu0 %v5565
        %6339 = vmatmul.mubr.bf16.gmra.mxu0 %v5564
        %v6340 = vpop.f32.mrf.mxu0
        %v6341 = vadd.f32 %v6300, %v6340
        %v6342 = vpop.f32.mrf.mxu0
        %v6343 = vadd.f32 %v6302, %v6342
        %v6344 = vpop.f32.mrf.mxu0
        %v6345 = vpop.f32.mrf.mxu0
        %6346 = vdwg.mxu0
        %6347 = vmatprep.subr.bf16.mxu0 %v5425
        %6348 = vmatpush1.bf16.msra.mxu0 %v5424
        %6349 = vmatprep.subr.bf16.mxu0 %v5409
        %6350 = vmatpush1.bf16.msra.mxu0 %v5408
        %6351 = vmatprep.subr.bf16.mxu0 %v5393
        %6352 = vmatpush1.bf16.msra.mxu0 %v5392
        %6353 = vmatprep.subr.bf16.mxu0 %v5377
        %6354 = vmatpush1.bf16.msra.mxu0 %v5376
        %6355 = vmatprep.subr.bf16.mxu0 %v5361
        %6356 = vmatpush1.bf16.msra.mxu0 %v5360
        %6357 = vmatprep.subr.bf16.mxu0 %v5345
        %6358 = vmatpush1.bf16.msra.mxu0 %v5344
        %6359 = vmatprep.subr.bf16.mxu0 %v5329
        %6360 = vmatpush1.bf16.msra.mxu0 %v5328
        %6361 = vmatprep.subr.bf16.mxu0 %v5313
        %6362 = vmatpush1.bf16.msra.mxu0 %v5312
        %6363 = vmatprep.subr.bf16.mxu0 %v5553
        %6364 = vmatpush2.bf16.msra.mxu0 %v5552
        %6365 = vmatprep.subr.bf16.mxu0 %v5537
        %6366 = vmatpush2.bf16.msra.mxu0 %v5536
        %6367 = vmatprep.subr.bf16.mxu0 %v5521
        %6368 = vmatpush2.bf16.msra.mxu0 %v5520
        %6369 = vmatprep.subr.bf16.mxu0 %v5505
        %6370 = vmatpush2.bf16.msra.mxu0 %v5504
        %6371 = vmatprep.subr.bf16.mxu0 %v5489
        %6372 = vmatpush2.bf16.msra.mxu0 %v5488
        %6373 = vmatprep.subr.bf16.mxu0 %v5473
        %6374 = vmatpush2.bf16.msra.mxu0 %v5472
        %6375 = vmatprep.subr.bf16.mxu0 %v5457
        %6376 = vmatpush2.bf16.msra.mxu0 %v5456
        %6377 = vmatprep.subr.bf16.mxu0 %v5441
        %6378 = vmatpush2.bf16.msra.mxu0 %v5440
        %6379 = vmatprep.mubr.bf16.mxu0 %v5567
        %6380 = vmatmul.mubr.bf16.gmra.mxu0 %v5566
        %v6381 = vpop.f32.mrf.mxu0
        %v6382 = vadd.f32 %v6341, %v6381
        %v6383 = vpop.f32.mrf.mxu0
        %v6384 = vadd.f32 %v6343, %v6383
        %v6385 = vpop.f32.mrf.mxu0
        %v6386 = vpop.f32.mrf.mxu0
        %6387 = vdwg.mxu0
        %6388 = vmatprep.subr.bf16.mxu0 %v4659
        %6389 = vmatpush1.bf16.msra.mxu0 %v4658
        %6390 = vmatprep.subr.bf16.mxu0 %v4643
        %6391 = vmatpush1.bf16.msra.mxu0 %v4642
        %6392 = vmatprep.subr.bf16.mxu0 %v4627
        %6393 = vmatpush1.bf16.msra.mxu0 %v4626
        %6394 = vmatprep.subr.bf16.mxu0 %v4611
        %6395 = vmatpush1.bf16.msra.mxu0 %v4610
        %6396 = vmatprep.subr.bf16.mxu0 %v4595
        %6397 = vmatpush1.bf16.msra.mxu0 %v4594
        %6398 = vmatprep.subr.bf16.mxu0 %v4579
        %6399 = vmatpush1.bf16.msra.mxu0 %v4578
        %6400 = vmatprep.subr.bf16.mxu0 %v4563
        %6401 = vmatpush1.bf16.msra.mxu0 %v4562
        %6402 = vmatprep.subr.bf16.mxu0 %v4547
        %6403 = vmatpush1.bf16.msra.mxu0 %v4546
        %6404 = vmatprep.subr.bf16.mxu0 %v4787
        %6405 = vmatpush2.bf16.msra.mxu0 %v4786
        %6406 = vmatprep.subr.bf16.mxu0 %v4771
        %6407 = vmatpush2.bf16.msra.mxu0 %v4770
        %6408 = vmatprep.subr.bf16.mxu0 %v4755
        %6409 = vmatpush2.bf16.msra.mxu0 %v4754
        %6410 = vmatprep.subr.bf16.mxu0 %v4739
        %6411 = vmatpush2.bf16.msra.mxu0 %v4738
        %6412 = vmatprep.subr.bf16.mxu0 %v4723
        %6413 = vmatpush2.bf16.msra.mxu0 %v4722
        %6414 = vmatprep.subr.bf16.mxu0 %v4707
        %6415 = vmatpush2.bf16.msra.mxu0 %v4706
        %6416 = vmatprep.subr.bf16.mxu0 %v4691
        %6417 = vmatpush2.bf16.msra.mxu0 %v4690
        %6418 = vmatprep.subr.bf16.mxu0 %v4675
        %6419 = vmatpush2.bf16.msra.mxu0 %v4674
        %6420 = vmatprep.mubr.bf16.mxu0 %v5561
        %6421 = vmatmul.mubr.bf16.gmra.mxu0 %v5560
        %v6422 = vpop.f32.mrf.mxu0
        %v6423 = vadd.f32 0.0, %v6422
        %v6424 = vpop.f32.mrf.mxu0
        %v6425 = vadd.f32 0.0, %v6424
        %v6426 = vpop.f32.mrf.mxu0
        %v6427 = vpop.f32.mrf.mxu0
        %6428 = vdwg.mxu0
        %6429 = vmatprep.subr.bf16.mxu0 %v4915
        %6430 = vmatpush1.bf16.msra.mxu0 %v4914
        %6431 = vmatprep.subr.bf16.mxu0 %v4899
        %6432 = vmatpush1.bf16.msra.mxu0 %v4898
        %6433 = vmatprep.subr.bf16.mxu0 %v4883
        %6434 = vmatpush1.bf16.msra.mxu0 %v4882
        %6435 = vmatprep.subr.bf16.mxu0 %v4867
        %6436 = vmatpush1.bf16.msra.mxu0 %v4866
        %6437 = vmatprep.subr.bf16.mxu0 %v4851
        %6438 = vmatpush1.bf16.msra.mxu0 %v4850
        %6439 = vmatprep.subr.bf16.mxu0 %v4835
        %6440 = vmatpush1.bf16.msra.mxu0 %v4834
        %6441 = vmatprep.subr.bf16.mxu0 %v4819
        %6442 = vmatpush1.bf16.msra.mxu0 %v4818
        %6443 = vmatprep.subr.bf16.mxu0 %v4803
        %6444 = vmatpush1.bf16.msra.mxu0 %v4802
        %6445 = vmatprep.subr.bf16.mxu0 %v5043
        %6446 = vmatpush2.bf16.msra.mxu0 %v5042
        %6447 = vmatprep.subr.bf16.mxu0 %v5027
        %6448 = vmatpush2.bf16.msra.mxu0 %v5026
        %6449 = vmatprep.subr.bf16.mxu0 %v5011
        %6450 = vmatpush2.bf16.msra.mxu0 %v5010
        %6451 = vmatprep.subr.bf16.mxu0 %v4995
        %6452 = vmatpush2.bf16.msra.mxu0 %v4994
        %6453 = vmatprep.subr.bf16.mxu0 %v4979
        %6454 = vmatpush2.bf16.msra.mxu0 %v4978
        %6455 = vmatprep.subr.bf16.mxu0 %v4963
        %6456 = vmatpush2.bf16.msra.mxu0 %v4962
        %6457 = vmatprep.subr.bf16.mxu0 %v4947
        %6458 = vmatpush2.bf16.msra.mxu0 %v4946
        %6459 = vmatprep.subr.bf16.mxu0 %v4931
        %6460 = vmatpush2.bf16.msra.mxu0 %v4930
        %6461 = vmatprep.mubr.bf16.mxu0 %v5563
        %6462 = vmatmul.mubr.bf16.gmra.mxu0 %v5562
        %v6463 = vpop.f32.mrf.mxu0
        %v6464 = vadd.f32 %v6423, %v6463
        %v6465 = vpop.f32.mrf.mxu0
        %v6466 = vadd.f32 %v6425, %v6465
        %v6467 = vpop.f32.mrf.mxu0
        %v6468 = vpop.f32.mrf.mxu0
        %6469 = vdwg.mxu0
        %6470 = vmatprep.subr.bf16.mxu0 %v5171
        %6471 = vmatpush1.bf16.msra.mxu0 %v5170
        %6472 = vmatprep.subr.bf16.mxu0 %v5155
        %6473 = vmatpush1.bf16.msra.mxu0 %v5154
        %6474 = vmatprep.subr.bf16.mxu0 %v5139
        %6475 = vmatpush1.bf16.msra.mxu0 %v5138
        %6476 = vmatprep.subr.bf16.mxu0 %v5123
        %6477 = vmatpush1.bf16.msra.mxu0 %v5122
        %6478 = vmatprep.subr.bf16.mxu0 %v5107
        %6479 = vmatpush1.bf16.msra.mxu0 %v5106
        %6480 = vmatprep.subr.bf16.mxu0 %v5091
        %6481 = vmatpush1.bf16.msra.mxu0 %v5090
        %6482 = vmatprep.subr.bf16.mxu0 %v5075
        %6483 = vmatpush1.bf16.msra.mxu0 %v5074
        %6484 = vmatprep.subr.bf16.mxu0 %v5059
        %6485 = vmatpush1.bf16.msra.mxu0 %v5058
        %6486 = vmatprep.subr.bf16.mxu0 %v5299
        %6487 = vmatpush2.bf16.msra.mxu0 %v5298
        %6488 = vmatprep.subr.bf16.mxu0 %v5283
        %6489 = vmatpush2.bf16.msra.mxu0 %v5282
        %6490 = vmatprep.subr.bf16.mxu0 %v5267
        %6491 = vmatpush2.bf16.msra.mxu0 %v5266
        %6492 = vmatprep.subr.bf16.mxu0 %v5251
        %6493 = vmatpush2.bf16.msra.mxu0 %v5250
        %6494 = vmatprep.subr.bf16.mxu0 %v5235
        %6495 = vmatpush2.bf16.msra.mxu0 %v5234
        %6496 = vmatprep.subr.bf16.mxu0 %v5219
        %6497 = vmatpush2.bf16.msra.mxu0 %v5218
        %6498 = vmatprep.subr.bf16.mxu0 %v5203
        %6499 = vmatpush2.bf16.msra.mxu0 %v5202
        %6500 = vmatprep.subr.bf16.mxu0 %v5187
        %6501 = vmatpush2.bf16.msra.mxu0 %v5186
        %6502 = vmatprep.mubr.bf16.mxu0 %v5565
        %6503 = vmatmul.mubr.bf16.gmra.mxu0 %v5564
        %v6504 = vpop.f32.mrf.mxu0
        %v6505 = vadd.f32 %v6464, %v6504
        %v6506 = vpop.f32.mrf.mxu0
        %v6507 = vadd.f32 %v6466, %v6506
        %v6508 = vpop.f32.mrf.mxu0
        %v6509 = vpop.f32.mrf.mxu0
        %6510 = vdwg.mxu0
        %6511 = vmatprep.subr.bf16.mxu0 %v5427
        %6512 = vmatpush1.bf16.msra.mxu0 %v5426
        %6513 = vmatprep.subr.bf16.mxu0 %v5411
        %6514 = vmatpush1.bf16.msra.mxu0 %v5410
        %6515 = vmatprep.subr.bf16.mxu0 %v5395
        %6516 = vmatpush1.bf16.msra.mxu0 %v5394
        %6517 = vmatprep.subr.bf16.mxu0 %v5379
        %6518 = vmatpush1.bf16.msra.mxu0 %v5378
        %6519 = vmatprep.subr.bf16.mxu0 %v5363
        %6520 = vmatpush1.bf16.msra.mxu0 %v5362
        %6521 = vmatprep.subr.bf16.mxu0 %v5347
        %6522 = vmatpush1.bf16.msra.mxu0 %v5346
        %6523 = vmatprep.subr.bf16.mxu0 %v5331
        %6524 = vmatpush1.bf16.msra.mxu0 %v5330
        %6525 = vmatprep.subr.bf16.mxu0 %v5315
        %6526 = vmatpush1.bf16.msra.mxu0 %v5314
        %6527 = vmatprep.subr.bf16.mxu0 %v5555
        %6528 = vmatpush2.bf16.msra.mxu0 %v5554
        %6529 = vmatprep.subr.bf16.mxu0 %v5539
        %6530 = vmatpush2.bf16.msra.mxu0 %v5538
        %6531 = vmatprep.subr.bf16.mxu0 %v5523
        %6532 = vmatpush2.bf16.msra.mxu0 %v5522
        %6533 = vmatprep.subr.bf16.mxu0 %v5507
        %6534 = vmatpush2.bf16.msra.mxu0 %v5506
        %6535 = vmatprep.subr.bf16.mxu0 %v5491
        %6536 = vmatpush2.bf16.msra.mxu0 %v5490
        %6537 = vmatprep.subr.bf16.mxu0 %v5475
        %6538 = vmatpush2.bf16.msra.mxu0 %v5474
        %6539 = vmatprep.subr.bf16.mxu0 %v5459
        %6540 = vmatpush2.bf16.msra.mxu0 %v5458
        %6541 = vmatprep.subr.bf16.mxu0 %v5443
        %6542 = vmatpush2.bf16.msra.mxu0 %v5442
        %6543 = vmatprep.mubr.bf16.mxu0 %v5567
        %6544 = vmatmul.mubr.bf16.gmra.mxu0 %v5566
        %v6545 = vpop.f32.mrf.mxu0
        %v6546 = vadd.f32 %v6505, %v6545
        %v6547 = vpop.f32.mrf.mxu0
        %v6548 = vadd.f32 %v6507, %v6547
        %v6549 = vpop.f32.mrf.mxu0
        %v6550 = vpop.f32.mrf.mxu0
        %6551 = vdwg.mxu0
        %6552 = vmatprep.subr.bf16.mxu0 %v4661
        %6553 = vmatpush1.bf16.msra.mxu0 %v4660
        %6554 = vmatprep.subr.bf16.mxu0 %v4645
        %6555 = vmatpush1.bf16.msra.mxu0 %v4644
        %6556 = vmatprep.subr.bf16.mxu0 %v4629
        %6557 = vmatpush1.bf16.msra.mxu0 %v4628
        %6558 = vmatprep.subr.bf16.mxu0 %v4613
        %6559 = vmatpush1.bf16.msra.mxu0 %v4612
        %6560 = vmatprep.subr.bf16.mxu0 %v4597
        %6561 = vmatpush1.bf16.msra.mxu0 %v4596
        %6562 = vmatprep.subr.bf16.mxu0 %v4581
        %6563 = vmatpush1.bf16.msra.mxu0 %v4580
        %6564 = vmatprep.subr.bf16.mxu0 %v4565
        %6565 = vmatpush1.bf16.msra.mxu0 %v4564
        %6566 = vmatprep.subr.bf16.mxu0 %v4549
        %6567 = vmatpush1.bf16.msra.mxu0 %v4548
        %6568 = vmatprep.subr.bf16.mxu0 %v4789
        %6569 = vmatpush2.bf16.msra.mxu0 %v4788
        %6570 = vmatprep.subr.bf16.mxu0 %v4773
        %6571 = vmatpush2.bf16.msra.mxu0 %v4772
        %6572 = vmatprep.subr.bf16.mxu0 %v4757
        %6573 = vmatpush2.bf16.msra.mxu0 %v4756
        %6574 = vmatprep.subr.bf16.mxu0 %v4741
        %6575 = vmatpush2.bf16.msra.mxu0 %v4740
        %6576 = vmatprep.subr.bf16.mxu0 %v4725
        %6577 = vmatpush2.bf16.msra.mxu0 %v4724
        %6578 = vmatprep.subr.bf16.mxu0 %v4709
        %6579 = vmatpush2.bf16.msra.mxu0 %v4708
        %6580 = vmatprep.subr.bf16.mxu0 %v4693
        %6581 = vmatpush2.bf16.msra.mxu0 %v4692
        %6582 = vmatprep.subr.bf16.mxu0 %v4677
        %6583 = vmatpush2.bf16.msra.mxu0 %v4676
        %6584 = vmatprep.mubr.bf16.mxu0 %v5561
        %6585 = vmatmul.mubr.bf16.gmra.mxu0 %v5560
        %v6586 = vpop.f32.mrf.mxu0
        %v6587 = vadd.f32 0.0, %v6586
        %v6588 = vpop.f32.mrf.mxu0
        %v6589 = vadd.f32 0.0, %v6588
        %v6590 = vpop.f32.mrf.mxu0
        %v6591 = vpop.f32.mrf.mxu0
        %6592 = vdwg.mxu0
        %6593 = vmatprep.subr.bf16.mxu0 %v4917
        %6594 = vmatpush1.bf16.msra.mxu0 %v4916
        %6595 = vmatprep.subr.bf16.mxu0 %v4901
        %6596 = vmatpush1.bf16.msra.mxu0 %v4900
        %6597 = vmatprep.subr.bf16.mxu0 %v4885
        %6598 = vmatpush1.bf16.msra.mxu0 %v4884
        %6599 = vmatprep.subr.bf16.mxu0 %v4869
        %6600 = vmatpush1.bf16.msra.mxu0 %v4868
        %6601 = vmatprep.subr.bf16.mxu0 %v4853
        %6602 = vmatpush1.bf16.msra.mxu0 %v4852
        %6603 = vmatprep.subr.bf16.mxu0 %v4837
        %6604 = vmatpush1.bf16.msra.mxu0 %v4836
        %6605 = vmatprep.subr.bf16.mxu0 %v4821
        %6606 = vmatpush1.bf16.msra.mxu0 %v4820
        %6607 = vmatprep.subr.bf16.mxu0 %v4805
        %6608 = vmatpush1.bf16.msra.mxu0 %v4804
        %6609 = vmatprep.subr.bf16.mxu0 %v5045
        %6610 = vmatpush2.bf16.msra.mxu0 %v5044
        %6611 = vmatprep.subr.bf16.mxu0 %v5029
        %6612 = vmatpush2.bf16.msra.mxu0 %v5028
        %6613 = vmatprep.subr.bf16.mxu0 %v5013
        %6614 = vmatpush2.bf16.msra.mxu0 %v5012
        %6615 = vmatprep.subr.bf16.mxu0 %v4997
        %6616 = vmatpush2.bf16.msra.mxu0 %v4996
        %6617 = vmatprep.subr.bf16.mxu0 %v4981
        %6618 = vmatpush2.bf16.msra.mxu0 %v4980
        %6619 = vmatprep.subr.bf16.mxu0 %v4965
        %6620 = vmatpush2.bf16.msra.mxu0 %v4964
        %6621 = vmatprep.subr.bf16.mxu0 %v4949
        %6622 = vmatpush2.bf16.msra.mxu0 %v4948
        %6623 = vmatprep.subr.bf16.mxu0 %v4933
        %6624 = vmatpush2.bf16.msra.mxu0 %v4932
        %6625 = vmatprep.mubr.bf16.mxu0 %v5563
        %6626 = vmatmul.mubr.bf16.gmra.mxu0 %v5562
        %v6627 = vpop.f32.mrf.mxu0
        %v6628 = vadd.f32 %v6587, %v6627
        %v6629 = vpop.f32.mrf.mxu0
        %v6630 = vadd.f32 %v6589, %v6629
        %v6631 = vpop.f32.mrf.mxu0
        %v6632 = vpop.f32.mrf.mxu0
        %6633 = vdwg.mxu0
        %6634 = vmatprep.subr.bf16.mxu0 %v5173
        %6635 = vmatpush1.bf16.msra.mxu0 %v5172
        %6636 = vmatprep.subr.bf16.mxu0 %v5157
        %6637 = vmatpush1.bf16.msra.mxu0 %v5156
        %6638 = vmatprep.subr.bf16.mxu0 %v5141
        %6639 = vmatpush1.bf16.msra.mxu0 %v5140
        %6640 = vmatprep.subr.bf16.mxu0 %v5125
        %6641 = vmatpush1.bf16.msra.mxu0 %v5124
        %6642 = vmatprep.subr.bf16.mxu0 %v5109
        %6643 = vmatpush1.bf16.msra.mxu0 %v5108
        %6644 = vmatprep.subr.bf16.mxu0 %v5093
        %6645 = vmatpush1.bf16.msra.mxu0 %v5092
        %6646 = vmatprep.subr.bf16.mxu0 %v5077
        %6647 = vmatpush1.bf16.msra.mxu0 %v5076
        %6648 = vmatprep.subr.bf16.mxu0 %v5061
        %6649 = vmatpush1.bf16.msra.mxu0 %v5060
        %6650 = vmatprep.subr.bf16.mxu0 %v5301
        %6651 = vmatpush2.bf16.msra.mxu0 %v5300
        %6652 = vmatprep.subr.bf16.mxu0 %v5285
        %6653 = vmatpush2.bf16.msra.mxu0 %v5284
        %6654 = vmatprep.subr.bf16.mxu0 %v5269
        %6655 = vmatpush2.bf16.msra.mxu0 %v5268
        %6656 = vmatprep.subr.bf16.mxu0 %v5253
        %6657 = vmatpush2.bf16.msra.mxu0 %v5252
        %6658 = vmatprep.subr.bf16.mxu0 %v5237
        %6659 = vmatpush2.bf16.msra.mxu0 %v5236
        %6660 = vmatprep.subr.bf16.mxu0 %v5221
        %6661 = vmatpush2.bf16.msra.mxu0 %v5220
        %6662 = vmatprep.subr.bf16.mxu0 %v5205
        %6663 = vmatpush2.bf16.msra.mxu0 %v5204
        %6664 = vmatprep.subr.bf16.mxu0 %v5189
        %6665 = vmatpush2.bf16.msra.mxu0 %v5188
        %6666 = vmatprep.mubr.bf16.mxu0 %v5565
        %6667 = vmatmul.mubr.bf16.gmra.mxu0 %v5564
        %v6668 = vpop.f32.mrf.mxu0
        %v6669 = vadd.f32 %v6628, %v6668
        %v6670 = vpop.f32.mrf.mxu0
        %v6671 = vadd.f32 %v6630, %v6670
        %v6672 = vpop.f32.mrf.mxu0
        %v6673 = vpop.f32.mrf.mxu0
        %6674 = vdwg.mxu0
        %6675 = vmatprep.subr.bf16.mxu0 %v5429
        %6676 = vmatpush1.bf16.msra.mxu0 %v5428
        %6677 = vmatprep.subr.bf16.mxu0 %v5413
        %6678 = vmatpush1.bf16.msra.mxu0 %v5412
        %6679 = vmatprep.subr.bf16.mxu0 %v5397
        %6680 = vmatpush1.bf16.msra.mxu0 %v5396
        %6681 = vmatprep.subr.bf16.mxu0 %v5381
        %6682 = vmatpush1.bf16.msra.mxu0 %v5380
        %6683 = vmatprep.subr.bf16.mxu0 %v5365
        %6684 = vmatpush1.bf16.msra.mxu0 %v5364
        %6685 = vmatprep.subr.bf16.mxu0 %v5349
        %6686 = vmatpush1.bf16.msra.mxu0 %v5348
        %6687 = vmatprep.subr.bf16.mxu0 %v5333
        %6688 = vmatpush1.bf16.msra.mxu0 %v5332
        %6689 = vmatprep.subr.bf16.mxu0 %v5317
        %6690 = vmatpush1.bf16.msra.mxu0 %v5316
        %6691 = vmatprep.subr.bf16.mxu0 %v5557
        %6692 = vmatpush2.bf16.msra.mxu0 %v5556
        %6693 = vmatprep.subr.bf16.mxu0 %v5541
        %6694 = vmatpush2.bf16.msra.mxu0 %v5540
        %6695 = vmatprep.subr.bf16.mxu0 %v5525
        %6696 = vmatpush2.bf16.msra.mxu0 %v5524
        %6697 = vmatprep.subr.bf16.mxu0 %v5509
        %6698 = vmatpush2.bf16.msra.mxu0 %v5508
        %6699 = vmatprep.subr.bf16.mxu0 %v5493
        %6700 = vmatpush2.bf16.msra.mxu0 %v5492
        %6701 = vmatprep.subr.bf16.mxu0 %v5477
        %6702 = vmatpush2.bf16.msra.mxu0 %v5476
        %6703 = vmatprep.subr.bf16.mxu0 %v5461
        %6704 = vmatpush2.bf16.msra.mxu0 %v5460
        %6705 = vmatprep.subr.bf16.mxu0 %v5445
        %6706 = vmatpush2.bf16.msra.mxu0 %v5444
        %6707 = vmatprep.mubr.bf16.mxu0 %v5567
        %6708 = vmatmul.mubr.bf16.gmra.mxu0 %v5566
        %v6709 = vpop.f32.mrf.mxu0
        %v6710 = vadd.f32 %v6669, %v6709
        %v6711 = vpop.f32.mrf.mxu0
        %v6712 = vadd.f32 %v6671, %v6711
        %v6713 = vpop.f32.mrf.mxu0
        %v6714 = vpop.f32.mrf.mxu0
        %6715 = vdwg.mxu0
        %6716 = vmatprep.subr.bf16.mxu0 %v4663
        %6717 = vmatpush1.bf16.msra.mxu0 %v4662
        %6718 = vmatprep.subr.bf16.mxu0 %v4647
        %6719 = vmatpush1.bf16.msra.mxu0 %v4646
        %6720 = vmatprep.subr.bf16.mxu0 %v4631
        %6721 = vmatpush1.bf16.msra.mxu0 %v4630
        %6722 = vmatprep.subr.bf16.mxu0 %v4615
        %6723 = vmatpush1.bf16.msra.mxu0 %v4614
        %6724 = vmatprep.subr.bf16.mxu0 %v4599
        %6725 = vmatpush1.bf16.msra.mxu0 %v4598
        %6726 = vmatprep.subr.bf16.mxu0 %v4583
        %6727 = vmatpush1.bf16.msra.mxu0 %v4582
        %6728 = vmatprep.subr.bf16.mxu0 %v4567
        %6729 = vmatpush1.bf16.msra.mxu0 %v4566
        %6730 = vmatprep.subr.bf16.mxu0 %v4551
        %6731 = vmatpush1.bf16.msra.mxu0 %v4550
        %6732 = vmatprep.subr.bf16.mxu0 %v4791
        %6733 = vmatpush2.bf16.msra.mxu0 %v4790
        %6734 = vmatprep.subr.bf16.mxu0 %v4775
        %6735 = vmatpush2.bf16.msra.mxu0 %v4774
        %6736 = vmatprep.subr.bf16.mxu0 %v4759
        %6737 = vmatpush2.bf16.msra.mxu0 %v4758
        %6738 = vmatprep.subr.bf16.mxu0 %v4743
        %6739 = vmatpush2.bf16.msra.mxu0 %v4742
        %6740 = vmatprep.subr.bf16.mxu0 %v4727
        %6741 = vmatpush2.bf16.msra.mxu0 %v4726
        %6742 = vmatprep.subr.bf16.mxu0 %v4711
        %6743 = vmatpush2.bf16.msra.mxu0 %v4710
        %6744 = vmatprep.subr.bf16.mxu0 %v4695
        %6745 = vmatpush2.bf16.msra.mxu0 %v4694
        %6746 = vmatprep.subr.bf16.mxu0 %v4679
        %6747 = vmatpush2.bf16.msra.mxu0 %v4678
        %6748 = vmatprep.mubr.bf16.mxu0 %v5561
        %6749 = vmatmul.mubr.bf16.gmra.mxu0 %v5560
        %v6750 = vpop.f32.mrf.mxu0
        %v6751 = vadd.f32 0.0, %v6750
        %v6752 = vpop.f32.mrf.mxu0
        %v6753 = vadd.f32 0.0, %v6752
        %v6754 = vpop.f32.mrf.mxu0
        %v6755 = vpop.f32.mrf.mxu0
        %6756 = vdwg.mxu0
        %6757 = vmatprep.subr.bf16.mxu0 %v4919
        %6758 = vmatpush1.bf16.msra.mxu0 %v4918
        %6759 = vmatprep.subr.bf16.mxu0 %v4903
        %6760 = vmatpush1.bf16.msra.mxu0 %v4902
        %6761 = vmatprep.subr.bf16.mxu0 %v4887
        %6762 = vmatpush1.bf16.msra.mxu0 %v4886
        %6763 = vmatprep.subr.bf16.mxu0 %v4871
        %6764 = vmatpush1.bf16.msra.mxu0 %v4870
        %6765 = vmatprep.subr.bf16.mxu0 %v4855
        %6766 = vmatpush1.bf16.msra.mxu0 %v4854
        %6767 = vmatprep.subr.bf16.mxu0 %v4839
        %6768 = vmatpush1.bf16.msra.mxu0 %v4838
        %6769 = vmatprep.subr.bf16.mxu0 %v4823
        %6770 = vmatpush1.bf16.msra.mxu0 %v4822
        %6771 = vmatprep.subr.bf16.mxu0 %v4807
        %6772 = vmatpush1.bf16.msra.mxu0 %v4806
        %6773 = vmatprep.subr.bf16.mxu0 %v5047
        %6774 = vmatpush2.bf16.msra.mxu0 %v5046
        %6775 = vmatprep.subr.bf16.mxu0 %v5031
        %6776 = vmatpush2.bf16.msra.mxu0 %v5030
        %6777 = vmatprep.subr.bf16.mxu0 %v5015
        %6778 = vmatpush2.bf16.msra.mxu0 %v5014
        %6779 = vmatprep.subr.bf16.mxu0 %v4999
        %6780 = vmatpush2.bf16.msra.mxu0 %v4998
        %6781 = vmatprep.subr.bf16.mxu0 %v4983
        %6782 = vmatpush2.bf16.msra.mxu0 %v4982
        %6783 = vmatprep.subr.bf16.mxu0 %v4967
        %6784 = vmatpush2.bf16.msra.mxu0 %v4966
        %6785 = vmatprep.subr.bf16.mxu0 %v4951
        %6786 = vmatpush2.bf16.msra.mxu0 %v4950
        %6787 = vmatprep.subr.bf16.mxu0 %v4935
        %6788 = vmatpush2.bf16.msra.mxu0 %v4934
        %6789 = vmatprep.mubr.bf16.mxu0 %v5563
        %6790 = vmatmul.mubr.bf16.gmra.mxu0 %v5562
        %v6791 = vpop.f32.mrf.mxu0
        %v6792 = vadd.f32 %v6751, %v6791
        %v6793 = vpop.f32.mrf.mxu0
        %v6794 = vadd.f32 %v6753, %v6793
        %v6795 = vpop.f32.mrf.mxu0
        %v6796 = vpop.f32.mrf.mxu0
        %6797 = vdwg.mxu0
        %6798 = vmatprep.subr.bf16.mxu0 %v5175
        %6799 = vmatpush1.bf16.msra.mxu0 %v5174
        %6800 = vmatprep.subr.bf16.mxu0 %v5159
        %6801 = vmatpush1.bf16.msra.mxu0 %v5158
        %6802 = vmatprep.subr.bf16.mxu0 %v5143
        %6803 = vmatpush1.bf16.msra.mxu0 %v5142
        %6804 = vmatprep.subr.bf16.mxu0 %v5127
        %6805 = vmatpush1.bf16.msra.mxu0 %v5126
        %6806 = vmatprep.subr.bf16.mxu0 %v5111
        %6807 = vmatpush1.bf16.msra.mxu0 %v5110
        %6808 = vmatprep.subr.bf16.mxu0 %v5095
        %6809 = vmatpush1.bf16.msra.mxu0 %v5094
        %6810 = vmatprep.subr.bf16.mxu0 %v5079
        %6811 = vmatpush1.bf16.msra.mxu0 %v5078
        %6812 = vmatprep.subr.bf16.mxu0 %v5063
        %6813 = vmatpush1.bf16.msra.mxu0 %v5062
        %6814 = vmatprep.subr.bf16.mxu0 %v5303
        %6815 = vmatpush2.bf16.msra.mxu0 %v5302
        %6816 = vmatprep.subr.bf16.mxu0 %v5287
        %6817 = vmatpush2.bf16.msra.mxu0 %v5286
        %6818 = vmatprep.subr.bf16.mxu0 %v5271
        %6819 = vmatpush2.bf16.msra.mxu0 %v5270
        %6820 = vmatprep.subr.bf16.mxu0 %v5255
        %6821 = vmatpush2.bf16.msra.mxu0 %v5254
        %6822 = vmatprep.subr.bf16.mxu0 %v5239
        %6823 = vmatpush2.bf16.msra.mxu0 %v5238
        %6824 = vmatprep.subr.bf16.mxu0 %v5223
        %6825 = vmatpush2.bf16.msra.mxu0 %v5222
        %6826 = vmatprep.subr.bf16.mxu0 %v5207
        %6827 = vmatpush2.bf16.msra.mxu0 %v5206
        %6828 = vmatprep.subr.bf16.mxu0 %v5191
        %6829 = vmatpush2.bf16.msra.mxu0 %v5190
        %6830 = vmatprep.mubr.bf16.mxu0 %v5565
        %6831 = vmatmul.mubr.bf16.gmra.mxu0 %v5564
        %v6832 = vpop.f32.mrf.mxu0
        %v6833 = vadd.f32 %v6792, %v6832
        %v6834 = vpop.f32.mrf.mxu0
        %v6835 = vadd.f32 %v6794, %v6834
        %v6836 = vpop.f32.mrf.mxu0
        %v6837 = vpop.f32.mrf.mxu0
        %6838 = vdwg.mxu0
        %6839 = vmatprep.subr.bf16.mxu0 %v5431
        %6840 = vmatpush1.bf16.msra.mxu0 %v5430
        %6841 = vmatprep.subr.bf16.mxu0 %v5415
        %6842 = vmatpush1.bf16.msra.mxu0 %v5414
        %6843 = vmatprep.subr.bf16.mxu0 %v5399
        %6844 = vmatpush1.bf16.msra.mxu0 %v5398
        %6845 = vmatprep.subr.bf16.mxu0 %v5383
        %6846 = vmatpush1.bf16.msra.mxu0 %v5382
        %6847 = vmatprep.subr.bf16.mxu0 %v5367
        %6848 = vmatpush1.bf16.msra.mxu0 %v5366
        %6849 = vmatprep.subr.bf16.mxu0 %v5351
        %6850 = vmatpush1.bf16.msra.mxu0 %v5350
        %6851 = vmatprep.subr.bf16.mxu0 %v5335
        %6852 = vmatpush1.bf16.msra.mxu0 %v5334
        %6853 = vmatprep.subr.bf16.mxu0 %v5319
        %6854 = vmatpush1.bf16.msra.mxu0 %v5318
        %6855 = vmatprep.subr.bf16.mxu0 %v5559
        %6856 = vmatpush2.bf16.msra.mxu0 %v5558
        %6857 = vmatprep.subr.bf16.mxu0 %v5543
        %6858 = vmatpush2.bf16.msra.mxu0 %v5542
        %6859 = vmatprep.subr.bf16.mxu0 %v5527
        %6860 = vmatpush2.bf16.msra.mxu0 %v5526
        %6861 = vmatprep.subr.bf16.mxu0 %v5511
        %6862 = vmatpush2.bf16.msra.mxu0 %v5510
        %6863 = vmatprep.subr.bf16.mxu0 %v5495
        %6864 = vmatpush2.bf16.msra.mxu0 %v5494
        %6865 = vmatprep.subr.bf16.mxu0 %v5479
        %6866 = vmatpush2.bf16.msra.mxu0 %v5478
        %6867 = vmatprep.subr.bf16.mxu0 %v5463
        %6868 = vmatpush2.bf16.msra.mxu0 %v5462
        %6869 = vmatprep.subr.bf16.mxu0 %v5447
        %6870 = vmatpush2.bf16.msra.mxu0 %v5446
        %6871 = vmatprep.mubr.bf16.mxu0 %v5567
        %6872 = vmatmul.mubr.bf16.gmra.mxu0 %v5566
        %v6873 = vpop.f32.mrf.mxu0
        %v6874 = vadd.f32 %v6833, %v6873
        %v6875 = vpop.f32.mrf.mxu0
        %v6876 = vadd.f32 %v6835, %v6875
        %v6877 = vpop.f32.mrf.mxu0
        %v6878 = vpop.f32.mrf.mxu0
        %6879 = vdwg.mxu0
        %v6882 = vlaneseq
        %v6883 = vshrl.u32 %v6882, 7
        %v6884 = vsub.s32 0, %v6883
        %v6885 = vrot.slane %v919, %v6884
        %v6886 = vlaneseq
        %v6887 = vshrl.u32 %v6886, 7
        %v6888 = vsub.s32 1, %v6887
        %v6889 = vrot.slane %v919, %v6888
        %v6890 = vlaneseq
        %v6891 = vshrl.u32 %v6890, 7
        %v6892 = vsub.s32 2, %v6891
        %v6893 = vrot.slane %v919, %v6892
        %v6894 = vlaneseq
        %v6895 = vshrl.u32 %v6894, 7
        %v6896 = vsub.s32 3, %v6895
        %v6897 = vrot.slane %v919, %v6896
        %v6898 = vlaneseq
        %v6899 = vshrl.u32 %v6898, 7
        %v6900 = vsub.s32 4, %v6899
        %v6901 = vrot.slane %v919, %v6900
        %v6902 = vlaneseq
        %v6903 = vshrl.u32 %v6902, 7
        %v6904 = vsub.s32 5, %v6903
        %v6905 = vrot.slane %v919, %v6904
        %v6906 = vlaneseq
        %v6907 = vshrl.u32 %v6906, 7
        %v6908 = vsub.s32 6, %v6907
        %v6909 = vrot.slane %v919, %v6908
        %v6910 = vlaneseq
        %v6911 = vshrl.u32 %v6910, 7
        %v6912 = vsub.s32 7, %v6911
        %v6913 = vrot.slane %v919, %v6912
        %v6914 = vlaneseq
        %v6915 = vshrl.u32 %v6914, 7
        %v6916 = vsub.s32 0, %v6915
        %v6917 = vrot.slane %v920, %v6916
        %v6918 = vlaneseq
        %v6919 = vshrl.u32 %v6918, 7
        %v6920 = vsub.s32 1, %v6919
        %v6921 = vrot.slane %v920, %v6920
        %v6922 = vlaneseq
        %v6923 = vshrl.u32 %v6922, 7
        %v6924 = vsub.s32 2, %v6923
        %v6925 = vrot.slane %v920, %v6924
        %v6926 = vlaneseq
        %v6927 = vshrl.u32 %v6926, 7
        %v6928 = vsub.s32 3, %v6927
        %v6929 = vrot.slane %v920, %v6928
        %v6930 = vlaneseq
        %v6931 = vshrl.u32 %v6930, 7
        %v6932 = vsub.s32 4, %v6931
        %v6933 = vrot.slane %v920, %v6932
        %v6934 = vlaneseq
        %v6935 = vshrl.u32 %v6934, 7
        %v6936 = vsub.s32 5, %v6935
        %v6937 = vrot.slane %v920, %v6936
        %v6938 = vlaneseq
        %v6939 = vshrl.u32 %v6938, 7
        %v6940 = vsub.s32 6, %v6939
        %v6941 = vrot.slane %v920, %v6940
        %v6942 = vlaneseq
        %v6943 = vshrl.u32 %v6942, 7
        %v6944 = vsub.s32 7, %v6943
        %v6945 = vrot.slane %v920, %v6944
        %v6962 = vmul.f32 %v5726, %v6885
        %v6963 = vmul.f32 %v5728, %v6889
        %v6964 = vmul.f32 %v5890, %v6893
        %v6965 = vmul.f32 %v5892, %v6897
        %v6966 = vmul.f32 %v6054, %v6901
        %v6967 = vmul.f32 %v6056, %v6905
        %v6968 = vmul.f32 %v6218, %v6909
        %v6969 = vmul.f32 %v6220, %v6913
        %v6970 = vmul.f32 %v6382, %v6917
        %v6971 = vmul.f32 %v6384, %v6921
        %v6972 = vmul.f32 %v6546, %v6925
        %v6973 = vmul.f32 %v6548, %v6929
        %v6974 = vmul.f32 %v6710, %v6933
        %v6975 = vmul.f32 %v6712, %v6937
        %v6976 = vmul.f32 %v6874, %v6941
        %v6977 = vmul.f32 %v6876, %v6945
        %v6980 = vlaneseq
        %v6981 = vshrl.u32 %v6980, 7
        %v6982 = vsub.s32 0, %v6981
        %v6983 = vrot.slane %v921, %v6982
        %v6984 = vlaneseq
        %v6985 = vshrl.u32 %v6984, 7
        %v6986 = vsub.s32 1, %v6985
        %v6987 = vrot.slane %v921, %v6986
        %v6988 = vlaneseq
        %v6989 = vshrl.u32 %v6988, 7
        %v6990 = vsub.s32 2, %v6989
        %v6991 = vrot.slane %v921, %v6990
        %v6992 = vlaneseq
        %v6993 = vshrl.u32 %v6992, 7
        %v6994 = vsub.s32 3, %v6993
        %v6995 = vrot.slane %v921, %v6994
        %v6996 = vlaneseq
        %v6997 = vshrl.u32 %v6996, 7
        %v6998 = vsub.s32 4, %v6997
        %v6999 = vrot.slane %v921, %v6998
        %v7000 = vlaneseq
        %v7001 = vshrl.u32 %v7000, 7
        %v7002 = vsub.s32 5, %v7001
        %v7003 = vrot.slane %v921, %v7002
        %v7004 = vlaneseq
        %v7005 = vshrl.u32 %v7004, 7
        %v7006 = vsub.s32 6, %v7005
        %v7007 = vrot.slane %v921, %v7006
        %v7008 = vlaneseq
        %v7009 = vshrl.u32 %v7008, 7
        %v7010 = vsub.s32 7, %v7009
        %v7011 = vrot.slane %v921, %v7010
        %v7012 = vlaneseq
        %v7013 = vshrl.u32 %v7012, 7
        %v7014 = vsub.s32 0, %v7013
        %v7015 = vrot.slane %v922, %v7014
        %v7016 = vlaneseq
        %v7017 = vshrl.u32 %v7016, 7
        %v7018 = vsub.s32 1, %v7017
        %v7019 = vrot.slane %v922, %v7018
        %v7020 = vlaneseq
        %v7021 = vshrl.u32 %v7020, 7
        %v7022 = vsub.s32 2, %v7021
        %v7023 = vrot.slane %v922, %v7022
        %v7024 = vlaneseq
        %v7025 = vshrl.u32 %v7024, 7
        %v7026 = vsub.s32 3, %v7025
        %v7027 = vrot.slane %v922, %v7026
        %v7028 = vlaneseq
        %v7029 = vshrl.u32 %v7028, 7
        %v7030 = vsub.s32 4, %v7029
        %v7031 = vrot.slane %v922, %v7030
        %v7032 = vlaneseq
        %v7033 = vshrl.u32 %v7032, 7
        %v7034 = vsub.s32 5, %v7033
        %v7035 = vrot.slane %v922, %v7034
        %v7036 = vlaneseq
        %v7037 = vshrl.u32 %v7036, 7
        %v7038 = vsub.s32 6, %v7037
        %v7039 = vrot.slane %v922, %v7038
        %v7040 = vlaneseq
        %v7041 = vshrl.u32 %v7040, 7
        %v7042 = vsub.s32 7, %v7041
        %v7043 = vrot.slane %v922, %v7042
        %v7060 = vadd.f32 %v6962, %v6983
        %v7061 = vadd.f32 %v6963, %v6987
        %v7062 = vadd.f32 %v6964, %v6991
        %v7063 = vadd.f32 %v6965, %v6995
        %v7064 = vadd.f32 %v6966, %v6999
        %v7065 = vadd.f32 %v6967, %v7003
        %v7066 = vadd.f32 %v6968, %v7007
        %v7067 = vadd.f32 %v6969, %v7011
        %v7068 = vadd.f32 %v6970, %v7015
        %v7069 = vadd.f32 %v6971, %v7019
        %v7070 = vadd.f32 %v6972, %v7023
        %v7071 = vadd.f32 %v6973, %v7027
        %v7072 = vadd.f32 %v6974, %v7031
        %v7073 = vadd.f32 %v6975, %v7035
        %v7074 = vadd.f32 %v6976, %v7039
        %v7075 = vadd.f32 %v6977, %v7043
        %v7076 = vxor.u32 %v7060, 2147483648
        %v7077 = vxor.u32 %v7061, 2147483648
        %v7078 = vxor.u32 %v7062, 2147483648
        %v7079 = vxor.u32 %v7063, 2147483648
        %v7080 = vxor.u32 %v7064, 2147483648
        %v7081 = vxor.u32 %v7065, 2147483648
        %v7082 = vxor.u32 %v7066, 2147483648
        %v7083 = vxor.u32 %v7067, 2147483648
        %v7084 = vxor.u32 %v7068, 2147483648
        %v7085 = vxor.u32 %v7069, 2147483648
        %v7086 = vxor.u32 %v7070, 2147483648
        %v7087 = vxor.u32 %v7071, 2147483648
        %v7088 = vxor.u32 %v7072, 2147483648
        %v7089 = vxor.u32 %v7073, 2147483648
        %v7090 = vxor.u32 %v7074, 2147483648
        %v7091 = vxor.u32 %v7075, 2147483648
        %v7092 = vmul.f32 %v7076, 1.442695
        %v7093 = vpow.pop %v7092
        %v7094 = vmul.f32 %v7077, 1.442695
        %v7095 = vpow.pop %v7094
        %v7096 = vmul.f32 %v7078, 1.442695
        %v7097 = vpow.pop %v7096
        %v7098 = vmul.f32 %v7079, 1.442695
        %v7099 = vpow.pop %v7098
        %v7100 = vmul.f32 %v7080, 1.442695
        %v7101 = vpow.pop %v7100
        %v7102 = vmul.f32 %v7081, 1.442695
        %v7103 = vpow.pop %v7102
        %v7104 = vmul.f32 %v7082, 1.442695
        %v7105 = vpow.pop %v7104
        %v7106 = vmul.f32 %v7083, 1.442695
        %v7107 = vpow.pop %v7106
        %v7108 = vmul.f32 %v7084, 1.442695
        %v7109 = vpow.pop %v7108
        %v7110 = vmul.f32 %v7085, 1.442695
        %v7111 = vpow.pop %v7110
        %v7112 = vmul.f32 %v7086, 1.442695
        %v7113 = vpow.pop %v7112
        %v7114 = vmul.f32 %v7087, 1.442695
        %v7115 = vpow.pop %v7114
        %v7116 = vmul.f32 %v7088, 1.442695
        %v7117 = vpow.pop %v7116
        %v7118 = vmul.f32 %v7089, 1.442695
        %v7119 = vpow.pop %v7118
        %v7120 = vmul.f32 %v7090, 1.442695
        %v7121 = vpow.pop %v7120
        %v7122 = vmul.f32 %v7091, 1.442695
        %v7123 = vpow.pop %v7122
        %v7124 = vadd.f32 %v7093, 1.0
        %v7125 = vadd.f32 %v7095, 1.0
        %v7126 = vadd.f32 %v7097, 1.0
        %v7127 = vadd.f32 %v7099, 1.0
        %v7128 = vadd.f32 %v7101, 1.0
        %v7129 = vadd.f32 %v7103, 1.0
        %v7130 = vadd.f32 %v7105, 1.0
        %v7131 = vadd.f32 %v7107, 1.0
        %v7132 = vadd.f32 %v7109, 1.0
        %v7133 = vadd.f32 %v7111, 1.0
        %v7134 = vadd.f32 %v7113, 1.0
        %v7135 = vadd.f32 %v7115, 1.0
        %v7136 = vadd.f32 %v7117, 1.0
        %v7137 = vadd.f32 %v7119, 1.0
        %v7138 = vadd.f32 %v7121, 1.0
        %v7139 = vadd.f32 %v7123, 1.0
        %v7140 = vrcp.pop %v7124
        %v7141 = vmul.f32 1.0, %v7140
        %v7142 = vrcp.pop %v7125
        %v7143 = vmul.f32 1.0, %v7142
        %v7144 = vrcp.pop %v7126
        %v7145 = vmul.f32 1.0, %v7144
        %v7146 = vrcp.pop %v7127
        %v7147 = vmul.f32 1.0, %v7146
        %v7148 = vrcp.pop %v7128
        %v7149 = vmul.f32 1.0, %v7148
        %v7150 = vrcp.pop %v7129
        %v7151 = vmul.f32 1.0, %v7150
        %v7152 = vrcp.pop %v7130
        %v7153 = vmul.f32 1.0, %v7152
        %v7154 = vrcp.pop %v7131
        %v7155 = vmul.f32 1.0, %v7154
        %v7156 = vrcp.pop %v7132
        %v7157 = vmul.f32 1.0, %v7156
        %v7158 = vrcp.pop %v7133
        %v7159 = vmul.f32 1.0, %v7158
        %v7160 = vrcp.pop %v7134
        %v7161 = vmul.f32 1.0, %v7160
        %v7162 = vrcp.pop %v7135
        %v7163 = vmul.f32 1.0, %v7162
        %v7164 = vrcp.pop %v7136
        %v7165 = vmul.f32 1.0, %v7164
        %v7166 = vrcp.pop %v7137
        %v7167 = vmul.f32 1.0, %v7166
        %v7168 = vrcp.pop %v7138
        %v7169 = vmul.f32 1.0, %v7168
        %v7170 = vrcp.pop %v7139
        %v7171 = vmul.f32 1.0, %v7170
        %v7172 = vadd.f32 %v7141, 1.0
        %v7173 = vadd.f32 %v7143, 1.0
        %v7174 = vadd.f32 %v7145, 1.0
        %v7175 = vadd.f32 %v7147, 1.0
        %v7176 = vadd.f32 %v7149, 1.0
        %v7177 = vadd.f32 %v7151, 1.0
        %v7178 = vadd.f32 %v7153, 1.0
        %v7179 = vadd.f32 %v7155, 1.0
        %v7180 = vadd.f32 %v7157, 1.0
        %v7181 = vadd.f32 %v7159, 1.0
        %v7182 = vadd.f32 %v7161, 1.0
        %v7183 = vadd.f32 %v7163, 1.0
        %v7184 = vadd.f32 %v7165, 1.0
        %v7185 = vadd.f32 %v7167, 1.0
        %v7186 = vadd.f32 %v7169, 1.0
        %v7187 = vadd.f32 %v7171, 1.0
        %v7204 = vrot.slane %v7172, 1
        %v7205 = vrot.slane %v7173, 1
        %v7206 = vrot.slane %v7174, 1
        %v7207 = vrot.slane %v7175, 1
        %v7208 = vrot.slane %v7176, 1
        %v7209 = vrot.slane %v7177, 1
        %v7210 = vrot.slane %v7178, 1
        %v7211 = vrot.slane %v7179, 1
        %v7212 = vrot.slane %v7180, 1
        %v7213 = vrot.slane %v7181, 1
        %v7214 = vrot.slane %v7182, 1
        %v7215 = vrot.slane %v7183, 1
        %v7216 = vrot.slane %v7184, 1
        %v7217 = vrot.slane %v7185, 1
        %v7218 = vrot.slane %v7186, 1
        %v7219 = vrot.slane %v7187, 1
        %v7252 = vmul.f32 %v885, %v7172
        %v7253 = vmul.f32 %v886, %v7173
        %v7254 = vmul.f32 %v887, %v7174
        %v7255 = vmul.f32 %v888, %v7175
        %v7256 = vmul.f32 %v889, %v7176
        %v7257 = vmul.f32 %v890, %v7177
        %v7258 = vmul.f32 %v891, %v7178
        %v7259 = vmul.f32 %v892, %v7179
        %v7260 = vmul.f32 %v893, %v7180
        %v7261 = vmul.f32 %v894, %v7181
        %v7262 = vmul.f32 %v895, %v7182
        %v7263 = vmul.f32 %v896, %v7183
        %v7264 = vmul.f32 %v897, %v7184
        %v7265 = vmul.f32 %v898, %v7185
        %v7266 = vmul.f32 %v899, %v7186
        %v7267 = vmul.f32 %v900, %v7187
        %v7268 = vmul.f32 %v901, %v7204
        %v7269 = vmul.f32 %v902, %v7205
        %v7270 = vmul.f32 %v903, %v7206
        %v7271 = vmul.f32 %v904, %v7207
        %v7272 = vmul.f32 %v905, %v7208
        %v7273 = vmul.f32 %v906, %v7209
        %v7274 = vmul.f32 %v907, %v7210
        %v7275 = vmul.f32 %v908, %v7211
        %v7276 = vmul.f32 %v909, %v7212
        %v7277 = vmul.f32 %v910, %v7213
        %v7278 = vmul.f32 %v911, %v7214
        %v7279 = vmul.f32 %v912, %v7215
        %v7280 = vmul.f32 %v913, %v7216
        %v7281 = vmul.f32 %v914, %v7217
        %v7282 = vmul.f32 %v915, %v7218
        %v7283 = vmul.f32 %v916, %v7219
        %v7284 = vld [vmem:[%s340] sm:$0xff]
        %v7285 = vld [vmem:[%s340 + $0x8] sm:$0xff]
        %v7286 = vld [vmem:[%s340 + $0x10] sm:$0xff]
        %v7287 = vld [vmem:[%s340 + $0x18] sm:$0xff]
        %v7288 = vld [vmem:[%s340 + $0x20] sm:$0xff]
        %v7289 = vld [vmem:[%s340 + $0x28] sm:$0xff]
        %v7290 = vld [vmem:[%s340 + $0x30] sm:$0xff]
        %v7291 = vld [vmem:[%s340 + $0x38] sm:$0xff]
        %v7292 = vld [vmem:[%s340 + $0x40] sm:$0xff]
        %v7293 = vld [vmem:[%s340 + $0x48] sm:$0xff]
        %v7294 = vld [vmem:[%s340 + $0x50] sm:$0xff]
        %v7295 = vld [vmem:[%s340 + $0x58] sm:$0xff]
        %v7296 = vld [vmem:[%s340 + $0x60] sm:$0xff]
        %v7297 = vld [vmem:[%s340 + $0x68] sm:$0xff]
        %v7298 = vld [vmem:[%s340 + $0x70] sm:$0xff]
        %v7299 = vld [vmem:[%s340 + $0x78] sm:$0xff]
        %v7300 = vld [vmem:[%s340 + $0x80] sm:$0xff]
        %v7301 = vld [vmem:[%s340 + $0x88] sm:$0xff]
        %v7302 = vld [vmem:[%s340 + $0x90] sm:$0xff]
        %v7303 = vld [vmem:[%s340 + $0x98] sm:$0xff]
        %v7304 = vld [vmem:[%s340 + $0xa0] sm:$0xff]
        %v7305 = vld [vmem:[%s340 + $0xa8] sm:$0xff]
        %v7306 = vld [vmem:[%s340 + $0xb0] sm:$0xff]
        %v7307 = vld [vmem:[%s340 + $0xb8] sm:$0xff]
        %v7308 = vld [vmem:[%s340 + $0xc0] sm:$0xff]
        %v7309 = vld [vmem:[%s340 + $0xc8] sm:$0xff]
        %v7310 = vld [vmem:[%s340 + $0xd0] sm:$0xff]
        %v7311 = vld [vmem:[%s340 + $0xd8] sm:$0xff]
        %v7312 = vld [vmem:[%s340 + $0xe0] sm:$0xff]
        %v7313 = vld [vmem:[%s340 + $0xe8] sm:$0xff]
        %v7314 = vld [vmem:[%s340 + $0xf0] sm:$0xff]
        %v7315 = vld [vmem:[%s340 + $0xf8] sm:$0xff]
        %v7316 = vld [vmem:[%s340 + $0x100] sm:$0xff]
        %v7317 = vld [vmem:[%s340 + $0x108] sm:$0xff]
        %v7318 = vld [vmem:[%s340 + $0x110] sm:$0xff]
        %v7319 = vld [vmem:[%s340 + $0x118] sm:$0xff]
        %v7320 = vld [vmem:[%s340 + $0x120] sm:$0xff]
        %v7321 = vld [vmem:[%s340 + $0x128] sm:$0xff]
        %v7322 = vld [vmem:[%s340 + $0x130] sm:$0xff]
        %v7323 = vld [vmem:[%s340 + $0x138] sm:$0xff]
        %v7324 = vld [vmem:[%s340 + $0x140] sm:$0xff]
        %v7325 = vld [vmem:[%s340 + $0x148] sm:$0xff]
        %v7326 = vld [vmem:[%s340 + $0x150] sm:$0xff]
        %v7327 = vld [vmem:[%s340 + $0x158] sm:$0xff]
        %v7328 = vld [vmem:[%s340 + $0x160] sm:$0xff]
        %v7329 = vld [vmem:[%s340 + $0x168] sm:$0xff]
        %v7330 = vld [vmem:[%s340 + $0x170] sm:$0xff]
        %v7331 = vld [vmem:[%s340 + $0x178] sm:$0xff]
        %v7332 = vld [vmem:[%s340 + $0x180] sm:$0xff]
        %v7333 = vld [vmem:[%s340 + $0x188] sm:$0xff]
        %v7334 = vld [vmem:[%s340 + $0x190] sm:$0xff]
        %v7335 = vld [vmem:[%s340 + $0x198] sm:$0xff]
        %v7336 = vld [vmem:[%s340 + $0x1a0] sm:$0xff]
        %v7337 = vld [vmem:[%s340 + $0x1a8] sm:$0xff]
        %v7338 = vld [vmem:[%s340 + $0x1b0] sm:$0xff]
        %v7339 = vld [vmem:[%s340 + $0x1b8] sm:$0xff]
        %v7340 = vld [vmem:[%s340 + $0x1c0] sm:$0xff]
        %v7341 = vld [vmem:[%s340 + $0x1c8] sm:$0xff]
        %v7342 = vld [vmem:[%s340 + $0x1d0] sm:$0xff]
        %v7343 = vld [vmem:[%s340 + $0x1d8] sm:$0xff]
        %v7344 = vld [vmem:[%s340 + $0x1e0] sm:$0xff]
        %v7345 = vld [vmem:[%s340 + $0x1e8] sm:$0xff]
        %v7346 = vld [vmem:[%s340 + $0x1f0] sm:$0xff]
        %v7347 = vld [vmem:[%s340 + $0x1f8] sm:$0xff]
        %v7348 = vld [vmem:[%s340 + $0x200] sm:$0xff]
        %v7349 = vld [vmem:[%s340 + $0x208] sm:$0xff]
        %v7350 = vld [vmem:[%s340 + $0x210] sm:$0xff]
        %v7351 = vld [vmem:[%s340 + $0x218] sm:$0xff]
        %v7352 = vld [vmem:[%s340 + $0x220] sm:$0xff]
        %v7353 = vld [vmem:[%s340 + $0x228] sm:$0xff]
        %v7354 = vld [vmem:[%s340 + $0x230] sm:$0xff]
        %v7355 = vld [vmem:[%s340 + $0x238] sm:$0xff]
        %v7356 = vld [vmem:[%s340 + $0x240] sm:$0xff]
        %v7357 = vld [vmem:[%s340 + $0x248] sm:$0xff]
        %v7358 = vld [vmem:[%s340 + $0x250] sm:$0xff]
        %v7359 = vld [vmem:[%s340 + $0x258] sm:$0xff]
        %v7360 = vld [vmem:[%s340 + $0x260] sm:$0xff]
        %v7361 = vld [vmem:[%s340 + $0x268] sm:$0xff]
        %v7362 = vld [vmem:[%s340 + $0x270] sm:$0xff]
        %v7363 = vld [vmem:[%s340 + $0x278] sm:$0xff]
        %v7364 = vld [vmem:[%s340 + $0x280] sm:$0xff]
        %v7365 = vld [vmem:[%s340 + $0x288] sm:$0xff]
        %v7366 = vld [vmem:[%s340 + $0x290] sm:$0xff]
        %v7367 = vld [vmem:[%s340 + $0x298] sm:$0xff]
        %v7368 = vld [vmem:[%s340 + $0x2a0] sm:$0xff]
        %v7369 = vld [vmem:[%s340 + $0x2a8] sm:$0xff]
        %v7370 = vld [vmem:[%s340 + $0x2b0] sm:$0xff]
        %v7371 = vld [vmem:[%s340 + $0x2b8] sm:$0xff]
        %v7372 = vld [vmem:[%s340 + $0x2c0] sm:$0xff]
        %v7373 = vld [vmem:[%s340 + $0x2c8] sm:$0xff]
        %v7374 = vld [vmem:[%s340 + $0x2d0] sm:$0xff]
        %v7375 = vld [vmem:[%s340 + $0x2d8] sm:$0xff]
        %v7376 = vld [vmem:[%s340 + $0x2e0] sm:$0xff]
        %v7377 = vld [vmem:[%s340 + $0x2e8] sm:$0xff]
        %v7378 = vld [vmem:[%s340 + $0x2f0] sm:$0xff]
        %v7379 = vld [vmem:[%s340 + $0x2f8] sm:$0xff]
        %v7380 = vld [vmem:[%s340 + $0x300] sm:$0xff]
        %v7381 = vld [vmem:[%s340 + $0x308] sm:$0xff]
        %v7382 = vld [vmem:[%s340 + $0x310] sm:$0xff]
        %v7383 = vld [vmem:[%s340 + $0x318] sm:$0xff]
        %v7384 = vld [vmem:[%s340 + $0x320] sm:$0xff]
        %v7385 = vld [vmem:[%s340 + $0x328] sm:$0xff]
        %v7386 = vld [vmem:[%s340 + $0x330] sm:$0xff]
        %v7387 = vld [vmem:[%s340 + $0x338] sm:$0xff]
        %v7388 = vld [vmem:[%s340 + $0x340] sm:$0xff]
        %v7389 = vld [vmem:[%s340 + $0x348] sm:$0xff]
        %v7390 = vld [vmem:[%s340 + $0x350] sm:$0xff]
        %v7391 = vld [vmem:[%s340 + $0x358] sm:$0xff]
        %v7392 = vld [vmem:[%s340 + $0x360] sm:$0xff]
        %v7393 = vld [vmem:[%s340 + $0x368] sm:$0xff]
        %v7394 = vld [vmem:[%s340 + $0x370] sm:$0xff]
        %v7395 = vld [vmem:[%s340 + $0x378] sm:$0xff]
        %v7396 = vld [vmem:[%s340 + $0x380] sm:$0xff]
        %v7397 = vld [vmem:[%s340 + $0x388] sm:$0xff]
        %v7398 = vld [vmem:[%s340 + $0x390] sm:$0xff]
        %v7399 = vld [vmem:[%s340 + $0x398] sm:$0xff]
        %v7400 = vld [vmem:[%s340 + $0x3a0] sm:$0xff]
        %v7401 = vld [vmem:[%s340 + $0x3a8] sm:$0xff]
        %v7402 = vld [vmem:[%s340 + $0x3b0] sm:$0xff]
        %v7403 = vld [vmem:[%s340 + $0x3b8] sm:$0xff]
        %v7404 = vld [vmem:[%s340 + $0x3c0] sm:$0xff]
        %v7405 = vld [vmem:[%s340 + $0x3c8] sm:$0xff]
        %v7406 = vld [vmem:[%s340 + $0x3d0] sm:$0xff]
        %v7407 = vld [vmem:[%s340 + $0x3d8] sm:$0xff]
        %v7408 = vld [vmem:[%s340 + $0x3e0] sm:$0xff]
        %v7409 = vld [vmem:[%s340 + $0x3e8] sm:$0xff]
        %v7410 = vld [vmem:[%s340 + $0x3f0] sm:$0xff]
        %v7411 = vld [vmem:[%s340 + $0x3f8] sm:$0xff]
        %v7412 = vld [vmem:[%s340 + $0x400] sm:$0xff]
        %v7413 = vld [vmem:[%s340 + $0x408] sm:$0xff]
        %v7414 = vld [vmem:[%s340 + $0x410] sm:$0xff]
        %v7415 = vld [vmem:[%s340 + $0x418] sm:$0xff]
        %v7416 = vld [vmem:[%s340 + $0x420] sm:$0xff]
        %v7417 = vld [vmem:[%s340 + $0x428] sm:$0xff]
        %v7418 = vld [vmem:[%s340 + $0x430] sm:$0xff]
        %v7419 = vld [vmem:[%s340 + $0x438] sm:$0xff]
        %v7420 = vld [vmem:[%s340 + $0x440] sm:$0xff]
        %v7421 = vld [vmem:[%s340 + $0x448] sm:$0xff]
        %v7422 = vld [vmem:[%s340 + $0x450] sm:$0xff]
        %v7423 = vld [vmem:[%s340 + $0x458] sm:$0xff]
        %v7424 = vld [vmem:[%s340 + $0x460] sm:$0xff]
        %v7425 = vld [vmem:[%s340 + $0x468] sm:$0xff]
        %v7426 = vld [vmem:[%s340 + $0x470] sm:$0xff]
        %v7427 = vld [vmem:[%s340 + $0x478] sm:$0xff]
        %v7428 = vld [vmem:[%s340 + $0x480] sm:$0xff]
        %v7429 = vld [vmem:[%s340 + $0x488] sm:$0xff]
        %v7430 = vld [vmem:[%s340 + $0x490] sm:$0xff]
        %v7431 = vld [vmem:[%s340 + $0x498] sm:$0xff]
        %v7432 = vld [vmem:[%s340 + $0x4a0] sm:$0xff]
        %v7433 = vld [vmem:[%s340 + $0x4a8] sm:$0xff]
        %v7434 = vld [vmem:[%s340 + $0x4b0] sm:$0xff]
        %v7435 = vld [vmem:[%s340 + $0x4b8] sm:$0xff]
        %v7436 = vld [vmem:[%s340 + $0x4c0] sm:$0xff]
        %v7437 = vld [vmem:[%s340 + $0x4c8] sm:$0xff]
        %v7438 = vld [vmem:[%s340 + $0x4d0] sm:$0xff]
        %v7439 = vld [vmem:[%s340 + $0x4d8] sm:$0xff]
        %v7440 = vld [vmem:[%s340 + $0x4e0] sm:$0xff]
        %v7441 = vld [vmem:[%s340 + $0x4e8] sm:$0xff]
        %v7442 = vld [vmem:[%s340 + $0x4f0] sm:$0xff]
        %v7443 = vld [vmem:[%s340 + $0x4f8] sm:$0xff]
        %v7444 = vld [vmem:[%s340 + $0x500] sm:$0xff]
        %v7445 = vld [vmem:[%s340 + $0x508] sm:$0xff]
        %v7446 = vld [vmem:[%s340 + $0x510] sm:$0xff]
        %v7447 = vld [vmem:[%s340 + $0x518] sm:$0xff]
        %v7448 = vld [vmem:[%s340 + $0x520] sm:$0xff]
        %v7449 = vld [vmem:[%s340 + $0x528] sm:$0xff]
        %v7450 = vld [vmem:[%s340 + $0x530] sm:$0xff]
        %v7451 = vld [vmem:[%s340 + $0x538] sm:$0xff]
        %v7452 = vld [vmem:[%s340 + $0x540] sm:$0xff]
        %v7453 = vld [vmem:[%s340 + $0x548] sm:$0xff]
        %v7454 = vld [vmem:[%s340 + $0x550] sm:$0xff]
        %v7455 = vld [vmem:[%s340 + $0x558] sm:$0xff]
        %v7456 = vld [vmem:[%s340 + $0x560] sm:$0xff]
        %v7457 = vld [vmem:[%s340 + $0x568] sm:$0xff]
        %v7458 = vld [vmem:[%s340 + $0x570] sm:$0xff]
        %v7459 = vld [vmem:[%s340 + $0x578] sm:$0xff]
        %v7460 = vld [vmem:[%s340 + $0x580] sm:$0xff]
        %v7461 = vld [vmem:[%s340 + $0x588] sm:$0xff]
        %v7462 = vld [vmem:[%s340 + $0x590] sm:$0xff]
        %v7463 = vld [vmem:[%s340 + $0x598] sm:$0xff]
        %v7464 = vld [vmem:[%s340 + $0x5a0] sm:$0xff]
        %v7465 = vld [vmem:[%s340 + $0x5a8] sm:$0xff]
        %v7466 = vld [vmem:[%s340 + $0x5b0] sm:$0xff]
        %v7467 = vld [vmem:[%s340 + $0x5b8] sm:$0xff]
        %v7468 = vld [vmem:[%s340 + $0x5c0] sm:$0xff]
        %v7469 = vld [vmem:[%s340 + $0x5c8] sm:$0xff]
        %v7470 = vld [vmem:[%s340 + $0x5d0] sm:$0xff]
        %v7471 = vld [vmem:[%s340 + $0x5d8] sm:$0xff]
        %v7472 = vld [vmem:[%s340 + $0x5e0] sm:$0xff]
        %v7473 = vld [vmem:[%s340 + $0x5e8] sm:$0xff]
        %v7474 = vld [vmem:[%s340 + $0x5f0] sm:$0xff]
        %v7475 = vld [vmem:[%s340 + $0x5f8] sm:$0xff]
        %v7476 = vld [vmem:[%s340 + $0x600] sm:$0xff]
        %v7477 = vld [vmem:[%s340 + $0x608] sm:$0xff]
        %v7478 = vld [vmem:[%s340 + $0x610] sm:$0xff]
        %v7479 = vld [vmem:[%s340 + $0x618] sm:$0xff]
        %v7480 = vld [vmem:[%s340 + $0x620] sm:$0xff]
        %v7481 = vld [vmem:[%s340 + $0x628] sm:$0xff]
        %v7482 = vld [vmem:[%s340 + $0x630] sm:$0xff]
        %v7483 = vld [vmem:[%s340 + $0x638] sm:$0xff]
        %v7484 = vld [vmem:[%s340 + $0x640] sm:$0xff]
        %v7485 = vld [vmem:[%s340 + $0x648] sm:$0xff]
        %v7486 = vld [vmem:[%s340 + $0x650] sm:$0xff]
        %v7487 = vld [vmem:[%s340 + $0x658] sm:$0xff]
        %v7488 = vld [vmem:[%s340 + $0x660] sm:$0xff]
        %v7489 = vld [vmem:[%s340 + $0x668] sm:$0xff]
        %v7490 = vld [vmem:[%s340 + $0x670] sm:$0xff]
        %v7491 = vld [vmem:[%s340 + $0x678] sm:$0xff]
        %v7492 = vld [vmem:[%s340 + $0x680] sm:$0xff]
        %v7493 = vld [vmem:[%s340 + $0x688] sm:$0xff]
        %v7494 = vld [vmem:[%s340 + $0x690] sm:$0xff]
        %v7495 = vld [vmem:[%s340 + $0x698] sm:$0xff]
        %v7496 = vld [vmem:[%s340 + $0x6a0] sm:$0xff]
        %v7497 = vld [vmem:[%s340 + $0x6a8] sm:$0xff]
        %v7498 = vld [vmem:[%s340 + $0x6b0] sm:$0xff]
        %v7499 = vld [vmem:[%s340 + $0x6b8] sm:$0xff]
        %v7500 = vld [vmem:[%s340 + $0x6c0] sm:$0xff]
        %v7501 = vld [vmem:[%s340 + $0x6c8] sm:$0xff]
        %v7502 = vld [vmem:[%s340 + $0x6d0] sm:$0xff]
        %v7503 = vld [vmem:[%s340 + $0x6d8] sm:$0xff]
        %v7504 = vld [vmem:[%s340 + $0x6e0] sm:$0xff]
        %v7505 = vld [vmem:[%s340 + $0x6e8] sm:$0xff]
        %v7506 = vld [vmem:[%s340 + $0x6f0] sm:$0xff]
        %v7507 = vld [vmem:[%s340 + $0x6f8] sm:$0xff]
        %v7508 = vld [vmem:[%s340 + $0x700] sm:$0xff]
        %v7509 = vld [vmem:[%s340 + $0x708] sm:$0xff]
        %v7510 = vld [vmem:[%s340 + $0x710] sm:$0xff]
        %v7511 = vld [vmem:[%s340 + $0x718] sm:$0xff]
        %v7512 = vld [vmem:[%s340 + $0x720] sm:$0xff]
        %v7513 = vld [vmem:[%s340 + $0x728] sm:$0xff]
        %v7514 = vld [vmem:[%s340 + $0x730] sm:$0xff]
        %v7515 = vld [vmem:[%s340 + $0x738] sm:$0xff]
        %v7516 = vld [vmem:[%s340 + $0x740] sm:$0xff]
        %v7517 = vld [vmem:[%s340 + $0x748] sm:$0xff]
        %v7518 = vld [vmem:[%s340 + $0x750] sm:$0xff]
        %v7519 = vld [vmem:[%s340 + $0x758] sm:$0xff]
        %v7520 = vld [vmem:[%s340 + $0x760] sm:$0xff]
        %v7521 = vld [vmem:[%s340 + $0x768] sm:$0xff]
        %v7522 = vld [vmem:[%s340 + $0x770] sm:$0xff]
        %v7523 = vld [vmem:[%s340 + $0x778] sm:$0xff]
        %v7524 = vld [vmem:[%s340 + $0x780] sm:$0xff]
        %v7525 = vld [vmem:[%s340 + $0x788] sm:$0xff]
        %v7526 = vld [vmem:[%s340 + $0x790] sm:$0xff]
        %v7527 = vld [vmem:[%s340 + $0x798] sm:$0xff]
        %v7528 = vld [vmem:[%s340 + $0x7a0] sm:$0xff]
        %v7529 = vld [vmem:[%s340 + $0x7a8] sm:$0xff]
        %v7530 = vld [vmem:[%s340 + $0x7b0] sm:$0xff]
        %v7531 = vld [vmem:[%s340 + $0x7b8] sm:$0xff]
        %v7532 = vld [vmem:[%s340 + $0x7c0] sm:$0xff]
        %v7533 = vld [vmem:[%s340 + $0x7c8] sm:$0xff]
        %v7534 = vld [vmem:[%s340 + $0x7d0] sm:$0xff]
        %v7535 = vld [vmem:[%s340 + $0x7d8] sm:$0xff]
        %v7536 = vld [vmem:[%s340 + $0x7e0] sm:$0xff]
        %v7537 = vld [vmem:[%s340 + $0x7e8] sm:$0xff]
        %v7538 = vld [vmem:[%s340 + $0x7f0] sm:$0xff]
        %v7539 = vld [vmem:[%s340 + $0x7f8] sm:$0xff]
        %v7540 = vld [vmem:[%s340 + $0x800] sm:$0xff]
        %v7541 = vld [vmem:[%s340 + $0x808] sm:$0xff]
        %v7542 = vld [vmem:[%s340 + $0x810] sm:$0xff]
        %v7543 = vld [vmem:[%s340 + $0x818] sm:$0xff]
        %v7544 = vld [vmem:[%s340 + $0x820] sm:$0xff]
        %v7545 = vld [vmem:[%s340 + $0x828] sm:$0xff]
        %v7546 = vld [vmem:[%s340 + $0x830] sm:$0xff]
        %v7547 = vld [vmem:[%s340 + $0x838] sm:$0xff]
        %v7548 = vld [vmem:[%s340 + $0x840] sm:$0xff]
        %v7549 = vld [vmem:[%s340 + $0x848] sm:$0xff]
        %v7550 = vld [vmem:[%s340 + $0x850] sm:$0xff]
        %v7551 = vld [vmem:[%s340 + $0x858] sm:$0xff]
        %v7552 = vld [vmem:[%s340 + $0x860] sm:$0xff]
        %v7553 = vld [vmem:[%s340 + $0x868] sm:$0xff]
        %v7554 = vld [vmem:[%s340 + $0x870] sm:$0xff]
        %v7555 = vld [vmem:[%s340 + $0x878] sm:$0xff]
        %v7556 = vld [vmem:[%s340 + $0x880] sm:$0xff]
        %v7557 = vld [vmem:[%s340 + $0x888] sm:$0xff]
        %v7558 = vld [vmem:[%s340 + $0x890] sm:$0xff]
        %v7559 = vld [vmem:[%s340 + $0x898] sm:$0xff]
        %v7560 = vld [vmem:[%s340 + $0x8a0] sm:$0xff]
        %v7561 = vld [vmem:[%s340 + $0x8a8] sm:$0xff]
        %v7562 = vld [vmem:[%s340 + $0x8b0] sm:$0xff]
        %v7563 = vld [vmem:[%s340 + $0x8b8] sm:$0xff]
        %v7564 = vld [vmem:[%s340 + $0x8c0] sm:$0xff]
        %v7565 = vld [vmem:[%s340 + $0x8c8] sm:$0xff]
        %v7566 = vld [vmem:[%s340 + $0x8d0] sm:$0xff]
        %v7567 = vld [vmem:[%s340 + $0x8d8] sm:$0xff]
        %v7568 = vld [vmem:[%s340 + $0x8e0] sm:$0xff]
        %v7569 = vld [vmem:[%s340 + $0x8e8] sm:$0xff]
        %v7570 = vld [vmem:[%s340 + $0x8f0] sm:$0xff]
        %v7571 = vld [vmem:[%s340 + $0x8f8] sm:$0xff]
        %v7572 = vld [vmem:[%s340 + $0x900] sm:$0xff]
        %v7573 = vld [vmem:[%s340 + $0x908] sm:$0xff]
        %v7574 = vld [vmem:[%s340 + $0x910] sm:$0xff]
        %v7575 = vld [vmem:[%s340 + $0x918] sm:$0xff]
        %v7576 = vld [vmem:[%s340 + $0x920] sm:$0xff]
        %v7577 = vld [vmem:[%s340 + $0x928] sm:$0xff]
        %v7578 = vld [vmem:[%s340 + $0x930] sm:$0xff]
        %v7579 = vld [vmem:[%s340 + $0x938] sm:$0xff]
        %v7580 = vld [vmem:[%s340 + $0x940] sm:$0xff]
        %v7581 = vld [vmem:[%s340 + $0x948] sm:$0xff]
        %v7582 = vld [vmem:[%s340 + $0x950] sm:$0xff]
        %v7583 = vld [vmem:[%s340 + $0x958] sm:$0xff]
        %v7584 = vld [vmem:[%s340 + $0x960] sm:$0xff]
        %v7585 = vld [vmem:[%s340 + $0x968] sm:$0xff]
        %v7586 = vld [vmem:[%s340 + $0x970] sm:$0xff]
        %v7587 = vld [vmem:[%s340 + $0x978] sm:$0xff]
        %v7588 = vld [vmem:[%s340 + $0x980] sm:$0xff]
        %v7589 = vld [vmem:[%s340 + $0x988] sm:$0xff]
        %v7590 = vld [vmem:[%s340 + $0x990] sm:$0xff]
        %v7591 = vld [vmem:[%s340 + $0x998] sm:$0xff]
        %v7592 = vld [vmem:[%s340 + $0x9a0] sm:$0xff]
        %v7593 = vld [vmem:[%s340 + $0x9a8] sm:$0xff]
        %v7594 = vld [vmem:[%s340 + $0x9b0] sm:$0xff]
        %v7595 = vld [vmem:[%s340 + $0x9b8] sm:$0xff]
        %v7596 = vld [vmem:[%s340 + $0x9c0] sm:$0xff]
        %v7597 = vld [vmem:[%s340 + $0x9c8] sm:$0xff]
        %v7598 = vld [vmem:[%s340 + $0x9d0] sm:$0xff]
        %v7599 = vld [vmem:[%s340 + $0x9d8] sm:$0xff]
        %v7600 = vld [vmem:[%s340 + $0x9e0] sm:$0xff]
        %v7601 = vld [vmem:[%s340 + $0x9e8] sm:$0xff]
        %v7602 = vld [vmem:[%s340 + $0x9f0] sm:$0xff]
        %v7603 = vld [vmem:[%s340 + $0x9f8] sm:$0xff]
        %v7604 = vld [vmem:[%s340 + $0xa00] sm:$0xff]
        %v7605 = vld [vmem:[%s340 + $0xa08] sm:$0xff]
        %v7606 = vld [vmem:[%s340 + $0xa10] sm:$0xff]
        %v7607 = vld [vmem:[%s340 + $0xa18] sm:$0xff]
        %v7608 = vld [vmem:[%s340 + $0xa20] sm:$0xff]
        %v7609 = vld [vmem:[%s340 + $0xa28] sm:$0xff]
        %v7610 = vld [vmem:[%s340 + $0xa30] sm:$0xff]
        %v7611 = vld [vmem:[%s340 + $0xa38] sm:$0xff]
        %v7612 = vld [vmem:[%s340 + $0xa40] sm:$0xff]
        %v7613 = vld [vmem:[%s340 + $0xa48] sm:$0xff]
        %v7614 = vld [vmem:[%s340 + $0xa50] sm:$0xff]
        %v7615 = vld [vmem:[%s340 + $0xa58] sm:$0xff]
        %v7616 = vld [vmem:[%s340 + $0xa60] sm:$0xff]
        %v7617 = vld [vmem:[%s340 + $0xa68] sm:$0xff]
        %v7618 = vld [vmem:[%s340 + $0xa70] sm:$0xff]
        %v7619 = vld [vmem:[%s340 + $0xa78] sm:$0xff]
        %v7620 = vld [vmem:[%s340 + $0xa80] sm:$0xff]
        %v7621 = vld [vmem:[%s340 + $0xa88] sm:$0xff]
        %v7622 = vld [vmem:[%s340 + $0xa90] sm:$0xff]
        %v7623 = vld [vmem:[%s340 + $0xa98] sm:$0xff]
        %v7624 = vld [vmem:[%s340 + $0xaa0] sm:$0xff]
        %v7625 = vld [vmem:[%s340 + $0xaa8] sm:$0xff]
        %v7626 = vld [vmem:[%s340 + $0xab0] sm:$0xff]
        %v7627 = vld [vmem:[%s340 + $0xab8] sm:$0xff]
        %v7628 = vld [vmem:[%s340 + $0xac0] sm:$0xff]
        %v7629 = vld [vmem:[%s340 + $0xac8] sm:$0xff]
        %v7630 = vld [vmem:[%s340 + $0xad0] sm:$0xff]
        %v7631 = vld [vmem:[%s340 + $0xad8] sm:$0xff]
        %v7632 = vld [vmem:[%s340 + $0xae0] sm:$0xff]
        %v7633 = vld [vmem:[%s340 + $0xae8] sm:$0xff]
        %v7634 = vld [vmem:[%s340 + $0xaf0] sm:$0xff]
        %v7635 = vld [vmem:[%s340 + $0xaf8] sm:$0xff]
        %v7636 = vld [vmem:[%s340 + $0xb00] sm:$0xff]
        %v7637 = vld [vmem:[%s340 + $0xb08] sm:$0xff]
        %v7638 = vld [vmem:[%s340 + $0xb10] sm:$0xff]
        %v7639 = vld [vmem:[%s340 + $0xb18] sm:$0xff]
        %v7640 = vld [vmem:[%s340 + $0xb20] sm:$0xff]
        %v7641 = vld [vmem:[%s340 + $0xb28] sm:$0xff]
        %v7642 = vld [vmem:[%s340 + $0xb30] sm:$0xff]
        %v7643 = vld [vmem:[%s340 + $0xb38] sm:$0xff]
        %v7644 = vld [vmem:[%s340 + $0xb40] sm:$0xff]
        %v7645 = vld [vmem:[%s340 + $0xb48] sm:$0xff]
        %v7646 = vld [vmem:[%s340 + $0xb50] sm:$0xff]
        %v7647 = vld [vmem:[%s340 + $0xb58] sm:$0xff]
        %v7648 = vld [vmem:[%s340 + $0xb60] sm:$0xff]
        %v7649 = vld [vmem:[%s340 + $0xb68] sm:$0xff]
        %v7650 = vld [vmem:[%s340 + $0xb70] sm:$0xff]
        %v7651 = vld [vmem:[%s340 + $0xb78] sm:$0xff]
        %v7652 = vld [vmem:[%s340 + $0xb80] sm:$0xff]
        %v7653 = vld [vmem:[%s340 + $0xb88] sm:$0xff]
        %v7654 = vld [vmem:[%s340 + $0xb90] sm:$0xff]
        %v7655 = vld [vmem:[%s340 + $0xb98] sm:$0xff]
        %v7656 = vld [vmem:[%s340 + $0xba0] sm:$0xff]
        %v7657 = vld [vmem:[%s340 + $0xba8] sm:$0xff]
        %v7658 = vld [vmem:[%s340 + $0xbb0] sm:$0xff]
        %v7659 = vld [vmem:[%s340 + $0xbb8] sm:$0xff]
        %v7660 = vld [vmem:[%s340 + $0xbc0] sm:$0xff]
        %v7661 = vld [vmem:[%s340 + $0xbc8] sm:$0xff]
        %v7662 = vld [vmem:[%s340 + $0xbd0] sm:$0xff]
        %v7663 = vld [vmem:[%s340 + $0xbd8] sm:$0xff]
        %v7664 = vld [vmem:[%s340 + $0xbe0] sm:$0xff]
        %v7665 = vld [vmem:[%s340 + $0xbe8] sm:$0xff]
        %v7666 = vld [vmem:[%s340 + $0xbf0] sm:$0xff]
        %v7667 = vld [vmem:[%s340 + $0xbf8] sm:$0xff]
        %v7668 = vld [vmem:[%s340 + $0xc00] sm:$0xff]
        %v7669 = vld [vmem:[%s340 + $0xc08] sm:$0xff]
        %v7670 = vld [vmem:[%s340 + $0xc10] sm:$0xff]
        %v7671 = vld [vmem:[%s340 + $0xc18] sm:$0xff]
        %v7672 = vld [vmem:[%s340 + $0xc20] sm:$0xff]
        %v7673 = vld [vmem:[%s340 + $0xc28] sm:$0xff]
        %v7674 = vld [vmem:[%s340 + $0xc30] sm:$0xff]
        %v7675 = vld [vmem:[%s340 + $0xc38] sm:$0xff]
        %v7676 = vld [vmem:[%s340 + $0xc40] sm:$0xff]
        %v7677 = vld [vmem:[%s340 + $0xc48] sm:$0xff]
        %v7678 = vld [vmem:[%s340 + $0xc50] sm:$0xff]
        %v7679 = vld [vmem:[%s340 + $0xc58] sm:$0xff]
        %v7680 = vld [vmem:[%s340 + $0xc60] sm:$0xff]
        %v7681 = vld [vmem:[%s340 + $0xc68] sm:$0xff]
        %v7682 = vld [vmem:[%s340 + $0xc70] sm:$0xff]
        %v7683 = vld [vmem:[%s340 + $0xc78] sm:$0xff]
        %v7684 = vld [vmem:[%s340 + $0xc80] sm:$0xff]
        %v7685 = vld [vmem:[%s340 + $0xc88] sm:$0xff]
        %v7686 = vld [vmem:[%s340 + $0xc90] sm:$0xff]
        %v7687 = vld [vmem:[%s340 + $0xc98] sm:$0xff]
        %v7688 = vld [vmem:[%s340 + $0xca0] sm:$0xff]
        %v7689 = vld [vmem:[%s340 + $0xca8] sm:$0xff]
        %v7690 = vld [vmem:[%s340 + $0xcb0] sm:$0xff]
        %v7691 = vld [vmem:[%s340 + $0xcb8] sm:$0xff]
        %v7692 = vld [vmem:[%s340 + $0xcc0] sm:$0xff]
        %v7693 = vld [vmem:[%s340 + $0xcc8] sm:$0xff]
        %v7694 = vld [vmem:[%s340 + $0xcd0] sm:$0xff]
        %v7695 = vld [vmem:[%s340 + $0xcd8] sm:$0xff]
        %v7696 = vld [vmem:[%s340 + $0xce0] sm:$0xff]
        %v7697 = vld [vmem:[%s340 + $0xce8] sm:$0xff]
        %v7698 = vld [vmem:[%s340 + $0xcf0] sm:$0xff]
        %v7699 = vld [vmem:[%s340 + $0xcf8] sm:$0xff]
        %v7700 = vld [vmem:[%s340 + $0xd00] sm:$0xff]
        %v7701 = vld [vmem:[%s340 + $0xd08] sm:$0xff]
        %v7702 = vld [vmem:[%s340 + $0xd10] sm:$0xff]
        %v7703 = vld [vmem:[%s340 + $0xd18] sm:$0xff]
        %v7704 = vld [vmem:[%s340 + $0xd20] sm:$0xff]
        %v7705 = vld [vmem:[%s340 + $0xd28] sm:$0xff]
        %v7706 = vld [vmem:[%s340 + $0xd30] sm:$0xff]
        %v7707 = vld [vmem:[%s340 + $0xd38] sm:$0xff]
        %v7708 = vld [vmem:[%s340 + $0xd40] sm:$0xff]
        %v7709 = vld [vmem:[%s340 + $0xd48] sm:$0xff]
        %v7710 = vld [vmem:[%s340 + $0xd50] sm:$0xff]
        %v7711 = vld [vmem:[%s340 + $0xd58] sm:$0xff]
        %v7712 = vld [vmem:[%s340 + $0xd60] sm:$0xff]
        %v7713 = vld [vmem:[%s340 + $0xd68] sm:$0xff]
        %v7714 = vld [vmem:[%s340 + $0xd70] sm:$0xff]
        %v7715 = vld [vmem:[%s340 + $0xd78] sm:$0xff]
        %v7716 = vld [vmem:[%s340 + $0xd80] sm:$0xff]
        %v7717 = vld [vmem:[%s340 + $0xd88] sm:$0xff]
        %v7718 = vld [vmem:[%s340 + $0xd90] sm:$0xff]
        %v7719 = vld [vmem:[%s340 + $0xd98] sm:$0xff]
        %v7720 = vld [vmem:[%s340 + $0xda0] sm:$0xff]
        %v7721 = vld [vmem:[%s340 + $0xda8] sm:$0xff]
        %v7722 = vld [vmem:[%s340 + $0xdb0] sm:$0xff]
        %v7723 = vld [vmem:[%s340 + $0xdb8] sm:$0xff]
        %v7724 = vld [vmem:[%s340 + $0xdc0] sm:$0xff]
        %v7725 = vld [vmem:[%s340 + $0xdc8] sm:$0xff]
        %v7726 = vld [vmem:[%s340 + $0xdd0] sm:$0xff]
        %v7727 = vld [vmem:[%s340 + $0xdd8] sm:$0xff]
        %v7728 = vld [vmem:[%s340 + $0xde0] sm:$0xff]
        %v7729 = vld [vmem:[%s340 + $0xde8] sm:$0xff]
        %v7730 = vld [vmem:[%s340 + $0xdf0] sm:$0xff]
        %v7731 = vld [vmem:[%s340 + $0xdf8] sm:$0xff]
        %v7732 = vld [vmem:[%s340 + $0xe00] sm:$0xff]
        %v7733 = vld [vmem:[%s340 + $0xe08] sm:$0xff]
        %v7734 = vld [vmem:[%s340 + $0xe10] sm:$0xff]
        %v7735 = vld [vmem:[%s340 + $0xe18] sm:$0xff]
        %v7736 = vld [vmem:[%s340 + $0xe20] sm:$0xff]
        %v7737 = vld [vmem:[%s340 + $0xe28] sm:$0xff]
        %v7738 = vld [vmem:[%s340 + $0xe30] sm:$0xff]
        %v7739 = vld [vmem:[%s340 + $0xe38] sm:$0xff]
        %v7740 = vld [vmem:[%s340 + $0xe40] sm:$0xff]
        %v7741 = vld [vmem:[%s340 + $0xe48] sm:$0xff]
        %v7742 = vld [vmem:[%s340 + $0xe50] sm:$0xff]
        %v7743 = vld [vmem:[%s340 + $0xe58] sm:$0xff]
        %v7744 = vld [vmem:[%s340 + $0xe60] sm:$0xff]
        %v7745 = vld [vmem:[%s340 + $0xe68] sm:$0xff]
        %v7746 = vld [vmem:[%s340 + $0xe70] sm:$0xff]
        %v7747 = vld [vmem:[%s340 + $0xe78] sm:$0xff]
        %v7748 = vld [vmem:[%s340 + $0xe80] sm:$0xff]
        %v7749 = vld [vmem:[%s340 + $0xe88] sm:$0xff]
        %v7750 = vld [vmem:[%s340 + $0xe90] sm:$0xff]
        %v7751 = vld [vmem:[%s340 + $0xe98] sm:$0xff]
        %v7752 = vld [vmem:[%s340 + $0xea0] sm:$0xff]
        %v7753 = vld [vmem:[%s340 + $0xea8] sm:$0xff]
        %v7754 = vld [vmem:[%s340 + $0xeb0] sm:$0xff]
        %v7755 = vld [vmem:[%s340 + $0xeb8] sm:$0xff]
        %v7756 = vld [vmem:[%s340 + $0xec0] sm:$0xff]
        %v7757 = vld [vmem:[%s340 + $0xec8] sm:$0xff]
        %v7758 = vld [vmem:[%s340 + $0xed0] sm:$0xff]
        %v7759 = vld [vmem:[%s340 + $0xed8] sm:$0xff]
        %v7760 = vld [vmem:[%s340 + $0xee0] sm:$0xff]
        %v7761 = vld [vmem:[%s340 + $0xee8] sm:$0xff]
        %v7762 = vld [vmem:[%s340 + $0xef0] sm:$0xff]
        %v7763 = vld [vmem:[%s340 + $0xef8] sm:$0xff]
        %v7764 = vld [vmem:[%s340 + $0xf00] sm:$0xff]
        %v7765 = vld [vmem:[%s340 + $0xf08] sm:$0xff]
        %v7766 = vld [vmem:[%s340 + $0xf10] sm:$0xff]
        %v7767 = vld [vmem:[%s340 + $0xf18] sm:$0xff]
        %v7768 = vld [vmem:[%s340 + $0xf20] sm:$0xff]
        %v7769 = vld [vmem:[%s340 + $0xf28] sm:$0xff]
        %v7770 = vld [vmem:[%s340 + $0xf30] sm:$0xff]
        %v7771 = vld [vmem:[%s340 + $0xf38] sm:$0xff]
        %v7772 = vld [vmem:[%s340 + $0xf40] sm:$0xff]
        %v7773 = vld [vmem:[%s340 + $0xf48] sm:$0xff]
        %v7774 = vld [vmem:[%s340 + $0xf50] sm:$0xff]
        %v7775 = vld [vmem:[%s340 + $0xf58] sm:$0xff]
        %v7776 = vld [vmem:[%s340 + $0xf60] sm:$0xff]
        %v7777 = vld [vmem:[%s340 + $0xf68] sm:$0xff]
        %v7778 = vld [vmem:[%s340 + $0xf70] sm:$0xff]
        %v7779 = vld [vmem:[%s340 + $0xf78] sm:$0xff]
        %v7780 = vld [vmem:[%s340 + $0xf80] sm:$0xff]
        %v7781 = vld [vmem:[%s340 + $0xf88] sm:$0xff]
        %v7782 = vld [vmem:[%s340 + $0xf90] sm:$0xff]
        %v7783 = vld [vmem:[%s340 + $0xf98] sm:$0xff]
        %v7784 = vld [vmem:[%s340 + $0xfa0] sm:$0xff]
        %v7785 = vld [vmem:[%s340 + $0xfa8] sm:$0xff]
        %v7786 = vld [vmem:[%s340 + $0xfb0] sm:$0xff]
        %v7787 = vld [vmem:[%s340 + $0xfb8] sm:$0xff]
        %v7788 = vld [vmem:[%s340 + $0xfc0] sm:$0xff]
        %v7789 = vld [vmem:[%s340 + $0xfc8] sm:$0xff]
        %v7790 = vld [vmem:[%s340 + $0xfd0] sm:$0xff]
        %v7791 = vld [vmem:[%s340 + $0xfd8] sm:$0xff]
        %v7792 = vld [vmem:[%s340 + $0xfe0] sm:$0xff]
        %v7793 = vld [vmem:[%s340 + $0xfe8] sm:$0xff]
        %v7794 = vld [vmem:[%s340 + $0xff0] sm:$0xff]
        %v7795 = vld [vmem:[%s340 + $0xff8] sm:$0xff]
        %v7796 = vunpack.c.l.s8.bf16 %v7284
        %v7797 = vunpack.c.l.s8.bf16 %v7285
        %v7798 = vunpack.c.l.s8.bf16 %v7286
        %v7799 = vunpack.c.l.s8.bf16 %v7287
        %v7800 = vunpack.c.l.s8.bf16 %v7288
        %v7801 = vunpack.c.l.s8.bf16 %v7289
        %v7802 = vunpack.c.l.s8.bf16 %v7290
        %v7803 = vunpack.c.l.s8.bf16 %v7291
        %v7804 = vunpack.c.h.s8.bf16 %v7284
        %v7805 = vunpack.c.h.s8.bf16 %v7285
        %v7806 = vunpack.c.h.s8.bf16 %v7286
        %v7807 = vunpack.c.h.s8.bf16 %v7287
        %v7808 = vunpack.c.h.s8.bf16 %v7288
        %v7809 = vunpack.c.h.s8.bf16 %v7289
        %v7810 = vunpack.c.h.s8.bf16 %v7290
        %v7811 = vunpack.c.h.s8.bf16 %v7291
        %v7812 = vunpack.c.l.s8.bf16 %v7292
        %v7813 = vunpack.c.l.s8.bf16 %v7293
        %v7814 = vunpack.c.l.s8.bf16 %v7294
        %v7815 = vunpack.c.l.s8.bf16 %v7295
        %v7816 = vunpack.c.l.s8.bf16 %v7296
        %v7817 = vunpack.c.l.s8.bf16 %v7297
        %v7818 = vunpack.c.l.s8.bf16 %v7298
        %v7819 = vunpack.c.l.s8.bf16 %v7299
        %v7820 = vunpack.c.h.s8.bf16 %v7292
        %v7821 = vunpack.c.h.s8.bf16 %v7293
        %v7822 = vunpack.c.h.s8.bf16 %v7294
        %v7823 = vunpack.c.h.s8.bf16 %v7295
        %v7824 = vunpack.c.h.s8.bf16 %v7296
        %v7825 = vunpack.c.h.s8.bf16 %v7297
        %v7826 = vunpack.c.h.s8.bf16 %v7298
        %v7827 = vunpack.c.h.s8.bf16 %v7299
        %v7828 = vunpack.c.l.s8.bf16 %v7300
        %v7829 = vunpack.c.l.s8.bf16 %v7301
        %v7830 = vunpack.c.l.s8.bf16 %v7302
        %v7831 = vunpack.c.l.s8.bf16 %v7303
        %v7832 = vunpack.c.l.s8.bf16 %v7304
        %v7833 = vunpack.c.l.s8.bf16 %v7305
        %v7834 = vunpack.c.l.s8.bf16 %v7306
        %v7835 = vunpack.c.l.s8.bf16 %v7307
        %v7836 = vunpack.c.h.s8.bf16 %v7300
        %v7837 = vunpack.c.h.s8.bf16 %v7301
        %v7838 = vunpack.c.h.s8.bf16 %v7302
        %v7839 = vunpack.c.h.s8.bf16 %v7303
        %v7840 = vunpack.c.h.s8.bf16 %v7304
        %v7841 = vunpack.c.h.s8.bf16 %v7305
        %v7842 = vunpack.c.h.s8.bf16 %v7306
        %v7843 = vunpack.c.h.s8.bf16 %v7307
        %v7844 = vunpack.c.l.s8.bf16 %v7308
        %v7845 = vunpack.c.l.s8.bf16 %v7309
        %v7846 = vunpack.c.l.s8.bf16 %v7310
        %v7847 = vunpack.c.l.s8.bf16 %v7311
        %v7848 = vunpack.c.l.s8.bf16 %v7312
        %v7849 = vunpack.c.l.s8.bf16 %v7313
        %v7850 = vunpack.c.l.s8.bf16 %v7314
        %v7851 = vunpack.c.l.s8.bf16 %v7315
        %v7852 = vunpack.c.h.s8.bf16 %v7308
        %v7853 = vunpack.c.h.s8.bf16 %v7309
        %v7854 = vunpack.c.h.s8.bf16 %v7310
        %v7855 = vunpack.c.h.s8.bf16 %v7311
        %v7856 = vunpack.c.h.s8.bf16 %v7312
        %v7857 = vunpack.c.h.s8.bf16 %v7313
        %v7858 = vunpack.c.h.s8.bf16 %v7314
        %v7859 = vunpack.c.h.s8.bf16 %v7315
        %v7860 = vunpack.c.l.s8.bf16 %v7316
        %v7861 = vunpack.c.l.s8.bf16 %v7317
        %v7862 = vunpack.c.l.s8.bf16 %v7318
        %v7863 = vunpack.c.l.s8.bf16 %v7319
        %v7864 = vunpack.c.l.s8.bf16 %v7320
        %v7865 = vunpack.c.l.s8.bf16 %v7321
        %v7866 = vunpack.c.l.s8.bf16 %v7322
        %v7867 = vunpack.c.l.s8.bf16 %v7323
        %v7868 = vunpack.c.h.s8.bf16 %v7316
        %v7869 = vunpack.c.h.s8.bf16 %v7317
        %v7870 = vunpack.c.h.s8.bf16 %v7318
        %v7871 = vunpack.c.h.s8.bf16 %v7319
        %v7872 = vunpack.c.h.s8.bf16 %v7320
        %v7873 = vunpack.c.h.s8.bf16 %v7321
        %v7874 = vunpack.c.h.s8.bf16 %v7322
        %v7875 = vunpack.c.h.s8.bf16 %v7323
        %v7876 = vunpack.c.l.s8.bf16 %v7324
        %v7877 = vunpack.c.l.s8.bf16 %v7325
        %v7878 = vunpack.c.l.s8.bf16 %v7326
        %v7879 = vunpack.c.l.s8.bf16 %v7327
        %v7880 = vunpack.c.l.s8.bf16 %v7328
        %v7881 = vunpack.c.l.s8.bf16 %v7329
        %v7882 = vunpack.c.l.s8.bf16 %v7330
        %v7883 = vunpack.c.l.s8.bf16 %v7331
        %v7884 = vunpack.c.h.s8.bf16 %v7324
        %v7885 = vunpack.c.h.s8.bf16 %v7325
        %v7886 = vunpack.c.h.s8.bf16 %v7326
        %v7887 = vunpack.c.h.s8.bf16 %v7327
        %v7888 = vunpack.c.h.s8.bf16 %v7328
        %v7889 = vunpack.c.h.s8.bf16 %v7329
        %v7890 = vunpack.c.h.s8.bf16 %v7330
        %v7891 = vunpack.c.h.s8.bf16 %v7331
        %v7892 = vunpack.c.l.s8.bf16 %v7332
        %v7893 = vunpack.c.l.s8.bf16 %v7333
        %v7894 = vunpack.c.l.s8.bf16 %v7334
        %v7895 = vunpack.c.l.s8.bf16 %v7335
        %v7896 = vunpack.c.l.s8.bf16 %v7336
        %v7897 = vunpack.c.l.s8.bf16 %v7337
        %v7898 = vunpack.c.l.s8.bf16 %v7338
        %v7899 = vunpack.c.l.s8.bf16 %v7339
        %v7900 = vunpack.c.h.s8.bf16 %v7332
        %v7901 = vunpack.c.h.s8.bf16 %v7333
        %v7902 = vunpack.c.h.s8.bf16 %v7334
        %v7903 = vunpack.c.h.s8.bf16 %v7335
        %v7904 = vunpack.c.h.s8.bf16 %v7336
        %v7905 = vunpack.c.h.s8.bf16 %v7337
        %v7906 = vunpack.c.h.s8.bf16 %v7338
        %v7907 = vunpack.c.h.s8.bf16 %v7339
        %v7908 = vunpack.c.l.s8.bf16 %v7340
        %v7909 = vunpack.c.l.s8.bf16 %v7341
        %v7910 = vunpack.c.l.s8.bf16 %v7342
        %v7911 = vunpack.c.l.s8.bf16 %v7343
        %v7912 = vunpack.c.l.s8.bf16 %v7344
        %v7913 = vunpack.c.l.s8.bf16 %v7345
        %v7914 = vunpack.c.l.s8.bf16 %v7346
        %v7915 = vunpack.c.l.s8.bf16 %v7347
        %v7916 = vunpack.c.h.s8.bf16 %v7340
        %v7917 = vunpack.c.h.s8.bf16 %v7341
        %v7918 = vunpack.c.h.s8.bf16 %v7342
        %v7919 = vunpack.c.h.s8.bf16 %v7343
        %v7920 = vunpack.c.h.s8.bf16 %v7344
        %v7921 = vunpack.c.h.s8.bf16 %v7345
        %v7922 = vunpack.c.h.s8.bf16 %v7346
        %v7923 = vunpack.c.h.s8.bf16 %v7347
        %v7924 = vunpack.c.l.s8.bf16 %v7348
        %v7925 = vunpack.c.l.s8.bf16 %v7349
        %v7926 = vunpack.c.l.s8.bf16 %v7350
        %v7927 = vunpack.c.l.s8.bf16 %v7351
        %v7928 = vunpack.c.l.s8.bf16 %v7352
        %v7929 = vunpack.c.l.s8.bf16 %v7353
        %v7930 = vunpack.c.l.s8.bf16 %v7354
        %v7931 = vunpack.c.l.s8.bf16 %v7355
        %v7932 = vunpack.c.h.s8.bf16 %v7348
        %v7933 = vunpack.c.h.s8.bf16 %v7349
        %v7934 = vunpack.c.h.s8.bf16 %v7350
        %v7935 = vunpack.c.h.s8.bf16 %v7351
        %v7936 = vunpack.c.h.s8.bf16 %v7352
        %v7937 = vunpack.c.h.s8.bf16 %v7353
        %v7938 = vunpack.c.h.s8.bf16 %v7354
        %v7939 = vunpack.c.h.s8.bf16 %v7355
        %v7940 = vunpack.c.l.s8.bf16 %v7356
        %v7941 = vunpack.c.l.s8.bf16 %v7357
        %v7942 = vunpack.c.l.s8.bf16 %v7358
        %v7943 = vunpack.c.l.s8.bf16 %v7359
        %v7944 = vunpack.c.l.s8.bf16 %v7360
        %v7945 = vunpack.c.l.s8.bf16 %v7361
        %v7946 = vunpack.c.l.s8.bf16 %v7362
        %v7947 = vunpack.c.l.s8.bf16 %v7363
        %v7948 = vunpack.c.h.s8.bf16 %v7356
        %v7949 = vunpack.c.h.s8.bf16 %v7357
        %v7950 = vunpack.c.h.s8.bf16 %v7358
        %v7951 = vunpack.c.h.s8.bf16 %v7359
        %v7952 = vunpack.c.h.s8.bf16 %v7360
        %v7953 = vunpack.c.h.s8.bf16 %v7361
        %v7954 = vunpack.c.h.s8.bf16 %v7362
        %v7955 = vunpack.c.h.s8.bf16 %v7363
        %v7956 = vunpack.c.l.s8.bf16 %v7364
        %v7957 = vunpack.c.l.s8.bf16 %v7365
        %v7958 = vunpack.c.l.s8.bf16 %v7366
        %v7959 = vunpack.c.l.s8.bf16 %v7367
        %v7960 = vunpack.c.l.s8.bf16 %v7368
        %v7961 = vunpack.c.l.s8.bf16 %v7369
        %v7962 = vunpack.c.l.s8.bf16 %v7370
        %v7963 = vunpack.c.l.s8.bf16 %v7371
        %v7964 = vunpack.c.h.s8.bf16 %v7364
        %v7965 = vunpack.c.h.s8.bf16 %v7365
        %v7966 = vunpack.c.h.s8.bf16 %v7366
        %v7967 = vunpack.c.h.s8.bf16 %v7367
        %v7968 = vunpack.c.h.s8.bf16 %v7368
        %v7969 = vunpack.c.h.s8.bf16 %v7369
        %v7970 = vunpack.c.h.s8.bf16 %v7370
        %v7971 = vunpack.c.h.s8.bf16 %v7371
        %v7972 = vunpack.c.l.s8.bf16 %v7372
        %v7973 = vunpack.c.l.s8.bf16 %v7373
        %v7974 = vunpack.c.l.s8.bf16 %v7374
        %v7975 = vunpack.c.l.s8.bf16 %v7375
        %v7976 = vunpack.c.l.s8.bf16 %v7376
        %v7977 = vunpack.c.l.s8.bf16 %v7377
        %v7978 = vunpack.c.l.s8.bf16 %v7378
        %v7979 = vunpack.c.l.s8.bf16 %v7379
        %v7980 = vunpack.c.h.s8.bf16 %v7372
        %v7981 = vunpack.c.h.s8.bf16 %v7373
        %v7982 = vunpack.c.h.s8.bf16 %v7374
        %v7983 = vunpack.c.h.s8.bf16 %v7375
        %v7984 = vunpack.c.h.s8.bf16 %v7376
        %v7985 = vunpack.c.h.s8.bf16 %v7377
        %v7986 = vunpack.c.h.s8.bf16 %v7378
        %v7987 = vunpack.c.h.s8.bf16 %v7379
        %v7988 = vunpack.c.l.s8.bf16 %v7380
        %v7989 = vunpack.c.l.s8.bf16 %v7381
        %v7990 = vunpack.c.l.s8.bf16 %v7382
        %v7991 = vunpack.c.l.s8.bf16 %v7383
        %v7992 = vunpack.c.l.s8.bf16 %v7384
        %v7993 = vunpack.c.l.s8.bf16 %v7385
        %v7994 = vunpack.c.l.s8.bf16 %v7386
        %v7995 = vunpack.c.l.s8.bf16 %v7387
        %v7996 = vunpack.c.h.s8.bf16 %v7380
        %v7997 = vunpack.c.h.s8.bf16 %v7381
        %v7998 = vunpack.c.h.s8.bf16 %v7382
        %v7999 = vunpack.c.h.s8.bf16 %v7383
        %v8000 = vunpack.c.h.s8.bf16 %v7384
        %v8001 = vunpack.c.h.s8.bf16 %v7385
        %v8002 = vunpack.c.h.s8.bf16 %v7386
        %v8003 = vunpack.c.h.s8.bf16 %v7387
        %v8004 = vunpack.c.l.s8.bf16 %v7388
        %v8005 = vunpack.c.l.s8.bf16 %v7389
        %v8006 = vunpack.c.l.s8.bf16 %v7390
        %v8007 = vunpack.c.l.s8.bf16 %v7391
        %v8008 = vunpack.c.l.s8.bf16 %v7392
        %v8009 = vunpack.c.l.s8.bf16 %v7393
        %v8010 = vunpack.c.l.s8.bf16 %v7394
        %v8011 = vunpack.c.l.s8.bf16 %v7395
        %v8012 = vunpack.c.h.s8.bf16 %v7388
        %v8013 = vunpack.c.h.s8.bf16 %v7389
        %v8014 = vunpack.c.h.s8.bf16 %v7390
        %v8015 = vunpack.c.h.s8.bf16 %v7391
        %v8016 = vunpack.c.h.s8.bf16 %v7392
        %v8017 = vunpack.c.h.s8.bf16 %v7393
        %v8018 = vunpack.c.h.s8.bf16 %v7394
        %v8019 = vunpack.c.h.s8.bf16 %v7395
        %v8020 = vunpack.c.l.s8.bf16 %v7396
        %v8021 = vunpack.c.l.s8.bf16 %v7397
        %v8022 = vunpack.c.l.s8.bf16 %v7398
        %v8023 = vunpack.c.l.s8.bf16 %v7399
        %v8024 = vunpack.c.l.s8.bf16 %v7400
        %v8025 = vunpack.c.l.s8.bf16 %v7401
        %v8026 = vunpack.c.l.s8.bf16 %v7402
        %v8027 = vunpack.c.l.s8.bf16 %v7403
        %v8028 = vunpack.c.h.s8.bf16 %v7396
        %v8029 = vunpack.c.h.s8.bf16 %v7397
        %v8030 = vunpack.c.h.s8.bf16 %v7398
        %v8031 = vunpack.c.h.s8.bf16 %v7399
        %v8032 = vunpack.c.h.s8.bf16 %v7400
        %v8033 = vunpack.c.h.s8.bf16 %v7401
        %v8034 = vunpack.c.h.s8.bf16 %v7402
        %v8035 = vunpack.c.h.s8.bf16 %v7403
        %v8036 = vunpack.c.l.s8.bf16 %v7404
        %v8037 = vunpack.c.l.s8.bf16 %v7405
        %v8038 = vunpack.c.l.s8.bf16 %v7406
        %v8039 = vunpack.c.l.s8.bf16 %v7407
        %v8040 = vunpack.c.l.s8.bf16 %v7408
        %v8041 = vunpack.c.l.s8.bf16 %v7409
        %v8042 = vunpack.c.l.s8.bf16 %v7410
        %v8043 = vunpack.c.l.s8.bf16 %v7411
        %v8044 = vunpack.c.h.s8.bf16 %v7404
        %v8045 = vunpack.c.h.s8.bf16 %v7405
        %v8046 = vunpack.c.h.s8.bf16 %v7406
        %v8047 = vunpack.c.h.s8.bf16 %v7407
        %v8048 = vunpack.c.h.s8.bf16 %v7408
        %v8049 = vunpack.c.h.s8.bf16 %v7409
        %v8050 = vunpack.c.h.s8.bf16 %v7410
        %v8051 = vunpack.c.h.s8.bf16 %v7411
        %v8052 = vunpack.c.l.s8.bf16 %v7412
        %v8053 = vunpack.c.l.s8.bf16 %v7413
        %v8054 = vunpack.c.l.s8.bf16 %v7414
        %v8055 = vunpack.c.l.s8.bf16 %v7415
        %v8056 = vunpack.c.l.s8.bf16 %v7416
        %v8057 = vunpack.c.l.s8.bf16 %v7417
        %v8058 = vunpack.c.l.s8.bf16 %v7418
        %v8059 = vunpack.c.l.s8.bf16 %v7419
        %v8060 = vunpack.c.h.s8.bf16 %v7412
        %v8061 = vunpack.c.h.s8.bf16 %v7413
        %v8062 = vunpack.c.h.s8.bf16 %v7414
        %v8063 = vunpack.c.h.s8.bf16 %v7415
        %v8064 = vunpack.c.h.s8.bf16 %v7416
        %v8065 = vunpack.c.h.s8.bf16 %v7417
        %v8066 = vunpack.c.h.s8.bf16 %v7418
        %v8067 = vunpack.c.h.s8.bf16 %v7419
        %v8068 = vunpack.c.l.s8.bf16 %v7420
        %v8069 = vunpack.c.l.s8.bf16 %v7421
        %v8070 = vunpack.c.l.s8.bf16 %v7422
        %v8071 = vunpack.c.l.s8.bf16 %v7423
        %v8072 = vunpack.c.l.s8.bf16 %v7424
        %v8073 = vunpack.c.l.s8.bf16 %v7425
        %v8074 = vunpack.c.l.s8.bf16 %v7426
        %v8075 = vunpack.c.l.s8.bf16 %v7427
        %v8076 = vunpack.c.h.s8.bf16 %v7420
        %v8077 = vunpack.c.h.s8.bf16 %v7421
        %v8078 = vunpack.c.h.s8.bf16 %v7422
        %v8079 = vunpack.c.h.s8.bf16 %v7423
        %v8080 = vunpack.c.h.s8.bf16 %v7424
        %v8081 = vunpack.c.h.s8.bf16 %v7425
        %v8082 = vunpack.c.h.s8.bf16 %v7426
        %v8083 = vunpack.c.h.s8.bf16 %v7427
        %v8084 = vunpack.c.l.s8.bf16 %v7428
        %v8085 = vunpack.c.l.s8.bf16 %v7429
        %v8086 = vunpack.c.l.s8.bf16 %v7430
        %v8087 = vunpack.c.l.s8.bf16 %v7431
        %v8088 = vunpack.c.l.s8.bf16 %v7432
        %v8089 = vunpack.c.l.s8.bf16 %v7433
        %v8090 = vunpack.c.l.s8.bf16 %v7434
        %v8091 = vunpack.c.l.s8.bf16 %v7435
        %v8092 = vunpack.c.h.s8.bf16 %v7428
        %v8093 = vunpack.c.h.s8.bf16 %v7429
        %v8094 = vunpack.c.h.s8.bf16 %v7430
        %v8095 = vunpack.c.h.s8.bf16 %v7431
        %v8096 = vunpack.c.h.s8.bf16 %v7432
        %v8097 = vunpack.c.h.s8.bf16 %v7433
        %v8098 = vunpack.c.h.s8.bf16 %v7434
        %v8099 = vunpack.c.h.s8.bf16 %v7435
        %v8100 = vunpack.c.l.s8.bf16 %v7436
        %v8101 = vunpack.c.l.s8.bf16 %v7437
        %v8102 = vunpack.c.l.s8.bf16 %v7438
        %v8103 = vunpack.c.l.s8.bf16 %v7439
        %v8104 = vunpack.c.l.s8.bf16 %v7440
        %v8105 = vunpack.c.l.s8.bf16 %v7441
        %v8106 = vunpack.c.l.s8.bf16 %v7442
        %v8107 = vunpack.c.l.s8.bf16 %v7443
        %v8108 = vunpack.c.h.s8.bf16 %v7436
        %v8109 = vunpack.c.h.s8.bf16 %v7437
        %v8110 = vunpack.c.h.s8.bf16 %v7438
        %v8111 = vunpack.c.h.s8.bf16 %v7439
        %v8112 = vunpack.c.h.s8.bf16 %v7440
        %v8113 = vunpack.c.h.s8.bf16 %v7441
        %v8114 = vunpack.c.h.s8.bf16 %v7442
        %v8115 = vunpack.c.h.s8.bf16 %v7443
        %v8116 = vunpack.c.l.s8.bf16 %v7444
        %v8117 = vunpack.c.l.s8.bf16 %v7445
        %v8118 = vunpack.c.l.s8.bf16 %v7446
        %v8119 = vunpack.c.l.s8.bf16 %v7447
        %v8120 = vunpack.c.l.s8.bf16 %v7448
        %v8121 = vunpack.c.l.s8.bf16 %v7449
        %v8122 = vunpack.c.l.s8.bf16 %v7450
        %v8123 = vunpack.c.l.s8.bf16 %v7451
        %v8124 = vunpack.c.h.s8.bf16 %v7444
        %v8125 = vunpack.c.h.s8.bf16 %v7445
        %v8126 = vunpack.c.h.s8.bf16 %v7446
        %v8127 = vunpack.c.h.s8.bf16 %v7447
        %v8128 = vunpack.c.h.s8.bf16 %v7448
        %v8129 = vunpack.c.h.s8.bf16 %v7449
        %v8130 = vunpack.c.h.s8.bf16 %v7450
        %v8131 = vunpack.c.h.s8.bf16 %v7451
        %v8132 = vunpack.c.l.s8.bf16 %v7452
        %v8133 = vunpack.c.l.s8.bf16 %v7453
        %v8134 = vunpack.c.l.s8.bf16 %v7454
        %v8135 = vunpack.c.l.s8.bf16 %v7455
        %v8136 = vunpack.c.l.s8.bf16 %v7456
        %v8137 = vunpack.c.l.s8.bf16 %v7457
        %v8138 = vunpack.c.l.s8.bf16 %v7458
        %v8139 = vunpack.c.l.s8.bf16 %v7459
        %v8140 = vunpack.c.h.s8.bf16 %v7452
        %v8141 = vunpack.c.h.s8.bf16 %v7453
        %v8142 = vunpack.c.h.s8.bf16 %v7454
        %v8143 = vunpack.c.h.s8.bf16 %v7455
        %v8144 = vunpack.c.h.s8.bf16 %v7456
        %v8145 = vunpack.c.h.s8.bf16 %v7457
        %v8146 = vunpack.c.h.s8.bf16 %v7458
        %v8147 = vunpack.c.h.s8.bf16 %v7459
        %v8148 = vunpack.c.l.s8.bf16 %v7460
        %v8149 = vunpack.c.l.s8.bf16 %v7461
        %v8150 = vunpack.c.l.s8.bf16 %v7462
        %v8151 = vunpack.c.l.s8.bf16 %v7463
        %v8152 = vunpack.c.l.s8.bf16 %v7464
        %v8153 = vunpack.c.l.s8.bf16 %v7465
        %v8154 = vunpack.c.l.s8.bf16 %v7466
        %v8155 = vunpack.c.l.s8.bf16 %v7467
        %v8156 = vunpack.c.h.s8.bf16 %v7460
        %v8157 = vunpack.c.h.s8.bf16 %v7461
        %v8158 = vunpack.c.h.s8.bf16 %v7462
        %v8159 = vunpack.c.h.s8.bf16 %v7463
        %v8160 = vunpack.c.h.s8.bf16 %v7464
        %v8161 = vunpack.c.h.s8.bf16 %v7465
        %v8162 = vunpack.c.h.s8.bf16 %v7466
        %v8163 = vunpack.c.h.s8.bf16 %v7467
        %v8164 = vunpack.c.l.s8.bf16 %v7468
        %v8165 = vunpack.c.l.s8.bf16 %v7469
        %v8166 = vunpack.c.l.s8.bf16 %v7470
        %v8167 = vunpack.c.l.s8.bf16 %v7471
        %v8168 = vunpack.c.l.s8.bf16 %v7472
        %v8169 = vunpack.c.l.s8.bf16 %v7473
        %v8170 = vunpack.c.l.s8.bf16 %v7474
        %v8171 = vunpack.c.l.s8.bf16 %v7475
        %v8172 = vunpack.c.h.s8.bf16 %v7468
        %v8173 = vunpack.c.h.s8.bf16 %v7469
        %v8174 = vunpack.c.h.s8.bf16 %v7470
        %v8175 = vunpack.c.h.s8.bf16 %v7471
        %v8176 = vunpack.c.h.s8.bf16 %v7472
        %v8177 = vunpack.c.h.s8.bf16 %v7473
        %v8178 = vunpack.c.h.s8.bf16 %v7474
        %v8179 = vunpack.c.h.s8.bf16 %v7475
        %v8180 = vunpack.c.l.s8.bf16 %v7476
        %v8181 = vunpack.c.l.s8.bf16 %v7477
        %v8182 = vunpack.c.l.s8.bf16 %v7478
        %v8183 = vunpack.c.l.s8.bf16 %v7479
        %v8184 = vunpack.c.l.s8.bf16 %v7480
        %v8185 = vunpack.c.l.s8.bf16 %v7481
        %v8186 = vunpack.c.l.s8.bf16 %v7482
        %v8187 = vunpack.c.l.s8.bf16 %v7483
        %v8188 = vunpack.c.h.s8.bf16 %v7476
        %v8189 = vunpack.c.h.s8.bf16 %v7477
        %v8190 = vunpack.c.h.s8.bf16 %v7478
        %v8191 = vunpack.c.h.s8.bf16 %v7479
        %v8192 = vunpack.c.h.s8.bf16 %v7480
        %v8193 = vunpack.c.h.s8.bf16 %v7481
        %v8194 = vunpack.c.h.s8.bf16 %v7482
        %v8195 = vunpack.c.h.s8.bf16 %v7483
        %v8196 = vunpack.c.l.s8.bf16 %v7484
        %v8197 = vunpack.c.l.s8.bf16 %v7485
        %v8198 = vunpack.c.l.s8.bf16 %v7486
        %v8199 = vunpack.c.l.s8.bf16 %v7487
        %v8200 = vunpack.c.l.s8.bf16 %v7488
        %v8201 = vunpack.c.l.s8.bf16 %v7489
        %v8202 = vunpack.c.l.s8.bf16 %v7490
        %v8203 = vunpack.c.l.s8.bf16 %v7491
        %v8204 = vunpack.c.h.s8.bf16 %v7484
        %v8205 = vunpack.c.h.s8.bf16 %v7485
        %v8206 = vunpack.c.h.s8.bf16 %v7486
        %v8207 = vunpack.c.h.s8.bf16 %v7487
        %v8208 = vunpack.c.h.s8.bf16 %v7488
        %v8209 = vunpack.c.h.s8.bf16 %v7489
        %v8210 = vunpack.c.h.s8.bf16 %v7490
        %v8211 = vunpack.c.h.s8.bf16 %v7491
        %v8212 = vunpack.c.l.s8.bf16 %v7492
        %v8213 = vunpack.c.l.s8.bf16 %v7493
        %v8214 = vunpack.c.l.s8.bf16 %v7494
        %v8215 = vunpack.c.l.s8.bf16 %v7495
        %v8216 = vunpack.c.l.s8.bf16 %v7496
        %v8217 = vunpack.c.l.s8.bf16 %v7497
        %v8218 = vunpack.c.l.s8.bf16 %v7498
        %v8219 = vunpack.c.l.s8.bf16 %v7499
        %v8220 = vunpack.c.h.s8.bf16 %v7492
        %v8221 = vunpack.c.h.s8.bf16 %v7493
        %v8222 = vunpack.c.h.s8.bf16 %v7494
        %v8223 = vunpack.c.h.s8.bf16 %v7495
        %v8224 = vunpack.c.h.s8.bf16 %v7496
        %v8225 = vunpack.c.h.s8.bf16 %v7497
        %v8226 = vunpack.c.h.s8.bf16 %v7498
        %v8227 = vunpack.c.h.s8.bf16 %v7499
        %v8228 = vunpack.c.l.s8.bf16 %v7500
        %v8229 = vunpack.c.l.s8.bf16 %v7501
        %v8230 = vunpack.c.l.s8.bf16 %v7502
        %v8231 = vunpack.c.l.s8.bf16 %v7503
        %v8232 = vunpack.c.l.s8.bf16 %v7504
        %v8233 = vunpack.c.l.s8.bf16 %v7505
        %v8234 = vunpack.c.l.s8.bf16 %v7506
        %v8235 = vunpack.c.l.s8.bf16 %v7507
        %v8236 = vunpack.c.h.s8.bf16 %v7500
        %v8237 = vunpack.c.h.s8.bf16 %v7501
        %v8238 = vunpack.c.h.s8.bf16 %v7502
        %v8239 = vunpack.c.h.s8.bf16 %v7503
        %v8240 = vunpack.c.h.s8.bf16 %v7504
        %v8241 = vunpack.c.h.s8.bf16 %v7505
        %v8242 = vunpack.c.h.s8.bf16 %v7506
        %v8243 = vunpack.c.h.s8.bf16 %v7507
        %v8244 = vunpack.c.l.s8.bf16 %v7508
        %v8245 = vunpack.c.l.s8.bf16 %v7509
        %v8246 = vunpack.c.l.s8.bf16 %v7510
        %v8247 = vunpack.c.l.s8.bf16 %v7511
        %v8248 = vunpack.c.l.s8.bf16 %v7512
        %v8249 = vunpack.c.l.s8.bf16 %v7513
        %v8250 = vunpack.c.l.s8.bf16 %v7514
        %v8251 = vunpack.c.l.s8.bf16 %v7515
        %v8252 = vunpack.c.h.s8.bf16 %v7508
        %v8253 = vunpack.c.h.s8.bf16 %v7509
        %v8254 = vunpack.c.h.s8.bf16 %v7510
        %v8255 = vunpack.c.h.s8.bf16 %v7511
        %v8256 = vunpack.c.h.s8.bf16 %v7512
        %v8257 = vunpack.c.h.s8.bf16 %v7513
        %v8258 = vunpack.c.h.s8.bf16 %v7514
        %v8259 = vunpack.c.h.s8.bf16 %v7515
        %v8260 = vunpack.c.l.s8.bf16 %v7516
        %v8261 = vunpack.c.l.s8.bf16 %v7517
        %v8262 = vunpack.c.l.s8.bf16 %v7518
        %v8263 = vunpack.c.l.s8.bf16 %v7519
        %v8264 = vunpack.c.l.s8.bf16 %v7520
        %v8265 = vunpack.c.l.s8.bf16 %v7521
        %v8266 = vunpack.c.l.s8.bf16 %v7522
        %v8267 = vunpack.c.l.s8.bf16 %v7523
        %v8268 = vunpack.c.h.s8.bf16 %v7516
        %v8269 = vunpack.c.h.s8.bf16 %v7517
        %v8270 = vunpack.c.h.s8.bf16 %v7518
        %v8271 = vunpack.c.h.s8.bf16 %v7519
        %v8272 = vunpack.c.h.s8.bf16 %v7520
        %v8273 = vunpack.c.h.s8.bf16 %v7521
        %v8274 = vunpack.c.h.s8.bf16 %v7522
        %v8275 = vunpack.c.h.s8.bf16 %v7523
        %v8276 = vunpack.c.l.s8.bf16 %v7524
        %v8277 = vunpack.c.l.s8.bf16 %v7525
        %v8278 = vunpack.c.l.s8.bf16 %v7526
        %v8279 = vunpack.c.l.s8.bf16 %v7527
        %v8280 = vunpack.c.l.s8.bf16 %v7528
        %v8281 = vunpack.c.l.s8.bf16 %v7529
        %v8282 = vunpack.c.l.s8.bf16 %v7530
        %v8283 = vunpack.c.l.s8.bf16 %v7531
        %v8284 = vunpack.c.h.s8.bf16 %v7524
        %v8285 = vunpack.c.h.s8.bf16 %v7525
        %v8286 = vunpack.c.h.s8.bf16 %v7526
        %v8287 = vunpack.c.h.s8.bf16 %v7527
        %v8288 = vunpack.c.h.s8.bf16 %v7528
        %v8289 = vunpack.c.h.s8.bf16 %v7529
        %v8290 = vunpack.c.h.s8.bf16 %v7530
        %v8291 = vunpack.c.h.s8.bf16 %v7531
        %v8292 = vunpack.c.l.s8.bf16 %v7532
        %v8293 = vunpack.c.l.s8.bf16 %v7533
        %v8294 = vunpack.c.l.s8.bf16 %v7534
        %v8295 = vunpack.c.l.s8.bf16 %v7535
        %v8296 = vunpack.c.l.s8.bf16 %v7536
        %v8297 = vunpack.c.l.s8.bf16 %v7537
        %v8298 = vunpack.c.l.s8.bf16 %v7538
        %v8299 = vunpack.c.l.s8.bf16 %v7539
        %v8300 = vunpack.c.h.s8.bf16 %v7532
        %v8301 = vunpack.c.h.s8.bf16 %v7533
        %v8302 = vunpack.c.h.s8.bf16 %v7534
        %v8303 = vunpack.c.h.s8.bf16 %v7535
        %v8304 = vunpack.c.h.s8.bf16 %v7536
        %v8305 = vunpack.c.h.s8.bf16 %v7537
        %v8306 = vunpack.c.h.s8.bf16 %v7538
        %v8307 = vunpack.c.h.s8.bf16 %v7539
        %v8308 = vunpack.c.l.s8.bf16 %v7540
        %v8309 = vunpack.c.l.s8.bf16 %v7541
        %v8310 = vunpack.c.l.s8.bf16 %v7542
        %v8311 = vunpack.c.l.s8.bf16 %v7543
        %v8312 = vunpack.c.l.s8.bf16 %v7544
        %v8313 = vunpack.c.l.s8.bf16 %v7545
        %v8314 = vunpack.c.l.s8.bf16 %v7546
        %v8315 = vunpack.c.l.s8.bf16 %v7547
        %v8316 = vunpack.c.h.s8.bf16 %v7540
        %v8317 = vunpack.c.h.s8.bf16 %v7541
        %v8318 = vunpack.c.h.s8.bf16 %v7542
        %v8319 = vunpack.c.h.s8.bf16 %v7543
        %v8320 = vunpack.c.h.s8.bf16 %v7544
        %v8321 = vunpack.c.h.s8.bf16 %v7545
        %v8322 = vunpack.c.h.s8.bf16 %v7546
        %v8323 = vunpack.c.h.s8.bf16 %v7547
        %v8324 = vunpack.c.l.s8.bf16 %v7548
        %v8325 = vunpack.c.l.s8.bf16 %v7549
        %v8326 = vunpack.c.l.s8.bf16 %v7550
        %v8327 = vunpack.c.l.s8.bf16 %v7551
        %v8328 = vunpack.c.l.s8.bf16 %v7552
        %v8329 = vunpack.c.l.s8.bf16 %v7553
        %v8330 = vunpack.c.l.s8.bf16 %v7554
        %v8331 = vunpack.c.l.s8.bf16 %v7555
        %v8332 = vunpack.c.h.s8.bf16 %v7548
        %v8333 = vunpack.c.h.s8.bf16 %v7549
        %v8334 = vunpack.c.h.s8.bf16 %v7550
        %v8335 = vunpack.c.h.s8.bf16 %v7551
        %v8336 = vunpack.c.h.s8.bf16 %v7552
        %v8337 = vunpack.c.h.s8.bf16 %v7553
        %v8338 = vunpack.c.h.s8.bf16 %v7554
        %v8339 = vunpack.c.h.s8.bf16 %v7555
        %v8340 = vunpack.c.l.s8.bf16 %v7556
        %v8341 = vunpack.c.l.s8.bf16 %v7557
        %v8342 = vunpack.c.l.s8.bf16 %v7558
        %v8343 = vunpack.c.l.s8.bf16 %v7559
        %v8344 = vunpack.c.l.s8.bf16 %v7560
        %v8345 = vunpack.c.l.s8.bf16 %v7561
        %v8346 = vunpack.c.l.s8.bf16 %v7562
        %v8347 = vunpack.c.l.s8.bf16 %v7563
        %v8348 = vunpack.c.h.s8.bf16 %v7556
        %v8349 = vunpack.c.h.s8.bf16 %v7557
        %v8350 = vunpack.c.h.s8.bf16 %v7558
        %v8351 = vunpack.c.h.s8.bf16 %v7559
        %v8352 = vunpack.c.h.s8.bf16 %v7560
        %v8353 = vunpack.c.h.s8.bf16 %v7561
        %v8354 = vunpack.c.h.s8.bf16 %v7562
        %v8355 = vunpack.c.h.s8.bf16 %v7563
        %v8356 = vunpack.c.l.s8.bf16 %v7564
        %v8357 = vunpack.c.l.s8.bf16 %v7565
        %v8358 = vunpack.c.l.s8.bf16 %v7566
        %v8359 = vunpack.c.l.s8.bf16 %v7567
        %v8360 = vunpack.c.l.s8.bf16 %v7568
        %v8361 = vunpack.c.l.s8.bf16 %v7569
        %v8362 = vunpack.c.l.s8.bf16 %v7570
        %v8363 = vunpack.c.l.s8.bf16 %v7571
        %v8364 = vunpack.c.h.s8.bf16 %v7564
        %v8365 = vunpack.c.h.s8.bf16 %v7565
        %v8366 = vunpack.c.h.s8.bf16 %v7566
        %v8367 = vunpack.c.h.s8.bf16 %v7567
        %v8368 = vunpack.c.h.s8.bf16 %v7568
        %v8369 = vunpack.c.h.s8.bf16 %v7569
        %v8370 = vunpack.c.h.s8.bf16 %v7570
        %v8371 = vunpack.c.h.s8.bf16 %v7571
        %v8372 = vunpack.c.l.s8.bf16 %v7572
        %v8373 = vunpack.c.l.s8.bf16 %v7573
        %v8374 = vunpack.c.l.s8.bf16 %v7574
        %v8375 = vunpack.c.l.s8.bf16 %v7575
        %v8376 = vunpack.c.l.s8.bf16 %v7576
        %v8377 = vunpack.c.l.s8.bf16 %v7577
        %v8378 = vunpack.c.l.s8.bf16 %v7578
        %v8379 = vunpack.c.l.s8.bf16 %v7579
        %v8380 = vunpack.c.h.s8.bf16 %v7572
        %v8381 = vunpack.c.h.s8.bf16 %v7573
        %v8382 = vunpack.c.h.s8.bf16 %v7574
        %v8383 = vunpack.c.h.s8.bf16 %v7575
        %v8384 = vunpack.c.h.s8.bf16 %v7576
        %v8385 = vunpack.c.h.s8.bf16 %v7577
        %v8386 = vunpack.c.h.s8.bf16 %v7578
        %v8387 = vunpack.c.h.s8.bf16 %v7579
        %v8388 = vunpack.c.l.s8.bf16 %v7580
        %v8389 = vunpack.c.l.s8.bf16 %v7581
        %v8390 = vunpack.c.l.s8.bf16 %v7582
        %v8391 = vunpack.c.l.s8.bf16 %v7583
        %v8392 = vunpack.c.l.s8.bf16 %v7584
        %v8393 = vunpack.c.l.s8.bf16 %v7585
        %v8394 = vunpack.c.l.s8.bf16 %v7586
        %v8395 = vunpack.c.l.s8.bf16 %v7587
        %v8396 = vunpack.c.h.s8.bf16 %v7580
        %v8397 = vunpack.c.h.s8.bf16 %v7581
        %v8398 = vunpack.c.h.s8.bf16 %v7582
        %v8399 = vunpack.c.h.s8.bf16 %v7583
        %v8400 = vunpack.c.h.s8.bf16 %v7584
        %v8401 = vunpack.c.h.s8.bf16 %v7585
        %v8402 = vunpack.c.h.s8.bf16 %v7586
        %v8403 = vunpack.c.h.s8.bf16 %v7587
        %v8404 = vunpack.c.l.s8.bf16 %v7588
        %v8405 = vunpack.c.l.s8.bf16 %v7589
        %v8406 = vunpack.c.l.s8.bf16 %v7590
        %v8407 = vunpack.c.l.s8.bf16 %v7591
        %v8408 = vunpack.c.l.s8.bf16 %v7592
        %v8409 = vunpack.c.l.s8.bf16 %v7593
        %v8410 = vunpack.c.l.s8.bf16 %v7594
        %v8411 = vunpack.c.l.s8.bf16 %v7595
        %v8412 = vunpack.c.h.s8.bf16 %v7588
        %v8413 = vunpack.c.h.s8.bf16 %v7589
        %v8414 = vunpack.c.h.s8.bf16 %v7590
        %v8415 = vunpack.c.h.s8.bf16 %v7591
        %v8416 = vunpack.c.h.s8.bf16 %v7592
        %v8417 = vunpack.c.h.s8.bf16 %v7593
        %v8418 = vunpack.c.h.s8.bf16 %v7594
        %v8419 = vunpack.c.h.s8.bf16 %v7595
        %v8420 = vunpack.c.l.s8.bf16 %v7596
        %v8421 = vunpack.c.l.s8.bf16 %v7597
        %v8422 = vunpack.c.l.s8.bf16 %v7598
        %v8423 = vunpack.c.l.s8.bf16 %v7599
        %v8424 = vunpack.c.l.s8.bf16 %v7600
        %v8425 = vunpack.c.l.s8.bf16 %v7601
        %v8426 = vunpack.c.l.s8.bf16 %v7602
        %v8427 = vunpack.c.l.s8.bf16 %v7603
        %v8428 = vunpack.c.h.s8.bf16 %v7596
        %v8429 = vunpack.c.h.s8.bf16 %v7597
        %v8430 = vunpack.c.h.s8.bf16 %v7598
        %v8431 = vunpack.c.h.s8.bf16 %v7599
        %v8432 = vunpack.c.h.s8.bf16 %v7600
        %v8433 = vunpack.c.h.s8.bf16 %v7601
        %v8434 = vunpack.c.h.s8.bf16 %v7602
        %v8435 = vunpack.c.h.s8.bf16 %v7603
        %v8436 = vunpack.c.l.s8.bf16 %v7604
        %v8437 = vunpack.c.l.s8.bf16 %v7605
        %v8438 = vunpack.c.l.s8.bf16 %v7606
        %v8439 = vunpack.c.l.s8.bf16 %v7607
        %v8440 = vunpack.c.l.s8.bf16 %v7608
        %v8441 = vunpack.c.l.s8.bf16 %v7609
        %v8442 = vunpack.c.l.s8.bf16 %v7610
        %v8443 = vunpack.c.l.s8.bf16 %v7611
        %v8444 = vunpack.c.h.s8.bf16 %v7604
        %v8445 = vunpack.c.h.s8.bf16 %v7605
        %v8446 = vunpack.c.h.s8.bf16 %v7606
        %v8447 = vunpack.c.h.s8.bf16 %v7607
        %v8448 = vunpack.c.h.s8.bf16 %v7608
        %v8449 = vunpack.c.h.s8.bf16 %v7609
        %v8450 = vunpack.c.h.s8.bf16 %v7610
        %v8451 = vunpack.c.h.s8.bf16 %v7611
        %v8452 = vunpack.c.l.s8.bf16 %v7612
        %v8453 = vunpack.c.l.s8.bf16 %v7613
        %v8454 = vunpack.c.l.s8.bf16 %v7614
        %v8455 = vunpack.c.l.s8.bf16 %v7615
        %v8456 = vunpack.c.l.s8.bf16 %v7616
        %v8457 = vunpack.c.l.s8.bf16 %v7617
        %v8458 = vunpack.c.l.s8.bf16 %v7618
        %v8459 = vunpack.c.l.s8.bf16 %v7619
        %v8460 = vunpack.c.h.s8.bf16 %v7612
        %v8461 = vunpack.c.h.s8.bf16 %v7613
        %v8462 = vunpack.c.h.s8.bf16 %v7614
        %v8463 = vunpack.c.h.s8.bf16 %v7615
        %v8464 = vunpack.c.h.s8.bf16 %v7616
        %v8465 = vunpack.c.h.s8.bf16 %v7617
        %v8466 = vunpack.c.h.s8.bf16 %v7618
        %v8467 = vunpack.c.h.s8.bf16 %v7619
        %v8468 = vunpack.c.l.s8.bf16 %v7620
        %v8469 = vunpack.c.l.s8.bf16 %v7621
        %v8470 = vunpack.c.l.s8.bf16 %v7622
        %v8471 = vunpack.c.l.s8.bf16 %v7623
        %v8472 = vunpack.c.l.s8.bf16 %v7624
        %v8473 = vunpack.c.l.s8.bf16 %v7625
        %v8474 = vunpack.c.l.s8.bf16 %v7626
        %v8475 = vunpack.c.l.s8.bf16 %v7627
        %v8476 = vunpack.c.h.s8.bf16 %v7620
        %v8477 = vunpack.c.h.s8.bf16 %v7621
        %v8478 = vunpack.c.h.s8.bf16 %v7622
        %v8479 = vunpack.c.h.s8.bf16 %v7623
        %v8480 = vunpack.c.h.s8.bf16 %v7624
        %v8481 = vunpack.c.h.s8.bf16 %v7625
        %v8482 = vunpack.c.h.s8.bf16 %v7626
        %v8483 = vunpack.c.h.s8.bf16 %v7627
        %v8484 = vunpack.c.l.s8.bf16 %v7628
        %v8485 = vunpack.c.l.s8.bf16 %v7629
        %v8486 = vunpack.c.l.s8.bf16 %v7630
        %v8487 = vunpack.c.l.s8.bf16 %v7631
        %v8488 = vunpack.c.l.s8.bf16 %v7632
        %v8489 = vunpack.c.l.s8.bf16 %v7633
        %v8490 = vunpack.c.l.s8.bf16 %v7634
        %v8491 = vunpack.c.l.s8.bf16 %v7635
        %v8492 = vunpack.c.h.s8.bf16 %v7628
        %v8493 = vunpack.c.h.s8.bf16 %v7629
        %v8494 = vunpack.c.h.s8.bf16 %v7630
        %v8495 = vunpack.c.h.s8.bf16 %v7631
        %v8496 = vunpack.c.h.s8.bf16 %v7632
        %v8497 = vunpack.c.h.s8.bf16 %v7633
        %v8498 = vunpack.c.h.s8.bf16 %v7634
        %v8499 = vunpack.c.h.s8.bf16 %v7635
        %v8500 = vunpack.c.l.s8.bf16 %v7636
        %v8501 = vunpack.c.l.s8.bf16 %v7637
        %v8502 = vunpack.c.l.s8.bf16 %v7638
        %v8503 = vunpack.c.l.s8.bf16 %v7639
        %v8504 = vunpack.c.l.s8.bf16 %v7640
        %v8505 = vunpack.c.l.s8.bf16 %v7641
        %v8506 = vunpack.c.l.s8.bf16 %v7642
        %v8507 = vunpack.c.l.s8.bf16 %v7643
        %v8508 = vunpack.c.h.s8.bf16 %v7636
        %v8509 = vunpack.c.h.s8.bf16 %v7637
        %v8510 = vunpack.c.h.s8.bf16 %v7638
        %v8511 = vunpack.c.h.s8.bf16 %v7639
        %v8512 = vunpack.c.h.s8.bf16 %v7640
        %v8513 = vunpack.c.h.s8.bf16 %v7641
        %v8514 = vunpack.c.h.s8.bf16 %v7642
        %v8515 = vunpack.c.h.s8.bf16 %v7643
        %v8516 = vunpack.c.l.s8.bf16 %v7644
        %v8517 = vunpack.c.l.s8.bf16 %v7645
        %v8518 = vunpack.c.l.s8.bf16 %v7646
        %v8519 = vunpack.c.l.s8.bf16 %v7647
        %v8520 = vunpack.c.l.s8.bf16 %v7648
        %v8521 = vunpack.c.l.s8.bf16 %v7649
        %v8522 = vunpack.c.l.s8.bf16 %v7650
        %v8523 = vunpack.c.l.s8.bf16 %v7651
        %v8524 = vunpack.c.h.s8.bf16 %v7644
        %v8525 = vunpack.c.h.s8.bf16 %v7645
        %v8526 = vunpack.c.h.s8.bf16 %v7646
        %v8527 = vunpack.c.h.s8.bf16 %v7647
        %v8528 = vunpack.c.h.s8.bf16 %v7648
        %v8529 = vunpack.c.h.s8.bf16 %v7649
        %v8530 = vunpack.c.h.s8.bf16 %v7650
        %v8531 = vunpack.c.h.s8.bf16 %v7651
        %v8532 = vunpack.c.l.s8.bf16 %v7652
        %v8533 = vunpack.c.l.s8.bf16 %v7653
        %v8534 = vunpack.c.l.s8.bf16 %v7654
        %v8535 = vunpack.c.l.s8.bf16 %v7655
        %v8536 = vunpack.c.l.s8.bf16 %v7656
        %v8537 = vunpack.c.l.s8.bf16 %v7657
        %v8538 = vunpack.c.l.s8.bf16 %v7658
        %v8539 = vunpack.c.l.s8.bf16 %v7659
        %v8540 = vunpack.c.h.s8.bf16 %v7652
        %v8541 = vunpack.c.h.s8.bf16 %v7653
        %v8542 = vunpack.c.h.s8.bf16 %v7654
        %v8543 = vunpack.c.h.s8.bf16 %v7655
        %v8544 = vunpack.c.h.s8.bf16 %v7656
        %v8545 = vunpack.c.h.s8.bf16 %v7657
        %v8546 = vunpack.c.h.s8.bf16 %v7658
        %v8547 = vunpack.c.h.s8.bf16 %v7659
        %v8548 = vunpack.c.l.s8.bf16 %v7660
        %v8549 = vunpack.c.l.s8.bf16 %v7661
        %v8550 = vunpack.c.l.s8.bf16 %v7662
        %v8551 = vunpack.c.l.s8.bf16 %v7663
        %v8552 = vunpack.c.l.s8.bf16 %v7664
        %v8553 = vunpack.c.l.s8.bf16 %v7665
        %v8554 = vunpack.c.l.s8.bf16 %v7666
        %v8555 = vunpack.c.l.s8.bf16 %v7667
        %v8556 = vunpack.c.h.s8.bf16 %v7660
        %v8557 = vunpack.c.h.s8.bf16 %v7661
        %v8558 = vunpack.c.h.s8.bf16 %v7662
        %v8559 = vunpack.c.h.s8.bf16 %v7663
        %v8560 = vunpack.c.h.s8.bf16 %v7664
        %v8561 = vunpack.c.h.s8.bf16 %v7665
        %v8562 = vunpack.c.h.s8.bf16 %v7666
        %v8563 = vunpack.c.h.s8.bf16 %v7667
        %v8564 = vunpack.c.l.s8.bf16 %v7668
        %v8565 = vunpack.c.l.s8.bf16 %v7669
        %v8566 = vunpack.c.l.s8.bf16 %v7670
        %v8567 = vunpack.c.l.s8.bf16 %v7671
        %v8568 = vunpack.c.l.s8.bf16 %v7672
        %v8569 = vunpack.c.l.s8.bf16 %v7673
        %v8570 = vunpack.c.l.s8.bf16 %v7674
        %v8571 = vunpack.c.l.s8.bf16 %v7675
        %v8572 = vunpack.c.h.s8.bf16 %v7668
        %v8573 = vunpack.c.h.s8.bf16 %v7669
        %v8574 = vunpack.c.h.s8.bf16 %v7670
        %v8575 = vunpack.c.h.s8.bf16 %v7671
        %v8576 = vunpack.c.h.s8.bf16 %v7672
        %v8577 = vunpack.c.h.s8.bf16 %v7673
        %v8578 = vunpack.c.h.s8.bf16 %v7674
        %v8579 = vunpack.c.h.s8.bf16 %v7675
        %v8580 = vunpack.c.l.s8.bf16 %v7676
        %v8581 = vunpack.c.l.s8.bf16 %v7677
        %v8582 = vunpack.c.l.s8.bf16 %v7678
        %v8583 = vunpack.c.l.s8.bf16 %v7679
        %v8584 = vunpack.c.l.s8.bf16 %v7680
        %v8585 = vunpack.c.l.s8.bf16 %v7681
        %v8586 = vunpack.c.l.s8.bf16 %v7682
        %v8587 = vunpack.c.l.s8.bf16 %v7683
        %v8588 = vunpack.c.h.s8.bf16 %v7676
        %v8589 = vunpack.c.h.s8.bf16 %v7677
        %v8590 = vunpack.c.h.s8.bf16 %v7678
        %v8591 = vunpack.c.h.s8.bf16 %v7679
        %v8592 = vunpack.c.h.s8.bf16 %v7680
        %v8593 = vunpack.c.h.s8.bf16 %v7681
        %v8594 = vunpack.c.h.s8.bf16 %v7682
        %v8595 = vunpack.c.h.s8.bf16 %v7683
        %v8596 = vunpack.c.l.s8.bf16 %v7684
        %v8597 = vunpack.c.l.s8.bf16 %v7685
        %v8598 = vunpack.c.l.s8.bf16 %v7686
        %v8599 = vunpack.c.l.s8.bf16 %v7687
        %v8600 = vunpack.c.l.s8.bf16 %v7688
        %v8601 = vunpack.c.l.s8.bf16 %v7689
        %v8602 = vunpack.c.l.s8.bf16 %v7690
        %v8603 = vunpack.c.l.s8.bf16 %v7691
        %v8604 = vunpack.c.h.s8.bf16 %v7684
        %v8605 = vunpack.c.h.s8.bf16 %v7685
        %v8606 = vunpack.c.h.s8.bf16 %v7686
        %v8607 = vunpack.c.h.s8.bf16 %v7687
        %v8608 = vunpack.c.h.s8.bf16 %v7688
        %v8609 = vunpack.c.h.s8.bf16 %v7689
        %v8610 = vunpack.c.h.s8.bf16 %v7690
        %v8611 = vunpack.c.h.s8.bf16 %v7691
        %v8612 = vunpack.c.l.s8.bf16 %v7692
        %v8613 = vunpack.c.l.s8.bf16 %v7693
        %v8614 = vunpack.c.l.s8.bf16 %v7694
        %v8615 = vunpack.c.l.s8.bf16 %v7695
        %v8616 = vunpack.c.l.s8.bf16 %v7696
        %v8617 = vunpack.c.l.s8.bf16 %v7697
        %v8618 = vunpack.c.l.s8.bf16 %v7698
        %v8619 = vunpack.c.l.s8.bf16 %v7699
        %v8620 = vunpack.c.h.s8.bf16 %v7692
        %v8621 = vunpack.c.h.s8.bf16 %v7693
        %v8622 = vunpack.c.h.s8.bf16 %v7694
        %v8623 = vunpack.c.h.s8.bf16 %v7695
        %v8624 = vunpack.c.h.s8.bf16 %v7696
        %v8625 = vunpack.c.h.s8.bf16 %v7697
        %v8626 = vunpack.c.h.s8.bf16 %v7698
        %v8627 = vunpack.c.h.s8.bf16 %v7699
        %v8628 = vunpack.c.l.s8.bf16 %v7700
        %v8629 = vunpack.c.l.s8.bf16 %v7701
        %v8630 = vunpack.c.l.s8.bf16 %v7702
        %v8631 = vunpack.c.l.s8.bf16 %v7703
        %v8632 = vunpack.c.l.s8.bf16 %v7704
        %v8633 = vunpack.c.l.s8.bf16 %v7705
        %v8634 = vunpack.c.l.s8.bf16 %v7706
        %v8635 = vunpack.c.l.s8.bf16 %v7707
        %v8636 = vunpack.c.h.s8.bf16 %v7700
        %v8637 = vunpack.c.h.s8.bf16 %v7701
        %v8638 = vunpack.c.h.s8.bf16 %v7702
        %v8639 = vunpack.c.h.s8.bf16 %v7703
        %v8640 = vunpack.c.h.s8.bf16 %v7704
        %v8641 = vunpack.c.h.s8.bf16 %v7705
        %v8642 = vunpack.c.h.s8.bf16 %v7706
        %v8643 = vunpack.c.h.s8.bf16 %v7707
        %v8644 = vunpack.c.l.s8.bf16 %v7708
        %v8645 = vunpack.c.l.s8.bf16 %v7709
        %v8646 = vunpack.c.l.s8.bf16 %v7710
        %v8647 = vunpack.c.l.s8.bf16 %v7711
        %v8648 = vunpack.c.l.s8.bf16 %v7712
        %v8649 = vunpack.c.l.s8.bf16 %v7713
        %v8650 = vunpack.c.l.s8.bf16 %v7714
        %v8651 = vunpack.c.l.s8.bf16 %v7715
        %v8652 = vunpack.c.h.s8.bf16 %v7708
        %v8653 = vunpack.c.h.s8.bf16 %v7709
        %v8654 = vunpack.c.h.s8.bf16 %v7710
        %v8655 = vunpack.c.h.s8.bf16 %v7711
        %v8656 = vunpack.c.h.s8.bf16 %v7712
        %v8657 = vunpack.c.h.s8.bf16 %v7713
        %v8658 = vunpack.c.h.s8.bf16 %v7714
        %v8659 = vunpack.c.h.s8.bf16 %v7715
        %v8660 = vunpack.c.l.s8.bf16 %v7716
        %v8661 = vunpack.c.l.s8.bf16 %v7717
        %v8662 = vunpack.c.l.s8.bf16 %v7718
        %v8663 = vunpack.c.l.s8.bf16 %v7719
        %v8664 = vunpack.c.l.s8.bf16 %v7720
        %v8665 = vunpack.c.l.s8.bf16 %v7721
        %v8666 = vunpack.c.l.s8.bf16 %v7722
        %v8667 = vunpack.c.l.s8.bf16 %v7723
        %v8668 = vunpack.c.h.s8.bf16 %v7716
        %v8669 = vunpack.c.h.s8.bf16 %v7717
        %v8670 = vunpack.c.h.s8.bf16 %v7718
        %v8671 = vunpack.c.h.s8.bf16 %v7719
        %v8672 = vunpack.c.h.s8.bf16 %v7720
        %v8673 = vunpack.c.h.s8.bf16 %v7721
        %v8674 = vunpack.c.h.s8.bf16 %v7722
        %v8675 = vunpack.c.h.s8.bf16 %v7723
        %v8676 = vunpack.c.l.s8.bf16 %v7724
        %v8677 = vunpack.c.l.s8.bf16 %v7725
        %v8678 = vunpack.c.l.s8.bf16 %v7726
        %v8679 = vunpack.c.l.s8.bf16 %v7727
        %v8680 = vunpack.c.l.s8.bf16 %v7728
        %v8681 = vunpack.c.l.s8.bf16 %v7729
        %v8682 = vunpack.c.l.s8.bf16 %v7730
        %v8683 = vunpack.c.l.s8.bf16 %v7731
        %v8684 = vunpack.c.h.s8.bf16 %v7724
        %v8685 = vunpack.c.h.s8.bf16 %v7725
        %v8686 = vunpack.c.h.s8.bf16 %v7726
        %v8687 = vunpack.c.h.s8.bf16 %v7727
        %v8688 = vunpack.c.h.s8.bf16 %v7728
        %v8689 = vunpack.c.h.s8.bf16 %v7729
        %v8690 = vunpack.c.h.s8.bf16 %v7730
        %v8691 = vunpack.c.h.s8.bf16 %v7731
        %v8692 = vunpack.c.l.s8.bf16 %v7732
        %v8693 = vunpack.c.l.s8.bf16 %v7733
        %v8694 = vunpack.c.l.s8.bf16 %v7734
        %v8695 = vunpack.c.l.s8.bf16 %v7735
        %v8696 = vunpack.c.l.s8.bf16 %v7736
        %v8697 = vunpack.c.l.s8.bf16 %v7737
        %v8698 = vunpack.c.l.s8.bf16 %v7738
        %v8699 = vunpack.c.l.s8.bf16 %v7739
        %v8700 = vunpack.c.h.s8.bf16 %v7732
        %v8701 = vunpack.c.h.s8.bf16 %v7733
        %v8702 = vunpack.c.h.s8.bf16 %v7734
        %v8703 = vunpack.c.h.s8.bf16 %v7735
        %v8704 = vunpack.c.h.s8.bf16 %v7736
        %v8705 = vunpack.c.h.s8.bf16 %v7737
        %v8706 = vunpack.c.h.s8.bf16 %v7738
        %v8707 = vunpack.c.h.s8.bf16 %v7739
        %v8708 = vunpack.c.l.s8.bf16 %v7740
        %v8709 = vunpack.c.l.s8.bf16 %v7741
        %v8710 = vunpack.c.l.s8.bf16 %v7742
        %v8711 = vunpack.c.l.s8.bf16 %v7743
        %v8712 = vunpack.c.l.s8.bf16 %v7744
        %v8713 = vunpack.c.l.s8.bf16 %v7745
        %v8714 = vunpack.c.l.s8.bf16 %v7746
        %v8715 = vunpack.c.l.s8.bf16 %v7747
        %v8716 = vunpack.c.h.s8.bf16 %v7740
        %v8717 = vunpack.c.h.s8.bf16 %v7741
        %v8718 = vunpack.c.h.s8.bf16 %v7742
        %v8719 = vunpack.c.h.s8.bf16 %v7743
        %v8720 = vunpack.c.h.s8.bf16 %v7744
        %v8721 = vunpack.c.h.s8.bf16 %v7745
        %v8722 = vunpack.c.h.s8.bf16 %v7746
        %v8723 = vunpack.c.h.s8.bf16 %v7747
        %v8724 = vunpack.c.l.s8.bf16 %v7748
        %v8725 = vunpack.c.l.s8.bf16 %v7749
        %v8726 = vunpack.c.l.s8.bf16 %v7750
        %v8727 = vunpack.c.l.s8.bf16 %v7751
        %v8728 = vunpack.c.l.s8.bf16 %v7752
        %v8729 = vunpack.c.l.s8.bf16 %v7753
        %v8730 = vunpack.c.l.s8.bf16 %v7754
        %v8731 = vunpack.c.l.s8.bf16 %v7755
        %v8732 = vunpack.c.h.s8.bf16 %v7748
        %v8733 = vunpack.c.h.s8.bf16 %v7749
        %v8734 = vunpack.c.h.s8.bf16 %v7750
        %v8735 = vunpack.c.h.s8.bf16 %v7751
        %v8736 = vunpack.c.h.s8.bf16 %v7752
        %v8737 = vunpack.c.h.s8.bf16 %v7753
        %v8738 = vunpack.c.h.s8.bf16 %v7754
        %v8739 = vunpack.c.h.s8.bf16 %v7755
        %v8740 = vunpack.c.l.s8.bf16 %v7756
        %v8741 = vunpack.c.l.s8.bf16 %v7757
        %v8742 = vunpack.c.l.s8.bf16 %v7758
        %v8743 = vunpack.c.l.s8.bf16 %v7759
        %v8744 = vunpack.c.l.s8.bf16 %v7760
        %v8745 = vunpack.c.l.s8.bf16 %v7761
        %v8746 = vunpack.c.l.s8.bf16 %v7762
        %v8747 = vunpack.c.l.s8.bf16 %v7763
        %v8748 = vunpack.c.h.s8.bf16 %v7756
        %v8749 = vunpack.c.h.s8.bf16 %v7757
        %v8750 = vunpack.c.h.s8.bf16 %v7758
        %v8751 = vunpack.c.h.s8.bf16 %v7759
        %v8752 = vunpack.c.h.s8.bf16 %v7760
        %v8753 = vunpack.c.h.s8.bf16 %v7761
        %v8754 = vunpack.c.h.s8.bf16 %v7762
        %v8755 = vunpack.c.h.s8.bf16 %v7763
        %v8756 = vunpack.c.l.s8.bf16 %v7764
        %v8757 = vunpack.c.l.s8.bf16 %v7765
        %v8758 = vunpack.c.l.s8.bf16 %v7766
        %v8759 = vunpack.c.l.s8.bf16 %v7767
        %v8760 = vunpack.c.l.s8.bf16 %v7768
        %v8761 = vunpack.c.l.s8.bf16 %v7769
        %v8762 = vunpack.c.l.s8.bf16 %v7770
        %v8763 = vunpack.c.l.s8.bf16 %v7771
        %v8764 = vunpack.c.h.s8.bf16 %v7764
        %v8765 = vunpack.c.h.s8.bf16 %v7765
        %v8766 = vunpack.c.h.s8.bf16 %v7766
        %v8767 = vunpack.c.h.s8.bf16 %v7767
        %v8768 = vunpack.c.h.s8.bf16 %v7768
        %v8769 = vunpack.c.h.s8.bf16 %v7769
        %v8770 = vunpack.c.h.s8.bf16 %v7770
        %v8771 = vunpack.c.h.s8.bf16 %v7771
        %v8772 = vunpack.c.l.s8.bf16 %v7772
        %v8773 = vunpack.c.l.s8.bf16 %v7773
        %v8774 = vunpack.c.l.s8.bf16 %v7774
        %v8775 = vunpack.c.l.s8.bf16 %v7775
        %v8776 = vunpack.c.l.s8.bf16 %v7776
        %v8777 = vunpack.c.l.s8.bf16 %v7777
        %v8778 = vunpack.c.l.s8.bf16 %v7778
        %v8779 = vunpack.c.l.s8.bf16 %v7779
        %v8780 = vunpack.c.h.s8.bf16 %v7772
        %v8781 = vunpack.c.h.s8.bf16 %v7773
        %v8782 = vunpack.c.h.s8.bf16 %v7774
        %v8783 = vunpack.c.h.s8.bf16 %v7775
        %v8784 = vunpack.c.h.s8.bf16 %v7776
        %v8785 = vunpack.c.h.s8.bf16 %v7777
        %v8786 = vunpack.c.h.s8.bf16 %v7778
        %v8787 = vunpack.c.h.s8.bf16 %v7779
        %v8788 = vunpack.c.l.s8.bf16 %v7780
        %v8789 = vunpack.c.l.s8.bf16 %v7781
        %v8790 = vunpack.c.l.s8.bf16 %v7782
        %v8791 = vunpack.c.l.s8.bf16 %v7783
        %v8792 = vunpack.c.l.s8.bf16 %v7784
        %v8793 = vunpack.c.l.s8.bf16 %v7785
        %v8794 = vunpack.c.l.s8.bf16 %v7786
        %v8795 = vunpack.c.l.s8.bf16 %v7787
        %v8796 = vunpack.c.h.s8.bf16 %v7780
        %v8797 = vunpack.c.h.s8.bf16 %v7781
        %v8798 = vunpack.c.h.s8.bf16 %v7782
        %v8799 = vunpack.c.h.s8.bf16 %v7783
        %v8800 = vunpack.c.h.s8.bf16 %v7784
        %v8801 = vunpack.c.h.s8.bf16 %v7785
        %v8802 = vunpack.c.h.s8.bf16 %v7786
        %v8803 = vunpack.c.h.s8.bf16 %v7787
        %v8804 = vunpack.c.l.s8.bf16 %v7788
        %v8805 = vunpack.c.l.s8.bf16 %v7789
        %v8806 = vunpack.c.l.s8.bf16 %v7790
        %v8807 = vunpack.c.l.s8.bf16 %v7791
        %v8808 = vunpack.c.l.s8.bf16 %v7792
        %v8809 = vunpack.c.l.s8.bf16 %v7793
        %v8810 = vunpack.c.l.s8.bf16 %v7794
        %v8811 = vunpack.c.l.s8.bf16 %v7795
        %v8812 = vunpack.c.h.s8.bf16 %v7788
        %v8813 = vunpack.c.h.s8.bf16 %v7789
        %v8814 = vunpack.c.h.s8.bf16 %v7790
        %v8815 = vunpack.c.h.s8.bf16 %v7791
        %v8816 = vunpack.c.h.s8.bf16 %v7792
        %v8817 = vunpack.c.h.s8.bf16 %v7793
        %v8818 = vunpack.c.h.s8.bf16 %v7794
        %v8819 = vunpack.c.h.s8.bf16 %v7795
        %v8820 = vpack.c.bf16 %v7252, %v7252
        %v8821 = vpack.c.bf16 %v7253, %v7253
        %v8822 = vpack.c.bf16 %v7254, %v7254
        %v8823 = vpack.c.bf16 %v7255, %v7255
        %v8824 = vpack.c.bf16 %v7256, %v7256
        %v8825 = vpack.c.bf16 %v7257, %v7257
        %v8826 = vpack.c.bf16 %v7258, %v7258
        %v8827 = vpack.c.bf16 %v7259, %v7259
        %v8828 = vpack.c.bf16 %v7260, %v7260
        %v8829 = vpack.c.bf16 %v7261, %v7261
        %v8830 = vpack.c.bf16 %v7262, %v7262
        %v8831 = vpack.c.bf16 %v7263, %v7263
        %v8832 = vpack.c.bf16 %v7264, %v7264
        %v8833 = vpack.c.bf16 %v7265, %v7265
        %v8834 = vpack.c.bf16 %v7266, %v7266
        %v8835 = vpack.c.bf16 %v7267, %v7267
        %v8836 = vpack.c.bf16 %v7268, %v7268
        %v8837 = vpack.c.bf16 %v7269, %v7269
        %v8838 = vpack.c.bf16 %v7270, %v7270
        %v8839 = vpack.c.bf16 %v7271, %v7271
        %v8840 = vpack.c.bf16 %v7272, %v7272
        %v8841 = vpack.c.bf16 %v7273, %v7273
        %v8842 = vpack.c.bf16 %v7274, %v7274
        %v8843 = vpack.c.bf16 %v7275, %v7275
        %v8844 = vpack.c.bf16 %v7276, %v7276
        %v8845 = vpack.c.bf16 %v7277, %v7277
        %v8846 = vpack.c.bf16 %v7278, %v7278
        %v8847 = vpack.c.bf16 %v7279, %v7279
        %v8848 = vpack.c.bf16 %v7280, %v7280
        %v8849 = vpack.c.bf16 %v7281, %v7281
        %v8850 = vpack.c.bf16 %v7282, %v7282
        %v8851 = vpack.c.bf16 %v7283, %v7283
        %v8884 = vunpack.c.l.b16 %v8820
        %v8885 = vunpack.c.l.b16 %v8821
        %v8886 = vunpack.c.l.b16 %v8822
        %v8887 = vunpack.c.l.b16 %v8823
        %v8888 = vunpack.c.l.b16 %v8824
        %v8889 = vunpack.c.l.b16 %v8825
        %v8890 = vunpack.c.l.b16 %v8826
        %v8891 = vunpack.c.l.b16 %v8827
        %v8892 = vunpack.c.l.b16 %v8828
        %v8893 = vunpack.c.l.b16 %v8829
        %v8894 = vunpack.c.l.b16 %v8830
        %v8895 = vunpack.c.l.b16 %v8831
        %v8896 = vunpack.c.l.b16 %v8832
        %v8897 = vunpack.c.l.b16 %v8833
        %v8898 = vunpack.c.l.b16 %v8834
        %v8899 = vunpack.c.l.b16 %v8835
        %v8900 = vunpack.c.l.b16 %v8836
        %v8901 = vunpack.c.l.b16 %v8837
        %v8902 = vunpack.c.l.b16 %v8838
        %v8903 = vunpack.c.l.b16 %v8839
        %v8904 = vunpack.c.l.b16 %v8840
        %v8905 = vunpack.c.l.b16 %v8841
        %v8906 = vunpack.c.l.b16 %v8842
        %v8907 = vunpack.c.l.b16 %v8843
        %v8908 = vunpack.c.l.b16 %v8844
        %v8909 = vunpack.c.l.b16 %v8845
        %v8910 = vunpack.c.l.b16 %v8846
        %v8911 = vunpack.c.l.b16 %v8847
        %v8912 = vunpack.c.l.b16 %v8848
        %v8913 = vunpack.c.l.b16 %v8849
        %v8914 = vunpack.c.l.b16 %v8850
        %v8915 = vunpack.c.l.b16 %v8851
        %v8916 = vrot.slane %v8900, 7
        %v8917 = vsel %vm2557, %v8916, %v8884
        %v8918 = vrot.slane %v8901, 7
        %v8919 = vsel %vm2557, %v8918, %v8885
        %v8920 = vrot.slane %v8902, 7
        %v8921 = vsel %vm2557, %v8920, %v8886
        %v8922 = vrot.slane %v8903, 7
        %v8923 = vsel %vm2557, %v8922, %v8887
        %v8924 = vrot.slane %v8904, 7
        %v8925 = vsel %vm2557, %v8924, %v8888
        %v8926 = vrot.slane %v8905, 7
        %v8927 = vsel %vm2557, %v8926, %v8889
        %v8928 = vrot.slane %v8906, 7
        %v8929 = vsel %vm2557, %v8928, %v8890
        %v8930 = vrot.slane %v8907, 7
        %v8931 = vsel %vm2557, %v8930, %v8891
        %v8932 = vrot.slane %v8908, 7
        %v8933 = vsel %vm2557, %v8932, %v8892
        %v8934 = vrot.slane %v8909, 7
        %v8935 = vsel %vm2557, %v8934, %v8893
        %v8936 = vrot.slane %v8910, 7
        %v8937 = vsel %vm2557, %v8936, %v8894
        %v8938 = vrot.slane %v8911, 7
        %v8939 = vsel %vm2557, %v8938, %v8895
        %v8940 = vrot.slane %v8912, 7
        %v8941 = vsel %vm2557, %v8940, %v8896
        %v8942 = vrot.slane %v8913, 7
        %v8943 = vsel %vm2557, %v8942, %v8897
        %v8944 = vrot.slane %v8914, 7
        %v8945 = vsel %vm2557, %v8944, %v8898
        %v8946 = vrot.slane %v8915, 7
        %v8947 = vsel %vm2557, %v8946, %v8899
        %v8948 = vpack.c.b16 %v8917, %v8917
        %v8949 = vpack.c.b16 %v8919, %v8919
        %v8950 = vpack.c.b16 %v8921, %v8921
        %v8951 = vpack.c.b16 %v8923, %v8923
        %v8952 = vpack.c.b16 %v8925, %v8925
        %v8953 = vpack.c.b16 %v8927, %v8927
        %v8954 = vpack.c.b16 %v8929, %v8929
        %v8955 = vpack.c.b16 %v8931, %v8931
        %v8956 = vpack.c.b16 %v8933, %v8933
        %v8957 = vpack.c.b16 %v8935, %v8935
        %v8958 = vpack.c.b16 %v8937, %v8937
        %v8959 = vpack.c.b16 %v8939, %v8939
        %v8960 = vpack.c.b16 %v8941, %v8941
        %v8961 = vpack.c.b16 %v8943, %v8943
        %v8962 = vpack.c.b16 %v8945, %v8945
        %v8963 = vpack.c.b16 %v8947, %v8947
        %8980 = vmatprep.subr.bf16.mxu0 %v7853
        %8981 = vmatpush1.bf16.msra.mxu0 %v7852
        %8982 = vmatprep.subr.bf16.mxu0 %v7845
        %8983 = vmatpush1.bf16.msra.mxu0 %v7844
        %8984 = vmatprep.subr.bf16.mxu0 %v7837
        %8985 = vmatpush1.bf16.msra.mxu0 %v7836
        %8986 = vmatprep.subr.bf16.mxu0 %v7829
        %8987 = vmatpush1.bf16.msra.mxu0 %v7828
        %8988 = vmatprep.subr.bf16.mxu0 %v7821
        %8989 = vmatpush1.bf16.msra.mxu0 %v7820
        %8990 = vmatprep.subr.bf16.mxu0 %v7813
        %8991 = vmatpush1.bf16.msra.mxu0 %v7812
        %8992 = vmatprep.subr.bf16.mxu0 %v7805
        %8993 = vmatpush1.bf16.msra.mxu0 %v7804
        %8994 = vmatprep.subr.bf16.mxu0 %v7797
        %8995 = vmatpush1.bf16.msra.mxu0 %v7796
        %8996 = vmatprep.subr.bf16.mxu0 %v7917
        %8997 = vmatpush2.bf16.msra.mxu0 %v7916
        %8998 = vmatprep.subr.bf16.mxu0 %v7909
        %8999 = vmatpush2.bf16.msra.mxu0 %v7908
        %9000 = vmatprep.subr.bf16.mxu0 %v7901
        %9001 = vmatpush2.bf16.msra.mxu0 %v7900
        %9002 = vmatprep.subr.bf16.mxu0 %v7893
        %9003 = vmatpush2.bf16.msra.mxu0 %v7892
        %9004 = vmatprep.subr.bf16.mxu0 %v7885
        %9005 = vmatpush2.bf16.msra.mxu0 %v7884
        %9006 = vmatprep.subr.bf16.mxu0 %v7877
        %9007 = vmatpush2.bf16.msra.mxu0 %v7876
        %9008 = vmatprep.subr.bf16.mxu0 %v7869
        %9009 = vmatpush2.bf16.msra.mxu0 %v7868
        %9010 = vmatprep.subr.bf16.mxu0 %v7861
        %9011 = vmatpush2.bf16.msra.mxu0 %v7860
        %9012 = vmatprep.mubr.bf16.mxu0 %v8949
        %9013 = vmatmul.mubr.bf16.gmra.mxu0 %v8948
        %v9014 = vpop.f32.mrf.mxu0
        %v9015 = vadd.f32 0.0, %v9014
        %v9016 = vpop.f32.mrf.mxu0
        %v9017 = vadd.f32 0.0, %v9016
        %v9018 = vpop.f32.mrf.mxu0
        %v9019 = vpop.f32.mrf.mxu0
        %9020 = vdwg.mxu0
        %9021 = vmatprep.subr.bf16.mxu0 %v7981
        %9022 = vmatpush1.bf16.msra.mxu0 %v7980
        %9023 = vmatprep.subr.bf16.mxu0 %v7973
        %9024 = vmatpush1.bf16.msra.mxu0 %v7972
        %9025 = vmatprep.subr.bf16.mxu0 %v7965
        %9026 = vmatpush1.bf16.msra.mxu0 %v7964
        %9027 = vmatprep.subr.bf16.mxu0 %v7957
        %9028 = vmatpush1.bf16.msra.mxu0 %v7956
        %9029 = vmatprep.subr.bf16.mxu0 %v7949
        %9030 = vmatpush1.bf16.msra.mxu0 %v7948
        %9031 = vmatprep.subr.bf16.mxu0 %v7941
        %9032 = vmatpush1.bf16.msra.mxu0 %v7940
        %9033 = vmatprep.subr.bf16.mxu0 %v7933
        %9034 = vmatpush1.bf16.msra.mxu0 %v7932
        %9035 = vmatprep.subr.bf16.mxu0 %v7925
        %9036 = vmatpush1.bf16.msra.mxu0 %v7924
        %9037 = vmatprep.subr.bf16.mxu0 %v8045
        %9038 = vmatpush2.bf16.msra.mxu0 %v8044
        %9039 = vmatprep.subr.bf16.mxu0 %v8037
        %9040 = vmatpush2.bf16.msra.mxu0 %v8036
        %9041 = vmatprep.subr.bf16.mxu0 %v8029
        %9042 = vmatpush2.bf16.msra.mxu0 %v8028
        %9043 = vmatprep.subr.bf16.mxu0 %v8021
        %9044 = vmatpush2.bf16.msra.mxu0 %v8020
        %9045 = vmatprep.subr.bf16.mxu0 %v8013
        %9046 = vmatpush2.bf16.msra.mxu0 %v8012
        %9047 = vmatprep.subr.bf16.mxu0 %v8005
        %9048 = vmatpush2.bf16.msra.mxu0 %v8004
        %9049 = vmatprep.subr.bf16.mxu0 %v7997
        %9050 = vmatpush2.bf16.msra.mxu0 %v7996
        %9051 = vmatprep.subr.bf16.mxu0 %v7989
        %9052 = vmatpush2.bf16.msra.mxu0 %v7988
        %9053 = vmatprep.mubr.bf16.mxu0 %v8951
        %9054 = vmatmul.mubr.bf16.gmra.mxu0 %v8950
        %v9055 = vpop.f32.mrf.mxu0
        %v9056 = vadd.f32 %v9015, %v9055
        %v9057 = vpop.f32.mrf.mxu0
        %v9058 = vadd.f32 %v9017, %v9057
        %v9059 = vpop.f32.mrf.mxu0
        %v9060 = vpop.f32.mrf.mxu0
        %9061 = vdwg.mxu0
        %9062 = vmatprep.subr.bf16.mxu0 %v8109
        %9063 = vmatpush1.bf16.msra.mxu0 %v8108
        %9064 = vmatprep.subr.bf16.mxu0 %v8101
        %9065 = vmatpush1.bf16.msra.mxu0 %v8100
        %9066 = vmatprep.subr.bf16.mxu0 %v8093
        %9067 = vmatpush1.bf16.msra.mxu0 %v8092
        %9068 = vmatprep.subr.bf16.mxu0 %v8085
        %9069 = vmatpush1.bf16.msra.mxu0 %v8084
        %9070 = vmatprep.subr.bf16.mxu0 %v8077
        %9071 = vmatpush1.bf16.msra.mxu0 %v8076
        %9072 = vmatprep.subr.bf16.mxu0 %v8069
        %9073 = vmatpush1.bf16.msra.mxu0 %v8068
        %9074 = vmatprep.subr.bf16.mxu0 %v8061
        %9075 = vmatpush1.bf16.msra.mxu0 %v8060
        %9076 = vmatprep.subr.bf16.mxu0 %v8053
        %9077 = vmatpush1.bf16.msra.mxu0 %v8052
        %9078 = vmatprep.subr.bf16.mxu0 %v8173
        %9079 = vmatpush2.bf16.msra.mxu0 %v8172
        %9080 = vmatprep.subr.bf16.mxu0 %v8165
        %9081 = vmatpush2.bf16.msra.mxu0 %v8164
        %9082 = vmatprep.subr.bf16.mxu0 %v8157
        %9083 = vmatpush2.bf16.msra.mxu0 %v8156
        %9084 = vmatprep.subr.bf16.mxu0 %v8149
        %9085 = vmatpush2.bf16.msra.mxu0 %v8148
        %9086 = vmatprep.subr.bf16.mxu0 %v8141
        %9087 = vmatpush2.bf16.msra.mxu0 %v8140
        %9088 = vmatprep.subr.bf16.mxu0 %v8133
        %9089 = vmatpush2.bf16.msra.mxu0 %v8132
        %9090 = vmatprep.subr.bf16.mxu0 %v8125
        %9091 = vmatpush2.bf16.msra.mxu0 %v8124
        %9092 = vmatprep.subr.bf16.mxu0 %v8117
        %9093 = vmatpush2.bf16.msra.mxu0 %v8116
        %9094 = vmatprep.mubr.bf16.mxu0 %v8953
        %9095 = vmatmul.mubr.bf16.gmra.mxu0 %v8952
        %v9096 = vpop.f32.mrf.mxu0
        %v9097 = vadd.f32 %v9056, %v9096
        %v9098 = vpop.f32.mrf.mxu0
        %v9099 = vadd.f32 %v9058, %v9098
        %v9100 = vpop.f32.mrf.mxu0
        %v9101 = vpop.f32.mrf.mxu0
        %9102 = vdwg.mxu0
        %9103 = vmatprep.subr.bf16.mxu0 %v8237
        %9104 = vmatpush1.bf16.msra.mxu0 %v8236
        %9105 = vmatprep.subr.bf16.mxu0 %v8229
        %9106 = vmatpush1.bf16.msra.mxu0 %v8228
        %9107 = vmatprep.subr.bf16.mxu0 %v8221
        %9108 = vmatpush1.bf16.msra.mxu0 %v8220
        %9109 = vmatprep.subr.bf16.mxu0 %v8213
        %9110 = vmatpush1.bf16.msra.mxu0 %v8212
        %9111 = vmatprep.subr.bf16.mxu0 %v8205
        %9112 = vmatpush1.bf16.msra.mxu0 %v8204
        %9113 = vmatprep.subr.bf16.mxu0 %v8197
        %9114 = vmatpush1.bf16.msra.mxu0 %v8196
        %9115 = vmatprep.subr.bf16.mxu0 %v8189
        %9116 = vmatpush1.bf16.msra.mxu0 %v8188
        %9117 = vmatprep.subr.bf16.mxu0 %v8181
        %9118 = vmatpush1.bf16.msra.mxu0 %v8180
        %9119 = vmatprep.subr.bf16.mxu0 %v8301
        %9120 = vmatpush2.bf16.msra.mxu0 %v8300
        %9121 = vmatprep.subr.bf16.mxu0 %v8293
        %9122 = vmatpush2.bf16.msra.mxu0 %v8292
        %9123 = vmatprep.subr.bf16.mxu0 %v8285
        %9124 = vmatpush2.bf16.msra.mxu0 %v8284
        %9125 = vmatprep.subr.bf16.mxu0 %v8277
        %9126 = vmatpush2.bf16.msra.mxu0 %v8276
        %9127 = vmatprep.subr.bf16.mxu0 %v8269
        %9128 = vmatpush2.bf16.msra.mxu0 %v8268
        %9129 = vmatprep.subr.bf16.mxu0 %v8261
        %9130 = vmatpush2.bf16.msra.mxu0 %v8260
        %9131 = vmatprep.subr.bf16.mxu0 %v8253
        %9132 = vmatpush2.bf16.msra.mxu0 %v8252
        %9133 = vmatprep.subr.bf16.mxu0 %v8245
        %9134 = vmatpush2.bf16.msra.mxu0 %v8244
        %9135 = vmatprep.mubr.bf16.mxu0 %v8955
        %9136 = vmatmul.mubr.bf16.gmra.mxu0 %v8954
        %v9137 = vpop.f32.mrf.mxu0
        %v9138 = vadd.f32 %v9097, %v9137
        %v9139 = vpop.f32.mrf.mxu0
        %v9140 = vadd.f32 %v9099, %v9139
        %v9141 = vpop.f32.mrf.mxu0
        %v9142 = vpop.f32.mrf.mxu0
        %9143 = vdwg.mxu0
        %9144 = vmatprep.subr.bf16.mxu0 %v8365
        %9145 = vmatpush1.bf16.msra.mxu0 %v8364
        %9146 = vmatprep.subr.bf16.mxu0 %v8357
        %9147 = vmatpush1.bf16.msra.mxu0 %v8356
        %9148 = vmatprep.subr.bf16.mxu0 %v8349
        %9149 = vmatpush1.bf16.msra.mxu0 %v8348
        %9150 = vmatprep.subr.bf16.mxu0 %v8341
        %9151 = vmatpush1.bf16.msra.mxu0 %v8340
        %9152 = vmatprep.subr.bf16.mxu0 %v8333
        %9153 = vmatpush1.bf16.msra.mxu0 %v8332
        %9154 = vmatprep.subr.bf16.mxu0 %v8325
        %9155 = vmatpush1.bf16.msra.mxu0 %v8324
        %9156 = vmatprep.subr.bf16.mxu0 %v8317
        %9157 = vmatpush1.bf16.msra.mxu0 %v8316
        %9158 = vmatprep.subr.bf16.mxu0 %v8309
        %9159 = vmatpush1.bf16.msra.mxu0 %v8308
        %9160 = vmatprep.subr.bf16.mxu0 %v8429
        %9161 = vmatpush2.bf16.msra.mxu0 %v8428
        %9162 = vmatprep.subr.bf16.mxu0 %v8421
        %9163 = vmatpush2.bf16.msra.mxu0 %v8420
        %9164 = vmatprep.subr.bf16.mxu0 %v8413
        %9165 = vmatpush2.bf16.msra.mxu0 %v8412
        %9166 = vmatprep.subr.bf16.mxu0 %v8405
        %9167 = vmatpush2.bf16.msra.mxu0 %v8404
        %9168 = vmatprep.subr.bf16.mxu0 %v8397
        %9169 = vmatpush2.bf16.msra.mxu0 %v8396
        %9170 = vmatprep.subr.bf16.mxu0 %v8389
        %9171 = vmatpush2.bf16.msra.mxu0 %v8388
        %9172 = vmatprep.subr.bf16.mxu0 %v8381
        %9173 = vmatpush2.bf16.msra.mxu0 %v8380
        %9174 = vmatprep.subr.bf16.mxu0 %v8373
        %9175 = vmatpush2.bf16.msra.mxu0 %v8372
        %9176 = vmatprep.mubr.bf16.mxu0 %v8957
        %9177 = vmatmul.mubr.bf16.gmra.mxu0 %v8956
        %v9178 = vpop.f32.mrf.mxu0
        %v9179 = vadd.f32 %v9138, %v9178
        %v9180 = vpop.f32.mrf.mxu0
        %v9181 = vadd.f32 %v9140, %v9180
        %v9182 = vpop.f32.mrf.mxu0
        %v9183 = vpop.f32.mrf.mxu0
        %9184 = vdwg.mxu0
        %9185 = vmatprep.subr.bf16.mxu0 %v8493
        %9186 = vmatpush1.bf16.msra.mxu0 %v8492
        %9187 = vmatprep.subr.bf16.mxu0 %v8485
        %9188 = vmatpush1.bf16.msra.mxu0 %v8484
        %9189 = vmatprep.subr.bf16.mxu0 %v8477
        %9190 = vmatpush1.bf16.msra.mxu0 %v8476
        %9191 = vmatprep.subr.bf16.mxu0 %v8469
        %9192 = vmatpush1.bf16.msra.mxu0 %v8468
        %9193 = vmatprep.subr.bf16.mxu0 %v8461
        %9194 = vmatpush1.bf16.msra.mxu0 %v8460
        %9195 = vmatprep.subr.bf16.mxu0 %v8453
        %9196 = vmatpush1.bf16.msra.mxu0 %v8452
        %9197 = vmatprep.subr.bf16.mxu0 %v8445
        %9198 = vmatpush1.bf16.msra.mxu0 %v8444
        %9199 = vmatprep.subr.bf16.mxu0 %v8437
        %9200 = vmatpush1.bf16.msra.mxu0 %v8436
        %9201 = vmatprep.subr.bf16.mxu0 %v8557
        %9202 = vmatpush2.bf16.msra.mxu0 %v8556
        %9203 = vmatprep.subr.bf16.mxu0 %v8549
        %9204 = vmatpush2.bf16.msra.mxu0 %v8548
        %9205 = vmatprep.subr.bf16.mxu0 %v8541
        %9206 = vmatpush2.bf16.msra.mxu0 %v8540
        %9207 = vmatprep.subr.bf16.mxu0 %v8533
        %9208 = vmatpush2.bf16.msra.mxu0 %v8532
        %9209 = vmatprep.subr.bf16.mxu0 %v8525
        %9210 = vmatpush2.bf16.msra.mxu0 %v8524
        %9211 = vmatprep.subr.bf16.mxu0 %v8517
        %9212 = vmatpush2.bf16.msra.mxu0 %v8516
        %9213 = vmatprep.subr.bf16.mxu0 %v8509
        %9214 = vmatpush2.bf16.msra.mxu0 %v8508
        %9215 = vmatprep.subr.bf16.mxu0 %v8501
        %9216 = vmatpush2.bf16.msra.mxu0 %v8500
        %9217 = vmatprep.mubr.bf16.mxu0 %v8959
        %9218 = vmatmul.mubr.bf16.gmra.mxu0 %v8958
        %v9219 = vpop.f32.mrf.mxu0
        %v9220 = vadd.f32 %v9179, %v9219
        %v9221 = vpop.f32.mrf.mxu0
        %v9222 = vadd.f32 %v9181, %v9221
        %v9223 = vpop.f32.mrf.mxu0
        %v9224 = vpop.f32.mrf.mxu0
        %9225 = vdwg.mxu0
        %9226 = vmatprep.subr.bf16.mxu0 %v8621
        %9227 = vmatpush1.bf16.msra.mxu0 %v8620
        %9228 = vmatprep.subr.bf16.mxu0 %v8613
        %9229 = vmatpush1.bf16.msra.mxu0 %v8612
        %9230 = vmatprep.subr.bf16.mxu0 %v8605
        %9231 = vmatpush1.bf16.msra.mxu0 %v8604
        %9232 = vmatprep.subr.bf16.mxu0 %v8597
        %9233 = vmatpush1.bf16.msra.mxu0 %v8596
        %9234 = vmatprep.subr.bf16.mxu0 %v8589
        %9235 = vmatpush1.bf16.msra.mxu0 %v8588
        %9236 = vmatprep.subr.bf16.mxu0 %v8581
        %9237 = vmatpush1.bf16.msra.mxu0 %v8580
        %9238 = vmatprep.subr.bf16.mxu0 %v8573
        %9239 = vmatpush1.bf16.msra.mxu0 %v8572
        %9240 = vmatprep.subr.bf16.mxu0 %v8565
        %9241 = vmatpush1.bf16.msra.mxu0 %v8564
        %9242 = vmatprep.subr.bf16.mxu0 %v8685
        %9243 = vmatpush2.bf16.msra.mxu0 %v8684
        %9244 = vmatprep.subr.bf16.mxu0 %v8677
        %9245 = vmatpush2.bf16.msra.mxu0 %v8676
        %9246 = vmatprep.subr.bf16.mxu0 %v8669
        %9247 = vmatpush2.bf16.msra.mxu0 %v8668
        %9248 = vmatprep.subr.bf16.mxu0 %v8661
        %9249 = vmatpush2.bf16.msra.mxu0 %v8660
        %9250 = vmatprep.subr.bf16.mxu0 %v8653
        %9251 = vmatpush2.bf16.msra.mxu0 %v8652
        %9252 = vmatprep.subr.bf16.mxu0 %v8645
        %9253 = vmatpush2.bf16.msra.mxu0 %v8644
        %9254 = vmatprep.subr.bf16.mxu0 %v8637
        %9255 = vmatpush2.bf16.msra.mxu0 %v8636
        %9256 = vmatprep.subr.bf16.mxu0 %v8629
        %9257 = vmatpush2.bf16.msra.mxu0 %v8628
        %9258 = vmatprep.mubr.bf16.mxu0 %v8961
        %9259 = vmatmul.mubr.bf16.gmra.mxu0 %v8960
        %v9260 = vpop.f32.mrf.mxu0
        %v9261 = vadd.f32 %v9220, %v9260
        %v9262 = vpop.f32.mrf.mxu0
        %v9263 = vadd.f32 %v9222, %v9262
        %v9264 = vpop.f32.mrf.mxu0
        %v9265 = vpop.f32.mrf.mxu0
        %9266 = vdwg.mxu0
        %9267 = vmatprep.subr.bf16.mxu0 %v8749
        %9268 = vmatpush1.bf16.msra.mxu0 %v8748
        %9269 = vmatprep.subr.bf16.mxu0 %v8741
        %9270 = vmatpush1.bf16.msra.mxu0 %v8740
        %9271 = vmatprep.subr.bf16.mxu0 %v8733
        %9272 = vmatpush1.bf16.msra.mxu0 %v8732
        %9273 = vmatprep.subr.bf16.mxu0 %v8725
        %9274 = vmatpush1.bf16.msra.mxu0 %v8724
        %9275 = vmatprep.subr.bf16.mxu0 %v8717
        %9276 = vmatpush1.bf16.msra.mxu0 %v8716
        %9277 = vmatprep.subr.bf16.mxu0 %v8709
        %9278 = vmatpush1.bf16.msra.mxu0 %v8708
        %9279 = vmatprep.subr.bf16.mxu0 %v8701
        %9280 = vmatpush1.bf16.msra.mxu0 %v8700
        %9281 = vmatprep.subr.bf16.mxu0 %v8693
        %9282 = vmatpush1.bf16.msra.mxu0 %v8692
        %9283 = vmatprep.subr.bf16.mxu0 %v8813
        %9284 = vmatpush2.bf16.msra.mxu0 %v8812
        %9285 = vmatprep.subr.bf16.mxu0 %v8805
        %9286 = vmatpush2.bf16.msra.mxu0 %v8804
        %9287 = vmatprep.subr.bf16.mxu0 %v8797
        %9288 = vmatpush2.bf16.msra.mxu0 %v8796
        %9289 = vmatprep.subr.bf16.mxu0 %v8789
        %9290 = vmatpush2.bf16.msra.mxu0 %v8788
        %9291 = vmatprep.subr.bf16.mxu0 %v8781
        %9292 = vmatpush2.bf16.msra.mxu0 %v8780
        %9293 = vmatprep.subr.bf16.mxu0 %v8773
        %9294 = vmatpush2.bf16.msra.mxu0 %v8772
        %9295 = vmatprep.subr.bf16.mxu0 %v8765
        %9296 = vmatpush2.bf16.msra.mxu0 %v8764
        %9297 = vmatprep.subr.bf16.mxu0 %v8757
        %9298 = vmatpush2.bf16.msra.mxu0 %v8756
        %9299 = vmatprep.mubr.bf16.mxu0 %v8963
        %9300 = vmatmul.mubr.bf16.gmra.mxu0 %v8962
        %v9301 = vpop.f32.mrf.mxu0
        %v9302 = vadd.f32 %v9261, %v9301
        %v9303 = vpop.f32.mrf.mxu0
        %v9304 = vadd.f32 %v9263, %v9303
        %v9305 = vpop.f32.mrf.mxu0
        %v9306 = vpop.f32.mrf.mxu0
        %9307 = vdwg.mxu0
        %9308 = vmatprep.subr.bf16.mxu0 %v7855
        %9309 = vmatpush1.bf16.msra.mxu0 %v7854
        %9310 = vmatprep.subr.bf16.mxu0 %v7847
        %9311 = vmatpush1.bf16.msra.mxu0 %v7846
        %9312 = vmatprep.subr.bf16.mxu0 %v7839
        %9313 = vmatpush1.bf16.msra.mxu0 %v7838
        %9314 = vmatprep.subr.bf16.mxu0 %v7831
        %9315 = vmatpush1.bf16.msra.mxu0 %v7830
        %9316 = vmatprep.subr.bf16.mxu0 %v7823
        %9317 = vmatpush1.bf16.msra.mxu0 %v7822
        %9318 = vmatprep.subr.bf16.mxu0 %v7815
        %9319 = vmatpush1.bf16.msra.mxu0 %v7814
        %9320 = vmatprep.subr.bf16.mxu0 %v7807
        %9321 = vmatpush1.bf16.msra.mxu0 %v7806
        %9322 = vmatprep.subr.bf16.mxu0 %v7799
        %9323 = vmatpush1.bf16.msra.mxu0 %v7798
        %9324 = vmatprep.subr.bf16.mxu0 %v7919
        %9325 = vmatpush2.bf16.msra.mxu0 %v7918
        %9326 = vmatprep.subr.bf16.mxu0 %v7911
        %9327 = vmatpush2.bf16.msra.mxu0 %v7910
        %9328 = vmatprep.subr.bf16.mxu0 %v7903
        %9329 = vmatpush2.bf16.msra.mxu0 %v7902
        %9330 = vmatprep.subr.bf16.mxu0 %v7895
        %9331 = vmatpush2.bf16.msra.mxu0 %v7894
        %9332 = vmatprep.subr.bf16.mxu0 %v7887
        %9333 = vmatpush2.bf16.msra.mxu0 %v7886
        %9334 = vmatprep.subr.bf16.mxu0 %v7879
        %9335 = vmatpush2.bf16.msra.mxu0 %v7878
        %9336 = vmatprep.subr.bf16.mxu0 %v7871
        %9337 = vmatpush2.bf16.msra.mxu0 %v7870
        %9338 = vmatprep.subr.bf16.mxu0 %v7863
        %9339 = vmatpush2.bf16.msra.mxu0 %v7862
        %9340 = vmatprep.mubr.bf16.mxu0 %v8949
        %9341 = vmatmul.mubr.bf16.gmra.mxu0 %v8948
        %v9342 = vpop.f32.mrf.mxu0
        %v9343 = vadd.f32 0.0, %v9342
        %v9344 = vpop.f32.mrf.mxu0
        %v9345 = vadd.f32 0.0, %v9344
        %v9346 = vpop.f32.mrf.mxu0
        %v9347 = vpop.f32.mrf.mxu0
        %9348 = vdwg.mxu0
        %9349 = vmatprep.subr.bf16.mxu0 %v7983
        %9350 = vmatpush1.bf16.msra.mxu0 %v7982
        %9351 = vmatprep.subr.bf16.mxu0 %v7975
        %9352 = vmatpush1.bf16.msra.mxu0 %v7974
        %9353 = vmatprep.subr.bf16.mxu0 %v7967
        %9354 = vmatpush1.bf16.msra.mxu0 %v7966
        %9355 = vmatprep.subr.bf16.mxu0 %v7959
        %9356 = vmatpush1.bf16.msra.mxu0 %v7958
        %9357 = vmatprep.subr.bf16.mxu0 %v7951
        %9358 = vmatpush1.bf16.msra.mxu0 %v7950
        %9359 = vmatprep.subr.bf16.mxu0 %v7943
        %9360 = vmatpush1.bf16.msra.mxu0 %v7942
        %9361 = vmatprep.subr.bf16.mxu0 %v7935
        %9362 = vmatpush1.bf16.msra.mxu0 %v7934
        %9363 = vmatprep.subr.bf16.mxu0 %v7927
        %9364 = vmatpush1.bf16.msra.mxu0 %v7926
        %9365 = vmatprep.subr.bf16.mxu0 %v8047
        %9366 = vmatpush2.bf16.msra.mxu0 %v8046
        %9367 = vmatprep.subr.bf16.mxu0 %v8039
        %9368 = vmatpush2.bf16.msra.mxu0 %v8038
        %9369 = vmatprep.subr.bf16.mxu0 %v8031
        %9370 = vmatpush2.bf16.msra.mxu0 %v8030
        %9371 = vmatprep.subr.bf16.mxu0 %v8023
        %9372 = vmatpush2.bf16.msra.mxu0 %v8022
        %9373 = vmatprep.subr.bf16.mxu0 %v8015
        %9374 = vmatpush2.bf16.msra.mxu0 %v8014
        %9375 = vmatprep.subr.bf16.mxu0 %v8007
        %9376 = vmatpush2.bf16.msra.mxu0 %v8006
        %9377 = vmatprep.subr.bf16.mxu0 %v7999
        %9378 = vmatpush2.bf16.msra.mxu0 %v7998
        %9379 = vmatprep.subr.bf16.mxu0 %v7991
        %9380 = vmatpush2.bf16.msra.mxu0 %v7990
        %9381 = vmatprep.mubr.bf16.mxu0 %v8951
        %9382 = vmatmul.mubr.bf16.gmra.mxu0 %v8950
        %v9383 = vpop.f32.mrf.mxu0
        %v9384 = vadd.f32 %v9343, %v9383
        %v9385 = vpop.f32.mrf.mxu0
        %v9386 = vadd.f32 %v9345, %v9385
        %v9387 = vpop.f32.mrf.mxu0
        %v9388 = vpop.f32.mrf.mxu0
        %9389 = vdwg.mxu0
        %9390 = vmatprep.subr.bf16.mxu0 %v8111
        %9391 = vmatpush1.bf16.msra.mxu0 %v8110
        %9392 = vmatprep.subr.bf16.mxu0 %v8103
        %9393 = vmatpush1.bf16.msra.mxu0 %v8102
        %9394 = vmatprep.subr.bf16.mxu0 %v8095
        %9395 = vmatpush1.bf16.msra.mxu0 %v8094
        %9396 = vmatprep.subr.bf16.mxu0 %v8087
        %9397 = vmatpush1.bf16.msra.mxu0 %v8086
        %9398 = vmatprep.subr.bf16.mxu0 %v8079
        %9399 = vmatpush1.bf16.msra.mxu0 %v8078
        %9400 = vmatprep.subr.bf16.mxu0 %v8071
        %9401 = vmatpush1.bf16.msra.mxu0 %v8070
        %9402 = vmatprep.subr.bf16.mxu0 %v8063
        %9403 = vmatpush1.bf16.msra.mxu0 %v8062
        %9404 = vmatprep.subr.bf16.mxu0 %v8055
        %9405 = vmatpush1.bf16.msra.mxu0 %v8054
        %9406 = vmatprep.subr.bf16.mxu0 %v8175
        %9407 = vmatpush2.bf16.msra.mxu0 %v8174
        %9408 = vmatprep.subr.bf16.mxu0 %v8167
        %9409 = vmatpush2.bf16.msra.mxu0 %v8166
        %9410 = vmatprep.subr.bf16.mxu0 %v8159
        %9411 = vmatpush2.bf16.msra.mxu0 %v8158
        %9412 = vmatprep.subr.bf16.mxu0 %v8151
        %9413 = vmatpush2.bf16.msra.mxu0 %v8150
        %9414 = vmatprep.subr.bf16.mxu0 %v8143
        %9415 = vmatpush2.bf16.msra.mxu0 %v8142
        %9416 = vmatprep.subr.bf16.mxu0 %v8135
        %9417 = vmatpush2.bf16.msra.mxu0 %v8134
        %9418 = vmatprep.subr.bf16.mxu0 %v8127
        %9419 = vmatpush2.bf16.msra.mxu0 %v8126
        %9420 = vmatprep.subr.bf16.mxu0 %v8119
        %9421 = vmatpush2.bf16.msra.mxu0 %v8118
        %9422 = vmatprep.mubr.bf16.mxu0 %v8953
        %9423 = vmatmul.mubr.bf16.gmra.mxu0 %v8952
        %v9424 = vpop.f32.mrf.mxu0
        %v9425 = vadd.f32 %v9384, %v9424
        %v9426 = vpop.f32.mrf.mxu0
        %v9427 = vadd.f32 %v9386, %v9426
        %v9428 = vpop.f32.mrf.mxu0
        %v9429 = vpop.f32.mrf.mxu0
        %9430 = vdwg.mxu0
        %9431 = vmatprep.subr.bf16.mxu0 %v8239
        %9432 = vmatpush1.bf16.msra.mxu0 %v8238
        %9433 = vmatprep.subr.bf16.mxu0 %v8231
        %9434 = vmatpush1.bf16.msra.mxu0 %v8230
        %9435 = vmatprep.subr.bf16.mxu0 %v8223
        %9436 = vmatpush1.bf16.msra.mxu0 %v8222
        %9437 = vmatprep.subr.bf16.mxu0 %v8215
        %9438 = vmatpush1.bf16.msra.mxu0 %v8214
        %9439 = vmatprep.subr.bf16.mxu0 %v8207
        %9440 = vmatpush1.bf16.msra.mxu0 %v8206
        %9441 = vmatprep.subr.bf16.mxu0 %v8199
        %9442 = vmatpush1.bf16.msra.mxu0 %v8198
        %9443 = vmatprep.subr.bf16.mxu0 %v8191
        %9444 = vmatpush1.bf16.msra.mxu0 %v8190
        %9445 = vmatprep.subr.bf16.mxu0 %v8183
        %9446 = vmatpush1.bf16.msra.mxu0 %v8182
        %9447 = vmatprep.subr.bf16.mxu0 %v8303
        %9448 = vmatpush2.bf16.msra.mxu0 %v8302
        %9449 = vmatprep.subr.bf16.mxu0 %v8295
        %9450 = vmatpush2.bf16.msra.mxu0 %v8294
        %9451 = vmatprep.subr.bf16.mxu0 %v8287
        %9452 = vmatpush2.bf16.msra.mxu0 %v8286
        %9453 = vmatprep.subr.bf16.mxu0 %v8279
        %9454 = vmatpush2.bf16.msra.mxu0 %v8278
        %9455 = vmatprep.subr.bf16.mxu0 %v8271
        %9456 = vmatpush2.bf16.msra.mxu0 %v8270
        %9457 = vmatprep.subr.bf16.mxu0 %v8263
        %9458 = vmatpush2.bf16.msra.mxu0 %v8262
        %9459 = vmatprep.subr.bf16.mxu0 %v8255
        %9460 = vmatpush2.bf16.msra.mxu0 %v8254
        %9461 = vmatprep.subr.bf16.mxu0 %v8247
        %9462 = vmatpush2.bf16.msra.mxu0 %v8246
        %9463 = vmatprep.mubr.bf16.mxu0 %v8955
        %9464 = vmatmul.mubr.bf16.gmra.mxu0 %v8954
        %v9465 = vpop.f32.mrf.mxu0
        %v9466 = vadd.f32 %v9425, %v9465
        %v9467 = vpop.f32.mrf.mxu0
        %v9468 = vadd.f32 %v9427, %v9467
        %v9469 = vpop.f32.mrf.mxu0
        %v9470 = vpop.f32.mrf.mxu0
        %9471 = vdwg.mxu0
        %9472 = vmatprep.subr.bf16.mxu0 %v8367
        %9473 = vmatpush1.bf16.msra.mxu0 %v8366
        %9474 = vmatprep.subr.bf16.mxu0 %v8359
        %9475 = vmatpush1.bf16.msra.mxu0 %v8358
        %9476 = vmatprep.subr.bf16.mxu0 %v8351
        %9477 = vmatpush1.bf16.msra.mxu0 %v8350
        %9478 = vmatprep.subr.bf16.mxu0 %v8343
        %9479 = vmatpush1.bf16.msra.mxu0 %v8342
        %9480 = vmatprep.subr.bf16.mxu0 %v8335
        %9481 = vmatpush1.bf16.msra.mxu0 %v8334
        %9482 = vmatprep.subr.bf16.mxu0 %v8327
        %9483 = vmatpush1.bf16.msra.mxu0 %v8326
        %9484 = vmatprep.subr.bf16.mxu0 %v8319
        %9485 = vmatpush1.bf16.msra.mxu0 %v8318
        %9486 = vmatprep.subr.bf16.mxu0 %v8311
        %9487 = vmatpush1.bf16.msra.mxu0 %v8310
        %9488 = vmatprep.subr.bf16.mxu0 %v8431
        %9489 = vmatpush2.bf16.msra.mxu0 %v8430
        %9490 = vmatprep.subr.bf16.mxu0 %v8423
        %9491 = vmatpush2.bf16.msra.mxu0 %v8422
        %9492 = vmatprep.subr.bf16.mxu0 %v8415
        %9493 = vmatpush2.bf16.msra.mxu0 %v8414
        %9494 = vmatprep.subr.bf16.mxu0 %v8407
        %9495 = vmatpush2.bf16.msra.mxu0 %v8406
        %9496 = vmatprep.subr.bf16.mxu0 %v8399
        %9497 = vmatpush2.bf16.msra.mxu0 %v8398
        %9498 = vmatprep.subr.bf16.mxu0 %v8391
        %9499 = vmatpush2.bf16.msra.mxu0 %v8390
        %9500 = vmatprep.subr.bf16.mxu0 %v8383
        %9501 = vmatpush2.bf16.msra.mxu0 %v8382
        %9502 = vmatprep.subr.bf16.mxu0 %v8375
        %9503 = vmatpush2.bf16.msra.mxu0 %v8374
        %9504 = vmatprep.mubr.bf16.mxu0 %v8957
        %9505 = vmatmul.mubr.bf16.gmra.mxu0 %v8956
        %v9506 = vpop.f32.mrf.mxu0
        %v9507 = vadd.f32 %v9466, %v9506
        %v9508 = vpop.f32.mrf.mxu0
        %v9509 = vadd.f32 %v9468, %v9508
        %v9510 = vpop.f32.mrf.mxu0
        %v9511 = vpop.f32.mrf.mxu0
        %9512 = vdwg.mxu0
        %9513 = vmatprep.subr.bf16.mxu0 %v8495
        %9514 = vmatpush1.bf16.msra.mxu0 %v8494
        %9515 = vmatprep.subr.bf16.mxu0 %v8487
        %9516 = vmatpush1.bf16.msra.mxu0 %v8486
        %9517 = vmatprep.subr.bf16.mxu0 %v8479
        %9518 = vmatpush1.bf16.msra.mxu0 %v8478
        %9519 = vmatprep.subr.bf16.mxu0 %v8471
        %9520 = vmatpush1.bf16.msra.mxu0 %v8470
        %9521 = vmatprep.subr.bf16.mxu0 %v8463
        %9522 = vmatpush1.bf16.msra.mxu0 %v8462
        %9523 = vmatprep.subr.bf16.mxu0 %v8455
        %9524 = vmatpush1.bf16.msra.mxu0 %v8454
        %9525 = vmatprep.subr.bf16.mxu0 %v8447
        %9526 = vmatpush1.bf16.msra.mxu0 %v8446
        %9527 = vmatprep.subr.bf16.mxu0 %v8439
        %9528 = vmatpush1.bf16.msra.mxu0 %v8438
        %9529 = vmatprep.subr.bf16.mxu0 %v8559
        %9530 = vmatpush2.bf16.msra.mxu0 %v8558
        %9531 = vmatprep.subr.bf16.mxu0 %v8551
        %9532 = vmatpush2.bf16.msra.mxu0 %v8550
        %9533 = vmatprep.subr.bf16.mxu0 %v8543
        %9534 = vmatpush2.bf16.msra.mxu0 %v8542
        %9535 = vmatprep.subr.bf16.mxu0 %v8535
        %9536 = vmatpush2.bf16.msra.mxu0 %v8534
        %9537 = vmatprep.subr.bf16.mxu0 %v8527
        %9538 = vmatpush2.bf16.msra.mxu0 %v8526
        %9539 = vmatprep.subr.bf16.mxu0 %v8519
        %9540 = vmatpush2.bf16.msra.mxu0 %v8518
        %9541 = vmatprep.subr.bf16.mxu0 %v8511
        %9542 = vmatpush2.bf16.msra.mxu0 %v8510
        %9543 = vmatprep.subr.bf16.mxu0 %v8503
        %9544 = vmatpush2.bf16.msra.mxu0 %v8502
        %9545 = vmatprep.mubr.bf16.mxu0 %v8959
        %9546 = vmatmul.mubr.bf16.gmra.mxu0 %v8958
        %v9547 = vpop.f32.mrf.mxu0
        %v9548 = vadd.f32 %v9507, %v9547
        %v9549 = vpop.f32.mrf.mxu0
        %v9550 = vadd.f32 %v9509, %v9549
        %v9551 = vpop.f32.mrf.mxu0
        %v9552 = vpop.f32.mrf.mxu0
        %9553 = vdwg.mxu0
        %9554 = vmatprep.subr.bf16.mxu0 %v8623
        %9555 = vmatpush1.bf16.msra.mxu0 %v8622
        %9556 = vmatprep.subr.bf16.mxu0 %v8615
        %9557 = vmatpush1.bf16.msra.mxu0 %v8614
        %9558 = vmatprep.subr.bf16.mxu0 %v8607
        %9559 = vmatpush1.bf16.msra.mxu0 %v8606
        %9560 = vmatprep.subr.bf16.mxu0 %v8599
        %9561 = vmatpush1.bf16.msra.mxu0 %v8598
        %9562 = vmatprep.subr.bf16.mxu0 %v8591
        %9563 = vmatpush1.bf16.msra.mxu0 %v8590
        %9564 = vmatprep.subr.bf16.mxu0 %v8583
        %9565 = vmatpush1.bf16.msra.mxu0 %v8582
        %9566 = vmatprep.subr.bf16.mxu0 %v8575
        %9567 = vmatpush1.bf16.msra.mxu0 %v8574
        %9568 = vmatprep.subr.bf16.mxu0 %v8567
        %9569 = vmatpush1.bf16.msra.mxu0 %v8566
        %9570 = vmatprep.subr.bf16.mxu0 %v8687
        %9571 = vmatpush2.bf16.msra.mxu0 %v8686
        %9572 = vmatprep.subr.bf16.mxu0 %v8679
        %9573 = vmatpush2.bf16.msra.mxu0 %v8678
        %9574 = vmatprep.subr.bf16.mxu0 %v8671
        %9575 = vmatpush2.bf16.msra.mxu0 %v8670
        %9576 = vmatprep.subr.bf16.mxu0 %v8663
        %9577 = vmatpush2.bf16.msra.mxu0 %v8662
        %9578 = vmatprep.subr.bf16.mxu0 %v8655
        %9579 = vmatpush2.bf16.msra.mxu0 %v8654
        %9580 = vmatprep.subr.bf16.mxu0 %v8647
        %9581 = vmatpush2.bf16.msra.mxu0 %v8646
        %9582 = vmatprep.subr.bf16.mxu0 %v8639
        %9583 = vmatpush2.bf16.msra.mxu0 %v8638
        %9584 = vmatprep.subr.bf16.mxu0 %v8631
        %9585 = vmatpush2.bf16.msra.mxu0 %v8630
        %9586 = vmatprep.mubr.bf16.mxu0 %v8961
        %9587 = vmatmul.mubr.bf16.gmra.mxu0 %v8960
        %v9588 = vpop.f32.mrf.mxu0
        %v9589 = vadd.f32 %v9548, %v9588
        %v9590 = vpop.f32.mrf.mxu0
        %v9591 = vadd.f32 %v9550, %v9590
        %v9592 = vpop.f32.mrf.mxu0
        %v9593 = vpop.f32.mrf.mxu0
        %9594 = vdwg.mxu0
        %9595 = vmatprep.subr.bf16.mxu0 %v8751
        %9596 = vmatpush1.bf16.msra.mxu0 %v8750
        %9597 = vmatprep.subr.bf16.mxu0 %v8743
        %9598 = vmatpush1.bf16.msra.mxu0 %v8742
        %9599 = vmatprep.subr.bf16.mxu0 %v8735
        %9600 = vmatpush1.bf16.msra.mxu0 %v8734
        %9601 = vmatprep.subr.bf16.mxu0 %v8727
        %9602 = vmatpush1.bf16.msra.mxu0 %v8726
        %9603 = vmatprep.subr.bf16.mxu0 %v8719
        %9604 = vmatpush1.bf16.msra.mxu0 %v8718
        %9605 = vmatprep.subr.bf16.mxu0 %v8711
        %9606 = vmatpush1.bf16.msra.mxu0 %v8710
        %9607 = vmatprep.subr.bf16.mxu0 %v8703
        %9608 = vmatpush1.bf16.msra.mxu0 %v8702
        %9609 = vmatprep.subr.bf16.mxu0 %v8695
        %9610 = vmatpush1.bf16.msra.mxu0 %v8694
        %9611 = vmatprep.subr.bf16.mxu0 %v8815
        %9612 = vmatpush2.bf16.msra.mxu0 %v8814
        %9613 = vmatprep.subr.bf16.mxu0 %v8807
        %9614 = vmatpush2.bf16.msra.mxu0 %v8806
        %9615 = vmatprep.subr.bf16.mxu0 %v8799
        %9616 = vmatpush2.bf16.msra.mxu0 %v8798
        %9617 = vmatprep.subr.bf16.mxu0 %v8791
        %9618 = vmatpush2.bf16.msra.mxu0 %v8790
        %9619 = vmatprep.subr.bf16.mxu0 %v8783
        %9620 = vmatpush2.bf16.msra.mxu0 %v8782
        %9621 = vmatprep.subr.bf16.mxu0 %v8775
        %9622 = vmatpush2.bf16.msra.mxu0 %v8774
        %9623 = vmatprep.subr.bf16.mxu0 %v8767
        %9624 = vmatpush2.bf16.msra.mxu0 %v8766
        %9625 = vmatprep.subr.bf16.mxu0 %v8759
        %9626 = vmatpush2.bf16.msra.mxu0 %v8758
        %9627 = vmatprep.mubr.bf16.mxu0 %v8963
        %9628 = vmatmul.mubr.bf16.gmra.mxu0 %v8962
        %v9629 = vpop.f32.mrf.mxu0
        %v9630 = vadd.f32 %v9589, %v9629
        %v9631 = vpop.f32.mrf.mxu0
        %v9632 = vadd.f32 %v9591, %v9631
        %v9633 = vpop.f32.mrf.mxu0
        %v9634 = vpop.f32.mrf.mxu0
        %9635 = vdwg.mxu0
        %9636 = vmatprep.subr.bf16.mxu0 %v7857
        %9637 = vmatpush1.bf16.msra.mxu0 %v7856
        %9638 = vmatprep.subr.bf16.mxu0 %v7849
        %9639 = vmatpush1.bf16.msra.mxu0 %v7848
        %9640 = vmatprep.subr.bf16.mxu0 %v7841
        %9641 = vmatpush1.bf16.msra.mxu0 %v7840
        %9642 = vmatprep.subr.bf16.mxu0 %v7833
        %9643 = vmatpush1.bf16.msra.mxu0 %v7832
        %9644 = vmatprep.subr.bf16.mxu0 %v7825
        %9645 = vmatpush1.bf16.msra.mxu0 %v7824
        %9646 = vmatprep.subr.bf16.mxu0 %v7817
        %9647 = vmatpush1.bf16.msra.mxu0 %v7816
        %9648 = vmatprep.subr.bf16.mxu0 %v7809
        %9649 = vmatpush1.bf16.msra.mxu0 %v7808
        %9650 = vmatprep.subr.bf16.mxu0 %v7801
        %9651 = vmatpush1.bf16.msra.mxu0 %v7800
        %9652 = vmatprep.subr.bf16.mxu0 %v7921
        %9653 = vmatpush2.bf16.msra.mxu0 %v7920
        %9654 = vmatprep.subr.bf16.mxu0 %v7913
        %9655 = vmatpush2.bf16.msra.mxu0 %v7912
        %9656 = vmatprep.subr.bf16.mxu0 %v7905
        %9657 = vmatpush2.bf16.msra.mxu0 %v7904
        %9658 = vmatprep.subr.bf16.mxu0 %v7897
        %9659 = vmatpush2.bf16.msra.mxu0 %v7896
        %9660 = vmatprep.subr.bf16.mxu0 %v7889
        %9661 = vmatpush2.bf16.msra.mxu0 %v7888
        %9662 = vmatprep.subr.bf16.mxu0 %v7881
        %9663 = vmatpush2.bf16.msra.mxu0 %v7880
        %9664 = vmatprep.subr.bf16.mxu0 %v7873
        %9665 = vmatpush2.bf16.msra.mxu0 %v7872
        %9666 = vmatprep.subr.bf16.mxu0 %v7865
        %9667 = vmatpush2.bf16.msra.mxu0 %v7864
        %9668 = vmatprep.mubr.bf16.mxu0 %v8949
        %9669 = vmatmul.mubr.bf16.gmra.mxu0 %v8948
        %v9670 = vpop.f32.mrf.mxu0
        %v9671 = vadd.f32 0.0, %v9670
        %v9672 = vpop.f32.mrf.mxu0
        %v9673 = vadd.f32 0.0, %v9672
        %v9674 = vpop.f32.mrf.mxu0
        %v9675 = vpop.f32.mrf.mxu0
        %9676 = vdwg.mxu0
        %9677 = vmatprep.subr.bf16.mxu0 %v7985
        %9678 = vmatpush1.bf16.msra.mxu0 %v7984
        %9679 = vmatprep.subr.bf16.mxu0 %v7977
        %9680 = vmatpush1.bf16.msra.mxu0 %v7976
        %9681 = vmatprep.subr.bf16.mxu0 %v7969
        %9682 = vmatpush1.bf16.msra.mxu0 %v7968
        %9683 = vmatprep.subr.bf16.mxu0 %v7961
        %9684 = vmatpush1.bf16.msra.mxu0 %v7960
        %9685 = vmatprep.subr.bf16.mxu0 %v7953
        %9686 = vmatpush1.bf16.msra.mxu0 %v7952
        %9687 = vmatprep.subr.bf16.mxu0 %v7945
        %9688 = vmatpush1.bf16.msra.mxu0 %v7944
        %9689 = vmatprep.subr.bf16.mxu0 %v7937
        %9690 = vmatpush1.bf16.msra.mxu0 %v7936
        %9691 = vmatprep.subr.bf16.mxu0 %v7929
        %9692 = vmatpush1.bf16.msra.mxu0 %v7928
        %9693 = vmatprep.subr.bf16.mxu0 %v8049
        %9694 = vmatpush2.bf16.msra.mxu0 %v8048
        %9695 = vmatprep.subr.bf16.mxu0 %v8041
        %9696 = vmatpush2.bf16.msra.mxu0 %v8040
        %9697 = vmatprep.subr.bf16.mxu0 %v8033
        %9698 = vmatpush2.bf16.msra.mxu0 %v8032
        %9699 = vmatprep.subr.bf16.mxu0 %v8025
        %9700 = vmatpush2.bf16.msra.mxu0 %v8024
        %9701 = vmatprep.subr.bf16.mxu0 %v8017
        %9702 = vmatpush2.bf16.msra.mxu0 %v8016
        %9703 = vmatprep.subr.bf16.mxu0 %v8009
        %9704 = vmatpush2.bf16.msra.mxu0 %v8008
        %9705 = vmatprep.subr.bf16.mxu0 %v8001
        %9706 = vmatpush2.bf16.msra.mxu0 %v8000
        %9707 = vmatprep.subr.bf16.mxu0 %v7993
        %9708 = vmatpush2.bf16.msra.mxu0 %v7992
        %9709 = vmatprep.mubr.bf16.mxu0 %v8951
        %9710 = vmatmul.mubr.bf16.gmra.mxu0 %v8950
        %v9711 = vpop.f32.mrf.mxu0
        %v9712 = vadd.f32 %v9671, %v9711
        %v9713 = vpop.f32.mrf.mxu0
        %v9714 = vadd.f32 %v9673, %v9713
        %v9715 = vpop.f32.mrf.mxu0
        %v9716 = vpop.f32.mrf.mxu0
        %9717 = vdwg.mxu0
        %9718 = vmatprep.subr.bf16.mxu0 %v8113
        %9719 = vmatpush1.bf16.msra.mxu0 %v8112
        %9720 = vmatprep.subr.bf16.mxu0 %v8105
        %9721 = vmatpush1.bf16.msra.mxu0 %v8104
        %9722 = vmatprep.subr.bf16.mxu0 %v8097
        %9723 = vmatpush1.bf16.msra.mxu0 %v8096
        %9724 = vmatprep.subr.bf16.mxu0 %v8089
        %9725 = vmatpush1.bf16.msra.mxu0 %v8088
        %9726 = vmatprep.subr.bf16.mxu0 %v8081
        %9727 = vmatpush1.bf16.msra.mxu0 %v8080
        %9728 = vmatprep.subr.bf16.mxu0 %v8073
        %9729 = vmatpush1.bf16.msra.mxu0 %v8072
        %9730 = vmatprep.subr.bf16.mxu0 %v8065
        %9731 = vmatpush1.bf16.msra.mxu0 %v8064
        %9732 = vmatprep.subr.bf16.mxu0 %v8057
        %9733 = vmatpush1.bf16.msra.mxu0 %v8056
        %9734 = vmatprep.subr.bf16.mxu0 %v8177
        %9735 = vmatpush2.bf16.msra.mxu0 %v8176
        %9736 = vmatprep.subr.bf16.mxu0 %v8169
        %9737 = vmatpush2.bf16.msra.mxu0 %v8168
        %9738 = vmatprep.subr.bf16.mxu0 %v8161
        %9739 = vmatpush2.bf16.msra.mxu0 %v8160
        %9740 = vmatprep.subr.bf16.mxu0 %v8153
        %9741 = vmatpush2.bf16.msra.mxu0 %v8152
        %9742 = vmatprep.subr.bf16.mxu0 %v8145
        %9743 = vmatpush2.bf16.msra.mxu0 %v8144
        %9744 = vmatprep.subr.bf16.mxu0 %v8137
        %9745 = vmatpush2.bf16.msra.mxu0 %v8136
        %9746 = vmatprep.subr.bf16.mxu0 %v8129
        %9747 = vmatpush2.bf16.msra.mxu0 %v8128
        %9748 = vmatprep.subr.bf16.mxu0 %v8121
        %9749 = vmatpush2.bf16.msra.mxu0 %v8120
        %9750 = vmatprep.mubr.bf16.mxu0 %v8953
        %9751 = vmatmul.mubr.bf16.gmra.mxu0 %v8952
        %v9752 = vpop.f32.mrf.mxu0
        %v9753 = vadd.f32 %v9712, %v9752
        %v9754 = vpop.f32.mrf.mxu0
        %v9755 = vadd.f32 %v9714, %v9754
        %v9756 = vpop.f32.mrf.mxu0
        %v9757 = vpop.f32.mrf.mxu0
        %9758 = vdwg.mxu0
        %9759 = vmatprep.subr.bf16.mxu0 %v8241
        %9760 = vmatpush1.bf16.msra.mxu0 %v8240
        %9761 = vmatprep.subr.bf16.mxu0 %v8233
        %9762 = vmatpush1.bf16.msra.mxu0 %v8232
        %9763 = vmatprep.subr.bf16.mxu0 %v8225
        %9764 = vmatpush1.bf16.msra.mxu0 %v8224
        %9765 = vmatprep.subr.bf16.mxu0 %v8217
        %9766 = vmatpush1.bf16.msra.mxu0 %v8216
        %9767 = vmatprep.subr.bf16.mxu0 %v8209
        %9768 = vmatpush1.bf16.msra.mxu0 %v8208
        %9769 = vmatprep.subr.bf16.mxu0 %v8201
        %9770 = vmatpush1.bf16.msra.mxu0 %v8200
        %9771 = vmatprep.subr.bf16.mxu0 %v8193
        %9772 = vmatpush1.bf16.msra.mxu0 %v8192
        %9773 = vmatprep.subr.bf16.mxu0 %v8185
        %9774 = vmatpush1.bf16.msra.mxu0 %v8184
        %9775 = vmatprep.subr.bf16.mxu0 %v8305
        %9776 = vmatpush2.bf16.msra.mxu0 %v8304
        %9777 = vmatprep.subr.bf16.mxu0 %v8297
        %9778 = vmatpush2.bf16.msra.mxu0 %v8296
        %9779 = vmatprep.subr.bf16.mxu0 %v8289
        %9780 = vmatpush2.bf16.msra.mxu0 %v8288
        %9781 = vmatprep.subr.bf16.mxu0 %v8281
        %9782 = vmatpush2.bf16.msra.mxu0 %v8280
        %9783 = vmatprep.subr.bf16.mxu0 %v8273
        %9784 = vmatpush2.bf16.msra.mxu0 %v8272
        %9785 = vmatprep.subr.bf16.mxu0 %v8265
        %9786 = vmatpush2.bf16.msra.mxu0 %v8264
        %9787 = vmatprep.subr.bf16.mxu0 %v8257
        %9788 = vmatpush2.bf16.msra.mxu0 %v8256
        %9789 = vmatprep.subr.bf16.mxu0 %v8249
        %9790 = vmatpush2.bf16.msra.mxu0 %v8248
        %9791 = vmatprep.mubr.bf16.mxu0 %v8955
        %9792 = vmatmul.mubr.bf16.gmra.mxu0 %v8954
        %v9793 = vpop.f32.mrf.mxu0
        %v9794 = vadd.f32 %v9753, %v9793
        %v9795 = vpop.f32.mrf.mxu0
        %v9796 = vadd.f32 %v9755, %v9795
        %v9797 = vpop.f32.mrf.mxu0
        %v9798 = vpop.f32.mrf.mxu0
        %9799 = vdwg.mxu0
        %9800 = vmatprep.subr.bf16.mxu0 %v8369
        %9801 = vmatpush1.bf16.msra.mxu0 %v8368
        %9802 = vmatprep.subr.bf16.mxu0 %v8361
        %9803 = vmatpush1.bf16.msra.mxu0 %v8360
        %9804 = vmatprep.subr.bf16.mxu0 %v8353
        %9805 = vmatpush1.bf16.msra.mxu0 %v8352
        %9806 = vmatprep.subr.bf16.mxu0 %v8345
        %9807 = vmatpush1.bf16.msra.mxu0 %v8344
        %9808 = vmatprep.subr.bf16.mxu0 %v8337
        %9809 = vmatpush1.bf16.msra.mxu0 %v8336
        %9810 = vmatprep.subr.bf16.mxu0 %v8329
        %9811 = vmatpush1.bf16.msra.mxu0 %v8328
        %9812 = vmatprep.subr.bf16.mxu0 %v8321
        %9813 = vmatpush1.bf16.msra.mxu0 %v8320
        %9814 = vmatprep.subr.bf16.mxu0 %v8313
        %9815 = vmatpush1.bf16.msra.mxu0 %v8312
        %9816 = vmatprep.subr.bf16.mxu0 %v8433
        %9817 = vmatpush2.bf16.msra.mxu0 %v8432
        %9818 = vmatprep.subr.bf16.mxu0 %v8425
        %9819 = vmatpush2.bf16.msra.mxu0 %v8424
        %9820 = vmatprep.subr.bf16.mxu0 %v8417
        %9821 = vmatpush2.bf16.msra.mxu0 %v8416
        %9822 = vmatprep.subr.bf16.mxu0 %v8409
        %9823 = vmatpush2.bf16.msra.mxu0 %v8408
        %9824 = vmatprep.subr.bf16.mxu0 %v8401
        %9825 = vmatpush2.bf16.msra.mxu0 %v8400
        %9826 = vmatprep.subr.bf16.mxu0 %v8393
        %9827 = vmatpush2.bf16.msra.mxu0 %v8392
        %9828 = vmatprep.subr.bf16.mxu0 %v8385
        %9829 = vmatpush2.bf16.msra.mxu0 %v8384
        %9830 = vmatprep.subr.bf16.mxu0 %v8377
        %9831 = vmatpush2.bf16.msra.mxu0 %v8376
        %9832 = vmatprep.mubr.bf16.mxu0 %v8957
        %9833 = vmatmul.mubr.bf16.gmra.mxu0 %v8956
        %v9834 = vpop.f32.mrf.mxu0
        %v9835 = vadd.f32 %v9794, %v9834
        %v9836 = vpop.f32.mrf.mxu0
        %v9837 = vadd.f32 %v9796, %v9836
        %v9838 = vpop.f32.mrf.mxu0
        %v9839 = vpop.f32.mrf.mxu0
        %9840 = vdwg.mxu0
        %9841 = vmatprep.subr.bf16.mxu0 %v8497
        %9842 = vmatpush1.bf16.msra.mxu0 %v8496
        %9843 = vmatprep.subr.bf16.mxu0 %v8489
        %9844 = vmatpush1.bf16.msra.mxu0 %v8488
        %9845 = vmatprep.subr.bf16.mxu0 %v8481
        %9846 = vmatpush1.bf16.msra.mxu0 %v8480
        %9847 = vmatprep.subr.bf16.mxu0 %v8473
        %9848 = vmatpush1.bf16.msra.mxu0 %v8472
        %9849 = vmatprep.subr.bf16.mxu0 %v8465
        %9850 = vmatpush1.bf16.msra.mxu0 %v8464
        %9851 = vmatprep.subr.bf16.mxu0 %v8457
        %9852 = vmatpush1.bf16.msra.mxu0 %v8456
        %9853 = vmatprep.subr.bf16.mxu0 %v8449
        %9854 = vmatpush1.bf16.msra.mxu0 %v8448
        %9855 = vmatprep.subr.bf16.mxu0 %v8441
        %9856 = vmatpush1.bf16.msra.mxu0 %v8440
        %9857 = vmatprep.subr.bf16.mxu0 %v8561
        %9858 = vmatpush2.bf16.msra.mxu0 %v8560
        %9859 = vmatprep.subr.bf16.mxu0 %v8553
        %9860 = vmatpush2.bf16.msra.mxu0 %v8552
        %9861 = vmatprep.subr.bf16.mxu0 %v8545
        %9862 = vmatpush2.bf16.msra.mxu0 %v8544
        %9863 = vmatprep.subr.bf16.mxu0 %v8537
        %9864 = vmatpush2.bf16.msra.mxu0 %v8536
        %9865 = vmatprep.subr.bf16.mxu0 %v8529
        %9866 = vmatpush2.bf16.msra.mxu0 %v8528
        %9867 = vmatprep.subr.bf16.mxu0 %v8521
        %9868 = vmatpush2.bf16.msra.mxu0 %v8520
        %9869 = vmatprep.subr.bf16.mxu0 %v8513
        %9870 = vmatpush2.bf16.msra.mxu0 %v8512
        %9871 = vmatprep.subr.bf16.mxu0 %v8505
        %9872 = vmatpush2.bf16.msra.mxu0 %v8504
        %9873 = vmatprep.mubr.bf16.mxu0 %v8959
        %9874 = vmatmul.mubr.bf16.gmra.mxu0 %v8958
        %v9875 = vpop.f32.mrf.mxu0
        %v9876 = vadd.f32 %v9835, %v9875
        %v9877 = vpop.f32.mrf.mxu0
        %v9878 = vadd.f32 %v9837, %v9877
        %v9879 = vpop.f32.mrf.mxu0
        %v9880 = vpop.f32.mrf.mxu0
        %9881 = vdwg.mxu0
        %9882 = vmatprep.subr.bf16.mxu0 %v8625
        %9883 = vmatpush1.bf16.msra.mxu0 %v8624
        %9884 = vmatprep.subr.bf16.mxu0 %v8617
        %9885 = vmatpush1.bf16.msra.mxu0 %v8616
        %9886 = vmatprep.subr.bf16.mxu0 %v8609
        %9887 = vmatpush1.bf16.msra.mxu0 %v8608
        %9888 = vmatprep.subr.bf16.mxu0 %v8601
        %9889 = vmatpush1.bf16.msra.mxu0 %v8600
        %9890 = vmatprep.subr.bf16.mxu0 %v8593
        %9891 = vmatpush1.bf16.msra.mxu0 %v8592
        %9892 = vmatprep.subr.bf16.mxu0 %v8585
        %9893 = vmatpush1.bf16.msra.mxu0 %v8584
        %9894 = vmatprep.subr.bf16.mxu0 %v8577
        %9895 = vmatpush1.bf16.msra.mxu0 %v8576
        %9896 = vmatprep.subr.bf16.mxu0 %v8569
        %9897 = vmatpush1.bf16.msra.mxu0 %v8568
        %9898 = vmatprep.subr.bf16.mxu0 %v8689
        %9899 = vmatpush2.bf16.msra.mxu0 %v8688
        %9900 = vmatprep.subr.bf16.mxu0 %v8681
        %9901 = vmatpush2.bf16.msra.mxu0 %v8680
        %9902 = vmatprep.subr.bf16.mxu0 %v8673
        %9903 = vmatpush2.bf16.msra.mxu0 %v8672
        %9904 = vmatprep.subr.bf16.mxu0 %v8665
        %9905 = vmatpush2.bf16.msra.mxu0 %v8664
        %9906 = vmatprep.subr.bf16.mxu0 %v8657
        %9907 = vmatpush2.bf16.msra.mxu0 %v8656
        %9908 = vmatprep.subr.bf16.mxu0 %v8649
        %9909 = vmatpush2.bf16.msra.mxu0 %v8648
        %9910 = vmatprep.subr.bf16.mxu0 %v8641
        %9911 = vmatpush2.bf16.msra.mxu0 %v8640
        %9912 = vmatprep.subr.bf16.mxu0 %v8633
        %9913 = vmatpush2.bf16.msra.mxu0 %v8632
        %9914 = vmatprep.mubr.bf16.mxu0 %v8961
        %9915 = vmatmul.mubr.bf16.gmra.mxu0 %v8960
        %v9916 = vpop.f32.mrf.mxu0
        %v9917 = vadd.f32 %v9876, %v9916
        %v9918 = vpop.f32.mrf.mxu0
        %v9919 = vadd.f32 %v9878, %v9918
        %v9920 = vpop.f32.mrf.mxu0
        %v9921 = vpop.f32.mrf.mxu0
        %9922 = vdwg.mxu0
        %9923 = vmatprep.subr.bf16.mxu0 %v8753
        %9924 = vmatpush1.bf16.msra.mxu0 %v8752
        %9925 = vmatprep.subr.bf16.mxu0 %v8745
        %9926 = vmatpush1.bf16.msra.mxu0 %v8744
        %9927 = vmatprep.subr.bf16.mxu0 %v8737
        %9928 = vmatpush1.bf16.msra.mxu0 %v8736
        %9929 = vmatprep.subr.bf16.mxu0 %v8729
        %9930 = vmatpush1.bf16.msra.mxu0 %v8728
        %9931 = vmatprep.subr.bf16.mxu0 %v8721
        %9932 = vmatpush1.bf16.msra.mxu0 %v8720
        %9933 = vmatprep.subr.bf16.mxu0 %v8713
        %9934 = vmatpush1.bf16.msra.mxu0 %v8712
        %9935 = vmatprep.subr.bf16.mxu0 %v8705
        %9936 = vmatpush1.bf16.msra.mxu0 %v8704
        %9937 = vmatprep.subr.bf16.mxu0 %v8697
        %9938 = vmatpush1.bf16.msra.mxu0 %v8696
        %9939 = vmatprep.subr.bf16.mxu0 %v8817
        %9940 = vmatpush2.bf16.msra.mxu0 %v8816
        %9941 = vmatprep.subr.bf16.mxu0 %v8809
        %9942 = vmatpush2.bf16.msra.mxu0 %v8808
        %9943 = vmatprep.subr.bf16.mxu0 %v8801
        %9944 = vmatpush2.bf16.msra.mxu0 %v8800
        %9945 = vmatprep.subr.bf16.mxu0 %v8793
        %9946 = vmatpush2.bf16.msra.mxu0 %v8792
        %9947 = vmatprep.subr.bf16.mxu0 %v8785
        %9948 = vmatpush2.bf16.msra.mxu0 %v8784
        %9949 = vmatprep.subr.bf16.mxu0 %v8777
        %9950 = vmatpush2.bf16.msra.mxu0 %v8776
        %9951 = vmatprep.subr.bf16.mxu0 %v8769
        %9952 = vmatpush2.bf16.msra.mxu0 %v8768
        %9953 = vmatprep.subr.bf16.mxu0 %v8761
        %9954 = vmatpush2.bf16.msra.mxu0 %v8760
        %9955 = vmatprep.mubr.bf16.mxu0 %v8963
        %9956 = vmatmul.mubr.bf16.gmra.mxu0 %v8962
        %v9957 = vpop.f32.mrf.mxu0
        %v9958 = vadd.f32 %v9917, %v9957
        %v9959 = vpop.f32.mrf.mxu0
        %v9960 = vadd.f32 %v9919, %v9959
        %v9961 = vpop.f32.mrf.mxu0
        %v9962 = vpop.f32.mrf.mxu0
        %9963 = vdwg.mxu0
        %9964 = vmatprep.subr.bf16.mxu0 %v7859
        %9965 = vmatpush1.bf16.msra.mxu0 %v7858
        %9966 = vmatprep.subr.bf16.mxu0 %v7851
        %9967 = vmatpush1.bf16.msra.mxu0 %v7850
        %9968 = vmatprep.subr.bf16.mxu0 %v7843
        %9969 = vmatpush1.bf16.msra.mxu0 %v7842
        %9970 = vmatprep.subr.bf16.mxu0 %v7835
        %9971 = vmatpush1.bf16.msra.mxu0 %v7834
        %9972 = vmatprep.subr.bf16.mxu0 %v7827
        %9973 = vmatpush1.bf16.msra.mxu0 %v7826
        %9974 = vmatprep.subr.bf16.mxu0 %v7819
        %9975 = vmatpush1.bf16.msra.mxu0 %v7818
        %9976 = vmatprep.subr.bf16.mxu0 %v7811
        %9977 = vmatpush1.bf16.msra.mxu0 %v7810
        %9978 = vmatprep.subr.bf16.mxu0 %v7803
        %9979 = vmatpush1.bf16.msra.mxu0 %v7802
        %9980 = vmatprep.subr.bf16.mxu0 %v7923
        %9981 = vmatpush2.bf16.msra.mxu0 %v7922
        %9982 = vmatprep.subr.bf16.mxu0 %v7915
        %9983 = vmatpush2.bf16.msra.mxu0 %v7914
        %9984 = vmatprep.subr.bf16.mxu0 %v7907
        %9985 = vmatpush2.bf16.msra.mxu0 %v7906
        %9986 = vmatprep.subr.bf16.mxu0 %v7899
        %9987 = vmatpush2.bf16.msra.mxu0 %v7898
        %9988 = vmatprep.subr.bf16.mxu0 %v7891
        %9989 = vmatpush2.bf16.msra.mxu0 %v7890
        %9990 = vmatprep.subr.bf16.mxu0 %v7883
        %9991 = vmatpush2.bf16.msra.mxu0 %v7882
        %9992 = vmatprep.subr.bf16.mxu0 %v7875
        %9993 = vmatpush2.bf16.msra.mxu0 %v7874
        %9994 = vmatprep.subr.bf16.mxu0 %v7867
        %9995 = vmatpush2.bf16.msra.mxu0 %v7866
        %9996 = vmatprep.mubr.bf16.mxu0 %v8949
        %9997 = vmatmul.mubr.bf16.gmra.mxu0 %v8948
        %v9998 = vpop.f32.mrf.mxu0
        %v9999 = vadd.f32 0.0, %v9998
        %v10000 = vpop.f32.mrf.mxu0
        %v10001 = vadd.f32 0.0, %v10000
        %v10002 = vpop.f32.mrf.mxu0
        %v10003 = vpop.f32.mrf.mxu0
        %10004 = vdwg.mxu0
        %10005 = vmatprep.subr.bf16.mxu0 %v7987
        %10006 = vmatpush1.bf16.msra.mxu0 %v7986
        %10007 = vmatprep.subr.bf16.mxu0 %v7979
        %10008 = vmatpush1.bf16.msra.mxu0 %v7978
        %10009 = vmatprep.subr.bf16.mxu0 %v7971
        %10010 = vmatpush1.bf16.msra.mxu0 %v7970
        %10011 = vmatprep.subr.bf16.mxu0 %v7963
        %10012 = vmatpush1.bf16.msra.mxu0 %v7962
        %10013 = vmatprep.subr.bf16.mxu0 %v7955
        %10014 = vmatpush1.bf16.msra.mxu0 %v7954
        %10015 = vmatprep.subr.bf16.mxu0 %v7947
        %10016 = vmatpush1.bf16.msra.mxu0 %v7946
        %10017 = vmatprep.subr.bf16.mxu0 %v7939
        %10018 = vmatpush1.bf16.msra.mxu0 %v7938
        %10019 = vmatprep.subr.bf16.mxu0 %v7931
        %10020 = vmatpush1.bf16.msra.mxu0 %v7930
        %10021 = vmatprep.subr.bf16.mxu0 %v8051
        %10022 = vmatpush2.bf16.msra.mxu0 %v8050
        %10023 = vmatprep.subr.bf16.mxu0 %v8043
        %10024 = vmatpush2.bf16.msra.mxu0 %v8042
        %10025 = vmatprep.subr.bf16.mxu0 %v8035
        %10026 = vmatpush2.bf16.msra.mxu0 %v8034
        %10027 = vmatprep.subr.bf16.mxu0 %v8027
        %10028 = vmatpush2.bf16.msra.mxu0 %v8026
        %10029 = vmatprep.subr.bf16.mxu0 %v8019
        %10030 = vmatpush2.bf16.msra.mxu0 %v8018
        %10031 = vmatprep.subr.bf16.mxu0 %v8011
        %10032 = vmatpush2.bf16.msra.mxu0 %v8010
        %10033 = vmatprep.subr.bf16.mxu0 %v8003
        %10034 = vmatpush2.bf16.msra.mxu0 %v8002
        %10035 = vmatprep.subr.bf16.mxu0 %v7995
        %10036 = vmatpush2.bf16.msra.mxu0 %v7994
        %10037 = vmatprep.mubr.bf16.mxu0 %v8951
        %10038 = vmatmul.mubr.bf16.gmra.mxu0 %v8950
        %v10039 = vpop.f32.mrf.mxu0
        %v10040 = vadd.f32 %v9999, %v10039
        %v10041 = vpop.f32.mrf.mxu0
        %v10042 = vadd.f32 %v10001, %v10041
        %v10043 = vpop.f32.mrf.mxu0
        %v10044 = vpop.f32.mrf.mxu0
        %10045 = vdwg.mxu0
        %10046 = vmatprep.subr.bf16.mxu0 %v8115
        %10047 = vmatpush1.bf16.msra.mxu0 %v8114
        %10048 = vmatprep.subr.bf16.mxu0 %v8107
        %10049 = vmatpush1.bf16.msra.mxu0 %v8106
        %10050 = vmatprep.subr.bf16.mxu0 %v8099
        %10051 = vmatpush1.bf16.msra.mxu0 %v8098
        %10052 = vmatprep.subr.bf16.mxu0 %v8091
        %10053 = vmatpush1.bf16.msra.mxu0 %v8090
        %10054 = vmatprep.subr.bf16.mxu0 %v8083
        %10055 = vmatpush1.bf16.msra.mxu0 %v8082
        %10056 = vmatprep.subr.bf16.mxu0 %v8075
        %10057 = vmatpush1.bf16.msra.mxu0 %v8074
        %10058 = vmatprep.subr.bf16.mxu0 %v8067
        %10059 = vmatpush1.bf16.msra.mxu0 %v8066
        %10060 = vmatprep.subr.bf16.mxu0 %v8059
        %10061 = vmatpush1.bf16.msra.mxu0 %v8058
        %10062 = vmatprep.subr.bf16.mxu0 %v8179
        %10063 = vmatpush2.bf16.msra.mxu0 %v8178
        %10064 = vmatprep.subr.bf16.mxu0 %v8171
        %10065 = vmatpush2.bf16.msra.mxu0 %v8170
        %10066 = vmatprep.subr.bf16.mxu0 %v8163
        %10067 = vmatpush2.bf16.msra.mxu0 %v8162
        %10068 = vmatprep.subr.bf16.mxu0 %v8155
        %10069 = vmatpush2.bf16.msra.mxu0 %v8154
        %10070 = vmatprep.subr.bf16.mxu0 %v8147
        %10071 = vmatpush2.bf16.msra.mxu0 %v8146
        %10072 = vmatprep.subr.bf16.mxu0 %v8139
        %10073 = vmatpush2.bf16.msra.mxu0 %v8138
        %10074 = vmatprep.subr.bf16.mxu0 %v8131
        %10075 = vmatpush2.bf16.msra.mxu0 %v8130
        %10076 = vmatprep.subr.bf16.mxu0 %v8123
        %10077 = vmatpush2.bf16.msra.mxu0 %v8122
        %10078 = vmatprep.mubr.bf16.mxu0 %v8953
        %10079 = vmatmul.mubr.bf16.gmra.mxu0 %v8952
        %v10080 = vpop.f32.mrf.mxu0
        %v10081 = vadd.f32 %v10040, %v10080
        %v10082 = vpop.f32.mrf.mxu0
        %v10083 = vadd.f32 %v10042, %v10082
        %v10084 = vpop.f32.mrf.mxu0
        %v10085 = vpop.f32.mrf.mxu0
        %10086 = vdwg.mxu0
        %10087 = vmatprep.subr.bf16.mxu0 %v8243
        %10088 = vmatpush1.bf16.msra.mxu0 %v8242
        %10089 = vmatprep.subr.bf16.mxu0 %v8235
        %10090 = vmatpush1.bf16.msra.mxu0 %v8234
        %10091 = vmatprep.subr.bf16.mxu0 %v8227
        %10092 = vmatpush1.bf16.msra.mxu0 %v8226
        %10093 = vmatprep.subr.bf16.mxu0 %v8219
        %10094 = vmatpush1.bf16.msra.mxu0 %v8218
        %10095 = vmatprep.subr.bf16.mxu0 %v8211
        %10096 = vmatpush1.bf16.msra.mxu0 %v8210
        %10097 = vmatprep.subr.bf16.mxu0 %v8203
        %10098 = vmatpush1.bf16.msra.mxu0 %v8202
        %10099 = vmatprep.subr.bf16.mxu0 %v8195
        %10100 = vmatpush1.bf16.msra.mxu0 %v8194
        %10101 = vmatprep.subr.bf16.mxu0 %v8187
        %10102 = vmatpush1.bf16.msra.mxu0 %v8186
        %10103 = vmatprep.subr.bf16.mxu0 %v8307
        %10104 = vmatpush2.bf16.msra.mxu0 %v8306
        %10105 = vmatprep.subr.bf16.mxu0 %v8299
        %10106 = vmatpush2.bf16.msra.mxu0 %v8298
        %10107 = vmatprep.subr.bf16.mxu0 %v8291
        %10108 = vmatpush2.bf16.msra.mxu0 %v8290
        %10109 = vmatprep.subr.bf16.mxu0 %v8283
        %10110 = vmatpush2.bf16.msra.mxu0 %v8282
        %10111 = vmatprep.subr.bf16.mxu0 %v8275
        %10112 = vmatpush2.bf16.msra.mxu0 %v8274
        %10113 = vmatprep.subr.bf16.mxu0 %v8267
        %10114 = vmatpush2.bf16.msra.mxu0 %v8266
        %10115 = vmatprep.subr.bf16.mxu0 %v8259
        %10116 = vmatpush2.bf16.msra.mxu0 %v8258
        %10117 = vmatprep.subr.bf16.mxu0 %v8251
        %10118 = vmatpush2.bf16.msra.mxu0 %v8250
        %10119 = vmatprep.mubr.bf16.mxu0 %v8955
        %10120 = vmatmul.mubr.bf16.gmra.mxu0 %v8954
        %v10121 = vpop.f32.mrf.mxu0
        %v10122 = vadd.f32 %v10081, %v10121
        %v10123 = vpop.f32.mrf.mxu0
        %v10124 = vadd.f32 %v10083, %v10123
        %v10125 = vpop.f32.mrf.mxu0
        %v10126 = vpop.f32.mrf.mxu0
        %10127 = vdwg.mxu0
        %10128 = vmatprep.subr.bf16.mxu0 %v8371
        %10129 = vmatpush1.bf16.msra.mxu0 %v8370
        %10130 = vmatprep.subr.bf16.mxu0 %v8363
        %10131 = vmatpush1.bf16.msra.mxu0 %v8362
        %10132 = vmatprep.subr.bf16.mxu0 %v8355
        %10133 = vmatpush1.bf16.msra.mxu0 %v8354
        %10134 = vmatprep.subr.bf16.mxu0 %v8347
        %10135 = vmatpush1.bf16.msra.mxu0 %v8346
        %10136 = vmatprep.subr.bf16.mxu0 %v8339
        %10137 = vmatpush1.bf16.msra.mxu0 %v8338
        %10138 = vmatprep.subr.bf16.mxu0 %v8331
        %10139 = vmatpush1.bf16.msra.mxu0 %v8330
        %10140 = vmatprep.subr.bf16.mxu0 %v8323
        %10141 = vmatpush1.bf16.msra.mxu0 %v8322
        %10142 = vmatprep.subr.bf16.mxu0 %v8315
        %10143 = vmatpush1.bf16.msra.mxu0 %v8314
        %10144 = vmatprep.subr.bf16.mxu0 %v8435
        %10145 = vmatpush2.bf16.msra.mxu0 %v8434
        %10146 = vmatprep.subr.bf16.mxu0 %v8427
        %10147 = vmatpush2.bf16.msra.mxu0 %v8426
        %10148 = vmatprep.subr.bf16.mxu0 %v8419
        %10149 = vmatpush2.bf16.msra.mxu0 %v8418
        %10150 = vmatprep.subr.bf16.mxu0 %v8411
        %10151 = vmatpush2.bf16.msra.mxu0 %v8410
        %10152 = vmatprep.subr.bf16.mxu0 %v8403
        %10153 = vmatpush2.bf16.msra.mxu0 %v8402
        %10154 = vmatprep.subr.bf16.mxu0 %v8395
        %10155 = vmatpush2.bf16.msra.mxu0 %v8394
        %10156 = vmatprep.subr.bf16.mxu0 %v8387
        %10157 = vmatpush2.bf16.msra.mxu0 %v8386
        %10158 = vmatprep.subr.bf16.mxu0 %v8379
        %10159 = vmatpush2.bf16.msra.mxu0 %v8378
        %10160 = vmatprep.mubr.bf16.mxu0 %v8957
        %10161 = vmatmul.mubr.bf16.gmra.mxu0 %v8956
        %v10162 = vpop.f32.mrf.mxu0
        %v10163 = vadd.f32 %v10122, %v10162
        %v10164 = vpop.f32.mrf.mxu0
        %v10165 = vadd.f32 %v10124, %v10164
        %v10166 = vpop.f32.mrf.mxu0
        %v10167 = vpop.f32.mrf.mxu0
        %10168 = vdwg.mxu0
        %10169 = vmatprep.subr.bf16.mxu0 %v8499
        %10170 = vmatpush1.bf16.msra.mxu0 %v8498
        %10171 = vmatprep.subr.bf16.mxu0 %v8491
        %10172 = vmatpush1.bf16.msra.mxu0 %v8490
        %10173 = vmatprep.subr.bf16.mxu0 %v8483
        %10174 = vmatpush1.bf16.msra.mxu0 %v8482
        %10175 = vmatprep.subr.bf16.mxu0 %v8475
        %10176 = vmatpush1.bf16.msra.mxu0 %v8474
        %10177 = vmatprep.subr.bf16.mxu0 %v8467
        %10178 = vmatpush1.bf16.msra.mxu0 %v8466
        %10179 = vmatprep.subr.bf16.mxu0 %v8459
        %10180 = vmatpush1.bf16.msra.mxu0 %v8458
        %10181 = vmatprep.subr.bf16.mxu0 %v8451
        %10182 = vmatpush1.bf16.msra.mxu0 %v8450
        %10183 = vmatprep.subr.bf16.mxu0 %v8443
        %10184 = vmatpush1.bf16.msra.mxu0 %v8442
        %10185 = vmatprep.subr.bf16.mxu0 %v8563
        %10186 = vmatpush2.bf16.msra.mxu0 %v8562
        %10187 = vmatprep.subr.bf16.mxu0 %v8555
        %10188 = vmatpush2.bf16.msra.mxu0 %v8554
        %10189 = vmatprep.subr.bf16.mxu0 %v8547
        %10190 = vmatpush2.bf16.msra.mxu0 %v8546
        %10191 = vmatprep.subr.bf16.mxu0 %v8539
        %10192 = vmatpush2.bf16.msra.mxu0 %v8538
        %10193 = vmatprep.subr.bf16.mxu0 %v8531
        %10194 = vmatpush2.bf16.msra.mxu0 %v8530
        %10195 = vmatprep.subr.bf16.mxu0 %v8523
        %10196 = vmatpush2.bf16.msra.mxu0 %v8522
        %10197 = vmatprep.subr.bf16.mxu0 %v8515
        %10198 = vmatpush2.bf16.msra.mxu0 %v8514
        %10199 = vmatprep.subr.bf16.mxu0 %v8507
        %10200 = vmatpush2.bf16.msra.mxu0 %v8506
        %10201 = vmatprep.mubr.bf16.mxu0 %v8959
        %10202 = vmatmul.mubr.bf16.gmra.mxu0 %v8958
        %v10203 = vpop.f32.mrf.mxu0
        %v10204 = vadd.f32 %v10163, %v10203
        %v10205 = vpop.f32.mrf.mxu0
        %v10206 = vadd.f32 %v10165, %v10205
        %v10207 = vpop.f32.mrf.mxu0
        %v10208 = vpop.f32.mrf.mxu0
        %10209 = vdwg.mxu0
        %10210 = vmatprep.subr.bf16.mxu0 %v8627
        %10211 = vmatpush1.bf16.msra.mxu0 %v8626
        %10212 = vmatprep.subr.bf16.mxu0 %v8619
        %10213 = vmatpush1.bf16.msra.mxu0 %v8618
        %10214 = vmatprep.subr.bf16.mxu0 %v8611
        %10215 = vmatpush1.bf16.msra.mxu0 %v8610
        %10216 = vmatprep.subr.bf16.mxu0 %v8603
        %10217 = vmatpush1.bf16.msra.mxu0 %v8602
        %10218 = vmatprep.subr.bf16.mxu0 %v8595
        %10219 = vmatpush1.bf16.msra.mxu0 %v8594
        %10220 = vmatprep.subr.bf16.mxu0 %v8587
        %10221 = vmatpush1.bf16.msra.mxu0 %v8586
        %10222 = vmatprep.subr.bf16.mxu0 %v8579
        %10223 = vmatpush1.bf16.msra.mxu0 %v8578
        %10224 = vmatprep.subr.bf16.mxu0 %v8571
        %10225 = vmatpush1.bf16.msra.mxu0 %v8570
        %10226 = vmatprep.subr.bf16.mxu0 %v8691
        %10227 = vmatpush2.bf16.msra.mxu0 %v8690
        %10228 = vmatprep.subr.bf16.mxu0 %v8683
        %10229 = vmatpush2.bf16.msra.mxu0 %v8682
        %10230 = vmatprep.subr.bf16.mxu0 %v8675
        %10231 = vmatpush2.bf16.msra.mxu0 %v8674
        %10232 = vmatprep.subr.bf16.mxu0 %v8667
        %10233 = vmatpush2.bf16.msra.mxu0 %v8666
        %10234 = vmatprep.subr.bf16.mxu0 %v8659
        %10235 = vmatpush2.bf16.msra.mxu0 %v8658
        %10236 = vmatprep.subr.bf16.mxu0 %v8651
        %10237 = vmatpush2.bf16.msra.mxu0 %v8650
        %10238 = vmatprep.subr.bf16.mxu0 %v8643
        %10239 = vmatpush2.bf16.msra.mxu0 %v8642
        %10240 = vmatprep.subr.bf16.mxu0 %v8635
        %10241 = vmatpush2.bf16.msra.mxu0 %v8634
        %10242 = vmatprep.mubr.bf16.mxu0 %v8961
        %10243 = vmatmul.mubr.bf16.gmra.mxu0 %v8960
        %v10244 = vpop.f32.mrf.mxu0
        %v10245 = vadd.f32 %v10204, %v10244
        %v10246 = vpop.f32.mrf.mxu0
        %v10247 = vadd.f32 %v10206, %v10246
        %v10248 = vpop.f32.mrf.mxu0
        %v10249 = vpop.f32.mrf.mxu0
        %10250 = vdwg.mxu0
        %10251 = vmatprep.subr.bf16.mxu0 %v8755
        %10252 = vmatpush1.bf16.msra.mxu0 %v8754
        %10253 = vmatprep.subr.bf16.mxu0 %v8747
        %10254 = vmatpush1.bf16.msra.mxu0 %v8746
        %10255 = vmatprep.subr.bf16.mxu0 %v8739
        %10256 = vmatpush1.bf16.msra.mxu0 %v8738
        %10257 = vmatprep.subr.bf16.mxu0 %v8731
        %10258 = vmatpush1.bf16.msra.mxu0 %v8730
        %10259 = vmatprep.subr.bf16.mxu0 %v8723
        %10260 = vmatpush1.bf16.msra.mxu0 %v8722
        %10261 = vmatprep.subr.bf16.mxu0 %v8715
        %10262 = vmatpush1.bf16.msra.mxu0 %v8714
        %10263 = vmatprep.subr.bf16.mxu0 %v8707
        %10264 = vmatpush1.bf16.msra.mxu0 %v8706
        %10265 = vmatprep.subr.bf16.mxu0 %v8699
        %10266 = vmatpush1.bf16.msra.mxu0 %v8698
        %10267 = vmatprep.subr.bf16.mxu0 %v8819
        %10268 = vmatpush2.bf16.msra.mxu0 %v8818
        %10269 = vmatprep.subr.bf16.mxu0 %v8811
        %10270 = vmatpush2.bf16.msra.mxu0 %v8810
        %10271 = vmatprep.subr.bf16.mxu0 %v8803
        %10272 = vmatpush2.bf16.msra.mxu0 %v8802
        %10273 = vmatprep.subr.bf16.mxu0 %v8795
        %10274 = vmatpush2.bf16.msra.mxu0 %v8794
        %10275 = vmatprep.subr.bf16.mxu0 %v8787
        %10276 = vmatpush2.bf16.msra.mxu0 %v8786
        %10277 = vmatprep.subr.bf16.mxu0 %v8779
        %10278 = vmatpush2.bf16.msra.mxu0 %v8778
        %10279 = vmatprep.subr.bf16.mxu0 %v8771
        %10280 = vmatpush2.bf16.msra.mxu0 %v8770
        %10281 = vmatprep.subr.bf16.mxu0 %v8763
        %10282 = vmatpush2.bf16.msra.mxu0 %v8762
        %10283 = vmatprep.mubr.bf16.mxu0 %v8963
        %10284 = vmatmul.mubr.bf16.gmra.mxu0 %v8962
        %v10285 = vpop.f32.mrf.mxu0
        %v10286 = vadd.f32 %v10245, %v10285
        %v10287 = vpop.f32.mrf.mxu0
        %v10288 = vadd.f32 %v10247, %v10287
        %v10289 = vpop.f32.mrf.mxu0
        %v10290 = vpop.f32.mrf.mxu0
        %10291 = vdwg.mxu0
        %v10293 = vlaneseq
        %v10294 = vshrl.u32 %v10293, 7
        %v10295 = vsub.s32 0, %v10294
        %v10296 = vrot.slane %v923, %v10295
        %v10297 = vlaneseq
        %v10298 = vshrl.u32 %v10297, 7
        %v10299 = vsub.s32 1, %v10298
        %v10300 = vrot.slane %v923, %v10299
        %v10301 = vlaneseq
        %v10302 = vshrl.u32 %v10301, 7
        %v10303 = vsub.s32 2, %v10302
        %v10304 = vrot.slane %v923, %v10303
        %v10305 = vlaneseq
        %v10306 = vshrl.u32 %v10305, 7
        %v10307 = vsub.s32 3, %v10306
        %v10308 = vrot.slane %v923, %v10307
        %v10309 = vlaneseq
        %v10310 = vshrl.u32 %v10309, 7
        %v10311 = vsub.s32 4, %v10310
        %v10312 = vrot.slane %v923, %v10311
        %v10313 = vlaneseq
        %v10314 = vshrl.u32 %v10313, 7
        %v10315 = vsub.s32 5, %v10314
        %v10316 = vrot.slane %v923, %v10315
        %v10317 = vlaneseq
        %v10318 = vshrl.u32 %v10317, 7
        %v10319 = vsub.s32 6, %v10318
        %v10320 = vrot.slane %v923, %v10319
        %v10321 = vlaneseq
        %v10322 = vshrl.u32 %v10321, 7
        %v10323 = vsub.s32 7, %v10322
        %v10324 = vrot.slane %v923, %v10323
        %v10333 = vmul.f32 %v9302, %v10296
        %v10334 = vmul.f32 %v9304, %v10300
        %v10335 = vmul.f32 %v9630, %v10304
        %v10336 = vmul.f32 %v9632, %v10308
        %v10337 = vmul.f32 %v9958, %v10312
        %v10338 = vmul.f32 %v9960, %v10316
        %v10339 = vmul.f32 %v10286, %v10320
        %v10340 = vmul.f32 %v10288, %v10324
        %v10342 = vlaneseq
        %v10343 = vshrl.u32 %v10342, 7
        %v10344 = vsub.s32 0, %v10343
        %v10345 = vrot.slane %v924, %v10344
        %v10346 = vlaneseq
        %v10347 = vshrl.u32 %v10346, 7
        %v10348 = vsub.s32 1, %v10347
        %v10349 = vrot.slane %v924, %v10348
        %v10350 = vlaneseq
        %v10351 = vshrl.u32 %v10350, 7
        %v10352 = vsub.s32 2, %v10351
        %v10353 = vrot.slane %v924, %v10352
        %v10354 = vlaneseq
        %v10355 = vshrl.u32 %v10354, 7
        %v10356 = vsub.s32 3, %v10355
        %v10357 = vrot.slane %v924, %v10356
        %v10358 = vlaneseq
        %v10359 = vshrl.u32 %v10358, 7
        %v10360 = vsub.s32 4, %v10359
        %v10361 = vrot.slane %v924, %v10360
        %v10362 = vlaneseq
        %v10363 = vshrl.u32 %v10362, 7
        %v10364 = vsub.s32 5, %v10363
        %v10365 = vrot.slane %v924, %v10364
        %v10366 = vlaneseq
        %v10367 = vshrl.u32 %v10366, 7
        %v10368 = vsub.s32 6, %v10367
        %v10369 = vrot.slane %v924, %v10368
        %v10370 = vlaneseq
        %v10371 = vshrl.u32 %v10370, 7
        %v10372 = vsub.s32 7, %v10371
        %v10373 = vrot.slane %v924, %v10372
        %v10382 = vadd.f32 %v10333, %v10345
        %v10383 = vadd.f32 %v10334, %v10349
        %v10384 = vadd.f32 %v10335, %v10353
        %v10385 = vadd.f32 %v10336, %v10357
        %v10386 = vadd.f32 %v10337, %v10361
        %v10387 = vadd.f32 %v10338, %v10365
        %v10388 = vadd.f32 %v10339, %v10369
        %v10389 = vadd.f32 %v10340, %v10373
        %v10390 = vmax.f32 %v10382, 0.0
        %v10391 = vmax.f32 %v10383, 0.0
        %v10392 = vmax.f32 %v10384, 0.0
        %v10393 = vmax.f32 %v10385, 0.0
        %v10394 = vmax.f32 %v10386, 0.0
        %v10395 = vmax.f32 %v10387, 0.0
        %v10396 = vmax.f32 %v10388, 0.0
        %v10397 = vmax.f32 %v10389, 0.0
        %v10406 = vcombine.low %v10390, %v10391
        %v10407 = vcombine.low %v10392, %v10393
        %v10409 = vunpack.c.l.s4 1983009808
        %v10410 = vunpack.c.0.s8 %v10409
        %v10411 = vlaneseq
        %v10412 = vshrl.u32 %v10411, 7
        %v10413 = vsub.s32 %v10410, %v10412
        %v10414 = vrot.slane %v10406, %v10413
        %v10416 = vunpack.c.l.s4 1983009808
        %v10417 = vunpack.c.0.s8 %v10416
        %v10418 = vlaneseq
        %v10419 = vshrl.u32 %v10418, 7
        %v10420 = vsub.s32 %v10417, %v10419
        %v10421 = vrot.slane %v10407, %v10420
        %v10422 = vcombine.low %v10414, %v10421
        %v10423 = vcombine.low %v10394, %v10395
        %v10424 = vcombine.low %v10396, %v10397
        %v10426 = vunpack.c.l.s4 1983009808
        %v10427 = vunpack.c.0.s8 %v10426
        %v10428 = vlaneseq
        %v10429 = vshrl.u32 %v10428, 7
        %v10430 = vsub.s32 %v10427, %v10429
        %v10431 = vrot.slane %v10423, %v10430
        %v10433 = vunpack.c.l.s4 1983009808
        %v10434 = vunpack.c.0.s8 %v10433
        %v10435 = vlaneseq
        %v10436 = vshrl.u32 %v10435, 7
        %v10437 = vsub.s32 %v10434, %v10436
        %v10438 = vrot.slane %v10424, %v10437
        %v10439 = vcombine.low %v10431, %v10438
        %10442 = vst [vmem:[%s388] sm:$0xff] %v10422
        %10443 = vst [vmem:[%s388 + $0x8] sm:$0xff] %v10439
        %s10444 = sand.u32 %s186, 1
        %s10445 = scalar_lea.sflag [#allocation4], %s10444
        %s10446 = sand.u32 %s186, 1
        %s10447 = smul.addr %s10446, 16
        %s10448 = scalar_lea.vmem [#allocation10], %s10447
        // Predicated region
        $region61: #{_lambda_.1} parent=43 // pred_check
          %p10449 = pneg %p196
        $region62: #{_lambda_.1} parent=43 // pred_check_branch
          %10451 = sbr.rel (%p10449) target = $region64
        $region63: #{_lambda_.1} parent=43 // pred_region
          %s10453 = ssub.s32 256, 256
          %10454 = vsyncadd %s10445, %s10453
          %s10455 = smul.addr %s27, 8
          %s10456 = smul.addr %s10455, 32
          %s10457 = scalar_lea.hbm %s6, %s10456
          %s10459 = sshll.u32 %s10448, 4
          %s10460 = int_to_ptr.vmem [resolvable:$true] %s10459
          %10462 = dma.vmem_to_hbm [thread:$0]  %s10460, 256, %s10457, %s10445
        $region64: #{_lambda_.1} parent=43 // pred_fallthru
          _
      $region44: #{_lambda_.1} parent=5 // pred_fallthru
        _
      %p10463 = scmp.le.s32.totalorder 2, %s22
      // Predicated region
      $region65: #{_lambda_.1} parent=5 // pred_check
        %p10464 = pneg %p10463
      $region66: #{_lambda_.1} parent=5 // pred_check_branch
        %10466 = sbr.rel (%p10464) target = $region68
      $region67: #{_lambda_.1} parent=5 // pred_region
        %s10467 = ssub.s32 %s22, 2
        // Predicated region
        $region69: #{_lambda_.1} parent=67 // pred_check
          %p10468 = pneg %p202
        $region70: #{_lambda_.1} parent=67 // pred_check_branch
          %10470 = sbr.rel (%p10468) target = $region72
        $region71: #{_lambda_.1} parent=67 // pred_region
          %s10471 = sand.u32 %s187, 1
          %s10472 = scalar_lea.sflag [#allocation4], %s10471
          %s10473 = sand.u32 %s187, 1
          %s10474 = smul.addr %s10473, 16
          %s10475 = scalar_lea.vmem [#allocation10], %s10474
          %10476 = dma.done %s10472, 256
        $region72: #{_lambda_.1} parent=67 // pred_fallthru
          _
      $region68: #{_lambda_.1} parent=5 // pred_fallthru
        _
    $region6: #{_lambda_.1} parent=1 // loop_footer
      %s26 = sadd.s32 1, %s22
    $region7: #{_lambda_.1} parent=1 // loop_footer_branch
      %21 = sbr.rel target = $region3
    $region8: #{_lambda_.1} parent=1 // loop_exit
      _
    %10477 = vsyncpa [#allocation3], 1
    %s10478 = scalar_lea.sflag [#allocation3], 1
    %10479 = vsyncpa %s10478, 1
    %10480 = vsyncpa [#allocation8], 1
    %s10481 = scalar_lea.sflag [#allocation8], 1
    %10482 = vsyncpa %s10481, 1
    %10483 = vsyncpa [#allocation4], 1
    %s10484 = scalar_lea.sflag [#allocation4], 1
    %10485 = vsyncpa %s10484, 1
    %10486 = vsyncpa [#allocation5], 1
    %s10487 = scalar_lea.sflag [#allocation5], 1
    %10488 = vsyncpa %s10487, 1

</llo_original>
